<compile_context>
chip_gen: v7x
topology: tpu7x:2x2x1
jax: 0.10.0
libtpu: 0.0.40
codegen_flags: <defaults>
</compile_context>

<pallas_src>
import functools

import numpy as np
import jax
import jax.numpy as jnp
from jax import lax
from jax.experimental import pallas as pl
from jax.experimental.pallas import tpu as pltpu  # noqa: F401  (imported for TPU backend)

# ----------------------------- configuration --------------------------------
DIM_FEAT = 4                       # C  (dim_feat)
ROW_SIZE = 16                      # H == W == row_size
DIM_TOKEN = 64                     # dim_token
NUM_CLS = 6                        # N
TOKEN_WINDOW = 5                   # TW
OFF_GRID = 2
HEADS = 2
DIM_HEAD = 32
INNER_DIM = HEADS * DIM_HEAD       # 64
MLP_DIM = 512
HEAD_HIDDEN = 256
IN_TOKEN_CHANNEL = DIM_FEAT * ROW_SIZE * TOKEN_WINDOW   # 320
BN_EPS = 1e-5
LN_EPS = 1e-5

W_PAD = ROW_SIZE + 2 * OFF_GRID    # 20  padded row width
CT = DIM_FEAT * TOKEN_WINDOW       # 20  per-row gathered patch width, lanes (c, j)
HCT = ROW_SIZE * CT                # 320 == IN_TOKEN_CHANNEL, lanes (h, c, j)
TOK_PAD = 8                        # tokens per batch padded 6 -> 8 (sublane multiple)
OUT_W = 128                        # lane-dense head output width


# ------------------------------ small helpers -------------------------------
def _mmf(a, b):
    # f32 MXU matmul (kept f32 on the argmax-critical heads path)
    return jnp.dot(a, b, preferred_element_type=jnp.float32)


def _mmb(a, b_bf16):
    # bf16-operand MXU matmul, f32 accumulate; b is pre-cast on the host
    return jnp.dot(a.astype(jnp.bfloat16), b_bf16,
                   preferred_element_type=jnp.float32)


def _layernorm(z, g, b):
    mu = jnp.mean(z, axis=-1, keepdims=True)
    var = jnp.mean((z - mu) ** 2, axis=-1, keepdims=True)
    return (z - mu) * lax.rsqrt(var + LN_EPS) * g + b


def _gelu(z):
    # PyTorch nn.GELU() default (exact erf form)
    return 0.5 * z * (1.0 + lax.erf(z * 0.7071067811865476))


# ----------------------------- the fused kernel ------------------------------
_KP_ARGS = (
    "w1m", "b1m", "w2m", "b2m", "laneid", "wmod",
    "gatherA", "scatterA", "tile_exp", "tile_expT", "blockmask", "row2b", "b2row",
    "wtok", "btok", "selbn", "embrep",
    "ln1g", "ln1b",
    "wq0", "wk0", "wv0", "wo0", "wq1", "wk1", "wv1", "wo1", "bo", "attnmask",
    "ln2g", "ln2b", "wf1", "bf1", "wf2", "bf2",
    "lnfg", "lnfb", "wproj", "bproj", "sellast",
)


def _mega_kernel(*refs, B):
    n_in = 1 + len(_KP_ARGS)
    xr_ref = refs[0]
    g = dict(zip(_KP_ARGS, refs[1:n_in]))
    head1_ref, head2_ref = refs[n_in:]

    H, W, TW = ROW_SIZE, ROW_SIZE, TOKEN_WINDOW
    N, D = NUM_CLS, DIM_TOKEN
    BH = B * H
    BNP = B * TOK_PAD

    xr = xr_ref[...]                                    # (BH, C*W_PAD) f32

    # ---------------- merged ext+cls heads (segmented softmax, 128-wide) -----
    def heads(z):
        # head weights loaded INSIDE each call -> short live ranges
        h1 = _mmf(z, g["w1m"][...]) + g["b1m"][...]                 # (BH, 512)
        logits = _mmf(h1, g["w2m"][...]) + g["b2m"][...]            # (BH, 128)
        lane = g["laneid"][...]                                     # (1, 128)
        ext_m = lane < 2.0
        cls_m = jnp.logical_and(lane >= 2.0, lane < 2.0 + W)
        neg = jnp.float32(-1e30)
        m_e = jnp.max(jnp.where(ext_m, logits, neg), axis=-1, keepdims=True)
        m_c = jnp.max(jnp.where(cls_m, logits, neg), axis=-1, keepdims=True)
        zl = jnp.where(jnp.logical_or(ext_m, cls_m), logits, neg)
        e = jnp.exp(zl - jnp.where(ext_m, m_e, m_c))                # invalid lanes -> 0
        s_e = jnp.sum(jnp.where(ext_m, e, 0.0), axis=-1, keepdims=True)
        s_c = jnp.sum(e, axis=-1, keepdims=True) - s_e
        return e / jnp.where(ext_m, s_e, s_c)                       # exact division

    # ---------------- pass 1 heads: one lane-dense store ----------------
    probs1 = heads(xr)
    head1_ref[...] = probs1

    lane = g["laneid"][...]
    cls_m = jnp.logical_and(lane >= 2.0, lane < 2.0 + W)
    ext0_m = lane < 1.0

    # data-dependent python `if mean(ext[:,:,0]) > 0.3` -> traced select
    s_row = jnp.sum(jnp.where(ext0_m, probs1, 0.0), axis=-1, keepdims=True)   # (BH,1)
    cond = (jnp.sum(s_row, axis=0, keepdims=True) * (1.0 / BH)) > 0.3         # (1,1)

    # first-occurrence argmax over the row_size class lanes
    maxc = jnp.max(jnp.where(cls_m, probs1, -1.0), axis=-1, keepdims=True)    # (BH,1)
    am = jnp.min(jnp.where(jnp.logical_and(cls_m, probs1 >= maxc),
                           lane - 2.0, 1e9),
                 axis=-1, keepdims=True)                                       # (BH,1)

    wmod = g["wmod"][...]                               # (1, C*W_PAD) lane -> w index

    # ---------------- gather the 5-wide window around argmax ----------------
    # pr[r, c*TW + j] = x_padded[b, c, h, argmax + j]   (disjoint output lanes per j)
    pr = jnp.zeros((BH, CT), jnp.float32)
    for j in range(TW):
        mj = wmod == (am + float(j))
        pr = pr + _mmf(jnp.where(mj, xr, 0.0), g["gatherA"][j, :, :])

    # fold per-row windows into the (B, H*CT) token-input layout (lanes (h,c,j))
    pe = _mmf(g["row2b"][...],
              _mmf(pr, g["tile_exp"][...]) * g["blockmask"][...])   # (B, HCT)

    # ---------------- to_token + class embeddings (padded token axis) -------
    base = _mmb(pe, g["wtok"][...]) + g["btok"][...]                # (B, D)
    x = _mmf(g["selbn"][...], base) + g["embrep"][...]              # (BNP, D)

    # ---------------- transformer block (depth=1), collapsed attention ------
    xn = _layernorm(x, g["ln1g"][...], g["ln1b"][...])
    xnb = xn.astype(jnp.bfloat16)
    amask = g["attnmask"][...]                                      # (BNP, BNP)
    scale = DIM_HEAD ** (-0.5)
    attn = jnp.zeros((BNP, D), jnp.float32) + g["bo"][...]
    wq = (g["wq0"], g["wq1"])
    wk = (g["wk0"], g["wk1"])
    wv = (g["wv0"], g["wv1"])
    wo = (g["wo0"], g["wo1"])
    for h in range(HEADS):
        qh = jnp.dot(xnb, wq[h][...], preferred_element_type=jnp.float32)   # (BNP,32)
        kh = jnp.dot(xnb, wk[h][...], preferred_element_type=jnp.float32)
        vh = jnp.dot(xnb, wv[h][...], preferred_element_type=jnp.float32)
        dots = lax.dot_general(qh.astype(jnp.bfloat16), kh.astype(jnp.bfloat16),
                               (((1,), (1,)), ((), ())),
                               preferred_element_type=jnp.float32) * scale + amask
        m = jnp.max(dots, axis=-1, keepdims=True)
        e = jnp.exp(dots - m)
        p = e * pl.reciprocal(jnp.sum(e, axis=-1, keepdims=True), approx=True)
        oh = jnp.dot(p.astype(jnp.bfloat16), vh.astype(jnp.bfloat16),
                     preferred_element_type=jnp.float32)                     # (BNP,32)
        attn = attn + jnp.dot(oh.astype(jnp.bfloat16), wo[h][...],
                              preferred_element_type=jnp.float32)            # (BNP,D)
    x = x + attn

    xn2 = _layernorm(x, g["ln2g"][...], g["ln2b"][...])
    hff = _gelu(_mmb(xn2, g["wf1"][...]) + g["bf1"][...])
    x = x + _mmb(hff, g["wf2"][...]) + g["bf2"][...]

    # ---------------- final LN + projection (only the last class token is
    # ever written back: the sequential torch writes mean the last index wins)
    xl = _mmf(g["sellast"][...], x)                                 # (B, D)
    xf = _layernorm(xl, g["lnfg"][...], g["lnfb"][...])
    refined = _mmb(xf, g["wproj"][...]) + g["bproj"][...]           # (B, HCT)

    # unfold (B, HCT) -> per-row windows (BH, CT), scatter into rows
    refE = _mmf(g["b2row"][...], refined)                           # (BH, HCT)
    rr = _mmf(refE * g["blockmask"][...], g["tile_expT"][...])      # (BH, CT)
    xw = xr
    for j in range(TW):
        mj = wmod == (am + float(j))                                # recomputed (cheap)
        xw = jnp.where(mj, _mmf(rr, g["scatterA"][j, :, :]), xw)
    xr2 = jnp.where(cond, xw, xr)

    # ---------------- pass 2 heads (padding lanes killed by zero w1m rows) --
    head2_ref[...] = heads(xr2)


# ----------------------- kernel-layout weights & constants -------------------
def _prepare_kernel_inputs(p, B):
    """Build, ONCE, all repacked weights and structural constants."""
    C, H, W, TW, Wp = DIM_FEAT, ROW_SIZE, ROW_SIZE, TOKEN_WINDOW, W_PAD
    N, D = NUM_CLS, DIM_TOKEN
    BH = B * H
    BNP = B * TOK_PAD
    f32 = jnp.float32
    bf16 = jnp.bfloat16
    kp = {}

    # BatchNorm1d folded in eval mode with default running stats (mean=0, var=1,
    # gamma=1, beta=0) -> pure scale on the following 1x1 conv.
    # TODO(synk): train-mode batch statistics for BatchNorm are not modeled.
    bn_scale = 1.0 / np.sqrt(1.0 + BN_EPS)

    # merged, zero-padded first head layer: rows indexed (c, w_padded)
    w1cat = jnp.concatenate([p["w1e"], p["w1c"]], axis=1)              # (C*W, 512)
    w1cat = w1cat.reshape(C, W, 2 * HEAD_HIDDEN)
    w1cat = jnp.pad(w1cat, ((0, 0), (OFF_GRID, OFF_GRID), (0, 0)))     # (C, Wp, 512)
    kp["w1m"] = w1cat.reshape(C * Wp, 2 * HEAD_HIDDEN).astype(f32)
    kp["b1m"] = jnp.concatenate([p["b1e"], p["b1c"]], axis=1).astype(f32)
    w2m = jnp.zeros((2 * HEAD_HIDDEN, OUT_W), f32)
    w2m = w2m.at[:HEAD_HIDDEN, 0:2].set(p["w2e"] * bn_scale)
    w2m = w2m.at[HEAD_HIDDEN:, 2:2 + W].set(p["w2c"] * bn_scale)
    kp["w2m"] = w2m                                                    # (512, 128)
    b2m = jnp.zeros((1, OUT_W), f32)
    b2m = b2m.at[:, 0:2].set(p["b2e"])
    b2m = b2m.at[:, 2:2 + W].set(p["b2c"])
    kp["b2m"] = b2m

    # ---------- structural constants (numpy, then device) ----------
    kp["laneid"] = jnp.asarray(np.arange(OUT_W, dtype=np.float32)[None, :])
    l = np.arange(C * Wp)
    kk = np.arange(CT)
    qi = np.arange(HCT)
    r = np.arange(BH)
    bb = np.arange(B)
    kp["wmod"] = jnp.asarray((l % Wp).astype(np.float32)[None, :])     # (1, C*Wp)
    ga = ((l[None, :, None] // Wp) == (kk[None, None, :] // TW)) & \
         ((kk[None, None, :] % TW) == np.arange(TW)[:, None, None])
    kp["gatherA"] = jnp.asarray(ga.astype(np.float32))                 # (TW, C*Wp, CT)
    kp["scatterA"] = jnp.asarray(np.transpose(ga, (0, 2, 1)).astype(np.float32))
    te = ((qi[None, :] % CT) == kk[:, None]).astype(np.float32)
    kp["tile_exp"] = jnp.asarray(te)                                   # (CT, HCT)
    kp["tile_expT"] = jnp.asarray(te.T)                                # (HCT, CT)
    kp["blockmask"] = jnp.asarray(
        ((qi[None, :] // CT) == (r[:, None] % H)).astype(np.float32))  # (BH, HCT)
    r2b = ((r[None, :] // H) == bb[:, None]).astype(np.float32)
    kp["row2b"] = jnp.asarray(r2b)                                     # (B, BH)
    kp["b2row"] = jnp.asarray(r2b.T)                                   # (BH, B)

    # padded token axis: token row t = b*TOK_PAD + n, n < N real, rest padding
    tt = np.arange(BNP)
    tok_b, tok_n = tt // TOK_PAD, tt % TOK_PAD
    valid = tok_n < N
    kp["selbn"] = jnp.asarray(
        (np.equal(tok_b[:, None], bb[None, :]) & valid[:, None]).astype(np.float32))
    kp["sellast"] = jnp.asarray(
        np.equal(tt[None, :], bb[:, None] * TOK_PAD + (N - 1)).astype(np.float32))
    allowed = (tok_b[:, None] == tok_b[None, :]) & valid[None, :]
    kp["attnmask"] = jnp.asarray(np.where(allowed, 0.0, -1e9).astype(np.float32))

    embrep = jnp.zeros((BNP, D), f32)
    for b in range(B):
        embrep = embrep.at[b * TOK_PAD:b * TOK_PAD + N].set(p["emb"])
    kp["embrep"] = embrep                                              # (BNP, D)

    # to_token: permute weight rows from torch (c,h,j) to kernel (h,c,j); bf16
    kp["wtok"] = (p["w_tok"].reshape(C, H, TW, D).transpose(1, 0, 2, 3)
                  .reshape(HCT, D).astype(bf16))
    kp["btok"] = p["b_tok"].astype(f32)

    # transformer weights: per-head q/k/v/out split host-side, bf16 operands
    kp["ln1g"], kp["ln1b"] = p["ln1_g"], p["ln1_b"]
    wq = p["w_qkv"][:, :INNER_DIM]
    wk = p["w_qkv"][:, INNER_DIM:2 * INNER_DIM]
    wv = p["w_qkv"][:, 2 * INNER_DIM:]
    for h in range(HEADS):
        cs, ce = h * DIM_HEAD, (h + 1) * DIM_HEAD
        kp[f"wq{h}"] = wq[:, cs:ce].astype(bf16)
        kp[f"wk{h}"] = wk[:, cs:ce].astype(bf16)
        kp[f"wv{h}"] = wv[:, cs:ce].astype(bf16)
        kp[f"wo{h}"] = p["w_out"][cs:ce, :].astype(bf16)
    kp["bo"] = p["b_out"].astype(f32)
    kp["ln2g"], kp["ln2b"] = p["ln2_g"], p["ln2_b"]
    kp["wf1"], kp["bf1"] = p["w_ff1"].astype(bf16), p["b_ff1"].astype(f32)
    kp["wf2"], kp["bf2"] = p["w_ff2"].astype(bf16), p["b_ff2"].astype(f32)
    kp["lnfg"], kp["lnfb"] = p["lnf_g"], p["lnf_b"]
    # final projection: permute output columns from (c,h,j) to (h,c,j); bf16
    kp["wproj"] = (p["w_proj"].reshape(D, C, H, TW).transpose(0, 2, 1, 3)
                   .reshape(D, HCT).astype(bf16))
    kp["bproj"] = (p["b_proj"].reshape(1, C, H, TW).transpose(0, 2, 1, 3)
                   .reshape(1, HCT).astype(f32))
    return kp


# --------------------------- parameter initialization ------------------------
def init_params(key):
    keys = iter(jax.random.split(key, 24))

    def nrm(shape, s=0.05):
        return jax.random.normal(next(keys), shape, jnp.float32) * s

    CW = DIM_FEAT * ROW_SIZE
    p = {}
    # shared_ext_head: Conv1d(CW,256,1) -> BN -> Conv1d(256,2,1)
    p["w1e"], p["b1e"] = nrm((CW, HEAD_HIDDEN)), nrm((1, HEAD_HIDDEN))
    p["w2e"], p["b2e"] = nrm((HEAD_HIDDEN, 2)), nrm((1, 2))
    # shared_cls_head: Conv1d(CW,256,1) -> BN -> Conv1d(256,row_size,1)
    p["w1c"], p["b1c"] = nrm((CW, HEAD_HIDDEN)), nrm((1, HEAD_HIDDEN))
    p["w2c"], p["b2c"] = nrm((HEAD_HIDDEN, ROW_SIZE)), nrm((1, ROW_SIZE))
    # to_token: Linear(in_token_channel, dim_token); class embeddings
    p["w_tok"], p["b_tok"] = nrm((IN_TOKEN_CHANNEL, DIM_TOKEN)), nrm((1, DIM_TOKEN))
    p["emb"] = nrm((NUM_CLS, DIM_TOKEN), s=1.0)
    # transformer (depth=1, heads=2, dim_head=32, mlp_dim=512)
    p["ln1_g"], p["ln1_b"] = jnp.ones((1, DIM_TOKEN)), jnp.zeros((1, DIM_TOKEN))
    p["w_qkv"] = nrm((DIM_TOKEN, 3 * INNER_DIM))                        # no bias
    p["w_out"], p["b_out"] = nrm((INNER_DIM, DIM_TOKEN)), nrm((1, DIM_TOKEN))
    p["ln2_g"], p["ln2_b"] = jnp.ones((1, DIM_TOKEN)), jnp.zeros((1, DIM_TOKEN))
    p["w_ff1"], p["b_ff1"] = nrm((DIM_TOKEN, MLP_DIM)), nrm((1, MLP_DIM))
    p["w_ff2"], p["b_ff2"] = nrm((MLP_DIM, DIM_TOKEN)), nrm((1, DIM_TOKEN))
    p["lnf_g"], p["lnf_b"] = jnp.ones((1, DIM_TOKEN)), jnp.zeros((1, DIM_TOKEN))
    p["w_proj"], p["b_proj"] = nrm((DIM_TOKEN, IN_TOKEN_CHANNEL)), nrm((1, IN_TOKEN_CHANNEL))
    return p


# --------------------------------- forward ----------------------------------
def forward(x, kp):
    """x: (B, C, H, W) NCHW; kp: prepared kernel inputs (built once)."""
    B, C, H, W = x.shape
    assert (C, H, W) == (DIM_FEAT, ROW_SIZE, ROW_SIZE)
    BH = B * H

    # one-time layout prep: NCHW -> padded (B*H, C*W_PAD) channels-on-lanes rows
    x_p = jnp.pad(x, ((0, 0), (0, 0), (0, 0), (OFF_GRID, OFF_GRID)))
    xr = jnp.transpose(x_p, (0, 2, 1, 3)).reshape(BH, DIM_FEAT * W_PAD).astype(jnp.float32)

    head1, head2 = pl.pallas_call(
        functools.partial(_mega_kernel, B=B),
        out_shape=(jax.ShapeDtypeStruct((BH, OUT_W), jnp.float32),
                   jax.ShapeDtypeStruct((BH, OUT_W), jnp.float32)),
    )(xr, *[kp[k] for k in _KP_ARGS])

    ext = head1[:, 0:2].reshape(B, H, 2)
    cls = head1[:, 2:2 + ROW_SIZE].reshape(B, H, ROW_SIZE)
    ext2 = head2[:, 0:2].reshape(B, H, 2)
    cls2 = head2[:, 2:2 + ROW_SIZE].reshape(B, H, ROW_SIZE)

    out = {}
    for idx in range(NUM_CLS):
        out[f"ext_{idx}"] = ext
        out[f"cls_{idx}"] = cls
        out[f"ext2_{idx}"] = ext2
        out[f"cls2_{idx}"] = cls2
    return out


# ----------------------------------- main ------------------------------------
if __name__ == "__main__":
    key = jax.random.PRNGKey(0)
    pkey, xkey = jax.random.split(key)
    params = init_params(pkey)

    B, C, H, W = 2, DIM_FEAT, ROW_SIZE, ROW_SIZE          # (2, 4, 16, 16)
    x = jax.random.normal(xkey, (B, C, H, W), jnp.float32)

    # constants / repacked weights built ONCE, outside the jitted forward
    kp = _prepare_kernel_inputs(params, B)

    fwd = jax.jit(forward)
    out = jax.block_until_ready(fwd(x, kp))

    assert out["ext_0"].shape == (B, H, 2)
    assert out["cls_0"].shape == (B, H, ROW_SIZE)
    assert out["ext2_5"].shape == (B, H, 2)
    assert out["cls2_5"].shape == (B, H, ROW_SIZE)
    assert all(bool(jnp.all(jnp.isfinite(v))) for v in out.values())
    # softmax outputs must sum to 1 along their class axes
    assert bool(jnp.allclose(jnp.sum(out["ext_0"], axis=-1), 1.0, atol=1e-4))
    assert bool(jnp.allclose(jnp.sum(out["cls_0"], axis=-1), 1.0, atol=1e-4))
    assert bool(jnp.allclose(jnp.sum(out["ext2_0"], axis=-1), 1.0, atol=1e-4))
    assert bool(jnp.allclose(jnp.sum(out["cls2_0"], axis=-1), 1.0, atol=1e-4))
    print("KERNEL_OK")
</pallas_src>

<mosaic_0001>
module attributes {stable_mosaic.version = 11 : i64} {
  func.func @_mega_kernel(%arg0: memref<32x80xf32, #tpu.memory_space<vmem>>, %arg1: memref<80x512xf32, #tpu.memory_space<vmem>>, %arg2: memref<1x512xf32, #tpu.memory_space<vmem>>, %arg3: memref<512x128xf32, #tpu.memory_space<vmem>>, %arg4: memref<1x128xf32, #tpu.memory_space<vmem>>, %arg5: memref<1x128xf32, #tpu.memory_space<vmem>>, %arg6: memref<1x80xf32, #tpu.memory_space<vmem>>, %arg7: memref<5x80x20xf32, #tpu.memory_space<vmem>>, %arg8: memref<5x20x80xf32, #tpu.memory_space<vmem>>, %arg9: memref<20x320xf32, #tpu.memory_space<vmem>>, %arg10: memref<320x20xf32, #tpu.memory_space<vmem>>, %arg11: memref<32x320xf32, #tpu.memory_space<vmem>>, %arg12: memref<2x32xf32, #tpu.memory_space<vmem>>, %arg13: memref<32x2xf32, #tpu.memory_space<vmem>>, %arg14: memref<320x64xbf16, #tpu.memory_space<vmem>>, %arg15: memref<1x64xf32, #tpu.memory_space<vmem>>, %arg16: memref<16x2xf32, #tpu.memory_space<vmem>>, %arg17: memref<16x64xf32, #tpu.memory_space<vmem>>, %arg18: memref<1x64xf32, #tpu.memory_space<vmem>>, %arg19: memref<1x64xf32, #tpu.memory_space<vmem>>, %arg20: memref<64x32xbf16, #tpu.memory_space<vmem>>, %arg21: memref<64x32xbf16, #tpu.memory_space<vmem>>, %arg22: memref<64x32xbf16, #tpu.memory_space<vmem>>, %arg23: memref<32x64xbf16, #tpu.memory_space<vmem>>, %arg24: memref<64x32xbf16, #tpu.memory_space<vmem>>, %arg25: memref<64x32xbf16, #tpu.memory_space<vmem>>, %arg26: memref<64x32xbf16, #tpu.memory_space<vmem>>, %arg27: memref<32x64xbf16, #tpu.memory_space<vmem>>, %arg28: memref<1x64xf32, #tpu.memory_space<vmem>>, %arg29: memref<16x16xf32, #tpu.memory_space<vmem>>, %arg30: memref<1x64xf32, #tpu.memory_space<vmem>>, %arg31: memref<1x64xf32, #tpu.memory_space<vmem>>, %arg32: memref<64x512xbf16, #tpu.memory_space<vmem>>, %arg33: memref<1x512xf32, #tpu.memory_space<vmem>>, %arg34: memref<512x64xbf16, #tpu.memory_space<vmem>>, %arg35: memref<1x64xf32, #tpu.memory_space<vmem>>, %arg36: memref<1x64xf32, #tpu.memory_space<vmem>>, %arg37: memref<1x64xf32, #tpu.memory_space<vmem>>, %arg38: memref<64x320xbf16, #tpu.memory_space<vmem>>, %arg39: memref<1x320xf32, #tpu.memory_space<vmem>>, %arg40: memref<2x16xf32, #tpu.memory_space<vmem>>, %arg41: memref<32x128xf32, #tpu.memory_space<vmem>>, %arg42: memref<32x128xf32, #tpu.memory_space<vmem>>) attributes {dimension_semantics = [], scalar_prefetch = 0 : i64, scratch_operands = 0 : i64, tpu.core_type = #tpu.core_type<tc>} {
    %c0 = arith.constant 0 : index
    %c0_0 = arith.constant 0 : index
    %0 = vector.load %arg0[%c0, %c0_0] : memref<32x80xf32, #tpu.memory_space<vmem>>, vector<32x80xf32>
    %c0_1 = arith.constant 0 : index
    %c0_2 = arith.constant 0 : index
    %1 = vector.load %arg1[%c0_1, %c0_2] : memref<80x512xf32, #tpu.memory_space<vmem>>, vector<80x512xf32>
    %cst = arith.constant dense<0.000000e+00> : vector<32x512xf32>
    %2 = tpu.matmul %0, %1, %cst {dimension_numbers = #tpu.dot_dimension_numbers<[1], [0], [0], [1], [0, 0, 1, 1], [], []>} : vector<32x80xf32>, vector<80x512xf32>, vector<32x512xf32> -> vector<32x512xf32>
    %c0_3 = arith.constant 0 : index
    %c0_4 = arith.constant 0 : index
    %3 = vector.load %arg2[%c0_3, %c0_4] : memref<1x512xf32, #tpu.memory_space<vmem>>, vector<1x512xf32>
    %4 = vector.broadcast %3 : vector<1x512xf32> to vector<32x512xf32>
    %5 = arith.addf %2, %4 : vector<32x512xf32>
    %c0_5 = arith.constant 0 : index
    %c0_6 = arith.constant 0 : index
    %6 = vector.load %arg3[%c0_5, %c0_6] : memref<512x128xf32, #tpu.memory_space<vmem>>, vector<512x128xf32>
    %cst_7 = arith.constant dense<0.000000e+00> : vector<32x128xf32>
    %7 = tpu.matmul %5, %6, %cst_7 {dimension_numbers = #tpu.dot_dimension_numbers<[1], [0], [0], [1], [0, 0, 1, 1], [], []>} : vector<32x512xf32>, vector<512x128xf32>, vector<32x128xf32> -> vector<32x128xf32>
    %c0_8 = arith.constant 0 : index
    %c0_9 = arith.constant 0 : index
    %8 = vector.load %arg4[%c0_8, %c0_9] : memref<1x128xf32, #tpu.memory_space<vmem>>, vector<1x128xf32>
    %9 = vector.broadcast %8 : vector<1x128xf32> to vector<32x128xf32>
    %10 = arith.addf %7, %9 : vector<32x128xf32>
    %c0_10 = arith.constant 0 : index
    %c0_11 = arith.constant 0 : index
    %11 = vector.load %arg5[%c0_10, %c0_11] : memref<1x128xf32, #tpu.memory_space<vmem>>, vector<1x128xf32>
    %cst_12 = arith.constant 2.000000e+00 : f32
    %12 = vector.broadcast %cst_12 : f32 to vector<1x128xf32>
    %13 = arith.cmpf olt, %11, %12 : vector<1x128xf32>
    %cst_13 = arith.constant 2.000000e+00 : f32
    %14 = vector.broadcast %cst_13 : f32 to vector<1x128xf32>
    %15 = arith.cmpf oge, %11, %14 : vector<1x128xf32>
    %cst_14 = arith.constant 1.800000e+01 : f32
    %16 = vector.broadcast %cst_14 : f32 to vector<1x128xf32>
    %17 = arith.cmpf olt, %11, %16 : vector<1x128xf32>
    %18 = arith.andi %15, %17 : vector<1x128xi1>
    %cst_15 = arith.constant -1.000000e+30 : f32
    %19 = vector.shape_cast %13 : vector<1x128xi1> to vector<1x128xi1>
    %20 = vector.broadcast %19 : vector<1x128xi1> to vector<32x128xi1>
    %21 = vector.broadcast %cst_15 : f32 to vector<32x128xf32>
    %22 = arith.select %20, %10, %21 : vector<32x128xi1>, vector<32x128xf32>
    %cst_16 = arith.constant dense<0xFF800000> : vector<32xf32>
    %23 = vector.multi_reduction <maximumf>, %22, %cst_16 [1] : vector<32x128xf32> to vector<32xf32>
    %24 = vector.shape_cast %23 : vector<32xf32> to vector<32x1xf32>
    %cst_17 = arith.constant -1.000000e+30 : f32
    %25 = vector.shape_cast %18 : vector<1x128xi1> to vector<1x128xi1>
    %26 = vector.broadcast %25 : vector<1x128xi1> to vector<32x128xi1>
    %27 = vector.broadcast %cst_17 : f32 to vector<32x128xf32>
    %28 = arith.select %26, %10, %27 : vector<32x128xi1>, vector<32x128xf32>
    %cst_18 = arith.constant dense<0xFF800000> : vector<32xf32>
    %29 = vector.multi_reduction <maximumf>, %28, %cst_18 [1] : vector<32x128xf32> to vector<32xf32>
    %30 = vector.shape_cast %29 : vector<32xf32> to vector<32x1xf32>
    %31 = arith.ori %13, %18 : vector<1x128xi1>
    %cst_19 = arith.constant -1.000000e+30 : f32
    %32 = vector.shape_cast %31 : vector<1x128xi1> to vector<1x128xi1>
    %33 = vector.broadcast %32 : vector<1x128xi1> to vector<32x128xi1>
    %34 = vector.broadcast %cst_19 : f32 to vector<32x128xf32>
    %35 = arith.select %33, %10, %34 : vector<32x128xi1>, vector<32x128xf32>
    %36 = vector.shape_cast %13 : vector<1x128xi1> to vector<1x128xi1>
    %37 = vector.broadcast %36 : vector<1x128xi1> to vector<32x128xi1>
    %38 = vector.shape_cast %24 : vector<32x1xf32> to vector<32x1xf32>
    %39 = vector.broadcast %38 : vector<32x1xf32> to vector<32x128xf32>
    %40 = vector.shape_cast %30 : vector<32x1xf32> to vector<32x1xf32>
    %41 = vector.broadcast %40 : vector<32x1xf32> to vector<32x128xf32>
    %42 = arith.select %37, %39, %41 : vector<32x128xi1>, vector<32x128xf32>
    %43 = arith.subf %35, %42 : vector<32x128xf32>
    %44 = math.exp %43 : vector<32x128xf32>
    %cst_20 = arith.constant 0.000000e+00 : f32
    %45 = vector.shape_cast %13 : vector<1x128xi1> to vector<1x128xi1>
    %46 = vector.broadcast %45 : vector<1x128xi1> to vector<32x128xi1>
    %47 = vector.broadcast %cst_20 : f32 to vector<32x128xf32>
    %48 = arith.select %46, %44, %47 : vector<32x128xi1>, vector<32x128xf32>
    %cst_21 = arith.constant dense<0.000000e+00> : vector<32xf32>
    %49 = vector.multi_reduction <add>, %48, %cst_21 [1] : vector<32x128xf32> to vector<32xf32>
    %50 = vector.shape_cast %49 : vector<32xf32> to vector<32x1xf32>
    %cst_22 = arith.constant dense<0.000000e+00> : vector<32xf32>
    %51 = vector.multi_reduction <add>, %44, %cst_22 [1] : vector<32x128xf32> to vector<32xf32>
    %52 = vector.shape_cast %51 : vector<32xf32> to vector<32x1xf32>
    %53 = arith.subf %52, %50 : vector<32x1xf32>
    %54 = vector.shape_cast %13 : vector<1x128xi1> to vector<1x128xi1>
    %55 = vector.broadcast %54 : vector<1x128xi1> to vector<32x128xi1>
    %56 = vector.shape_cast %50 : vector<32x1xf32> to vector<32x1xf32>
    %57 = vector.broadcast %56 : vector<32x1xf32> to vector<32x128xf32>
    %58 = vector.shape_cast %53 : vector<32x1xf32> to vector<32x1xf32>
    %59 = vector.broadcast %58 : vector<32x1xf32> to vector<32x128xf32>
    %60 = arith.select %55, %57, %59 : vector<32x128xi1>, vector<32x128xf32>
    %61 = arith.divf %44, %60 : vector<32x128xf32>
    %c0_23 = arith.constant 0 : index
    %c0_24 = arith.constant 0 : index
    %62 = vector.load %arg41[%c0_23, %c0_24] : memref<32x128xf32, #tpu.memory_space<vmem>>, vector<32x128xf32>
    tpu.vector_store %arg41[%c0_23, %c0_24], %61 {strides = array<i32>} : memref<32x128xf32, #tpu.memory_space<vmem>>, vector<32x128xf32>,
    %c0_25 = arith.constant 0 : index
    %c0_26 = arith.constant 0 : index
    %63 = vector.load %arg5[%c0_25, %c0_26] : memref<1x128xf32, #tpu.memory_space<vmem>>, vector<1x128xf32>
    %cst_27 = arith.constant 2.000000e+00 : f32
    %64 = vector.broadcast %cst_27 : f32 to vector<1x128xf32>
    %65 = arith.cmpf oge, %63, %64 : vector<1x128xf32>
    %cst_28 = arith.constant 1.800000e+01 : f32
    %66 = vector.broadcast %cst_28 : f32 to vector<1x128xf32>
    %67 = arith.cmpf olt, %63, %66 : vector<1x128xf32>
    %68 = arith.andi %65, %67 : vector<1x128xi1>
    %cst_29 = arith.constant 1.000000e+00 : f32
    %69 = vector.broadcast %cst_29 : f32 to vector<1x128xf32>
    %70 = arith.cmpf olt, %63, %69 : vector<1x128xf32>
    %cst_30 = arith.constant 0.000000e+00 : f32
    %71 = vector.shape_cast %70 : vector<1x128xi1> to vector<1x128xi1>
    %72 = vector.broadcast %71 : vector<1x128xi1> to vector<32x128xi1>
    %73 = vector.broadcast %cst_30 : f32 to vector<32x128xf32>
    %74 = arith.select %72, %61, %73 : vector<32x128xi1>, vector<32x128xf32>
    %cst_31 = arith.constant dense<0.000000e+00> : vector<32xf32>
    %75 = vector.multi_reduction <add>, %74, %cst_31 [1] : vector<32x128xf32> to vector<32xf32>
    %76 = vector.shape_cast %75 : vector<32xf32> to vector<32x1xf32>
    %cst_32 = arith.constant dense<0.000000e+00> : vector<1xf32>
    %77 = vector.multi_reduction <add>, %76, %cst_32 [0] : vector<32x1xf32> to vector<1xf32>
    %78 = vector.shape_cast %77 : vector<1xf32> to vector<1x1xf32>
    %cst_33 = arith.constant 3.125000e-02 : f32
    %79 = vector.broadcast %cst_33 : f32 to vector<1x1xf32>
    %80 = arith.mulf %78, %79 : vector<1x1xf32>
    %cst_34 = arith.constant 3.000000e-01 : f32
    %81 = vector.broadcast %cst_34 : f32 to vector<1x1xf32>
    %82 = arith.cmpf ogt, %80, %81 : vector<1x1xf32>
    %cst_35 = arith.constant -1.000000e+00 : f32
    %83 = vector.shape_cast %68 : vector<1x128xi1> to vector<1x128xi1>
    %84 = vector.broadcast %83 : vector<1x128xi1> to vector<32x128xi1>
    %85 = vector.broadcast %cst_35 : f32 to vector<32x128xf32>
    %86 = arith.select %84, %61, %85 : vector<32x128xi1>, vector<32x128xf32>
    %cst_36 = arith.constant dense<0xFF800000> : vector<32xf32>
    %87 = vector.multi_reduction <maximumf>, %86, %cst_36 [1] : vector<32x128xf32> to vector<32xf32>
    %88 = vector.shape_cast %87 : vector<32xf32> to vector<32x1xf32>
    %89 = vector.broadcast %88 : vector<32x1xf32> to vector<32x128xf32>
    %90 = arith.cmpf oge, %61, %89 : vector<32x128xf32>
    %91 = vector.broadcast %68 : vector<1x128xi1> to vector<32x128xi1>
    %92 = arith.andi %91, %90 : vector<32x128xi1>
    %cst_37 = arith.constant 2.000000e+00 : f32
    %93 = vector.broadcast %cst_37 : f32 to vector<1x128xf32>
    %94 = arith.subf %63, %93 : vector<1x128xf32>
    %cst_38 = arith.constant 1.000000e+09 : f32
    %95 = vector.shape_cast %94 : vector<1x128xf32> to vector<1x128xf32>
    %96 = vector.broadcast %95 : vector<1x128xf32> to vector<32x128xf32>
    %97 = vector.broadcast %cst_38 : f32 to vector<32x128xf32>
    %98 = arith.select %92, %96, %97 : vector<32x128xi1>, vector<32x128xf32>
    %cst_39 = arith.constant dense<0x7F800000> : vector<32xf32>
    %99 = vector.multi_reduction <minimumf>, %98, %cst_39 [1] : vector<32x128xf32> to vector<32xf32>
    %100 = vector.shape_cast %99 : vector<32xf32> to vector<32x1xf32>
    %c0_40 = arith.constant 0 : index
    %c0_41 = arith.constant 0 : index
    %101 = vector.load %arg6[%c0_40, %c0_41] : memref<1x80xf32, #tpu.memory_space<vmem>>, vector<1x80xf32>
    %cst_42 = arith.constant 0.000000e+00 : f32
    %102 = vector.broadcast %cst_42 : f32 to vector<32x20xf32>
    %cst_43 = arith.constant 0.000000e+00 : f32
    %103 = vector.broadcast %cst_43 : f32 to vector<32x1xf32>
    %104 = arith.addf %100, %103 : vector<32x1xf32>
    %105 = vector.broadcast %101 : vector<1x80xf32> to vector<32x80xf32>
    %106 = vector.broadcast %104 : vector<32x1xf32> to vector<32x80xf32>
    %107 = arith.cmpf oeq, %105, %106 : vector<32x80xf32>
    %cst_44 = arith.constant 0.000000e+00 : f32
    %108 = vector.broadcast %cst_44 : f32 to vector<32x80xf32>
    %109 = arith.select %107, %0, %108 : vector<32x80xi1>, vector<32x80xf32>
    %c0_45 = arith.constant 0 : index
    %c0_46 = arith.constant 0 : index
    %c0_47 = arith.constant 0 : index
    %110 = vector.load %arg7[%c0_45, %c0_46, %c0_47] : memref<5x80x20xf32, #tpu.memory_space<vmem>>, vector<1x80x20xf32>
    %111 = vector.shape_cast %110 : vector<1x80x20xf32> to vector<80x20xf32>
    %cst_48 = arith.constant dense<0.000000e+00> : vector<32x20xf32>
    %112 = tpu.matmul %109, %111, %cst_48 {dimension_numbers = #tpu.dot_dimension_numbers<[1], [0], [0], [1], [0, 0, 1, 1], [], []>} : vector<32x80xf32>, vector<80x20xf32>, vector<32x20xf32> -> vector<32x20xf32>
    %113 = arith.addf %102, %112 : vector<32x20xf32>
    %cst_49 = arith.constant 1.000000e+00 : f32
    %114 = vector.broadcast %cst_49 : f32 to vector<32x1xf32>
    %115 = arith.addf %100, %114 : vector<32x1xf32>
    %116 = vector.broadcast %101 : vector<1x80xf32> to vector<32x80xf32>
    %117 = vector.broadcast %115 : vector<32x1xf32> to vector<32x80xf32>
    %118 = arith.cmpf oeq, %116, %117 : vector<32x80xf32>
    %cst_50 = arith.constant 0.000000e+00 : f32
    %119 = vector.broadcast %cst_50 : f32 to vector<32x80xf32>
    %120 = arith.select %118, %0, %119 : vector<32x80xi1>, vector<32x80xf32>
    %c1 = arith.constant 1 : index
    %c0_51 = arith.constant 0 : index
    %c0_52 = arith.constant 0 : index
    %121 = vector.load %arg7[%c1, %c0_51, %c0_52] : memref<5x80x20xf32, #tpu.memory_space<vmem>>, vector<1x80x20xf32>
    %122 = vector.shape_cast %121 : vector<1x80x20xf32> to vector<80x20xf32>
    %cst_53 = arith.constant dense<0.000000e+00> : vector<32x20xf32>
    %123 = tpu.matmul %120, %122, %cst_53 {dimension_numbers = #tpu.dot_dimension_numbers<[1], [0], [0], [1], [0, 0, 1, 1], [], []>} : vector<32x80xf32>, vector<80x20xf32>, vector<32x20xf32> -> vector<32x20xf32>
    %124 = arith.addf %113, %123 : vector<32x20xf32>
    %cst_54 = arith.constant 2.000000e+00 : f32
    %125 = vector.broadcast %cst_54 : f32 to vector<32x1xf32>
    %126 = arith.addf %100, %125 : vector<32x1xf32>
    %127 = vector.broadcast %101 : vector<1x80xf32> to vector<32x80xf32>
    %128 = vector.broadcast %126 : vector<32x1xf32> to vector<32x80xf32>
    %129 = arith.cmpf oeq, %127, %128 : vector<32x80xf32>
    %cst_55 = arith.constant 0.000000e+00 : f32
    %130 = vector.broadcast %cst_55 : f32 to vector<32x80xf32>
    %131 = arith.select %129, %0, %130 : vector<32x80xi1>, vector<32x80xf32>
    %c2 = arith.constant 2 : index
    %c0_56 = arith.constant 0 : index
    %c0_57 = arith.constant 0 : index
    %132 = vector.load %arg7[%c2, %c0_56, %c0_57] : memref<5x80x20xf32, #tpu.memory_space<vmem>>, vector<1x80x20xf32>
    %133 = vector.shape_cast %132 : vector<1x80x20xf32> to vector<80x20xf32>
    %cst_58 = arith.constant dense<0.000000e+00> : vector<32x20xf32>
    %134 = tpu.matmul %131, %133, %cst_58 {dimension_numbers = #tpu.dot_dimension_numbers<[1], [0], [0], [1], [0, 0, 1, 1], [], []>} : vector<32x80xf32>, vector<80x20xf32>, vector<32x20xf32> -> vector<32x20xf32>
    %135 = arith.addf %124, %134 : vector<32x20xf32>
    %cst_59 = arith.constant 3.000000e+00 : f32
    %136 = vector.broadcast %cst_59 : f32 to vector<32x1xf32>
    %137 = arith.addf %100, %136 : vector<32x1xf32>
    %138 = vector.broadcast %101 : vector<1x80xf32> to vector<32x80xf32>
    %139 = vector.broadcast %137 : vector<32x1xf32> to vector<32x80xf32>
    %140 = arith.cmpf oeq, %138, %139 : vector<32x80xf32>
    %cst_60 = arith.constant 0.000000e+00 : f32
    %141 = vector.broadcast %cst_60 : f32 to vector<32x80xf32>
    %142 = arith.select %140, %0, %141 : vector<32x80xi1>, vector<32x80xf32>
    %c3 = arith.constant 3 : index
    %c0_61 = arith.constant 0 : index
    %c0_62 = arith.constant 0 : index
    %143 = vector.load %arg7[%c3, %c0_61, %c0_62] : memref<5x80x20xf32, #tpu.memory_space<vmem>>, vector<1x80x20xf32>
    %144 = vector.shape_cast %143 : vector<1x80x20xf32> to vector<80x20xf32>
    %cst_63 = arith.constant dense<0.000000e+00> : vector<32x20xf32>
    %145 = tpu.matmul %142, %144, %cst_63 {dimension_numbers = #tpu.dot_dimension_numbers<[1], [0], [0], [1], [0, 0, 1, 1], [], []>} : vector<32x80xf32>, vector<80x20xf32>, vector<32x20xf32> -> vector<32x20xf32>
    %146 = arith.addf %135, %145 : vector<32x20xf32>
    %cst_64 = arith.constant 4.000000e+00 : f32
    %147 = vector.broadcast %cst_64 : f32 to vector<32x1xf32>
    %148 = arith.addf %100, %147 : vector<32x1xf32>
    %149 = vector.broadcast %101 : vector<1x80xf32> to vector<32x80xf32>
    %150 = vector.broadcast %148 : vector<32x1xf32> to vector<32x80xf32>
    %151 = arith.cmpf oeq, %149, %150 : vector<32x80xf32>
    %cst_65 = arith.constant 0.000000e+00 : f32
    %152 = vector.broadcast %cst_65 : f32 to vector<32x80xf32>
    %153 = arith.select %151, %0, %152 : vector<32x80xi1>, vector<32x80xf32>
    %c4 = arith.constant 4 : index
    %c0_66 = arith.constant 0 : index
    %c0_67 = arith.constant 0 : index
    %154 = vector.load %arg7[%c4, %c0_66, %c0_67] : memref<5x80x20xf32, #tpu.memory_space<vmem>>, vector<1x80x20xf32>
    %155 = vector.shape_cast %154 : vector<1x80x20xf32> to vector<80x20xf32>
    %cst_68 = arith.constant dense<0.000000e+00> : vector<32x20xf32>
    %156 = tpu.matmul %153, %155, %cst_68 {dimension_numbers = #tpu.dot_dimension_numbers<[1], [0], [0], [1], [0, 0, 1, 1], [], []>} : vector<32x80xf32>, vector<80x20xf32>, vector<32x20xf32> -> vector<32x20xf32>
    %157 = arith.addf %146, %156 : vector<32x20xf32>
    %c0_69 = arith.constant 0 : index
    %c0_70 = arith.constant 0 : index
    %158 = vector.load %arg12[%c0_69, %c0_70] : memref<2x32xf32, #tpu.memory_space<vmem>>, vector<2x32xf32>
    %c0_71 = arith.constant 0 : index
    %c0_72 = arith.constant 0 : index
    %159 = vector.load %arg9[%c0_71, %c0_72] : memref<20x320xf32, #tpu.memory_space<vmem>>, vector<20x320xf32>
    %cst_73 = arith.constant dense<0.000000e+00> : vector<32x320xf32>
    %160 = tpu.matmul %157, %159, %cst_73 {dimension_numbers = #tpu.dot_dimension_numbers<[1], [0], [0], [1], [0, 0, 1, 1], [], []>} : vector<32x20xf32>, vector<20x320xf32>, vector<32x320xf32> -> vector<32x320xf32>
    %c0_74 = arith.constant 0 : index
    %c0_75 = arith.constant 0 : index
    %161 = vector.load %arg11[%c0_74, %c0_75] : memref<32x320xf32, #tpu.memory_space<vmem>>, vector<32x320xf32>
    %162 = arith.mulf %160, %161 : vector<32x320xf32>
    %cst_76 = arith.constant dense<0.000000e+00> : vector<2x320xf32>
    %163 = tpu.matmul %158, %162, %cst_76 {dimension_numbers = #tpu.dot_dimension_numbers<[1], [0], [0], [1], [0, 0, 1, 1], [], []>} : vector<2x32xf32>, vector<32x320xf32>, vector<2x320xf32> -> vector<2x320xf32>
    %c0_77 = arith.constant 0 : index
    %c0_78 = arith.constant 0 : index
    %164 = vector.load %arg14[%c0_77, %c0_78] : memref<320x64xbf16, #tpu.memory_space<vmem>>, vector<320x64xbf16>
    %165 = arith.truncf %163 : vector<2x320xf32> to vector<2x320xbf16>
    %cst_79 = arith.constant dense<0.000000e+00> : vector<2x64xf32>
    %166 = tpu.matmul %165, %164, %cst_79 {dimension_numbers = #tpu.dot_dimension_numbers<[1], [0], [0], [1], [0, 0, 1, 1], [], []>} : vector<2x320xbf16>, vector<320x64xbf16>, vector<2x64xf32> -> vector<2x64xf32>
    %c0_80 = arith.constant 0 : index
    %c0_81 = arith.constant 0 : index
    %167 = vector.load %arg15[%c0_80, %c0_81] : memref<1x64xf32, #tpu.memory_space<vmem>>, vector<1x64xf32>
    %168 = vector.broadcast %167 : vector<1x64xf32> to vector<2x64xf32>
    %169 = arith.addf %166, %168 : vector<2x64xf32>
    %c0_82 = arith.constant 0 : index
    %c0_83 = arith.constant 0 : index
    %170 = vector.load %arg16[%c0_82, %c0_83] : memref<16x2xf32, #tpu.memory_space<vmem>>, vector<16x2xf32>
    %cst_84 = arith.constant dense<0.000000e+00> : vector<16x64xf32>
    %171 = tpu.matmul %170, %169, %cst_84 {dimension_numbers = #tpu.dot_dimension_numbers<[1], [0], [0], [1], [0, 0, 1, 1], [], []>} : vector<16x2xf32>, vector<2x64xf32>, vector<16x64xf32> -> vector<16x64xf32>
    %c0_85 = arith.constant 0 : index
    %c0_86 = arith.constant 0 : index
    %172 = vector.load %arg17[%c0_85, %c0_86] : memref<16x64xf32, #tpu.memory_space<vmem>>, vector<16x64xf32>
    %173 = arith.addf %171, %172 : vector<16x64xf32>
    %c0_87 = arith.constant 0 : index
    %c0_88 = arith.constant 0 : index
    %174 = vector.load %arg18[%c0_87, %c0_88] : memref<1x64xf32, #tpu.memory_space<vmem>>, vector<1x64xf32>
    %c0_89 = arith.constant 0 : index
    %c0_90 = arith.constant 0 : index
    %175 = vector.load %arg19[%c0_89, %c0_90] : memref<1x64xf32, #tpu.memory_space<vmem>>, vector<1x64xf32>
    %cst_91 = arith.constant dense<0.000000e+00> : vector<16xf32>
    %176 = vector.multi_reduction <add>, %173, %cst_91 [1] : vector<16x64xf32> to vector<16xf32>
    %177 = vector.shape_cast %176 : vector<16xf32> to vector<16x1xf32>
    %cst_92 = arith.constant 6.400000e+01 : f32
    %178 = vector.broadcast %cst_92 : f32 to vector<16x1xf32>
    %179 = arith.divf %177, %178 : vector<16x1xf32>
    %180 = vector.broadcast %179 : vector<16x1xf32> to vector<16x64xf32>
    %181 = arith.subf %173, %180 : vector<16x64xf32>
    %182 = arith.mulf %181, %181 : vector<16x64xf32>
    %cst_93 = arith.constant dense<0.000000e+00> : vector<16xf32>
    %183 = vector.multi_reduction <add>, %182, %cst_93 [1] : vector<16x64xf32> to vector<16xf32>
    %184 = vector.shape_cast %183 : vector<16xf32> to vector<16x1xf32>
    %cst_94 = arith.constant 6.400000e+01 : f32
    %185 = vector.broadcast %cst_94 : f32 to vector<16x1xf32>
    %186 = arith.divf %184, %185 : vector<16x1xf32>
    %187 = vector.broadcast %179 : vector<16x1xf32> to vector<16x64xf32>
    %188 = arith.subf %173, %187 : vector<16x64xf32>
    %cst_95 = arith.constant 9.99999974E-6 : f32
    %189 = vector.broadcast %cst_95 : f32 to vector<16x1xf32>
    %190 = arith.addf %186, %189 : vector<16x1xf32>
    %191 = math.rsqrt %190 : vector<16x1xf32>
    %192 = vector.broadcast %191 : vector<16x1xf32> to vector<16x64xf32>
    %193 = arith.mulf %188, %192 : vector<16x64xf32>
    %194 = vector.broadcast %174 : vector<1x64xf32> to vector<16x64xf32>
    %195 = arith.mulf %193, %194 : vector<16x64xf32>
    %196 = vector.broadcast %175 : vector<1x64xf32> to vector<16x64xf32>
    %197 = arith.addf %195, %196 : vector<16x64xf32>
    %198 = arith.truncf %197 : vector<16x64xf32> to vector<16x64xbf16>
    %c0_96 = arith.constant 0 : index
    %c0_97 = arith.constant 0 : index
    %199 = vector.load %arg29[%c0_96, %c0_97] : memref<16x16xf32, #tpu.memory_space<vmem>>, vector<16x16xf32>
    %cst_98 = arith.constant 0.000000e+00 : f32
    %200 = vector.broadcast %cst_98 : f32 to vector<16x64xf32>
    %c0_99 = arith.constant 0 : index
    %c0_100 = arith.constant 0 : index
    %201 = vector.load %arg28[%c0_99, %c0_100] : memref<1x64xf32, #tpu.memory_space<vmem>>, vector<1x64xf32>
    %202 = vector.broadcast %201 : vector<1x64xf32> to vector<16x64xf32>
    %203 = arith.addf %200, %202 : vector<16x64xf32>
    %c0_101 = arith.constant 0 : index
    %c0_102 = arith.constant 0 : index
    %204 = vector.load %arg20[%c0_101, %c0_102] : memref<64x32xbf16, #tpu.memory_space<vmem>>, vector<64x32xbf16>
    %cst_103 = arith.constant dense<0.000000e+00> : vector<16x32xf32>
    %205 = tpu.matmul %198, %204, %cst_103 {dimension_numbers = #tpu.dot_dimension_numbers<[1], [0], [0], [1], [0, 0, 1, 1], [], []>} : vector<16x64xbf16>, vector<64x32xbf16>, vector<16x32xf32> -> vector<16x32xf32>
    %c0_104 = arith.constant 0 : index
    %c0_105 = arith.constant 0 : index
    %206 = vector.load %arg21[%c0_104, %c0_105] : memref<64x32xbf16, #tpu.memory_space<vmem>>, vector<64x32xbf16>
    %cst_106 = arith.constant dense<0.000000e+00> : vector<16x32xf32>
    %207 = tpu.matmul %198, %206, %cst_106 {dimension_numbers = #tpu.dot_dimension_numbers<[1], [0], [0], [1], [0, 0, 1, 1], [], []>} : vector<16x64xbf16>, vector<64x32xbf16>, vector<16x32xf32> -> vector<16x32xf32>
    %c0_107 = arith.constant 0 : index
    %c0_108 = arith.constant 0 : index
    %208 = vector.load %arg22[%c0_107, %c0_108] : memref<64x32xbf16, #tpu.memory_space<vmem>>, vector<64x32xbf16>
    %cst_109 = arith.constant dense<0.000000e+00> : vector<16x32xf32>
    %209 = tpu.matmul %198, %208, %cst_109 {dimension_numbers = #tpu.dot_dimension_numbers<[1], [0], [0], [1], [0, 0, 1, 1], [], []>} : vector<16x64xbf16>, vector<64x32xbf16>, vector<16x32xf32> -> vector<16x32xf32>
    %210 = arith.truncf %205 : vector<16x32xf32> to vector<16x32xbf16>
    %211 = arith.truncf %207 : vector<16x32xf32> to vector<16x32xbf16>
    %cst_110 = arith.constant dense<0.000000e+00> : vector<16x16xf32>
    %212 = tpu.matmul %210, %211, %cst_110 {dimension_numbers = #tpu.dot_dimension_numbers<[1], [1], [0], [0], [0, 0, 1, 0], [], []>} : vector<16x32xbf16>, vector<16x32xbf16>, vector<16x16xf32> -> vector<16x16xf32>
    %cst_111 = arith.constant 0.176776692 : f32
    %213 = vector.broadcast %cst_111 : f32 to vector<16x16xf32>
    %214 = arith.mulf %212, %213 : vector<16x16xf32>
    %215 = arith.addf %214, %199 : vector<16x16xf32>
    %cst_112 = arith.constant dense<0xFF800000> : vector<16xf32>
    %216 = vector.multi_reduction <maximumf>, %215, %cst_112 [1] : vector<16x16xf32> to vector<16xf32>
    %217 = vector.shape_cast %216 : vector<16xf32> to vector<16x1xf32>
    %218 = vector.broadcast %217 : vector<16x1xf32> to vector<16x16xf32>
    %219 = arith.subf %215, %218 : vector<16x16xf32>
    %220 = math.exp %219 : vector<16x16xf32>
    %cst_113 = arith.constant dense<0.000000e+00> : vector<16xf32>
    %221 = vector.multi_reduction <add>, %220, %cst_113 [1] : vector<16x16xf32> to vector<16xf32>
    %222 = vector.shape_cast %221 : vector<16xf32> to vector<16x1xf32>
    %223 = tpu.reciprocal %222 {approx = true} : vector<16x1xf32> -> vector<16x1xf32>
    %224 = vector.broadcast %223 : vector<16x1xf32> to vector<16x16xf32>
    %225 = arith.mulf %220, %224 : vector<16x16xf32>
    %226 = arith.truncf %225 : vector<16x16xf32> to vector<16x16xbf16>
    %227 = arith.truncf %209 : vector<16x32xf32> to vector<16x32xbf16>
    %cst_114 = arith.constant dense<0.000000e+00> : vector<16x32xf32>
    %228 = tpu.matmul %226, %227, %cst_114 {dimension_numbers = #tpu.dot_dimension_numbers<[1], [0], [0], [1], [0, 0, 1, 1], [], []>} : vector<16x16xbf16>, vector<16x32xbf16>, vector<16x32xf32> -> vector<16x32xf32>
    %229 = arith.truncf %228 : vector<16x32xf32> to vector<16x32xbf16>
    %c0_115 = arith.constant 0 : index
    %c0_116 = arith.constant 0 : index
    %230 = vector.load %arg23[%c0_115, %c0_116] : memref<32x64xbf16, #tpu.memory_space<vmem>>, vector<32x64xbf16>
    %cst_117 = arith.constant dense<0.000000e+00> : vector<16x64xf32>
    %231 = tpu.matmul %229, %230, %cst_117 {dimension_numbers = #tpu.dot_dimension_numbers<[1], [0], [0], [1], [0, 0, 1, 1], [], []>} : vector<16x32xbf16>, vector<32x64xbf16>, vector<16x64xf32> -> vector<16x64xf32>
    %232 = arith.addf %203, %231 : vector<16x64xf32>
    %c0_118 = arith.constant 0 : index
    %c0_119 = arith.constant 0 : index
    %233 = vector.load %arg24[%c0_118, %c0_119] : memref<64x32xbf16, #tpu.memory_space<vmem>>, vector<64x32xbf16>
    %cst_120 = arith.constant dense<0.000000e+00> : vector<16x32xf32>
    %234 = tpu.matmul %198, %233, %cst_120 {dimension_numbers = #tpu.dot_dimension_numbers<[1], [0], [0], [1], [0, 0, 1, 1], [], []>} : vector<16x64xbf16>, vector<64x32xbf16>, vector<16x32xf32> -> vector<16x32xf32>
    %c0_121 = arith.constant 0 : index
    %c0_122 = arith.constant 0 : index
    %235 = vector.load %arg25[%c0_121, %c0_122] : memref<64x32xbf16, #tpu.memory_space<vmem>>, vector<64x32xbf16>
    %cst_123 = arith.constant dense<0.000000e+00> : vector<16x32xf32>
    %236 = tpu.matmul %198, %235, %cst_123 {dimension_numbers = #tpu.dot_dimension_numbers<[1], [0], [0], [1], [0, 0, 1, 1], [], []>} : vector<16x64xbf16>, vector<64x32xbf16>, vector<16x32xf32> -> vector<16x32xf32>
    %c0_124 = arith.constant 0 : index
    %c0_125 = arith.constant 0 : index
    %237 = vector.load %arg26[%c0_124, %c0_125] : memref<64x32xbf16, #tpu.memory_space<vmem>>, vector<64x32xbf16>
    %cst_126 = arith.constant dense<0.000000e+00> : vector<16x32xf32>
    %238 = tpu.matmul %198, %237, %cst_126 {dimension_numbers = #tpu.dot_dimension_numbers<[1], [0], [0], [1], [0, 0, 1, 1], [], []>} : vector<16x64xbf16>, vector<64x32xbf16>, vector<16x32xf32> -> vector<16x32xf32>
    %239 = arith.truncf %234 : vector<16x32xf32> to vector<16x32xbf16>
    %240 = arith.truncf %236 : vector<16x32xf32> to vector<16x32xbf16>
    %cst_127 = arith.constant dense<0.000000e+00> : vector<16x16xf32>
    %241 = tpu.matmul %239, %240, %cst_127 {dimension_numbers = #tpu.dot_dimension_numbers<[1], [1], [0], [0], [0, 0, 1, 0], [], []>} : vector<16x32xbf16>, vector<16x32xbf16>, vector<16x16xf32> -> vector<16x16xf32>
    %cst_128 = arith.constant 0.176776692 : f32
    %242 = vector.broadcast %cst_128 : f32 to vector<16x16xf32>
    %243 = arith.mulf %241, %242 : vector<16x16xf32>
    %244 = arith.addf %243, %199 : vector<16x16xf32>
    %cst_129 = arith.constant dense<0xFF800000> : vector<16xf32>
    %245 = vector.multi_reduction <maximumf>, %244, %cst_129 [1] : vector<16x16xf32> to vector<16xf32>
    %246 = vector.shape_cast %245 : vector<16xf32> to vector<16x1xf32>
    %247 = vector.broadcast %246 : vector<16x1xf32> to vector<16x16xf32>
    %248 = arith.subf %244, %247 : vector<16x16xf32>
    %249 = math.exp %248 : vector<16x16xf32>
    %cst_130 = arith.constant dense<0.000000e+00> : vector<16xf32>
    %250 = vector.multi_reduction <add>, %249, %cst_130 [1] : vector<16x16xf32> to vector<16xf32>
    %251 = vector.shape_cast %250 : vector<16xf32> to vector<16x1xf32>
    %252 = tpu.reciprocal %251 {approx = true} : vector<16x1xf32> -> vector<16x1xf32>
    %253 = vector.broadcast %252 : vector<16x1xf32> to vector<16x16xf32>
    %254 = arith.mulf %249, %253 : vector<16x16xf32>
    %255 = arith.truncf %254 : vector<16x16xf32> to vector<16x16xbf16>
    %256 = arith.truncf %238 : vector<16x32xf32> to vector<16x32xbf16>
    %cst_131 = arith.constant dense<0.000000e+00> : vector<16x32xf32>
    %257 = tpu.matmul %255, %256, %cst_131 {dimension_numbers = #tpu.dot_dimension_numbers<[1], [0], [0], [1], [0, 0, 1, 1], [], []>} : vector<16x16xbf16>, vector<16x32xbf16>, vector<16x32xf32> -> vector<16x32xf32>
    %258 = arith.truncf %257 : vector<16x32xf32> to vector<16x32xbf16>
    %c0_132 = arith.constant 0 : index
    %c0_133 = arith.constant 0 : index
    %259 = vector.load %arg27[%c0_132, %c0_133] : memref<32x64xbf16, #tpu.memory_space<vmem>>, vector<32x64xbf16>
    %cst_134 = arith.constant dense<0.000000e+00> : vector<16x64xf32>
    %260 = tpu.matmul %258, %259, %cst_134 {dimension_numbers = #tpu.dot_dimension_numbers<[1], [0], [0], [1], [0, 0, 1, 1], [], []>} : vector<16x32xbf16>, vector<32x64xbf16>, vector<16x64xf32> -> vector<16x64xf32>
    %261 = arith.addf %232, %260 : vector<16x64xf32>
    %262 = arith.addf %173, %261 : vector<16x64xf32>
    %c0_135 = arith.constant 0 : index
    %c0_136 = arith.constant 0 : index
    %263 = vector.load %arg30[%c0_135, %c0_136] : memref<1x64xf32, #tpu.memory_space<vmem>>, vector<1x64xf32>
    %c0_137 = arith.constant 0 : index
    %c0_138 = arith.constant 0 : index
    %264 = vector.load %arg31[%c0_137, %c0_138] : memref<1x64xf32, #tpu.memory_space<vmem>>, vector<1x64xf32>
    %cst_139 = arith.constant dense<0.000000e+00> : vector<16xf32>
    %265 = vector.multi_reduction <add>, %262, %cst_139 [1] : vector<16x64xf32> to vector<16xf32>
    %266 = vector.shape_cast %265 : vector<16xf32> to vector<16x1xf32>
    %cst_140 = arith.constant 6.400000e+01 : f32
    %267 = vector.broadcast %cst_140 : f32 to vector<16x1xf32>
    %268 = arith.divf %266, %267 : vector<16x1xf32>
    %269 = vector.broadcast %268 : vector<16x1xf32> to vector<16x64xf32>
    %270 = arith.subf %262, %269 : vector<16x64xf32>
    %271 = arith.mulf %270, %270 : vector<16x64xf32>
    %cst_141 = arith.constant dense<0.000000e+00> : vector<16xf32>
    %272 = vector.multi_reduction <add>, %271, %cst_141 [1] : vector<16x64xf32> to vector<16xf32>
    %273 = vector.shape_cast %272 : vector<16xf32> to vector<16x1xf32>
    %cst_142 = arith.constant 6.400000e+01 : f32
    %274 = vector.broadcast %cst_142 : f32 to vector<16x1xf32>
    %275 = arith.divf %273, %274 : vector<16x1xf32>
    %276 = vector.broadcast %268 : vector<16x1xf32> to vector<16x64xf32>
    %277 = arith.subf %262, %276 : vector<16x64xf32>
    %cst_143 = arith.constant 9.99999974E-6 : f32
    %278 = vector.broadcast %cst_143 : f32 to vector<16x1xf32>
    %279 = arith.addf %275, %278 : vector<16x1xf32>
    %280 = math.rsqrt %279 : vector<16x1xf32>
    %281 = vector.broadcast %280 : vector<16x1xf32> to vector<16x64xf32>
    %282 = arith.mulf %277, %281 : vector<16x64xf32>
    %283 = vector.broadcast %263 : vector<1x64xf32> to vector<16x64xf32>
    %284 = arith.mulf %282, %283 : vector<16x64xf32>
    %285 = vector.broadcast %264 : vector<1x64xf32> to vector<16x64xf32>
    %286 = arith.addf %284, %285 : vector<16x64xf32>
    %c0_144 = arith.constant 0 : index
    %c0_145 = arith.constant 0 : index
    %287 = vector.load %arg32[%c0_144, %c0_145] : memref<64x512xbf16, #tpu.memory_space<vmem>>, vector<64x512xbf16>
    %288 = arith.truncf %286 : vector<16x64xf32> to vector<16x64xbf16>
    %cst_146 = arith.constant dense<0.000000e+00> : vector<16x512xf32>
    %289 = tpu.matmul %288, %287, %cst_146 {dimension_numbers = #tpu.dot_dimension_numbers<[1], [0], [0], [1], [0, 0, 1, 1], [], []>} : vector<16x64xbf16>, vector<64x512xbf16>, vector<16x512xf32> -> vector<16x512xf32>
    %c0_147 = arith.constant 0 : index
    %c0_148 = arith.constant 0 : index
    %290 = vector.load %arg33[%c0_147, %c0_148] : memref<1x512xf32, #tpu.memory_space<vmem>>, vector<1x512xf32>
    %291 = vector.broadcast %290 : vector<1x512xf32> to vector<16x512xf32>
    %292 = arith.addf %289, %291 : vector<16x512xf32>
    %cst_149 = arith.constant 5.000000e-01 : f32
    %293 = vector.broadcast %cst_149 : f32 to vector<16x512xf32>
    %294 = arith.mulf %293, %292 : vector<16x512xf32>
    %cst_150 = arith.constant 0.707106769 : f32
    %295 = vector.broadcast %cst_150 : f32 to vector<16x512xf32>
    %296 = arith.mulf %292, %295 : vector<16x512xf32>
    %297 = math.erf %296 : vector<16x512xf32>
    %cst_151 = arith.constant 1.000000e+00 : f32
    %298 = vector.broadcast %cst_151 : f32 to vector<16x512xf32>
    %299 = arith.addf %298, %297 : vector<16x512xf32>
    %300 = arith.mulf %294, %299 : vector<16x512xf32>
    %c0_152 = arith.constant 0 : index
    %c0_153 = arith.constant 0 : index
    %301 = vector.load %arg34[%c0_152, %c0_153] : memref<512x64xbf16, #tpu.memory_space<vmem>>, vector<512x64xbf16>
    %302 = arith.truncf %300 : vector<16x512xf32> to vector<16x512xbf16>
    %cst_154 = arith.constant dense<0.000000e+00> : vector<16x64xf32>
    %303 = tpu.matmul %302, %301, %cst_154 {dimension_numbers = #tpu.dot_dimension_numbers<[1], [0], [0], [1], [0, 0, 1, 1], [], []>} : vector<16x512xbf16>, vector<512x64xbf16>, vector<16x64xf32> -> vector<16x64xf32>
    %304 = arith.addf %262, %303 : vector<16x64xf32>
    %c0_155 = arith.constant 0 : index
    %c0_156 = arith.constant 0 : index
    %305 = vector.load %arg35[%c0_155, %c0_156] : memref<1x64xf32, #tpu.memory_space<vmem>>, vector<1x64xf32>
    %306 = vector.broadcast %305 : vector<1x64xf32> to vector<16x64xf32>
    %307 = arith.addf %304, %306 : vector<16x64xf32>
    %c0_157 = arith.constant 0 : index
    %c0_158 = arith.constant 0 : index
    %308 = vector.load %arg40[%c0_157, %c0_158] : memref<2x16xf32, #tpu.memory_space<vmem>>, vector<2x16xf32>
    %cst_159 = arith.constant dense<0.000000e+00> : vector<2x64xf32>
    %309 = tpu.matmul %308, %307, %cst_159 {dimension_numbers = #tpu.dot_dimension_numbers<[1], [0], [0], [1], [0, 0, 1, 1], [], []>} : vector<2x16xf32>, vector<16x64xf32>, vector<2x64xf32> -> vector<2x64xf32>
    %c0_160 = arith.constant 0 : index
    %c0_161 = arith.constant 0 : index
    %310 = vector.load %arg36[%c0_160, %c0_161] : memref<1x64xf32, #tpu.memory_space<vmem>>, vector<1x64xf32>
    %c0_162 = arith.constant 0 : index
    %c0_163 = arith.constant 0 : index
    %311 = vector.load %arg37[%c0_162, %c0_163] : memref<1x64xf32, #tpu.memory_space<vmem>>, vector<1x64xf32>
    %cst_164 = arith.constant dense<0.000000e+00> : vector<2xf32>
    %312 = vector.multi_reduction <add>, %309, %cst_164 [1] : vector<2x64xf32> to vector<2xf32>
    %313 = vector.shape_cast %312 : vector<2xf32> to vector<2x1xf32>
    %cst_165 = arith.constant 6.400000e+01 : f32
    %314 = vector.broadcast %cst_165 : f32 to vector<2x1xf32>
    %315 = arith.divf %313, %314 : vector<2x1xf32>
    %316 = vector.broadcast %315 : vector<2x1xf32> to vector<2x64xf32>
    %317 = arith.subf %309, %316 : vector<2x64xf32>
    %318 = arith.mulf %317, %317 : vector<2x64xf32>
    %cst_166 = arith.constant dense<0.000000e+00> : vector<2xf32>
    %319 = vector.multi_reduction <add>, %318, %cst_166 [1] : vector<2x64xf32> to vector<2xf32>
    %320 = vector.shape_cast %319 : vector<2xf32> to vector<2x1xf32>
    %cst_167 = arith.constant 6.400000e+01 : f32
    %321 = vector.broadcast %cst_167 : f32 to vector<2x1xf32>
    %322 = arith.divf %320, %321 : vector<2x1xf32>
    %323 = vector.broadcast %315 : vector<2x1xf32> to vector<2x64xf32>
    %324 = arith.subf %309, %323 : vector<2x64xf32>
    %cst_168 = arith.constant 9.99999974E-6 : f32
    %325 = vector.broadcast %cst_168 : f32 to vector<2x1xf32>
    %326 = arith.addf %322, %325 : vector<2x1xf32>
    %327 = math.rsqrt %326 : vector<2x1xf32>
    %328 = vector.broadcast %327 : vector<2x1xf32> to vector<2x64xf32>
    %329 = arith.mulf %324, %328 : vector<2x64xf32>
    %330 = vector.broadcast %310 : vector<1x64xf32> to vector<2x64xf32>
    %331 = arith.mulf %329, %330 : vector<2x64xf32>
    %332 = vector.broadcast %311 : vector<1x64xf32> to vector<2x64xf32>
    %333 = arith.addf %331, %332 : vector<2x64xf32>
    %c0_169 = arith.constant 0 : index
    %c0_170 = arith.constant 0 : index
    %334 = vector.load %arg38[%c0_169, %c0_170] : memref<64x320xbf16, #tpu.memory_space<vmem>>, vector<64x320xbf16>
    %335 = arith.truncf %333 : vector<2x64xf32> to vector<2x64xbf16>
    %cst_171 = arith.constant dense<0.000000e+00> : vector<2x320xf32>
    %336 = tpu.matmul %335, %334, %cst_171 {dimension_numbers = #tpu.dot_dimension_numbers<[1], [0], [0], [1], [0, 0, 1, 1], [], []>} : vector<2x64xbf16>, vector<64x320xbf16>, vector<2x320xf32> -> vector<2x320xf32>
    %c0_172 = arith.constant 0 : index
    %c0_173 = arith.constant 0 : index
    %337 = vector.load %arg39[%c0_172, %c0_173] : memref<1x320xf32, #tpu.memory_space<vmem>>, vector<1x320xf32>
    %338 = vector.broadcast %337 : vector<1x320xf32> to vector<2x320xf32>
    %339 = arith.addf %336, %338 : vector<2x320xf32>
    %c0_174 = arith.constant 0 : index
    %c0_175 = arith.constant 0 : index
    %340 = vector.load %arg13[%c0_174, %c0_175] : memref<32x2xf32, #tpu.memory_space<vmem>>, vector<32x2xf32>
    %cst_176 = arith.constant dense<0.000000e+00> : vector<32x320xf32>
    %341 = tpu.matmul %340, %339, %cst_176 {dimension_numbers = #tpu.dot_dimension_numbers<[1], [0], [0], [1], [0, 0, 1, 1], [], []>} : vector<32x2xf32>, vector<2x320xf32>, vector<32x320xf32> -> vector<32x320xf32>
    %c0_177 = arith.constant 0 : index
    %c0_178 = arith.constant 0 : index
    %342 = vector.load %arg11[%c0_177, %c0_178] : memref<32x320xf32, #tpu.memory_space<vmem>>, vector<32x320xf32>
    %343 = arith.mulf %341, %342 : vector<32x320xf32>
    %c0_179 = arith.constant 0 : index
    %c0_180 = arith.constant 0 : index
    %344 = vector.load %arg10[%c0_179, %c0_180] : memref<320x20xf32, #tpu.memory_space<vmem>>, vector<320x20xf32>
    %cst_181 = arith.constant dense<0.000000e+00> : vector<32x20xf32>
    %345 = tpu.matmul %343, %344, %cst_181 {dimension_numbers = #tpu.dot_dimension_numbers<[1], [0], [0], [1], [0, 0, 1, 1], [], []>} : vector<32x320xf32>, vector<320x20xf32>, vector<32x20xf32> -> vector<32x20xf32>
    %cst_182 = arith.constant 0.000000e+00 : f32
    %346 = vector.broadcast %cst_182 : f32 to vector<32x1xf32>
    %347 = arith.addf %100, %346 : vector<32x1xf32>
    %348 = vector.broadcast %101 : vector<1x80xf32> to vector<32x80xf32>
    %349 = vector.broadcast %347 : vector<32x1xf32> to vector<32x80xf32>
    %350 = arith.cmpf oeq, %348, %349 : vector<32x80xf32>
    %c0_183 = arith.constant 0 : index
    %c0_184 = arith.constant 0 : index
    %c0_185 = arith.constant 0 : index
    %351 = vector.load %arg8[%c0_183, %c0_184, %c0_185] : memref<5x20x80xf32, #tpu.memory_space<vmem>>, vector<1x20x80xf32>
    %352 = vector.shape_cast %351 : vector<1x20x80xf32> to vector<20x80xf32>
    %cst_186 = arith.constant dense<0.000000e+00> : vector<32x80xf32>
    %353 = tpu.matmul %345, %352, %cst_186 {dimension_numbers = #tpu.dot_dimension_numbers<[1], [0], [0], [1], [0, 0, 1, 1], [], []>} : vector<32x20xf32>, vector<20x80xf32>, vector<32x80xf32> -> vector<32x80xf32>
    %354 = arith.select %350, %353, %0 : vector<32x80xi1>, vector<32x80xf32>
    %cst_187 = arith.constant 1.000000e+00 : f32
    %355 = vector.broadcast %cst_187 : f32 to vector<32x1xf32>
    %356 = arith.addf %100, %355 : vector<32x1xf32>
    %357 = vector.broadcast %101 : vector<1x80xf32> to vector<32x80xf32>
    %358 = vector.broadcast %356 : vector<32x1xf32> to vector<32x80xf32>
    %359 = arith.cmpf oeq, %357, %358 : vector<32x80xf32>
    %c1_188 = arith.constant 1 : index
    %c0_189 = arith.constant 0 : index
    %c0_190 = arith.constant 0 : index
    %360 = vector.load %arg8[%c1_188, %c0_189, %c0_190] : memref<5x20x80xf32, #tpu.memory_space<vmem>>, vector<1x20x80xf32>
    %361 = vector.shape_cast %360 : vector<1x20x80xf32> to vector<20x80xf32>
    %cst_191 = arith.constant dense<0.000000e+00> : vector<32x80xf32>
    %362 = tpu.matmul %345, %361, %cst_191 {dimension_numbers = #tpu.dot_dimension_numbers<[1], [0], [0], [1], [0, 0, 1, 1], [], []>} : vector<32x20xf32>, vector<20x80xf32>, vector<32x80xf32> -> vector<32x80xf32>
    %363 = arith.select %359, %362, %354 : vector<32x80xi1>, vector<32x80xf32>
    %cst_192 = arith.constant 2.000000e+00 : f32
    %364 = vector.broadcast %cst_192 : f32 to vector<32x1xf32>
    %365 = arith.addf %100, %364 : vector<32x1xf32>
    %366 = vector.broadcast %101 : vector<1x80xf32> to vector<32x80xf32>
    %367 = vector.broadcast %365 : vector<32x1xf32> to vector<32x80xf32>
    %368 = arith.cmpf oeq, %366, %367 : vector<32x80xf32>
    %c2_193 = arith.constant 2 : index
    %c0_194 = arith.constant 0 : index
    %c0_195 = arith.constant 0 : index
    %369 = vector.load %arg8[%c2_193, %c0_194, %c0_195] : memref<5x20x80xf32, #tpu.memory_space<vmem>>, vector<1x20x80xf32>
    %370 = vector.shape_cast %369 : vector<1x20x80xf32> to vector<20x80xf32>
    %cst_196 = arith.constant dense<0.000000e+00> : vector<32x80xf32>
    %371 = tpu.matmul %345, %370, %cst_196 {dimension_numbers = #tpu.dot_dimension_numbers<[1], [0], [0], [1], [0, 0, 1, 1], [], []>} : vector<32x20xf32>, vector<20x80xf32>, vector<32x80xf32> -> vector<32x80xf32>
    %372 = arith.select %368, %371, %363 : vector<32x80xi1>, vector<32x80xf32>
    %cst_197 = arith.constant 3.000000e+00 : f32
    %373 = vector.broadcast %cst_197 : f32 to vector<32x1xf32>
    %374 = arith.addf %100, %373 : vector<32x1xf32>
    %375 = vector.broadcast %101 : vector<1x80xf32> to vector<32x80xf32>
    %376 = vector.broadcast %374 : vector<32x1xf32> to vector<32x80xf32>
    %377 = arith.cmpf oeq, %375, %376 : vector<32x80xf32>
    %c3_198 = arith.constant 3 : index
    %c0_199 = arith.constant 0 : index
    %c0_200 = arith.constant 0 : index
    %378 = vector.load %arg8[%c3_198, %c0_199, %c0_200] : memref<5x20x80xf32, #tpu.memory_space<vmem>>, vector<1x20x80xf32>
    %379 = vector.shape_cast %378 : vector<1x20x80xf32> to vector<20x80xf32>
    %cst_201 = arith.constant dense<0.000000e+00> : vector<32x80xf32>
    %380 = tpu.matmul %345, %379, %cst_201 {dimension_numbers = #tpu.dot_dimension_numbers<[1], [0], [0], [1], [0, 0, 1, 1], [], []>} : vector<32x20xf32>, vector<20x80xf32>, vector<32x80xf32> -> vector<32x80xf32>
    %381 = arith.select %377, %380, %372 : vector<32x80xi1>, vector<32x80xf32>
    %cst_202 = arith.constant 4.000000e+00 : f32
    %382 = vector.broadcast %cst_202 : f32 to vector<32x1xf32>
    %383 = arith.addf %100, %382 : vector<32x1xf32>
    %384 = vector.broadcast %101 : vector<1x80xf32> to vector<32x80xf32>
    %385 = vector.broadcast %383 : vector<32x1xf32> to vector<32x80xf32>
    %386 = arith.cmpf oeq, %384, %385 : vector<32x80xf32>
    %c4_203 = arith.constant 4 : index
    %c0_204 = arith.constant 0 : index
    %c0_205 = arith.constant 0 : index
    %387 = vector.load %arg8[%c4_203, %c0_204, %c0_205] : memref<5x20x80xf32, #tpu.memory_space<vmem>>, vector<1x20x80xf32>
    %388 = vector.shape_cast %387 : vector<1x20x80xf32> to vector<20x80xf32>
    %cst_206 = arith.constant dense<0.000000e+00> : vector<32x80xf32>
    %389 = tpu.matmul %345, %388, %cst_206 {dimension_numbers = #tpu.dot_dimension_numbers<[1], [0], [0], [1], [0, 0, 1, 1], [], []>} : vector<32x20xf32>, vector<20x80xf32>, vector<32x80xf32> -> vector<32x80xf32>
    %390 = arith.select %386, %389, %381 : vector<32x80xi1>, vector<32x80xf32>
    %391 = vector.shape_cast %82 : vector<1x1xi1> to vector<1x1xi1>
    %392 = vector.broadcast %391 : vector<1x1xi1> to vector<32x80xi1>
    %393 = arith.select %392, %390, %0 : vector<32x80xi1>, vector<32x80xf32>
    %c0_207 = arith.constant 0 : index
    %c0_208 = arith.constant 0 : index
    %394 = vector.load %arg1[%c0_207, %c0_208] : memref<80x512xf32, #tpu.memory_space<vmem>>, vector<80x512xf32>
    %cst_209 = arith.constant dense<0.000000e+00> : vector<32x512xf32>
    %395 = tpu.matmul %393, %394, %cst_209 {dimension_numbers = #tpu.dot_dimension_numbers<[1], [0], [0], [1], [0, 0, 1, 1], [], []>} : vector<32x80xf32>, vector<80x512xf32>, vector<32x512xf32> -> vector<32x512xf32>
    %c0_210 = arith.constant 0 : index
    %c0_211 = arith.constant 0 : index
    %396 = vector.load %arg2[%c0_210, %c0_211] : memref<1x512xf32, #tpu.memory_space<vmem>>, vector<1x512xf32>
    %397 = vector.broadcast %396 : vector<1x512xf32> to vector<32x512xf32>
    %398 = arith.addf %395, %397 : vector<32x512xf32>
    %c0_212 = arith.constant 0 : index
    %c0_213 = arith.constant 0 : index
    %399 = vector.load %arg3[%c0_212, %c0_213] : memref<512x128xf32, #tpu.memory_space<vmem>>, vector<512x128xf32>
    %cst_214 = arith.constant dense<0.000000e+00> : vector<32x128xf32>
    %400 = tpu.matmul %398, %399, %cst_214 {dimension_numbers = #tpu.dot_dimension_numbers<[1], [0], [0], [1], [0, 0, 1, 1], [], []>} : vector<32x512xf32>, vector<512x128xf32>, vector<32x128xf32> -> vector<32x128xf32>
    %c0_215 = arith.constant 0 : index
    %c0_216 = arith.constant 0 : index
    %401 = vector.load %arg4[%c0_215, %c0_216] : memref<1x128xf32, #tpu.memory_space<vmem>>, vector<1x128xf32>
    %402 = vector.broadcast %401 : vector<1x128xf32> to vector<32x128xf32>
    %403 = arith.addf %400, %402 : vector<32x128xf32>
    %c0_217 = arith.constant 0 : index
    %c0_218 = arith.constant 0 : index
    %404 = vector.load %arg5[%c0_217, %c0_218] : memref<1x128xf32, #tpu.memory_space<vmem>>, vector<1x128xf32>
    %cst_219 = arith.constant 2.000000e+00 : f32
    %405 = vector.broadcast %cst_219 : f32 to vector<1x128xf32>
    %406 = arith.cmpf olt, %404, %405 : vector<1x128xf32>
    %cst_220 = arith.constant 2.000000e+00 : f32
    %407 = vector.broadcast %cst_220 : f32 to vector<1x128xf32>
    %408 = arith.cmpf oge, %404, %407 : vector<1x128xf32>
    %cst_221 = arith.constant 1.800000e+01 : f32
    %409 = vector.broadcast %cst_221 : f32 to vector<1x128xf32>
    %410 = arith.cmpf olt, %404, %409 : vector<1x128xf32>
    %411 = arith.andi %408, %410 : vector<1x128xi1>
    %cst_222 = arith.constant -1.000000e+30 : f32
    %412 = vector.shape_cast %406 : vector<1x128xi1> to vector<1x128xi1>
    %413 = vector.broadcast %412 : vector<1x128xi1> to vector<32x128xi1>
    %414 = vector.broadcast %cst_222 : f32 to vector<32x128xf32>
    %415 = arith.select %413, %403, %414 : vector<32x128xi1>, vector<32x128xf32>
    %cst_223 = arith.constant dense<0xFF800000> : vector<32xf32>
    %416 = vector.multi_reduction <maximumf>, %415, %cst_223 [1] : vector<32x128xf32> to vector<32xf32>
    %417 = vector.shape_cast %416 : vector<32xf32> to vector<32x1xf32>
    %cst_224 = arith.constant -1.000000e+30 : f32
    %418 = vector.shape_cast %411 : vector<1x128xi1> to vector<1x128xi1>
    %419 = vector.broadcast %418 : vector<1x128xi1> to vector<32x128xi1>
    %420 = vector.broadcast %cst_224 : f32 to vector<32x128xf32>
    %421 = arith.select %419, %403, %420 : vector<32x128xi1>, vector<32x128xf32>
    %cst_225 = arith.constant dense<0xFF800000> : vector<32xf32>
    %422 = vector.multi_reduction <maximumf>, %421, %cst_225 [1] : vector<32x128xf32> to vector<32xf32>
    %423 = vector.shape_cast %422 : vector<32xf32> to vector<32x1xf32>
    %424 = arith.ori %406, %411 : vector<1x128xi1>
    %cst_226 = arith.constant -1.000000e+30 : f32
    %425 = vector.shape_cast %424 : vector<1x128xi1> to vector<1x128xi1>
    %426 = vector.broadcast %425 : vector<1x128xi1> to vector<32x128xi1>
    %427 = vector.broadcast %cst_226 : f32 to vector<32x128xf32>
    %428 = arith.select %426, %403, %427 : vector<32x128xi1>, vector<32x128xf32>
    %429 = vector.shape_cast %406 : vector<1x128xi1> to vector<1x128xi1>
    %430 = vector.broadcast %429 : vector<1x128xi1> to vector<32x128xi1>
    %431 = vector.shape_cast %417 : vector<32x1xf32> to vector<32x1xf32>
    %432 = vector.broadcast %431 : vector<32x1xf32> to vector<32x128xf32>
    %433 = vector.shape_cast %423 : vector<32x1xf32> to vector<32x1xf32>
    %434 = vector.broadcast %433 : vector<32x1xf32> to vector<32x128xf32>
    %435 = arith.select %430, %432, %434 : vector<32x128xi1>, vector<32x128xf32>
    %436 = arith.subf %428, %435 : vector<32x128xf32>
    %437 = math.exp %436 : vector<32x128xf32>
    %cst_227 = arith.constant 0.000000e+00 : f32
    %438 = vector.shape_cast %406 : vector<1x128xi1> to vector<1x128xi1>
    %439 = vector.broadcast %438 : vector<1x128xi1> to vector<32x128xi1>
    %440 = vector.broadcast %cst_227 : f32 to vector<32x128xf32>
    %441 = arith.select %439, %437, %440 : vector<32x128xi1>, vector<32x128xf32>
    %cst_228 = arith.constant dense<0.000000e+00> : vector<32xf32>
    %442 = vector.multi_reduction <add>, %441, %cst_228 [1] : vector<32x128xf32> to vector<32xf32>
    %443 = vector.shape_cast %442 : vector<32xf32> to vector<32x1xf32>
    %cst_229 = arith.constant dense<0.000000e+00> : vector<32xf32>
    %444 = vector.multi_reduction <add>, %437, %cst_229 [1] : vector<32x128xf32> to vector<32xf32>
    %445 = vector.shape_cast %444 : vector<32xf32> to vector<32x1xf32>
    %446 = arith.subf %445, %443 : vector<32x1xf32>
    %447 = vector.shape_cast %406 : vector<1x128xi1> to vector<1x128xi1>
    %448 = vector.broadcast %447 : vector<1x128xi1> to vector<32x128xi1>
    %449 = vector.shape_cast %443 : vector<32x1xf32> to vector<32x1xf32>
    %450 = vector.broadcast %449 : vector<32x1xf32> to vector<32x128xf32>
    %451 = vector.shape_cast %446 : vector<32x1xf32> to vector<32x1xf32>
    %452 = vector.broadcast %451 : vector<32x1xf32> to vector<32x128xf32>
    %453 = arith.select %448, %450, %452 : vector<32x128xi1>, vector<32x128xf32>
    %454 = arith.divf %437, %453 : vector<32x128xf32>
    %c0_230 = arith.constant 0 : index
    %c0_231 = arith.constant 0 : index
    %455 = vector.load %arg42[%c0_230, %c0_231] : memref<32x128xf32, #tpu.memory_space<vmem>>, vector<32x128xf32>
    tpu.vector_store %arg42[%c0_230, %c0_231], %454 {strides = array<i32>} : memref<32x128xf32, #tpu.memory_space<vmem>>, vector<32x128xf32>,
    return
  }
}

</mosaic_0001>

<llo_original>
// kernel: forward.1
$region0: #{forward.1}
  #allocation0 [shape = 'u32[]', space=smem, size = 0x4, offset = 0x4, fixed_abs, tag = 'smem constant byte address 0x4 - core index']
  #allocation1 [shape = 'u32[144,128]{1,0:T(1,128)}', space=vmem, size = 0x12000, scoped, tag = 'internal scratch']
  %s0 = inlined_call_operand.smem [shape: u32[43], index: -1, kind: input, shape index: {}]
  %s1 = sld [smem:[%s0]]
  %s2 = scalar_lea.smem %s0, 1
  %s3 = sld [smem:[%s2]]
  %s4 = scalar_lea.smem %s0, 2
  %s5 = sld [smem:[%s4]]
  %s6 = scalar_lea.smem %s0, 3
  %s7 = sld [smem:[%s6]]
  %s8 = scalar_lea.smem %s0, 4
  %s9 = sld [smem:[%s8]]
  %s10 = scalar_lea.smem %s0, 5
  %s11 = sld [smem:[%s10]]
  %s12 = scalar_lea.smem %s0, 6
  %s13 = sld [smem:[%s12]]
  %s14 = scalar_lea.smem %s0, 7
  %s15 = sld [smem:[%s14]]
  %s16 = scalar_lea.smem %s0, 8
  %s17 = sld [smem:[%s16]]
  %s18 = scalar_lea.smem %s0, 9
  %s19 = sld [smem:[%s18]]
  %s20 = scalar_lea.smem %s0, 10
  %s21 = sld [smem:[%s20]]
  %s22 = scalar_lea.smem %s0, 11
  %s23 = sld [smem:[%s22]]
  %s24 = scalar_lea.smem %s0, 12
  %s25 = sld [smem:[%s24]]
  %s26 = scalar_lea.smem %s0, 13
  %s27 = sld [smem:[%s26]]
  %s28 = scalar_lea.smem %s0, 14
  %s29 = sld [smem:[%s28]]
  %s30 = scalar_lea.smem %s0, 15
  %s31 = sld [smem:[%s30]]
  %s32 = scalar_lea.smem %s0, 16
  %s33 = sld [smem:[%s32]]
  %s34 = scalar_lea.smem %s0, 17
  %s35 = sld [smem:[%s34]]
  %s36 = scalar_lea.smem %s0, 18
  %s37 = sld [smem:[%s36]]
  %s38 = scalar_lea.smem %s0, 19
  %s39 = sld [smem:[%s38]]
  %s40 = scalar_lea.smem %s0, 20
  %s41 = sld [smem:[%s40]]
  %s42 = scalar_lea.smem %s0, 21
  %s43 = sld [smem:[%s42]]
  %s44 = scalar_lea.smem %s0, 22
  %s45 = sld [smem:[%s44]]
  %s46 = scalar_lea.smem %s0, 23
  %s47 = sld [smem:[%s46]]
  %s48 = scalar_lea.smem %s0, 24
  %s49 = sld [smem:[%s48]]
  %s50 = scalar_lea.smem %s0, 25
  %s51 = sld [smem:[%s50]]
  %s52 = scalar_lea.smem %s0, 26
  %s53 = sld [smem:[%s52]]
  %s54 = scalar_lea.smem %s0, 27
  %s55 = sld [smem:[%s54]]
  %s56 = scalar_lea.smem %s0, 28
  %s57 = sld [smem:[%s56]]
  %s58 = scalar_lea.smem %s0, 29
  %s59 = sld [smem:[%s58]]
  %s60 = scalar_lea.smem %s0, 30
  %s61 = sld [smem:[%s60]]
  %s62 = scalar_lea.smem %s0, 31
  %s63 = sld [smem:[%s62]]
  %s64 = scalar_lea.smem %s0, 32
  %s65 = sld [smem:[%s64]]
  %s66 = scalar_lea.smem %s0, 33
  %s67 = sld [smem:[%s66]]
  %s68 = scalar_lea.smem %s0, 34
  %s69 = sld [smem:[%s68]]
  %s70 = scalar_lea.smem %s0, 35
  %s71 = sld [smem:[%s70]]
  %s72 = scalar_lea.smem %s0, 36
  %s73 = sld [smem:[%s72]]
  %s74 = scalar_lea.smem %s0, 37
  %s75 = sld [smem:[%s74]]
  %s76 = scalar_lea.smem %s0, 38
  %s77 = sld [smem:[%s76]]
  %s78 = scalar_lea.smem %s0, 39
  %s79 = sld [smem:[%s78]]
  %s80 = scalar_lea.smem %s0, 40
  %s81 = sld [smem:[%s80]]
  %s82 = scalar_lea.smem %s0, 41
  %s83 = sld [smem:[%s82]]
  %s84 = scalar_lea.smem %s0, 42
  %s85 = sld [smem:[%s84]]
  %86 = xla_tuple %s83, %s85
  %s87 = sld [smem:[#allocation0]]
  $region182: #{forward.1} parent=0
    _
  %s89 = ssub.s32 1, %s87
  %s90 = scalar_select 0, %s89, %s87
  // Predicated region
  $region2: #{forward.1} parent=0 // pred_check
    _
  $region3: #{forward.1} parent=0 // pred_check_branch
    %92 = sbr.rel (0) target = $region5
  $region4: #{forward.1} parent=0 // pred_region
    _
  $region5: #{forward.1} parent=0 // pred_fallthru
    _
  // Predicated region
  $region6: #{forward.1} parent=0 // pred_check
    _
  $region7: #{forward.1} parent=0 // pred_check_branch
    %94 = sbr.rel (0) target = $region9
  $region8: #{forward.1} parent=0 // pred_region
    _
  $region9: #{forward.1} parent=0 // pred_fallthru
    _
  // Predicated region
  $region10: #{forward.1} parent=0 // pred_check
    _
  $region11: #{forward.1} parent=0 // pred_check_branch
    %96 = sbr.rel (0) target = $region13
  $region12: #{forward.1} parent=0 // pred_region
    _
  $region13: #{forward.1} parent=0 // pred_fallthru
    _
  // Predicated region
  $region14: #{forward.1} parent=0 // pred_check
    _
  $region15: #{forward.1} parent=0 // pred_check_branch
    %98 = sbr.rel (0) target = $region17
  $region16: #{forward.1} parent=0 // pred_region
    _
  $region17: #{forward.1} parent=0 // pred_fallthru
    _
  // Predicated region
  $region18: #{forward.1} parent=0 // pred_check
    _
  $region19: #{forward.1} parent=0 // pred_check_branch
    %100 = sbr.rel (0) target = $region21
  $region20: #{forward.1} parent=0 // pred_region
    _
  $region21: #{forward.1} parent=0 // pred_fallthru
    _
  // Predicated region
  $region22: #{forward.1} parent=0 // pred_check
    _
  $region23: #{forward.1} parent=0 // pred_check_branch
    %102 = sbr.rel (0) target = $region25
  $region24: #{forward.1} parent=0 // pred_region
    _
  $region25: #{forward.1} parent=0 // pred_fallthru
    _
  // Predicated region
  $region26: #{forward.1} parent=0 // pred_check
    _
  $region27: #{forward.1} parent=0 // pred_check_branch
    %104 = sbr.rel (0) target = $region29
  $region28: #{forward.1} parent=0 // pred_region
    _
  $region29: #{forward.1} parent=0 // pred_fallthru
    _
  // Predicated region
  $region30: #{forward.1} parent=0 // pred_check
    _
  $region31: #{forward.1} parent=0 // pred_check_branch
    %106 = sbr.rel (0) target = $region33
  $region32: #{forward.1} parent=0 // pred_region
    _
  $region33: #{forward.1} parent=0 // pred_fallthru
    _
  // Predicated region
  $region34: #{forward.1} parent=0 // pred_check
    _
  $region35: #{forward.1} parent=0 // pred_check_branch
    %108 = sbr.rel (0) target = $region37
  $region36: #{forward.1} parent=0 // pred_region
    _
  $region37: #{forward.1} parent=0 // pred_fallthru
    _
  // Predicated region
  $region38: #{forward.1} parent=0 // pred_check
    _
  $region39: #{forward.1} parent=0 // pred_check_branch
    %110 = sbr.rel (0) target = $region41
  $region40: #{forward.1} parent=0 // pred_region
    _
  $region41: #{forward.1} parent=0 // pred_fallthru
    _
  // Predicated region
  $region42: #{forward.1} parent=0 // pred_check
    _
  $region43: #{forward.1} parent=0 // pred_check_branch
    %112 = sbr.rel (0) target = $region45
  $region44: #{forward.1} parent=0 // pred_region
    _
  $region45: #{forward.1} parent=0 // pred_fallthru
    _
  // Predicated region
  $region46: #{forward.1} parent=0 // pred_check
    _
  $region47: #{forward.1} parent=0 // pred_check_branch
    %114 = sbr.rel (0) target = $region49
  $region48: #{forward.1} parent=0 // pred_region
    _
  $region49: #{forward.1} parent=0 // pred_fallthru
    _
  // Predicated region
  $region50: #{forward.1} parent=0 // pred_check
    _
  $region51: #{forward.1} parent=0 // pred_check_branch
    %116 = sbr.rel (0) target = $region53
  $region52: #{forward.1} parent=0 // pred_region
    _
  $region53: #{forward.1} parent=0 // pred_fallthru
    _
  // Predicated region
  $region54: #{forward.1} parent=0 // pred_check
    _
  $region55: #{forward.1} parent=0 // pred_check_branch
    %118 = sbr.rel (0) target = $region57
  $region56: #{forward.1} parent=0 // pred_region
    _
  $region57: #{forward.1} parent=0 // pred_fallthru
    _
  // Predicated region
  $region58: #{forward.1} parent=0 // pred_check
    _
  $region59: #{forward.1} parent=0 // pred_check_branch
    %120 = sbr.rel (0) target = $region61
  $region60: #{forward.1} parent=0 // pred_region
    _
  $region61: #{forward.1} parent=0 // pred_fallthru
    _
  // Predicated region
  $region62: #{forward.1} parent=0 // pred_check
    _
  $region63: #{forward.1} parent=0 // pred_check_branch
    %122 = sbr.rel (0) target = $region65
  $region64: #{forward.1} parent=0 // pred_region
    _
  $region65: #{forward.1} parent=0 // pred_fallthru
    _
  // Predicated region
  $region66: #{forward.1} parent=0 // pred_check
    _
  $region67: #{forward.1} parent=0 // pred_check_branch
    %124 = sbr.rel (0) target = $region69
  $region68: #{forward.1} parent=0 // pred_region
    _
  $region69: #{forward.1} parent=0 // pred_fallthru
    _
  // Predicated region
  $region70: #{forward.1} parent=0 // pred_check
    _
  $region71: #{forward.1} parent=0 // pred_check_branch
    %126 = sbr.rel (0) target = $region73
  $region72: #{forward.1} parent=0 // pred_region
    _
  $region73: #{forward.1} parent=0 // pred_fallthru
    _
  // Predicated region
  $region74: #{forward.1} parent=0 // pred_check
    _
  $region75: #{forward.1} parent=0 // pred_check_branch
    %128 = sbr.rel (0) target = $region77
  $region76: #{forward.1} parent=0 // pred_region
    _
  $region77: #{forward.1} parent=0 // pred_fallthru
    _
  // Predicated region
  $region78: #{forward.1} parent=0 // pred_check
    _
  $region79: #{forward.1} parent=0 // pred_check_branch
    %130 = sbr.rel (0) target = $region81
  $region80: #{forward.1} parent=0 // pred_region
    _
  $region81: #{forward.1} parent=0 // pred_fallthru
    _
  // Predicated region
  $region82: #{forward.1} parent=0 // pred_check
    _
  $region83: #{forward.1} parent=0 // pred_check_branch
    %132 = sbr.rel (0) target = $region85
  $region84: #{forward.1} parent=0 // pred_region
    _
  $region85: #{forward.1} parent=0 // pred_fallthru
    _
  // Predicated region
  $region86: #{forward.1} parent=0 // pred_check
    _
  $region87: #{forward.1} parent=0 // pred_check_branch
    %134 = sbr.rel (0) target = $region89
  $region88: #{forward.1} parent=0 // pred_region
    _
  $region89: #{forward.1} parent=0 // pred_fallthru
    _
  // Predicated region
  $region90: #{forward.1} parent=0 // pred_check
    _
  $region91: #{forward.1} parent=0 // pred_check_branch
    %136 = sbr.rel (0) target = $region93
  $region92: #{forward.1} parent=0 // pred_region
    _
  $region93: #{forward.1} parent=0 // pred_fallthru
    _
  // Predicated region
  $region94: #{forward.1} parent=0 // pred_check
    _
  $region95: #{forward.1} parent=0 // pred_check_branch
    %138 = sbr.rel (0) target = $region97
  $region96: #{forward.1} parent=0 // pred_region
    _
  $region97: #{forward.1} parent=0 // pred_fallthru
    _
  // Predicated region
  $region98: #{forward.1} parent=0 // pred_check
    _
  $region99: #{forward.1} parent=0 // pred_check_branch
    %140 = sbr.rel (0) target = $region101
  $region100: #{forward.1} parent=0 // pred_region
    _
  $region101: #{forward.1} parent=0 // pred_fallthru
    _
  // Predicated region
  $region102: #{forward.1} parent=0 // pred_check
    _
  $region103: #{forward.1} parent=0 // pred_check_branch
    %142 = sbr.rel (0) target = $region105
  $region104: #{forward.1} parent=0 // pred_region
    _
  $region105: #{forward.1} parent=0 // pred_fallthru
    _
  // Predicated region
  $region106: #{forward.1} parent=0 // pred_check
    _
  $region107: #{forward.1} parent=0 // pred_check_branch
    %144 = sbr.rel (0) target = $region109
  $region108: #{forward.1} parent=0 // pred_region
    _
  $region109: #{forward.1} parent=0 // pred_fallthru
    _
  // Predicated region
  $region110: #{forward.1} parent=0 // pred_check
    _
  $region111: #{forward.1} parent=0 // pred_check_branch
    %146 = sbr.rel (0) target = $region113
  $region112: #{forward.1} parent=0 // pred_region
    _
  $region113: #{forward.1} parent=0 // pred_fallthru
    _
  // Predicated region
  $region114: #{forward.1} parent=0 // pred_check
    _
  $region115: #{forward.1} parent=0 // pred_check_branch
    %148 = sbr.rel (0) target = $region117
  $region116: #{forward.1} parent=0 // pred_region
    _
  $region117: #{forward.1} parent=0 // pred_fallthru
    _
  // Predicated region
  $region118: #{forward.1} parent=0 // pred_check
    _
  $region119: #{forward.1} parent=0 // pred_check_branch
    %150 = sbr.rel (0) target = $region121
  $region120: #{forward.1} parent=0 // pred_region
    _
  $region121: #{forward.1} parent=0 // pred_fallthru
    _
  // Predicated region
  $region122: #{forward.1} parent=0 // pred_check
    _
  $region123: #{forward.1} parent=0 // pred_check_branch
    %152 = sbr.rel (0) target = $region125
  $region124: #{forward.1} parent=0 // pred_region
    _
  $region125: #{forward.1} parent=0 // pred_fallthru
    _
  // Predicated region
  $region126: #{forward.1} parent=0 // pred_check
    _
  $region127: #{forward.1} parent=0 // pred_check_branch
    %154 = sbr.rel (0) target = $region129
  $region128: #{forward.1} parent=0 // pred_region
    _
  $region129: #{forward.1} parent=0 // pred_fallthru
    _
  // Predicated region
  $region130: #{forward.1} parent=0 // pred_check
    _
  $region131: #{forward.1} parent=0 // pred_check_branch
    %156 = sbr.rel (0) target = $region133
  $region132: #{forward.1} parent=0 // pred_region
    _
  $region133: #{forward.1} parent=0 // pred_fallthru
    _
  // Predicated region
  $region134: #{forward.1} parent=0 // pred_check
    _
  $region135: #{forward.1} parent=0 // pred_check_branch
    %158 = sbr.rel (0) target = $region137
  $region136: #{forward.1} parent=0 // pred_region
    _
  $region137: #{forward.1} parent=0 // pred_fallthru
    _
  // Predicated region
  $region138: #{forward.1} parent=0 // pred_check
    _
  $region139: #{forward.1} parent=0 // pred_check_branch
    %160 = sbr.rel (0) target = $region141
  $region140: #{forward.1} parent=0 // pred_region
    _
  $region141: #{forward.1} parent=0 // pred_fallthru
    _
  // Predicated region
  $region142: #{forward.1} parent=0 // pred_check
    _
  $region143: #{forward.1} parent=0 // pred_check_branch
    %162 = sbr.rel (0) target = $region145
  $region144: #{forward.1} parent=0 // pred_region
    _
  $region145: #{forward.1} parent=0 // pred_fallthru
    _
  // Predicated region
  $region146: #{forward.1} parent=0 // pred_check
    _
  $region147: #{forward.1} parent=0 // pred_check_branch
    %164 = sbr.rel (0) target = $region149
  $region148: #{forward.1} parent=0 // pred_region
    _
  $region149: #{forward.1} parent=0 // pred_fallthru
    _
  // Predicated region
  $region150: #{forward.1} parent=0 // pred_check
    _
  $region151: #{forward.1} parent=0 // pred_check_branch
    %166 = sbr.rel (0) target = $region153
  $region152: #{forward.1} parent=0 // pred_region
    _
  $region153: #{forward.1} parent=0 // pred_fallthru
    _
  // Predicated region
  $region154: #{forward.1} parent=0 // pred_check
    _
  $region155: #{forward.1} parent=0 // pred_check_branch
    %168 = sbr.rel (0) target = $region157
  $region156: #{forward.1} parent=0 // pred_region
    _
  $region157: #{forward.1} parent=0 // pred_fallthru
    _
  // Predicated region
  $region158: #{forward.1} parent=0 // pred_check
    _
  $region159: #{forward.1} parent=0 // pred_check_branch
    %170 = sbr.rel (0) target = $region161
  $region160: #{forward.1} parent=0 // pred_region
    _
  $region161: #{forward.1} parent=0 // pred_fallthru
    _
  // Predicated region
  $region162: #{forward.1} parent=0 // pred_check
    _
  $region163: #{forward.1} parent=0 // pred_check_branch
    %172 = sbr.rel (0) target = $region165
  $region164: #{forward.1} parent=0 // pred_region
    _
  $region165: #{forward.1} parent=0 // pred_fallthru
    _
  %v174 = vld [vmem:[%s1] sm:$0xff]
  %v175 = vld [vmem:[%s1 + $0x8] sm:$0xff]
  %v176 = vld [vmem:[%s1 + $0x10] sm:$0xff]
  %v177 = vld [vmem:[%s1 + $0x18] sm:$0xff]
  %v178 = vld [vmem:[%s3] sm:$0xff]
  %v179 = vld [vmem:[%s3 + $0x8] sm:$0xff]
  %v180 = vld [vmem:[%s3 + $0x10] sm:$0xff]
  %v181 = vld [vmem:[%s3 + $0x18] sm:$0xff]
  %v182 = vld [vmem:[%s3 + $0x20] sm:$0xff]
  %v183 = vld [vmem:[%s3 + $0x28] sm:$0xff]
  %v184 = vld [vmem:[%s3 + $0x30] sm:$0xff]
  %v185 = vld [vmem:[%s3 + $0x38] sm:$0xff]
  %v186 = vld [vmem:[%s3 + $0x40] sm:$0xff]
  %v187 = vld [vmem:[%s3 + $0x48] sm:$0xff]
  %v188 = vld [vmem:[%s3 + $0x50] sm:$0xff]
  %v189 = vld [vmem:[%s3 + $0x58] sm:$0xff]
  %v190 = vld [vmem:[%s3 + $0x60] sm:$0xff]
  %v191 = vld [vmem:[%s3 + $0x68] sm:$0xff]
  %v192 = vld [vmem:[%s3 + $0x70] sm:$0xff]
  %v193 = vld [vmem:[%s3 + $0x78] sm:$0xff]
  %v194 = vld [vmem:[%s3 + $0x80] sm:$0xff]
  %v195 = vld [vmem:[%s3 + $0x88] sm:$0xff]
  %v196 = vld [vmem:[%s3 + $0x90] sm:$0xff]
  %v197 = vld [vmem:[%s3 + $0x98] sm:$0xff]
  %v198 = vld [vmem:[%s3 + $0xa0] sm:$0xff]
  %v199 = vld [vmem:[%s3 + $0xa8] sm:$0xff]
  %v200 = vld [vmem:[%s3 + $0xb0] sm:$0xff]
  %v201 = vld [vmem:[%s3 + $0xb8] sm:$0xff]
  %v202 = vld [vmem:[%s3 + $0xc0] sm:$0xff]
  %v203 = vld [vmem:[%s3 + $0xc8] sm:$0xff]
  %v204 = vld [vmem:[%s3 + $0xd0] sm:$0xff]
  %v205 = vld [vmem:[%s3 + $0xd8] sm:$0xff]
  %v206 = vld [vmem:[%s3 + $0xe0] sm:$0xff]
  %v207 = vld [vmem:[%s3 + $0xe8] sm:$0xff]
  %v208 = vld [vmem:[%s3 + $0xf0] sm:$0xff]
  %v209 = vld [vmem:[%s3 + $0xf8] sm:$0xff]
  %v210 = vld [vmem:[%s3 + $0x100] sm:$0xff]
  %v211 = vld [vmem:[%s3 + $0x108] sm:$0xff]
  %v212 = vld [vmem:[%s3 + $0x110] sm:$0xff]
  %v213 = vld [vmem:[%s3 + $0x118] sm:$0xff]
  %v214 = vld [vmem:[%s3 + $0x120] sm:$0xff]
  %v215 = vld [vmem:[%s3 + $0x128] sm:$0xff]
  %v216 = vld [vmem:[%s3 + $0x130] sm:$0xff]
  %v217 = vld [vmem:[%s3 + $0x138] sm:$0xff]
  %v218 = vld [vmem:[%s5] sm:$0xf]
  %v220 = vlaneseq
  %v221 = vshrl.u32 %v220, 7
  %v222 = vsub.s32 0, %v221
  %v223 = vrot.slane %v218, %v222
  %v224 = vlaneseq
  %v225 = vshrl.u32 %v224, 7
  %v226 = vsub.s32 1, %v225
  %v227 = vrot.slane %v218, %v226
  %v228 = vlaneseq
  %v229 = vshrl.u32 %v228, 7
  %v230 = vsub.s32 2, %v229
  %v231 = vrot.slane %v218, %v230
  %v232 = vlaneseq
  %v233 = vshrl.u32 %v232, 7
  %v234 = vsub.s32 3, %v233
  %v235 = vrot.slane %v218, %v234
  %vm240 = vcmask 654336
  %v242 = vsel %vm240, %v174, 0
  %v245 = vsel %vm240, %v175, 0
  %v248 = vsel %vm240, %v176, 0
  %v251 = vsel %vm240, %v177, 0
  %253 = vmatprep.subr.mxu0 %v179
  %254 = vmatpush1.msra.mxu0 %v178
  %255 = vmatprep.subr.mxu0 %v183
  %256 = vmatpush1.msra.mxu0 %v182
  %257 = vmatprep.subr.mxu0 %v187
  %258 = vmatpush1.msra.mxu0 %v186
  %259 = vmatprep.subr.mxu0 %v191
  %260 = vmatpush1.msra.mxu0 %v190
  %261 = vmatprep.subr.mxu0 %v195
  %262 = vmatpush1.msra.mxu0 %v194
  %263 = vmatprep.subr.mxu0 %v199
  %264 = vmatpush1.msra.mxu0 %v198
  %265 = vmatprep.subr.mxu0 %v203
  %266 = vmatpush1.msra.mxu0 %v202
  %267 = vmatprep.subr.mxu0 %v207
  %268 = vmatpush1.msra.mxu0 %v206
  %269 = vmatprep.subr.mxu0 %v211
  %270 = vmatpush1.msra.mxu0 %v210
  %271 = vmatprep.subr.mxu0 %v215
  %272 = vmatpush1.msra.mxu0 %v214
  %273 = vmatprep.subr.mxu0 0.0
  %274 = vmatpush1.msra.mxu0 0.0
  %275 = vmatprep.subr.mxu0 0.0
  %276 = vmatpush1.msra.mxu0 0.0
  %277 = vmatprep.subr.mxu0 0.0
  %278 = vmatpush1.msra.mxu0 0.0
  %279 = vmatprep.subr.mxu0 0.0
  %280 = vmatpush1.msra.mxu0 0.0
  %281 = vmatprep.subr.mxu0 0.0
  %282 = vmatpush1.msra.mxu0 0.0
  %283 = vmatprep.subr.mxu0 0.0
  %284 = vmatpush1.msra.mxu0 0.0
  %285 = vmatprep.subr.mxu0 0.0
  %286 = vmatpush1.msra.mxu0 0.0
  %287 = vmatprep.subr.mxu0 0.0
  %288 = vmatpush1.msra.mxu0 0.0
  %289 = vmatprep.subr.mxu0 0.0
  %290 = vmatpush1.msra.mxu0 0.0
  %291 = vmatprep.subr.mxu0 0.0
  %292 = vmatpush1.msra.mxu0 0.0
  %293 = vmatprep.subr.mxu0 0.0
  %294 = vmatpush1.msra.mxu0 0.0
  %295 = vmatprep.subr.mxu0 0.0
  %296 = vmatpush1.msra.mxu0 0.0
  %297 = vmatprep.subr.mxu0 0.0
  %298 = vmatpush1.msra.mxu0 0.0
  %299 = vmatprep.subr.mxu0 0.0
  %300 = vmatpush1.msra.mxu0 0.0
  %301 = vmatprep.subr.mxu0 0.0
  %302 = vmatpush1.msra.mxu0 0.0
  %303 = vmatprep.subr.mxu0 0.0
  %304 = vmatpush1.msra.mxu0 0.0
  %305 = vmatprep.subr.mxu0 0.0
  %306 = vmatpush1.msra.mxu0 0.0
  %307 = vmatprep.subr.mxu0 0.0
  %308 = vmatpush1.msra.mxu0 0.0
  %309 = vmatprep.subr.mxu0 0.0
  %310 = vmatpush1.msra.mxu0 0.0
  %311 = vmatprep.subr.mxu0 0.0
  %312 = vmatpush1.msra.mxu0 0.0
  %313 = vmatprep.subr.mxu0 0.0
  %314 = vmatpush1.msra.mxu0 0.0
  %315 = vmatprep.subr.mxu0 0.0
  %316 = vmatpush1.msra.mxu0 0.0
  %317 = vmatprep.mubr.f32.mxu0 0.0
  %318 = vmatmul.mubr.f32.gmra.mrb[0].mxu0 %v242
  %v319 = vpop.f32.mrb[0].mxu0
  %v320 = vadd.f32 %v223, %v319
  %v321 = vpop.f32.mrb[0].mxu0
  %v322 = vadd.f32 %v227, %v321
  %323 = vmatprep.mubr.f32.mxu0 0.0
  %324 = vmatmul.mubr.f32.gmra.mrb[0].mxu0 %v245
  %v325 = vpop.f32.mrb[0].mxu0
  %v326 = vadd.f32 %v223, %v325
  %v327 = vpop.f32.mrb[0].mxu0
  %v328 = vadd.f32 %v227, %v327
  %329 = vmatprep.mubr.f32.mxu0 0.0
  %330 = vmatmul.mubr.f32.gmra.mrb[0].mxu0 %v248
  %v331 = vpop.f32.mrb[0].mxu0
  %v332 = vadd.f32 %v223, %v331
  %v333 = vpop.f32.mrb[0].mxu0
  %v334 = vadd.f32 %v227, %v333
  %335 = vmatprep.mubr.f32.mxu0 0.0
  %336 = vmatmul.mubr.f32.gmra.mrb[0].mxu0 %v251
  %v337 = vpop.f32.mrb[0].mxu0
  %v338 = vadd.f32 %v223, %v337
  %v339 = vpop.f32.mrb[0].mxu0
  %v340 = vadd.f32 %v227, %v339
  %341 = vdwg.mxu0
  %342 = vmatprep.subr.mxu0 %v181
  %343 = vmatpush1.msra.mxu0 %v180
  %344 = vmatprep.subr.mxu0 %v185
  %345 = vmatpush1.msra.mxu0 %v184
  %346 = vmatprep.subr.mxu0 %v189
  %347 = vmatpush1.msra.mxu0 %v188
  %348 = vmatprep.subr.mxu0 %v193
  %349 = vmatpush1.msra.mxu0 %v192
  %350 = vmatprep.subr.mxu0 %v197
  %351 = vmatpush1.msra.mxu0 %v196
  %352 = vmatprep.subr.mxu0 %v201
  %353 = vmatpush1.msra.mxu0 %v200
  %354 = vmatprep.subr.mxu0 %v205
  %355 = vmatpush1.msra.mxu0 %v204
  %356 = vmatprep.subr.mxu0 %v209
  %357 = vmatpush1.msra.mxu0 %v208
  %358 = vmatprep.subr.mxu0 %v213
  %359 = vmatpush1.msra.mxu0 %v212
  %360 = vmatprep.subr.mxu0 %v217
  %361 = vmatpush1.msra.mxu0 %v216
  %362 = vmatprep.subr.mxu0 0.0
  %363 = vmatpush1.msra.mxu0 0.0
  %364 = vmatprep.subr.mxu0 0.0
  %365 = vmatpush1.msra.mxu0 0.0
  %366 = vmatprep.subr.mxu0 0.0
  %367 = vmatpush1.msra.mxu0 0.0
  %368 = vmatprep.subr.mxu0 0.0
  %369 = vmatpush1.msra.mxu0 0.0
  %370 = vmatprep.subr.mxu0 0.0
  %371 = vmatpush1.msra.mxu0 0.0
  %372 = vmatprep.subr.mxu0 0.0
  %373 = vmatpush1.msra.mxu0 0.0
  %374 = vmatprep.subr.mxu0 0.0
  %375 = vmatpush1.msra.mxu0 0.0
  %376 = vmatprep.subr.mxu0 0.0
  %377 = vmatpush1.msra.mxu0 0.0
  %378 = vmatprep.subr.mxu0 0.0
  %379 = vmatpush1.msra.mxu0 0.0
  %380 = vmatprep.subr.mxu0 0.0
  %381 = vmatpush1.msra.mxu0 0.0
  %382 = vmatprep.subr.mxu0 0.0
  %383 = vmatpush1.msra.mxu0 0.0
  %384 = vmatprep.subr.mxu0 0.0
  %385 = vmatpush1.msra.mxu0 0.0
  %386 = vmatprep.subr.mxu0 0.0
  %387 = vmatpush1.msra.mxu0 0.0
  %388 = vmatprep.subr.mxu0 0.0
  %389 = vmatpush1.msra.mxu0 0.0
  %390 = vmatprep.subr.mxu0 0.0
  %391 = vmatpush1.msra.mxu0 0.0
  %392 = vmatprep.subr.mxu0 0.0
  %393 = vmatpush1.msra.mxu0 0.0
  %394 = vmatprep.subr.mxu0 0.0
  %395 = vmatpush1.msra.mxu0 0.0
  %396 = vmatprep.subr.mxu0 0.0
  %397 = vmatpush1.msra.mxu0 0.0
  %398 = vmatprep.subr.mxu0 0.0
  %399 = vmatpush1.msra.mxu0 0.0
  %400 = vmatprep.subr.mxu0 0.0
  %401 = vmatpush1.msra.mxu0 0.0
  %402 = vmatprep.subr.mxu0 0.0
  %403 = vmatpush1.msra.mxu0 0.0
  %404 = vmatprep.subr.mxu0 0.0
  %405 = vmatpush1.msra.mxu0 0.0
  %406 = vmatprep.mubr.f32.mxu0 0.0
  %407 = vmatmul.mubr.f32.gmra.mrb[0].mxu0 %v242
  %v408 = vpop.f32.mrb[0].mxu0
  %v409 = vadd.f32 %v231, %v408
  %v410 = vpop.f32.mrb[0].mxu0
  %v411 = vadd.f32 %v235, %v410
  %412 = vmatprep.mubr.f32.mxu0 0.0
  %413 = vmatmul.mubr.f32.gmra.mrb[0].mxu0 %v245
  %v414 = vpop.f32.mrb[0].mxu0
  %v415 = vadd.f32 %v231, %v414
  %v416 = vpop.f32.mrb[0].mxu0
  %v417 = vadd.f32 %v235, %v416
  %418 = vmatprep.mubr.f32.mxu0 0.0
  %419 = vmatmul.mubr.f32.gmra.mrb[0].mxu0 %v248
  %v420 = vpop.f32.mrb[0].mxu0
  %v421 = vadd.f32 %v231, %v420
  %v422 = vpop.f32.mrb[0].mxu0
  %v423 = vadd.f32 %v235, %v422
  %424 = vmatprep.mubr.f32.mxu0 0.0
  %425 = vmatmul.mubr.f32.gmra.mrb[0].mxu0 %v251
  %v426 = vpop.f32.mrb[0].mxu0
  %v427 = vadd.f32 %v231, %v426
  %v428 = vpop.f32.mrb[0].mxu0
  %v429 = vadd.f32 %v235, %v428
  %430 = vdwg.mxu0
  %v431 = vld [vmem:[%s7] sm:$0xff]
  %v432 = vld [vmem:[%s7 + $0x8] sm:$0xff]
  %v433 = vld [vmem:[%s7 + $0x10] sm:$0xff]
  %v434 = vld [vmem:[%s7 + $0x18] sm:$0xff]
  %v435 = vld [vmem:[%s7 + $0x20] sm:$0xff]
  %v436 = vld [vmem:[%s7 + $0x28] sm:$0xff]
  %v437 = vld [vmem:[%s7 + $0x30] sm:$0xff]
  %v438 = vld [vmem:[%s7 + $0x38] sm:$0xff]
  %v439 = vld [vmem:[%s7 + $0x40] sm:$0xff]
  %v440 = vld [vmem:[%s7 + $0x48] sm:$0xff]
  %v441 = vld [vmem:[%s7 + $0x50] sm:$0xff]
  %v442 = vld [vmem:[%s7 + $0x58] sm:$0xff]
  %v443 = vld [vmem:[%s7 + $0x60] sm:$0xff]
  %v444 = vld [vmem:[%s7 + $0x68] sm:$0xff]
  %v445 = vld [vmem:[%s7 + $0x70] sm:$0xff]
  %v446 = vld [vmem:[%s7 + $0x78] sm:$0xff]
  %v447 = vld [vmem:[%s7 + $0x80] sm:$0xff]
  %v448 = vld [vmem:[%s7 + $0x88] sm:$0xff]
  %v449 = vld [vmem:[%s7 + $0x90] sm:$0xff]
  %v450 = vld [vmem:[%s7 + $0x98] sm:$0xff]
  %v451 = vld [vmem:[%s7 + $0xa0] sm:$0xff]
  %v452 = vld [vmem:[%s7 + $0xa8] sm:$0xff]
  %v453 = vld [vmem:[%s7 + $0xb0] sm:$0xff]
  %v454 = vld [vmem:[%s7 + $0xb8] sm:$0xff]
  %v455 = vld [vmem:[%s7 + $0xc0] sm:$0xff]
  %v456 = vld [vmem:[%s7 + $0xc8] sm:$0xff]
  %v457 = vld [vmem:[%s7 + $0xd0] sm:$0xff]
  %v458 = vld [vmem:[%s7 + $0xd8] sm:$0xff]
  %v459 = vld [vmem:[%s7 + $0xe0] sm:$0xff]
  %v460 = vld [vmem:[%s7 + $0xe8] sm:$0xff]
  %v461 = vld [vmem:[%s7 + $0xf0] sm:$0xff]
  %v462 = vld [vmem:[%s7 + $0xf8] sm:$0xff]
  %v463 = vld [vmem:[%s7 + $0x100] sm:$0xff]
  %v464 = vld [vmem:[%s7 + $0x108] sm:$0xff]
  %v465 = vld [vmem:[%s7 + $0x110] sm:$0xff]
  %v466 = vld [vmem:[%s7 + $0x118] sm:$0xff]
  %v467 = vld [vmem:[%s7 + $0x120] sm:$0xff]
  %v468 = vld [vmem:[%s7 + $0x128] sm:$0xff]
  %v469 = vld [vmem:[%s7 + $0x130] sm:$0xff]
  %v470 = vld [vmem:[%s7 + $0x138] sm:$0xff]
  %v471 = vld [vmem:[%s7 + $0x140] sm:$0xff]
  %v472 = vld [vmem:[%s7 + $0x148] sm:$0xff]
  %v473 = vld [vmem:[%s7 + $0x150] sm:$0xff]
  %v474 = vld [vmem:[%s7 + $0x158] sm:$0xff]
  %v475 = vld [vmem:[%s7 + $0x160] sm:$0xff]
  %v476 = vld [vmem:[%s7 + $0x168] sm:$0xff]
  %v477 = vld [vmem:[%s7 + $0x170] sm:$0xff]
  %v478 = vld [vmem:[%s7 + $0x178] sm:$0xff]
  %v479 = vld [vmem:[%s7 + $0x180] sm:$0xff]
  %v480 = vld [vmem:[%s7 + $0x188] sm:$0xff]
  %v481 = vld [vmem:[%s7 + $0x190] sm:$0xff]
  %v482 = vld [vmem:[%s7 + $0x198] sm:$0xff]
  %v483 = vld [vmem:[%s7 + $0x1a0] sm:$0xff]
  %v484 = vld [vmem:[%s7 + $0x1a8] sm:$0xff]
  %v485 = vld [vmem:[%s7 + $0x1b0] sm:$0xff]
  %v486 = vld [vmem:[%s7 + $0x1b8] sm:$0xff]
  %v487 = vld [vmem:[%s7 + $0x1c0] sm:$0xff]
  %v488 = vld [vmem:[%s7 + $0x1c8] sm:$0xff]
  %v489 = vld [vmem:[%s7 + $0x1d0] sm:$0xff]
  %v490 = vld [vmem:[%s7 + $0x1d8] sm:$0xff]
  %v491 = vld [vmem:[%s7 + $0x1e0] sm:$0xff]
  %v492 = vld [vmem:[%s7 + $0x1e8] sm:$0xff]
  %v493 = vld [vmem:[%s7 + $0x1f0] sm:$0xff]
  %v494 = vld [vmem:[%s7 + $0x1f8] sm:$0xff]
  %v495 = vld [vmem:[%s9] sm:$0x1]
  %v497 = vlaneseq
  %v498 = vshrl.u32 %v497, 7
  %v499 = vsub.s32 0, %v498
  %v500 = vrot.slane %v495, %v499
  %502 = vmatprep.subr.mxu0 0.0
  %503 = vmatpush1.msra.mxu0 %v431
  %504 = vmatprep.subr.mxu0 0.0
  %505 = vmatpush1.msra.mxu0 %v432
  %506 = vmatprep.subr.mxu0 0.0
  %507 = vmatpush1.msra.mxu0 %v433
  %508 = vmatprep.subr.mxu0 0.0
  %509 = vmatpush1.msra.mxu0 %v434
  %510 = vmatprep.subr.mxu0 0.0
  %511 = vmatpush1.msra.mxu0 %v435
  %512 = vmatprep.subr.mxu0 0.0
  %513 = vmatpush1.msra.mxu0 %v436
  %514 = vmatprep.subr.mxu0 0.0
  %515 = vmatpush1.msra.mxu0 %v437
  %516 = vmatprep.subr.mxu0 0.0
  %517 = vmatpush1.msra.mxu0 %v438
  %518 = vmatprep.subr.mxu0 0.0
  %519 = vmatpush1.msra.mxu0 %v439
  %520 = vmatprep.subr.mxu0 0.0
  %521 = vmatpush1.msra.mxu0 %v440
  %522 = vmatprep.subr.mxu0 0.0
  %523 = vmatpush1.msra.mxu0 %v441
  %524 = vmatprep.subr.mxu0 0.0
  %525 = vmatpush1.msra.mxu0 %v442
  %526 = vmatprep.subr.mxu0 0.0
  %527 = vmatpush1.msra.mxu0 %v443
  %528 = vmatprep.subr.mxu0 0.0
  %529 = vmatpush1.msra.mxu0 %v444
  %530 = vmatprep.subr.mxu0 0.0
  %531 = vmatpush1.msra.mxu0 %v445
  %532 = vmatprep.subr.mxu0 0.0
  %533 = vmatpush1.msra.mxu0 %v446
  %534 = vmatprep.subr.mxu0 0.0
  %535 = vmatpush1.msra.mxu0 %v447
  %536 = vmatprep.subr.mxu0 0.0
  %537 = vmatpush1.msra.mxu0 %v448
  %538 = vmatprep.subr.mxu0 0.0
  %539 = vmatpush1.msra.mxu0 %v449
  %540 = vmatprep.subr.mxu0 0.0
  %541 = vmatpush1.msra.mxu0 %v450
  %542 = vmatprep.subr.mxu0 0.0
  %543 = vmatpush1.msra.mxu0 %v451
  %544 = vmatprep.subr.mxu0 0.0
  %545 = vmatpush1.msra.mxu0 %v452
  %546 = vmatprep.subr.mxu0 0.0
  %547 = vmatpush1.msra.mxu0 %v453
  %548 = vmatprep.subr.mxu0 0.0
  %549 = vmatpush1.msra.mxu0 %v454
  %550 = vmatprep.subr.mxu0 0.0
  %551 = vmatpush1.msra.mxu0 %v455
  %552 = vmatprep.subr.mxu0 0.0
  %553 = vmatpush1.msra.mxu0 %v456
  %554 = vmatprep.subr.mxu0 0.0
  %555 = vmatpush1.msra.mxu0 %v457
  %556 = vmatprep.subr.mxu0 0.0
  %557 = vmatpush1.msra.mxu0 %v458
  %558 = vmatprep.subr.mxu0 0.0
  %559 = vmatpush1.msra.mxu0 %v459
  %560 = vmatprep.subr.mxu0 0.0
  %561 = vmatpush1.msra.mxu0 %v460
  %562 = vmatprep.subr.mxu0 0.0
  %563 = vmatpush1.msra.mxu0 %v461
  %564 = vmatprep.subr.mxu0 0.0
  %565 = vmatpush1.msra.mxu0 %v462
  %566 = vmatprep.mubr.f32.mxu0 %v322
  %567 = vmatmul.mubr.f32.gmra.mrb[0].mxu0 %v320
  %v568 = vpop.f32.mrb[0].mxu0
  %v569 = vadd.f32 %v500, %v568
  %v570 = vpop.f32.mrb[0].mxu0
  %571 = vmatprep.mubr.f32.mxu0 %v328
  %572 = vmatmul.mubr.f32.gmra.mrb[0].mxu0 %v326
  %v573 = vpop.f32.mrb[0].mxu0
  %v574 = vadd.f32 %v500, %v573
  %v575 = vpop.f32.mrb[0].mxu0
  %576 = vmatprep.mubr.f32.mxu0 %v334
  %577 = vmatmul.mubr.f32.gmra.mrb[0].mxu0 %v332
  %v578 = vpop.f32.mrb[0].mxu0
  %v579 = vadd.f32 %v500, %v578
  %v580 = vpop.f32.mrb[0].mxu0
  %581 = vmatprep.mubr.f32.mxu0 %v340
  %582 = vmatmul.mubr.f32.gmra.mrb[0].mxu0 %v338
  %v583 = vpop.f32.mrb[0].mxu0
  %v584 = vadd.f32 %v500, %v583
  %v585 = vpop.f32.mrb[0].mxu0
  %586 = vdwg.mxu0
  %587 = vmatprep.subr.mxu0 0.0
  %588 = vmatpush1.msra.mxu0 %v463
  %589 = vmatprep.subr.mxu0 0.0
  %590 = vmatpush1.msra.mxu0 %v464
  %591 = vmatprep.subr.mxu0 0.0
  %592 = vmatpush1.msra.mxu0 %v465
  %593 = vmatprep.subr.mxu0 0.0
  %594 = vmatpush1.msra.mxu0 %v466
  %595 = vmatprep.subr.mxu0 0.0
  %596 = vmatpush1.msra.mxu0 %v467
  %597 = vmatprep.subr.mxu0 0.0
  %598 = vmatpush1.msra.mxu0 %v468
  %599 = vmatprep.subr.mxu0 0.0
  %600 = vmatpush1.msra.mxu0 %v469
  %601 = vmatprep.subr.mxu0 0.0
  %602 = vmatpush1.msra.mxu0 %v470
  %603 = vmatprep.subr.mxu0 0.0
  %604 = vmatpush1.msra.mxu0 %v471
  %605 = vmatprep.subr.mxu0 0.0
  %606 = vmatpush1.msra.mxu0 %v472
  %607 = vmatprep.subr.mxu0 0.0
  %608 = vmatpush1.msra.mxu0 %v473
  %609 = vmatprep.subr.mxu0 0.0
  %610 = vmatpush1.msra.mxu0 %v474
  %611 = vmatprep.subr.mxu0 0.0
  %612 = vmatpush1.msra.mxu0 %v475
  %613 = vmatprep.subr.mxu0 0.0
  %614 = vmatpush1.msra.mxu0 %v476
  %615 = vmatprep.subr.mxu0 0.0
  %616 = vmatpush1.msra.mxu0 %v477
  %617 = vmatprep.subr.mxu0 0.0
  %618 = vmatpush1.msra.mxu0 %v478
  %619 = vmatprep.subr.mxu0 0.0
  %620 = vmatpush1.msra.mxu0 %v479
  %621 = vmatprep.subr.mxu0 0.0
  %622 = vmatpush1.msra.mxu0 %v480
  %623 = vmatprep.subr.mxu0 0.0
  %624 = vmatpush1.msra.mxu0 %v481
  %625 = vmatprep.subr.mxu0 0.0
  %626 = vmatpush1.msra.mxu0 %v482
  %627 = vmatprep.subr.mxu0 0.0
  %628 = vmatpush1.msra.mxu0 %v483
  %629 = vmatprep.subr.mxu0 0.0
  %630 = vmatpush1.msra.mxu0 %v484
  %631 = vmatprep.subr.mxu0 0.0
  %632 = vmatpush1.msra.mxu0 %v485
  %633 = vmatprep.subr.mxu0 0.0
  %634 = vmatpush1.msra.mxu0 %v486
  %635 = vmatprep.subr.mxu0 0.0
  %636 = vmatpush1.msra.mxu0 %v487
  %637 = vmatprep.subr.mxu0 0.0
  %638 = vmatpush1.msra.mxu0 %v488
  %639 = vmatprep.subr.mxu0 0.0
  %640 = vmatpush1.msra.mxu0 %v489
  %641 = vmatprep.subr.mxu0 0.0
  %642 = vmatpush1.msra.mxu0 %v490
  %643 = vmatprep.subr.mxu0 0.0
  %644 = vmatpush1.msra.mxu0 %v491
  %645 = vmatprep.subr.mxu0 0.0
  %646 = vmatpush1.msra.mxu0 %v492
  %647 = vmatprep.subr.mxu0 0.0
  %648 = vmatpush1.msra.mxu0 %v493
  %649 = vmatprep.subr.mxu0 0.0
  %650 = vmatpush1.msra.mxu0 %v494
  %651 = vmatprep.mubr.f32.mxu0 %v411
  %652 = vmatmul.mubr.f32.gmra.mrb[0].mxu0 %v409
  %v653 = vpop.f32.mrb[0].mxu0
  %v654 = vadd.f32 %v569, %v653
  %v655 = vpop.f32.mrb[0].mxu0
  %656 = vmatprep.mubr.f32.mxu0 %v417
  %657 = vmatmul.mubr.f32.gmra.mrb[0].mxu0 %v415
  %v658 = vpop.f32.mrb[0].mxu0
  %v659 = vadd.f32 %v574, %v658
  %v660 = vpop.f32.mrb[0].mxu0
  %661 = vmatprep.mubr.f32.mxu0 %v423
  %662 = vmatmul.mubr.f32.gmra.mrb[0].mxu0 %v421
  %v663 = vpop.f32.mrb[0].mxu0
  %v664 = vadd.f32 %v579, %v663
  %v665 = vpop.f32.mrb[0].mxu0
  %666 = vmatprep.mubr.f32.mxu0 %v429
  %667 = vmatmul.mubr.f32.gmra.mrb[0].mxu0 %v427
  %v668 = vpop.f32.mrb[0].mxu0
  %v669 = vadd.f32 %v584, %v668
  %v670 = vpop.f32.mrb[0].mxu0
  %671 = vdwg.mxu0
  %v672 = vld [vmem:[%s11] sm:$0x1]
  %vm673 = vcmp.lt.f32.partialorder %v672, 2.0
  %vm674 = vcmp.ge.f32.partialorder %v672, 2.0
  %vm675 = vcmp.lt.f32.partialorder %v672, 18.0
  %vm676 = vmand %vm674, %vm675
  %v677 = vsel %vm673, 1, 0
  %v678 = vlaneseq
  %v679 = vshrl.u32 %v678, 7
  %v680 = vsub.s32 0, %v679
  %v681 = vrot.slane %v677, %v680
  %vm682 = vcmp.eq.s32.totalorder %v681, 1
  %v683 = vsel %vm682, %v654, -1e+30
  %v684 = vsel %vm682, %v659, -1e+30
  %v685 = vsel %vm682, %v664, -1e+30
  %v686 = vsel %vm682, %v669, -1e+30
  %687 = vmax.xlane.f32.xlu0 %v683
  %v688 = vpop.xlane.xlu0 %687
  %689 = vmax.xlane.f32.xlu0 %v684
  %v690 = vpop.xlane.xlu0 %689
  %691 = vmax.xlane.f32.xlu0 %v685
  %v692 = vpop.xlane.xlu0 %691
  %693 = vmax.xlane.f32.xlu0 %v686
  %v694 = vpop.xlane.xlu0 %693
  %v695 = vsel %vm676, 1, 0
  %v696 = vlaneseq
  %v697 = vshrl.u32 %v696, 7
  %v698 = vsub.s32 0, %v697
  %v699 = vrot.slane %v695, %v698
  %vm700 = vcmp.eq.s32.totalorder %v699, 1
  %v701 = vsel %vm700, %v654, -1e+30
  %v702 = vsel %vm700, %v659, -1e+30
  %v703 = vsel %vm700, %v664, -1e+30
  %v704 = vsel %vm700, %v669, -1e+30
  %705 = vmax.xlane.f32.xlu0 %v701
  %v706 = vpop.xlane.xlu0 %705
  %707 = vmax.xlane.f32.xlu0 %v702
  %v708 = vpop.xlane.xlu0 %707
  %709 = vmax.xlane.f32.xlu0 %v703
  %v710 = vpop.xlane.xlu0 %709
  %711 = vmax.xlane.f32.xlu0 %v704
  %v712 = vpop.xlane.xlu0 %711
  %vm713 = vmor %vm673, %vm676
  %v714 = vsel %vm713, 1, 0
  %v715 = vlaneseq
  %v716 = vshrl.u32 %v715, 7
  %v717 = vsub.s32 0, %v716
  %v718 = vrot.slane %v714, %v717
  %vm719 = vcmp.eq.s32.totalorder %v718, 1
  %v720 = vsel %vm719, %v654, -1e+30
  %v721 = vsel %vm719, %v659, -1e+30
  %v722 = vsel %vm719, %v664, -1e+30
  %v723 = vsel %vm719, %v669, -1e+30
  %v724 = vsel %vm682, %v688, %v706
  %v725 = vsel %vm682, %v690, %v708
  %v726 = vsel %vm682, %v692, %v710
  %v727 = vsel %vm682, %v694, %v712
  %v728 = vsub.f32 %v720, %v724
  %v729 = vsub.f32 %v721, %v725
  %v730 = vsub.f32 %v722, %v726
  %v731 = vsub.f32 %v723, %v727
  %v732 = vmul.f32 %v728, 1.442695
  %v733 = vpow.pop %v732
  %v734 = vmul.f32 %v729, 1.442695
  %v735 = vpow.pop %v734
  %v736 = vmul.f32 %v730, 1.442695
  %v737 = vpow.pop %v736
  %v738 = vmul.f32 %v731, 1.442695
  %v739 = vpow.pop %v738
  %v740 = vsel %vm682, %v733, 0.0
  %v741 = vsel %vm682, %v735, 0.0
  %v742 = vsel %vm682, %v737, 0.0
  %v743 = vsel %vm682, %v739, 0.0
  %744 = vadd.xlane.f32.xlu0 %v740
  %v745 = vpop.xlane.xlu0 %744
  %746 = vadd.xlane.f32.xlu0 %v741
  %v747 = vpop.xlane.xlu0 %746
  %748 = vadd.xlane.f32.xlu0 %v742
  %v749 = vpop.xlane.xlu0 %748
  %750 = vadd.xlane.f32.xlu0 %v743
  %v751 = vpop.xlane.xlu0 %750
  %752 = vadd.xlane.f32.xlu0 %v733
  %v753 = vpop.xlane.xlu0 %752
  %754 = vadd.xlane.f32.xlu0 %v735
  %v755 = vpop.xlane.xlu0 %754
  %756 = vadd.xlane.f32.xlu0 %v737
  %v757 = vpop.xlane.xlu0 %756
  %758 = vadd.xlane.f32.xlu0 %v739
  %v759 = vpop.xlane.xlu0 %758
  %v760 = vsub.f32 %v753, %v745
  %v761 = vsub.f32 %v755, %v747
  %v762 = vsub.f32 %v757, %v749
  %v763 = vsub.f32 %v759, %v751
  %v764 = vsel %vm682, %v745, %v760
  %v765 = vsel %vm682, %v747, %v761
  %v766 = vsel %vm682, %v749, %v762
  %v767 = vsel %vm682, %v751, %v763
  %v768 = vrcp.pop %v764
  %v769 = vmul.f32 %v733, %v768
  %v770 = vrcp.pop %v765
  %v771 = vmul.f32 %v735, %v770
  %v772 = vrcp.pop %v766
  %v773 = vmul.f32 %v737, %v772
  %v774 = vrcp.pop %v767
  %v775 = vmul.f32 %v739, %v774
  %776 = vst [vmem:[%s83] sm:$0xff] %v769
  %777 = vst [vmem:[%s83 + $0x8] sm:$0xff] %v771
  %778 = vst [vmem:[%s83 + $0x10] sm:$0xff] %v773
  %779 = vst [vmem:[%s83 + $0x18] sm:$0xff] %v775
  %v780 = vld [vmem:[%s11] sm:$0x1]
  %vm781 = vcmp.ge.f32.partialorder %v780, 2.0
  %vm782 = vcmp.lt.f32.partialorder %v780, 18.0
  %vm783 = vmand %vm781, %vm782
  %vm784 = vcmp.lt.f32.partialorder %v780, 1.0
  %v785 = vsel %vm784, 1, 0
  %v786 = vlaneseq
  %v787 = vshrl.u32 %v786, 7
  %v788 = vsub.s32 0, %v787
  %v789 = vrot.slane %v785, %v788
  %vm790 = vcmp.eq.s32.totalorder %v789, 1
  %v791 = vsel %vm790, %v769, 0.0
  %v792 = vsel %vm790, %v771, 0.0
  %v793 = vsel %vm790, %v773, 0.0
  %v794 = vsel %vm790, %v775, 0.0
  %795 = vadd.xlane.f32.xlu0 %v791
  %v796 = vpop.xlane.xlu0 %795
  %797 = vadd.xlane.f32.xlu0 %v792
  %v798 = vpop.xlane.xlu0 %797
  %799 = vadd.xlane.f32.xlu0 %v793
  %v800 = vpop.xlane.xlu0 %799
  %801 = vadd.xlane.f32.xlu0 %v794
  %v802 = vpop.xlane.xlu0 %801
  %v803 = vadd.f32 %v796, %v798
  %v804 = vadd.f32 %v803, %v800
  %v805 = vadd.f32 %v804, %v802
  %v806 = vrot.slane %v805, 4
  %v807 = vadd.f32 %v805, %v806
  %v808 = vrot.slane %v807, 2
  %v809 = vadd.f32 %v807, %v808
  %v810 = vrot.slane %v809, 1
  %v811 = vadd.f32 %v809, %v810
  %v812 = vmul.f32 %v811, 0.03125
  %vm813 = vcmp.gt.f32.partialorder %v812, 0.3
  %v814 = vsel %vm783, 1, 0
  %v815 = vlaneseq
  %v816 = vshrl.u32 %v815, 7
  %v817 = vsub.s32 0, %v816
  %v818 = vrot.slane %v814, %v817
  %vm819 = vcmp.eq.s32.totalorder %v818, 1
  %v820 = vsel %vm819, %v769, -1.0
  %v821 = vsel %vm819, %v771, -1.0
  %v822 = vsel %vm819, %v773, -1.0
  %v823 = vsel %vm819, %v775, -1.0
  %824 = vmax.xlane.f32.xlu0 %v820
  %v825 = vpop.xlane.xlu0 %824
  %826 = vmax.xlane.f32.xlu0 %v821
  %v827 = vpop.xlane.xlu0 %826
  %828 = vmax.xlane.f32.xlu0 %v822
  %v829 = vpop.xlane.xlu0 %828
  %830 = vmax.xlane.f32.xlu0 %v823
  %v831 = vpop.xlane.xlu0 %830
  %vm832 = vcmp.ge.f32.partialorder %v769, %v825
  %vm833 = vcmp.ge.f32.partialorder %v771, %v827
  %vm834 = vcmp.ge.f32.partialorder %v773, %v829
  %vm835 = vcmp.ge.f32.partialorder %v775, %v831
  %vm836 = vmand %vm819, %vm832
  %vm837 = vmand %vm819, %vm833
  %vm838 = vmand %vm819, %vm834
  %vm839 = vmand %vm819, %vm835
  %v840 = vsub.f32 %v780, 2.0
  %v842 = vlaneseq
  %v843 = vshrl.u32 %v842, 7
  %v844 = vsub.s32 0, %v843
  %v845 = vrot.slane %v840, %v844
  %v847 = vsel %vm836, %v845, 1e+09
  %v848 = vsel %vm837, %v845, 1e+09
  %v849 = vsel %vm838, %v845, 1e+09
  %v850 = vsel %vm839, %v845, 1e+09
  %851 = vmin.xlane.f32.xlu0 %v847
  %v852 = vpop.xlane.xlu0 %851
  %853 = vmin.xlane.f32.xlu0 %v848
  %v854 = vpop.xlane.xlu0 %853
  %855 = vmin.xlane.f32.xlu0 %v849
  %v856 = vpop.xlane.xlu0 %855
  %857 = vmin.xlane.f32.xlu0 %v850
  %v858 = vpop.xlane.xlu0 %857
  %v859 = vld [vmem:[%s13] sm:$0x1]
  %v860 = vadd.f32 %v852, 0.0
  %v861 = vadd.f32 %v854, 0.0
  %v862 = vadd.f32 %v856, 0.0
  %v863 = vadd.f32 %v858, 0.0
  %v865 = vlaneseq
  %v866 = vshrl.u32 %v865, 7
  %v867 = vsub.s32 0, %v866
  %v868 = vrot.slane %v859, %v867
  %vm870 = vcmp.eq.f32.partialorder %v868, %v860
  %vm871 = vcmp.eq.f32.partialorder %v868, %v861
  %vm872 = vcmp.eq.f32.partialorder %v868, %v862
  %vm873 = vcmp.eq.f32.partialorder %v868, %v863
  %v874 = vsel %vm870, %v174, 0.0
  %v875 = vsel %vm871, %v175, 0.0
  %v876 = vsel %vm872, %v176, 0.0
  %v877 = vsel %vm873, %v177, 0.0
  %v878 = vld [vmem:[%s15] sm:$0xff]
  %v879 = vld [vmem:[%s15 + $0x8] sm:$0xff]
  %v880 = vld [vmem:[%s15 + $0x10] sm:$0xff]
  %v881 = vld [vmem:[%s15 + $0x18] sm:$0xff]
  %v882 = vld [vmem:[%s15 + $0x20] sm:$0xff]
  %v883 = vld [vmem:[%s15 + $0x28] sm:$0xff]
  %v884 = vld [vmem:[%s15 + $0x30] sm:$0xff]
  %v885 = vld [vmem:[%s15 + $0x38] sm:$0xff]
  %v886 = vld [vmem:[%s15 + $0x40] sm:$0xff]
  %v887 = vld [vmem:[%s15 + $0x48] sm:$0xff]
  %v888 = vadd.f32 %v852, 1.0
  %v889 = vadd.f32 %v854, 1.0
  %v890 = vadd.f32 %v856, 1.0
  %v891 = vadd.f32 %v858, 1.0
  %vm892 = vcmp.eq.f32.partialorder %v868, %v888
  %vm893 = vcmp.eq.f32.partialorder %v868, %v889
  %vm894 = vcmp.eq.f32.partialorder %v868, %v890
  %vm895 = vcmp.eq.f32.partialorder %v868, %v891
  %v896 = vsel %vm892, %v174, 0.0
  %v897 = vsel %vm893, %v175, 0.0
  %v898 = vsel %vm894, %v176, 0.0
  %v899 = vsel %vm895, %v177, 0.0
  %s900 = scalar_lea.vmem %s15, 80
  %v901 = vld [vmem:[%s900] sm:$0xff]
  %v902 = vld [vmem:[%s900 + $0x8] sm:$0xff]
  %v903 = vld [vmem:[%s900 + $0x10] sm:$0xff]
  %v904 = vld [vmem:[%s900 + $0x18] sm:$0xff]
  %v905 = vld [vmem:[%s900 + $0x20] sm:$0xff]
  %v906 = vld [vmem:[%s900 + $0x28] sm:$0xff]
  %v907 = vld [vmem:[%s900 + $0x30] sm:$0xff]
  %v908 = vld [vmem:[%s900 + $0x38] sm:$0xff]
  %v909 = vld [vmem:[%s900 + $0x40] sm:$0xff]
  %v910 = vld [vmem:[%s900 + $0x48] sm:$0xff]
  %v912 = vsel %vm240, %v896, 0
  %v915 = vsel %vm240, %v897, 0
  %v918 = vsel %vm240, %v898, 0
  %v921 = vsel %vm240, %v899, 0
  %923 = vmatprep.subr.mxu0 0.0
  %924 = vmatpush1.msra.mxu0 %v901
  %925 = vmatprep.subr.mxu0 0.0
  %926 = vmatpush1.msra.mxu0 %v902
  %927 = vmatprep.subr.mxu0 0.0
  %928 = vmatpush1.msra.mxu0 %v903
  %929 = vmatprep.subr.mxu0 0.0
  %930 = vmatpush1.msra.mxu0 %v904
  %931 = vmatprep.subr.mxu0 0.0
  %932 = vmatpush1.msra.mxu0 %v905
  %933 = vmatprep.subr.mxu0 0.0
  %934 = vmatpush1.msra.mxu0 %v906
  %935 = vmatprep.subr.mxu0 0.0
  %936 = vmatpush1.msra.mxu0 %v907
  %937 = vmatprep.subr.mxu0 0.0
  %938 = vmatpush1.msra.mxu0 %v908
  %939 = vmatprep.subr.mxu0 0.0
  %940 = vmatpush1.msra.mxu0 %v909
  %941 = vmatprep.subr.mxu0 0.0
  %942 = vmatpush1.msra.mxu0 %v910
  %943 = vmatprep.subr.mxu0 0.0
  %944 = vmatpush1.msra.mxu0 0.0
  %945 = vmatprep.subr.mxu0 0.0
  %946 = vmatpush1.msra.mxu0 0.0
  %947 = vmatprep.subr.mxu0 0.0
  %948 = vmatpush1.msra.mxu0 0.0
  %949 = vmatprep.subr.mxu0 0.0
  %950 = vmatpush1.msra.mxu0 0.0
  %951 = vmatprep.subr.mxu0 0.0
  %952 = vmatpush1.msra.mxu0 0.0
  %953 = vmatprep.subr.mxu0 0.0
  %954 = vmatpush1.msra.mxu0 0.0
  %955 = vmatprep.subr.mxu0 0.0
  %956 = vmatpush1.msra.mxu0 0.0
  %957 = vmatprep.subr.mxu0 0.0
  %958 = vmatpush1.msra.mxu0 0.0
  %959 = vmatprep.subr.mxu0 0.0
  %960 = vmatpush1.msra.mxu0 0.0
  %961 = vmatprep.subr.mxu0 0.0
  %962 = vmatpush1.msra.mxu0 0.0
  %963 = vmatprep.subr.mxu0 0.0
  %964 = vmatpush1.msra.mxu0 0.0
  %965 = vmatprep.subr.mxu0 0.0
  %966 = vmatpush1.msra.mxu0 0.0
  %967 = vmatprep.subr.mxu0 0.0
  %968 = vmatpush1.msra.mxu0 0.0
  %969 = vmatprep.subr.mxu0 0.0
  %970 = vmatpush1.msra.mxu0 0.0
  %971 = vmatprep.subr.mxu0 0.0
  %972 = vmatpush1.msra.mxu0 0.0
  %973 = vmatprep.subr.mxu0 0.0
  %974 = vmatpush1.msra.mxu0 0.0
  %975 = vmatprep.subr.mxu0 0.0
  %976 = vmatpush1.msra.mxu0 0.0
  %977 = vmatprep.subr.mxu0 0.0
  %978 = vmatpush1.msra.mxu0 0.0
  %979 = vmatprep.subr.mxu0 0.0
  %980 = vmatpush1.msra.mxu0 0.0
  %981 = vmatprep.subr.mxu0 0.0
  %982 = vmatpush1.msra.mxu0 0.0
  %983 = vmatprep.subr.mxu0 0.0
  %984 = vmatpush1.msra.mxu0 0.0
  %985 = vmatprep.subr.mxu0 0.0
  %986 = vmatpush1.msra.mxu0 0.0
  %987 = vmatprep.mubr.f32.mxu0 0.0
  %988 = vmatmul.mubr.f32.gmra.mrb[0].mxu0 %v912
  %v989 = vpop.f32.mrb[0].mxu0
  %v990 = vadd.f32 0.0, %v989
  %v991 = vpop.f32.mrb[0].mxu0
  %992 = vmatprep.mubr.f32.mxu0 0.0
  %993 = vmatmul.mubr.f32.gmra.mrb[0].mxu0 %v915
  %v994 = vpop.f32.mrb[0].mxu0
  %v995 = vadd.f32 0.0, %v994
  %v996 = vpop.f32.mrb[0].mxu0
  %997 = vmatprep.mubr.f32.mxu0 0.0
  %998 = vmatmul.mubr.f32.gmra.mrb[0].mxu0 %v918
  %v999 = vpop.f32.mrb[0].mxu0
  %v1000 = vadd.f32 0.0, %v999
  %v1001 = vpop.f32.mrb[0].mxu0
  %1002 = vmatprep.mubr.f32.mxu0 0.0
  %1003 = vmatmul.mubr.f32.gmra.mrb[0].mxu0 %v921
  %v1004 = vpop.f32.mrb[0].mxu0
  %v1005 = vadd.f32 0.0, %v1004
  %v1006 = vpop.f32.mrb[0].mxu0
  %1007 = vdwg.mxu0
  %v1009 = vsel %vm240, %v874, 0
  %v1012 = vsel %vm240, %v875, 0
  %v1015 = vsel %vm240, %v876, 0
  %v1018 = vsel %vm240, %v877, 0
  %1020 = vmatprep.subr.mxu0 0.0
  %1021 = vmatpush1.msra.mxu0 %v878
  %1022 = vmatprep.subr.mxu0 0.0
  %1023 = vmatpush1.msra.mxu0 %v879
  %1024 = vmatprep.subr.mxu0 0.0
  %1025 = vmatpush1.msra.mxu0 %v880
  %1026 = vmatprep.subr.mxu0 0.0
  %1027 = vmatpush1.msra.mxu0 %v881
  %1028 = vmatprep.subr.mxu0 0.0
  %1029 = vmatpush1.msra.mxu0 %v882
  %1030 = vmatprep.subr.mxu0 0.0
  %1031 = vmatpush1.msra.mxu0 %v883
  %1032 = vmatprep.subr.mxu0 0.0
  %1033 = vmatpush1.msra.mxu0 %v884
  %1034 = vmatprep.subr.mxu0 0.0
  %1035 = vmatpush1.msra.mxu0 %v885
  %1036 = vmatprep.subr.mxu0 0.0
  %1037 = vmatpush1.msra.mxu0 %v886
  %1038 = vmatprep.subr.mxu0 0.0
  %1039 = vmatpush1.msra.mxu0 %v887
  %1040 = vmatprep.subr.mxu0 0.0
  %1041 = vmatpush1.msra.mxu0 0.0
  %1042 = vmatprep.subr.mxu0 0.0
  %1043 = vmatpush1.msra.mxu0 0.0
  %1044 = vmatprep.subr.mxu0 0.0
  %1045 = vmatpush1.msra.mxu0 0.0
  %1046 = vmatprep.subr.mxu0 0.0
  %1047 = vmatpush1.msra.mxu0 0.0
  %1048 = vmatprep.subr.mxu0 0.0
  %1049 = vmatpush1.msra.mxu0 0.0
  %1050 = vmatprep.subr.mxu0 0.0
  %1051 = vmatpush1.msra.mxu0 0.0
  %1052 = vmatprep.subr.mxu0 0.0
  %1053 = vmatpush1.msra.mxu0 0.0
  %1054 = vmatprep.subr.mxu0 0.0
  %1055 = vmatpush1.msra.mxu0 0.0
  %1056 = vmatprep.subr.mxu0 0.0
  %1057 = vmatpush1.msra.mxu0 0.0
  %1058 = vmatprep.subr.mxu0 0.0
  %1059 = vmatpush1.msra.mxu0 0.0
  %1060 = vmatprep.subr.mxu0 0.0
  %1061 = vmatpush1.msra.mxu0 0.0
  %1062 = vmatprep.subr.mxu0 0.0
  %1063 = vmatpush1.msra.mxu0 0.0
  %1064 = vmatprep.subr.mxu0 0.0
  %1065 = vmatpush1.msra.mxu0 0.0
  %1066 = vmatprep.subr.mxu0 0.0
  %1067 = vmatpush1.msra.mxu0 0.0
  %1068 = vmatprep.subr.mxu0 0.0
  %1069 = vmatpush1.msra.mxu0 0.0
  %1070 = vmatprep.subr.mxu0 0.0
  %1071 = vmatpush1.msra.mxu0 0.0
  %1072 = vmatprep.subr.mxu0 0.0
  %1073 = vmatpush1.msra.mxu0 0.0
  %1074 = vmatprep.subr.mxu0 0.0
  %1075 = vmatpush1.msra.mxu0 0.0
  %1076 = vmatprep.subr.mxu0 0.0
  %1077 = vmatpush1.msra.mxu0 0.0
  %1078 = vmatprep.subr.mxu0 0.0
  %1079 = vmatpush1.msra.mxu0 0.0
  %1080 = vmatprep.subr.mxu0 0.0
  %1081 = vmatpush1.msra.mxu0 0.0
  %1082 = vmatprep.subr.mxu0 0.0
  %1083 = vmatpush1.msra.mxu0 0.0
  %1084 = vmatprep.mubr.f32.mxu0 0.0
  %1085 = vmatmul.mubr.f32.gmra.mrb[0].mxu0 %v1009
  %v1086 = vpop.f32.mrb[0].mxu0
  %v1087 = vadd.f32 %v990, %v1086
  %v1088 = vpop.f32.mrb[0].mxu0
  %1089 = vmatprep.mubr.f32.mxu0 0.0
  %1090 = vmatmul.mubr.f32.gmra.mrb[0].mxu0 %v1012
  %v1091 = vpop.f32.mrb[0].mxu0
  %v1092 = vadd.f32 %v995, %v1091
  %v1093 = vpop.f32.mrb[0].mxu0
  %1094 = vmatprep.mubr.f32.mxu0 0.0
  %1095 = vmatmul.mubr.f32.gmra.mrb[0].mxu0 %v1015
  %v1096 = vpop.f32.mrb[0].mxu0
  %v1097 = vadd.f32 %v1000, %v1096
  %v1098 = vpop.f32.mrb[0].mxu0
  %1099 = vmatprep.mubr.f32.mxu0 0.0
  %1100 = vmatmul.mubr.f32.gmra.mrb[0].mxu0 %v1018
  %v1101 = vpop.f32.mrb[0].mxu0
  %v1102 = vadd.f32 %v1005, %v1101
  %v1103 = vpop.f32.mrb[0].mxu0
  %1104 = vdwg.mxu0
  %v1105 = vadd.f32 %v852, 2.0
  %v1106 = vadd.f32 %v854, 2.0
  %v1107 = vadd.f32 %v856, 2.0
  %v1108 = vadd.f32 %v858, 2.0
  %vm1109 = vcmp.eq.f32.partialorder %v868, %v1105
  %vm1110 = vcmp.eq.f32.partialorder %v868, %v1106
  %vm1111 = vcmp.eq.f32.partialorder %v868, %v1107
  %vm1112 = vcmp.eq.f32.partialorder %v868, %v1108
  %v1113 = vsel %vm1109, %v174, 0.0
  %v1114 = vsel %vm1110, %v175, 0.0
  %v1115 = vsel %vm1111, %v176, 0.0
  %v1116 = vsel %vm1112, %v177, 0.0
  %s1117 = scalar_lea.vmem %s15, 160
  %v1118 = vld [vmem:[%s1117] sm:$0xff]
  %v1119 = vld [vmem:[%s1117 + $0x8] sm:$0xff]
  %v1120 = vld [vmem:[%s1117 + $0x10] sm:$0xff]
  %v1121 = vld [vmem:[%s1117 + $0x18] sm:$0xff]
  %v1122 = vld [vmem:[%s1117 + $0x20] sm:$0xff]
  %v1123 = vld [vmem:[%s1117 + $0x28] sm:$0xff]
  %v1124 = vld [vmem:[%s1117 + $0x30] sm:$0xff]
  %v1125 = vld [vmem:[%s1117 + $0x38] sm:$0xff]
  %v1126 = vld [vmem:[%s1117 + $0x40] sm:$0xff]
  %v1127 = vld [vmem:[%s1117 + $0x48] sm:$0xff]
  %v1129 = vsel %vm240, %v1113, 0
  %v1132 = vsel %vm240, %v1114, 0
  %v1135 = vsel %vm240, %v1115, 0
  %v1138 = vsel %vm240, %v1116, 0
  %1140 = vmatprep.subr.mxu0 0.0
  %1141 = vmatpush1.msra.mxu0 %v1118
  %1142 = vmatprep.subr.mxu0 0.0
  %1143 = vmatpush1.msra.mxu0 %v1119
  %1144 = vmatprep.subr.mxu0 0.0
  %1145 = vmatpush1.msra.mxu0 %v1120
  %1146 = vmatprep.subr.mxu0 0.0
  %1147 = vmatpush1.msra.mxu0 %v1121
  %1148 = vmatprep.subr.mxu0 0.0
  %1149 = vmatpush1.msra.mxu0 %v1122
  %1150 = vmatprep.subr.mxu0 0.0
  %1151 = vmatpush1.msra.mxu0 %v1123
  %1152 = vmatprep.subr.mxu0 0.0
  %1153 = vmatpush1.msra.mxu0 %v1124
  %1154 = vmatprep.subr.mxu0 0.0
  %1155 = vmatpush1.msra.mxu0 %v1125
  %1156 = vmatprep.subr.mxu0 0.0
  %1157 = vmatpush1.msra.mxu0 %v1126
  %1158 = vmatprep.subr.mxu0 0.0
  %1159 = vmatpush1.msra.mxu0 %v1127
  %1160 = vmatprep.subr.mxu0 0.0
  %1161 = vmatpush1.msra.mxu0 0.0
  %1162 = vmatprep.subr.mxu0 0.0
  %1163 = vmatpush1.msra.mxu0 0.0
  %1164 = vmatprep.subr.mxu0 0.0
  %1165 = vmatpush1.msra.mxu0 0.0
  %1166 = vmatprep.subr.mxu0 0.0
  %1167 = vmatpush1.msra.mxu0 0.0
  %1168 = vmatprep.subr.mxu0 0.0
  %1169 = vmatpush1.msra.mxu0 0.0
  %1170 = vmatprep.subr.mxu0 0.0
  %1171 = vmatpush1.msra.mxu0 0.0
  %1172 = vmatprep.subr.mxu0 0.0
  %1173 = vmatpush1.msra.mxu0 0.0
  %1174 = vmatprep.subr.mxu0 0.0
  %1175 = vmatpush1.msra.mxu0 0.0
  %1176 = vmatprep.subr.mxu0 0.0
  %1177 = vmatpush1.msra.mxu0 0.0
  %1178 = vmatprep.subr.mxu0 0.0
  %1179 = vmatpush1.msra.mxu0 0.0
  %1180 = vmatprep.subr.mxu0 0.0
  %1181 = vmatpush1.msra.mxu0 0.0
  %1182 = vmatprep.subr.mxu0 0.0
  %1183 = vmatpush1.msra.mxu0 0.0
  %1184 = vmatprep.subr.mxu0 0.0
  %1185 = vmatpush1.msra.mxu0 0.0
  %1186 = vmatprep.subr.mxu0 0.0
  %1187 = vmatpush1.msra.mxu0 0.0
  %1188 = vmatprep.subr.mxu0 0.0
  %1189 = vmatpush1.msra.mxu0 0.0
  %1190 = vmatprep.subr.mxu0 0.0
  %1191 = vmatpush1.msra.mxu0 0.0
  %1192 = vmatprep.subr.mxu0 0.0
  %1193 = vmatpush1.msra.mxu0 0.0
  %1194 = vmatprep.subr.mxu0 0.0
  %1195 = vmatpush1.msra.mxu0 0.0
  %1196 = vmatprep.subr.mxu0 0.0
  %1197 = vmatpush1.msra.mxu0 0.0
  %1198 = vmatprep.subr.mxu0 0.0
  %1199 = vmatpush1.msra.mxu0 0.0
  %1200 = vmatprep.subr.mxu0 0.0
  %1201 = vmatpush1.msra.mxu0 0.0
  %1202 = vmatprep.subr.mxu0 0.0
  %1203 = vmatpush1.msra.mxu0 0.0
  %1204 = vmatprep.mubr.f32.mxu0 0.0
  %1205 = vmatmul.mubr.f32.gmra.mrb[0].mxu0 %v1129
  %v1206 = vpop.f32.mrb[0].mxu0
  %v1207 = vadd.f32 0.0, %v1206
  %v1208 = vpop.f32.mrb[0].mxu0
  %1209 = vmatprep.mubr.f32.mxu0 0.0
  %1210 = vmatmul.mubr.f32.gmra.mrb[0].mxu0 %v1132
  %v1211 = vpop.f32.mrb[0].mxu0
  %v1212 = vadd.f32 0.0, %v1211
  %v1213 = vpop.f32.mrb[0].mxu0
  %1214 = vmatprep.mubr.f32.mxu0 0.0
  %1215 = vmatmul.mubr.f32.gmra.mrb[0].mxu0 %v1135
  %v1216 = vpop.f32.mrb[0].mxu0
  %v1217 = vadd.f32 0.0, %v1216
  %v1218 = vpop.f32.mrb[0].mxu0
  %1219 = vmatprep.mubr.f32.mxu0 0.0
  %1220 = vmatmul.mubr.f32.gmra.mrb[0].mxu0 %v1138
  %v1221 = vpop.f32.mrb[0].mxu0
  %v1222 = vadd.f32 0.0, %v1221
  %v1223 = vpop.f32.mrb[0].mxu0
  %1224 = vdwg.mxu0
  %v1225 = vadd.f32 %v1087, %v1207
  %v1226 = vadd.f32 %v1092, %v1212
  %v1227 = vadd.f32 %v1097, %v1217
  %v1228 = vadd.f32 %v1102, %v1222
  %v1229 = vadd.f32 %v852, 3.0
  %v1230 = vadd.f32 %v854, 3.0
  %v1231 = vadd.f32 %v856, 3.0
  %v1232 = vadd.f32 %v858, 3.0
  %vm1233 = vcmp.eq.f32.partialorder %v868, %v1229
  %vm1234 = vcmp.eq.f32.partialorder %v868, %v1230
  %vm1235 = vcmp.eq.f32.partialorder %v868, %v1231
  %vm1236 = vcmp.eq.f32.partialorder %v868, %v1232
  %v1237 = vsel %vm1233, %v174, 0.0
  %v1238 = vsel %vm1234, %v175, 0.0
  %v1239 = vsel %vm1235, %v176, 0.0
  %v1240 = vsel %vm1236, %v177, 0.0
  %s1241 = scalar_lea.vmem %s15, 240
  %v1242 = vld [vmem:[%s1241] sm:$0xff]
  %v1243 = vld [vmem:[%s1241 + $0x8] sm:$0xff]
  %v1244 = vld [vmem:[%s1241 + $0x10] sm:$0xff]
  %v1245 = vld [vmem:[%s1241 + $0x18] sm:$0xff]
  %v1246 = vld [vmem:[%s1241 + $0x20] sm:$0xff]
  %v1247 = vld [vmem:[%s1241 + $0x28] sm:$0xff]
  %v1248 = vld [vmem:[%s1241 + $0x30] sm:$0xff]
  %v1249 = vld [vmem:[%s1241 + $0x38] sm:$0xff]
  %v1250 = vld [vmem:[%s1241 + $0x40] sm:$0xff]
  %v1251 = vld [vmem:[%s1241 + $0x48] sm:$0xff]
  %v1253 = vsel %vm240, %v1237, 0
  %v1256 = vsel %vm240, %v1238, 0
  %v1259 = vsel %vm240, %v1239, 0
  %v1262 = vsel %vm240, %v1240, 0
  %1264 = vmatprep.subr.mxu0 0.0
  %1265 = vmatpush1.msra.mxu0 %v1242
  %1266 = vmatprep.subr.mxu0 0.0
  %1267 = vmatpush1.msra.mxu0 %v1243
  %1268 = vmatprep.subr.mxu0 0.0
  %1269 = vmatpush1.msra.mxu0 %v1244
  %1270 = vmatprep.subr.mxu0 0.0
  %1271 = vmatpush1.msra.mxu0 %v1245
  %1272 = vmatprep.subr.mxu0 0.0
  %1273 = vmatpush1.msra.mxu0 %v1246
  %1274 = vmatprep.subr.mxu0 0.0
  %1275 = vmatpush1.msra.mxu0 %v1247
  %1276 = vmatprep.subr.mxu0 0.0
  %1277 = vmatpush1.msra.mxu0 %v1248
  %1278 = vmatprep.subr.mxu0 0.0
  %1279 = vmatpush1.msra.mxu0 %v1249
  %1280 = vmatprep.subr.mxu0 0.0
  %1281 = vmatpush1.msra.mxu0 %v1250
  %1282 = vmatprep.subr.mxu0 0.0
  %1283 = vmatpush1.msra.mxu0 %v1251
  %1284 = vmatprep.subr.mxu0 0.0
  %1285 = vmatpush1.msra.mxu0 0.0
  %1286 = vmatprep.subr.mxu0 0.0
  %1287 = vmatpush1.msra.mxu0 0.0
  %1288 = vmatprep.subr.mxu0 0.0
  %1289 = vmatpush1.msra.mxu0 0.0
  %1290 = vmatprep.subr.mxu0 0.0
  %1291 = vmatpush1.msra.mxu0 0.0
  %1292 = vmatprep.subr.mxu0 0.0
  %1293 = vmatpush1.msra.mxu0 0.0
  %1294 = vmatprep.subr.mxu0 0.0
  %1295 = vmatpush1.msra.mxu0 0.0
  %1296 = vmatprep.subr.mxu0 0.0
  %1297 = vmatpush1.msra.mxu0 0.0
  %1298 = vmatprep.subr.mxu0 0.0
  %1299 = vmatpush1.msra.mxu0 0.0
  %1300 = vmatprep.subr.mxu0 0.0
  %1301 = vmatpush1.msra.mxu0 0.0
  %1302 = vmatprep.subr.mxu0 0.0
  %1303 = vmatpush1.msra.mxu0 0.0
  %1304 = vmatprep.subr.mxu0 0.0
  %1305 = vmatpush1.msra.mxu0 0.0
  %1306 = vmatprep.subr.mxu0 0.0
  %1307 = vmatpush1.msra.mxu0 0.0
  %1308 = vmatprep.subr.mxu0 0.0
  %1309 = vmatpush1.msra.mxu0 0.0
  %1310 = vmatprep.subr.mxu0 0.0
  %1311 = vmatpush1.msra.mxu0 0.0
  %1312 = vmatprep.subr.mxu0 0.0
  %1313 = vmatpush1.msra.mxu0 0.0
  %1314 = vmatprep.subr.mxu0 0.0
  %1315 = vmatpush1.msra.mxu0 0.0
  %1316 = vmatprep.subr.mxu0 0.0
  %1317 = vmatpush1.msra.mxu0 0.0
  %1318 = vmatprep.subr.mxu0 0.0
  %1319 = vmatpush1.msra.mxu0 0.0
  %1320 = vmatprep.subr.mxu0 0.0
  %1321 = vmatpush1.msra.mxu0 0.0
  %1322 = vmatprep.subr.mxu0 0.0
  %1323 = vmatpush1.msra.mxu0 0.0
  %1324 = vmatprep.subr.mxu0 0.0
  %1325 = vmatpush1.msra.mxu0 0.0
  %1326 = vmatprep.subr.mxu0 0.0
  %1327 = vmatpush1.msra.mxu0 0.0
  %1328 = vmatprep.mubr.f32.mxu0 0.0
  %1329 = vmatmul.mubr.f32.gmra.mrb[0].mxu0 %v1253
  %v1330 = vpop.f32.mrb[0].mxu0
  %v1331 = vadd.f32 0.0, %v1330
  %v1332 = vpop.f32.mrb[0].mxu0
  %1333 = vmatprep.mubr.f32.mxu0 0.0
  %1334 = vmatmul.mubr.f32.gmra.mrb[0].mxu0 %v1256
  %v1335 = vpop.f32.mrb[0].mxu0
  %v1336 = vadd.f32 0.0, %v1335
  %v1337 = vpop.f32.mrb[0].mxu0
  %1338 = vmatprep.mubr.f32.mxu0 0.0
  %1339 = vmatmul.mubr.f32.gmra.mrb[0].mxu0 %v1259
  %v1340 = vpop.f32.mrb[0].mxu0
  %v1341 = vadd.f32 0.0, %v1340
  %v1342 = vpop.f32.mrb[0].mxu0
  %1343 = vmatprep.mubr.f32.mxu0 0.0
  %1344 = vmatmul.mubr.f32.gmra.mrb[0].mxu0 %v1262
  %v1345 = vpop.f32.mrb[0].mxu0
  %v1346 = vadd.f32 0.0, %v1345
  %v1347 = vpop.f32.mrb[0].mxu0
  %1348 = vdwg.mxu0
  %v1349 = vadd.f32 %v1225, %v1331
  %v1350 = vadd.f32 %v1226, %v1336
  %v1351 = vadd.f32 %v1227, %v1341
  %v1352 = vadd.f32 %v1228, %v1346
  %v1353 = vadd.f32 %v852, 4.0
  %v1354 = vadd.f32 %v854, 4.0
  %v1355 = vadd.f32 %v856, 4.0
  %v1356 = vadd.f32 %v858, 4.0
  %vm1357 = vcmp.eq.f32.partialorder %v868, %v1353
  %vm1358 = vcmp.eq.f32.partialorder %v868, %v1354
  %vm1359 = vcmp.eq.f32.partialorder %v868, %v1355
  %vm1360 = vcmp.eq.f32.partialorder %v868, %v1356
  %v1361 = vsel %vm1357, %v174, 0.0
  %v1362 = vsel %vm1358, %v175, 0.0
  %v1363 = vsel %vm1359, %v176, 0.0
  %v1364 = vsel %vm1360, %v177, 0.0
  %s1365 = scalar_lea.vmem %s15, 320
  %v1366 = vld [vmem:[%s1365] sm:$0xff]
  %v1367 = vld [vmem:[%s1365 + $0x8] sm:$0xff]
  %v1368 = vld [vmem:[%s1365 + $0x10] sm:$0xff]
  %v1369 = vld [vmem:[%s1365 + $0x18] sm:$0xff]
  %v1370 = vld [vmem:[%s1365 + $0x20] sm:$0xff]
  %v1371 = vld [vmem:[%s1365 + $0x28] sm:$0xff]
  %v1372 = vld [vmem:[%s1365 + $0x30] sm:$0xff]
  %v1373 = vld [vmem:[%s1365 + $0x38] sm:$0xff]
  %v1374 = vld [vmem:[%s1365 + $0x40] sm:$0xff]
  %v1375 = vld [vmem:[%s1365 + $0x48] sm:$0xff]
  %v1377 = vsel %vm240, %v1361, 0
  %v1380 = vsel %vm240, %v1362, 0
  %v1383 = vsel %vm240, %v1363, 0
  %v1386 = vsel %vm240, %v1364, 0
  %1388 = vmatprep.subr.mxu0 0.0
  %1389 = vmatpush1.msra.mxu0 %v1366
  %1390 = vmatprep.subr.mxu0 0.0
  %1391 = vmatpush1.msra.mxu0 %v1367
  %1392 = vmatprep.subr.mxu0 0.0
  %1393 = vmatpush1.msra.mxu0 %v1368
  %1394 = vmatprep.subr.mxu0 0.0
  %1395 = vmatpush1.msra.mxu0 %v1369
  %1396 = vmatprep.subr.mxu0 0.0
  %1397 = vmatpush1.msra.mxu0 %v1370
  %1398 = vmatprep.subr.mxu0 0.0
  %1399 = vmatpush1.msra.mxu0 %v1371
  %1400 = vmatprep.subr.mxu0 0.0
  %1401 = vmatpush1.msra.mxu0 %v1372
  %1402 = vmatprep.subr.mxu0 0.0
  %1403 = vmatpush1.msra.mxu0 %v1373
  %1404 = vmatprep.subr.mxu0 0.0
  %1405 = vmatpush1.msra.mxu0 %v1374
  %1406 = vmatprep.subr.mxu0 0.0
  %1407 = vmatpush1.msra.mxu0 %v1375
  %1408 = vmatprep.subr.mxu0 0.0
  %1409 = vmatpush1.msra.mxu0 0.0
  %1410 = vmatprep.subr.mxu0 0.0
  %1411 = vmatpush1.msra.mxu0 0.0
  %1412 = vmatprep.subr.mxu0 0.0
  %1413 = vmatpush1.msra.mxu0 0.0
  %1414 = vmatprep.subr.mxu0 0.0
  %1415 = vmatpush1.msra.mxu0 0.0
  %1416 = vmatprep.subr.mxu0 0.0
  %1417 = vmatpush1.msra.mxu0 0.0
  %1418 = vmatprep.subr.mxu0 0.0
  %1419 = vmatpush1.msra.mxu0 0.0
  %1420 = vmatprep.subr.mxu0 0.0
  %1421 = vmatpush1.msra.mxu0 0.0
  %1422 = vmatprep.subr.mxu0 0.0
  %1423 = vmatpush1.msra.mxu0 0.0
  %1424 = vmatprep.subr.mxu0 0.0
  %1425 = vmatpush1.msra.mxu0 0.0
  %1426 = vmatprep.subr.mxu0 0.0
  %1427 = vmatpush1.msra.mxu0 0.0
  %1428 = vmatprep.subr.mxu0 0.0
  %1429 = vmatpush1.msra.mxu0 0.0
  %1430 = vmatprep.subr.mxu0 0.0
  %1431 = vmatpush1.msra.mxu0 0.0
  %1432 = vmatprep.subr.mxu0 0.0
  %1433 = vmatpush1.msra.mxu0 0.0
  %1434 = vmatprep.subr.mxu0 0.0
  %1435 = vmatpush1.msra.mxu0 0.0
  %1436 = vmatprep.subr.mxu0 0.0
  %1437 = vmatpush1.msra.mxu0 0.0
  %1438 = vmatprep.subr.mxu0 0.0
  %1439 = vmatpush1.msra.mxu0 0.0
  %1440 = vmatprep.subr.mxu0 0.0
  %1441 = vmatpush1.msra.mxu0 0.0
  %1442 = vmatprep.subr.mxu0 0.0
  %1443 = vmatpush1.msra.mxu0 0.0
  %1444 = vmatprep.subr.mxu0 0.0
  %1445 = vmatpush1.msra.mxu0 0.0
  %1446 = vmatprep.subr.mxu0 0.0
  %1447 = vmatpush1.msra.mxu0 0.0
  %1448 = vmatprep.subr.mxu0 0.0
  %1449 = vmatpush1.msra.mxu0 0.0
  %1450 = vmatprep.subr.mxu0 0.0
  %1451 = vmatpush1.msra.mxu0 0.0
  %1452 = vmatprep.mubr.f32.mxu0 0.0
  %1453 = vmatmul.mubr.f32.gmra.mrb[0].mxu0 %v1377
  %v1454 = vpop.f32.mrb[0].mxu0
  %v1455 = vadd.f32 0.0, %v1454
  %v1456 = vpop.f32.mrb[0].mxu0
  %1457 = vmatprep.mubr.f32.mxu0 0.0
  %1458 = vmatmul.mubr.f32.gmra.mrb[0].mxu0 %v1380
  %v1459 = vpop.f32.mrb[0].mxu0
  %v1460 = vadd.f32 0.0, %v1459
  %v1461 = vpop.f32.mrb[0].mxu0
  %1462 = vmatprep.mubr.f32.mxu0 0.0
  %1463 = vmatmul.mubr.f32.gmra.mrb[0].mxu0 %v1383
  %v1464 = vpop.f32.mrb[0].mxu0
  %v1465 = vadd.f32 0.0, %v1464
  %v1466 = vpop.f32.mrb[0].mxu0
  %1467 = vmatprep.mubr.f32.mxu0 0.0
  %1468 = vmatmul.mubr.f32.gmra.mrb[0].mxu0 %v1386
  %v1469 = vpop.f32.mrb[0].mxu0
  %v1470 = vadd.f32 0.0, %v1469
  %v1471 = vpop.f32.mrb[0].mxu0
  %1472 = vdwg.mxu0
  %v1473 = vadd.f32 %v1349, %v1455
  %v1474 = vadd.f32 %v1350, %v1460
  %v1475 = vadd.f32 %v1351, %v1465
  %v1476 = vadd.f32 %v1352, %v1470
  %v1477 = vld [vmem:[%s25] sm:$0x3]
  %v1478 = vld [vmem:[%s19] sm:$0xff]
  %v1479 = vld [vmem:[%s19 + $0x8] sm:$0xff]
  %v1480 = vld [vmem:[%s19 + $0x10] sm:$0xff]
  %v1481 = vld [vmem:[%s19 + $0x18] sm:$0xff]
  %v1482 = vld [vmem:[%s19 + $0x20] sm:$0xff]
  %v1483 = vld [vmem:[%s19 + $0x28] sm:$0xff]
  %v1484 = vld [vmem:[%s19 + $0x30] sm:$0xf]
  %v1485 = vld [vmem:[%s19 + $0x38] sm:$0xf]
  %v1486 = vld [vmem:[%s19 + $0x40] sm:$0xf]
  %vm1487 = vcmask 162816
  %v1489 = vsel %vm1487, %v1473, 0
  %v1492 = vsel %vm1487, %v1474, 0
  %v1495 = vsel %vm1487, %v1475, 0
  %v1498 = vsel %vm1487, %v1476, 0
  %vm1500 = vcmask 1043456
  %v1502 = vsel %vm1500, %v1484, 0
  %v1505 = vsel %vm1500, %v1485, 0
  %v1508 = vsel %vm1500, %v1486, 0
  %1510 = vmatprep.subr.mxu0 %v1479
  %1511 = vmatpush1.msra.mxu0 %v1478
  %1512 = vmatprep.subr.mxu0 %v1482
  %1513 = vmatpush1.msra.mxu0 %v1481
  %1514 = vmatprep.subr.mxu0 %v1505
  %1515 = vmatpush1.msra.mxu0 %v1502
  %1516 = vmatprep.subr.mxu0 0.0
  %1517 = vmatpush1.msra.mxu0 0.0
  %1518 = vmatprep.subr.mxu0 0.0
  %1519 = vmatpush1.msra.mxu0 0.0
  %1520 = vmatprep.subr.mxu0 0.0
  %1521 = vmatpush1.msra.mxu0 0.0
  %1522 = vmatprep.subr.mxu0 0.0
  %1523 = vmatpush1.msra.mxu0 0.0
  %1524 = vmatprep.subr.mxu0 0.0
  %1525 = vmatpush1.msra.mxu0 0.0
  %1526 = vmatprep.subr.mxu0 0.0
  %1527 = vmatpush1.msra.mxu0 0.0
  %1528 = vmatprep.subr.mxu0 0.0
  %1529 = vmatpush1.msra.mxu0 0.0
  %1530 = vmatprep.subr.mxu0 0.0
  %1531 = vmatpush1.msra.mxu0 0.0
  %1532 = vmatprep.subr.mxu0 0.0
  %1533 = vmatpush1.msra.mxu0 0.0
  %1534 = vmatprep.subr.mxu0 0.0
  %1535 = vmatpush1.msra.mxu0 0.0
  %1536 = vmatprep.subr.mxu0 0.0
  %1537 = vmatpush1.msra.mxu0 0.0
  %1538 = vmatprep.subr.mxu0 0.0
  %1539 = vmatpush1.msra.mxu0 0.0
  %1540 = vmatprep.subr.mxu0 0.0
  %1541 = vmatpush1.msra.mxu0 0.0
  %1542 = vmatprep.subr.mxu0 0.0
  %1543 = vmatpush1.msra.mxu0 0.0
  %1544 = vmatprep.subr.mxu0 0.0
  %1545 = vmatpush1.msra.mxu0 0.0
  %1546 = vmatprep.subr.mxu0 0.0
  %1547 = vmatpush1.msra.mxu0 0.0
  %1548 = vmatprep.subr.mxu0 0.0
  %1549 = vmatpush1.msra.mxu0 0.0
  %1550 = vmatprep.subr.mxu0 0.0
  %1551 = vmatpush1.msra.mxu0 0.0
  %1552 = vmatprep.subr.mxu0 0.0
  %1553 = vmatpush1.msra.mxu0 0.0
  %1554 = vmatprep.subr.mxu0 0.0
  %1555 = vmatpush1.msra.mxu0 0.0
  %1556 = vmatprep.subr.mxu0 0.0
  %1557 = vmatpush1.msra.mxu0 0.0
  %1558 = vmatprep.subr.mxu0 0.0
  %1559 = vmatpush1.msra.mxu0 0.0
  %1560 = vmatprep.subr.mxu0 0.0
  %1561 = vmatpush1.msra.mxu0 0.0
  %1562 = vmatprep.subr.mxu0 0.0
  %1563 = vmatpush1.msra.mxu0 0.0
  %1564 = vmatprep.subr.mxu0 0.0
  %1565 = vmatpush1.msra.mxu0 0.0
  %1566 = vmatprep.subr.mxu0 0.0
  %1567 = vmatpush1.msra.mxu0 0.0
  %1568 = vmatprep.subr.mxu0 0.0
  %1569 = vmatpush1.msra.mxu0 0.0
  %1570 = vmatprep.subr.mxu0 0.0
  %1571 = vmatpush1.msra.mxu0 0.0
  %1572 = vmatprep.subr.mxu0 0.0
  %1573 = vmatpush1.msra.mxu0 0.0
  %1574 = vmatprep.mubr.f32.mxu0 0.0
  %1575 = vmatmul.mubr.f32.gmra.mrb[0].mxu0 %v1489
  %v1576 = vpop.f32.mrb[0].mxu0
  %v1577 = vadd.f32 0.0, %v1576
  %v1578 = vpop.f32.mrb[0].mxu0
  %v1579 = vadd.f32 0.0, %v1578
  %1580 = vmatprep.mubr.f32.mxu0 0.0
  %1581 = vmatmul.mubr.f32.gmra.mrb[0].mxu0 %v1492
  %v1582 = vpop.f32.mrb[0].mxu0
  %v1583 = vadd.f32 0.0, %v1582
  %v1584 = vpop.f32.mrb[0].mxu0
  %v1585 = vadd.f32 0.0, %v1584
  %1586 = vmatprep.mubr.f32.mxu0 0.0
  %1587 = vmatmul.mubr.f32.gmra.mrb[0].mxu0 %v1495
  %v1588 = vpop.f32.mrb[0].mxu0
  %v1589 = vadd.f32 0.0, %v1588
  %v1590 = vpop.f32.mrb[0].mxu0
  %v1591 = vadd.f32 0.0, %v1590
  %1592 = vmatprep.mubr.f32.mxu0 0.0
  %1593 = vmatmul.mubr.f32.gmra.mrb[0].mxu0 %v1498
  %v1594 = vpop.f32.mrb[0].mxu0
  %v1595 = vadd.f32 0.0, %v1594
  %v1596 = vpop.f32.mrb[0].mxu0
  %v1597 = vadd.f32 0.0, %v1596
  %1598 = vdwg.mxu0
  %1599 = vmatprep.subr.mxu0 0.0
  %1600 = vmatpush1.msra.mxu0 %v1480
  %1601 = vmatprep.subr.mxu0 0.0
  %1602 = vmatpush1.msra.mxu0 %v1483
  %1603 = vmatprep.subr.mxu0 0.0
  %1604 = vmatpush1.msra.mxu0 %v1508
  %1605 = vmatprep.subr.mxu0 0.0
  %1606 = vmatpush1.msra.mxu0 0.0
  %1607 = vmatprep.subr.mxu0 0.0
  %1608 = vmatpush1.msra.mxu0 0.0
  %1609 = vmatprep.subr.mxu0 0.0
  %1610 = vmatpush1.msra.mxu0 0.0
  %1611 = vmatprep.subr.mxu0 0.0
  %1612 = vmatpush1.msra.mxu0 0.0
  %1613 = vmatprep.subr.mxu0 0.0
  %1614 = vmatpush1.msra.mxu0 0.0
  %1615 = vmatprep.subr.mxu0 0.0
  %1616 = vmatpush1.msra.mxu0 0.0
  %1617 = vmatprep.subr.mxu0 0.0
  %1618 = vmatpush1.msra.mxu0 0.0
  %1619 = vmatprep.subr.mxu0 0.0
  %1620 = vmatpush1.msra.mxu0 0.0
  %1621 = vmatprep.subr.mxu0 0.0
  %1622 = vmatpush1.msra.mxu0 0.0
  %1623 = vmatprep.subr.mxu0 0.0
  %1624 = vmatpush1.msra.mxu0 0.0
  %1625 = vmatprep.subr.mxu0 0.0
  %1626 = vmatpush1.msra.mxu0 0.0
  %1627 = vmatprep.subr.mxu0 0.0
  %1628 = vmatpush1.msra.mxu0 0.0
  %1629 = vmatprep.subr.mxu0 0.0
  %1630 = vmatpush1.msra.mxu0 0.0
  %1631 = vmatprep.subr.mxu0 0.0
  %1632 = vmatpush1.msra.mxu0 0.0
  %1633 = vmatprep.subr.mxu0 0.0
  %1634 = vmatpush1.msra.mxu0 0.0
  %1635 = vmatprep.subr.mxu0 0.0
  %1636 = vmatpush1.msra.mxu0 0.0
  %1637 = vmatprep.subr.mxu0 0.0
  %1638 = vmatpush1.msra.mxu0 0.0
  %1639 = vmatprep.subr.mxu0 0.0
  %1640 = vmatpush1.msra.mxu0 0.0
  %1641 = vmatprep.subr.mxu0 0.0
  %1642 = vmatpush1.msra.mxu0 0.0
  %1643 = vmatprep.subr.mxu0 0.0
  %1644 = vmatpush1.msra.mxu0 0.0
  %1645 = vmatprep.subr.mxu0 0.0
  %1646 = vmatpush1.msra.mxu0 0.0
  %1647 = vmatprep.subr.mxu0 0.0
  %1648 = vmatpush1.msra.mxu0 0.0
  %1649 = vmatprep.subr.mxu0 0.0
  %1650 = vmatpush1.msra.mxu0 0.0
  %1651 = vmatprep.subr.mxu0 0.0
  %1652 = vmatpush1.msra.mxu0 0.0
  %1653 = vmatprep.subr.mxu0 0.0
  %1654 = vmatpush1.msra.mxu0 0.0
  %1655 = vmatprep.subr.mxu0 0.0
  %1656 = vmatpush1.msra.mxu0 0.0
  %1657 = vmatprep.subr.mxu0 0.0
  %1658 = vmatpush1.msra.mxu0 0.0
  %1659 = vmatprep.subr.mxu0 0.0
  %1660 = vmatpush1.msra.mxu0 0.0
  %1661 = vmatprep.subr.mxu0 0.0
  %1662 = vmatpush1.msra.mxu0 0.0
  %1663 = vmatprep.mubr.f32.mxu0 0.0
  %1664 = vmatmul.mubr.f32.gmra.mrb[0].mxu0 %v1489
  %v1665 = vpop.f32.mrb[0].mxu0
  %v1666 = vadd.f32 0.0, %v1665
  %v1667 = vpop.f32.mrb[0].mxu0
  %1668 = vmatprep.mubr.f32.mxu0 0.0
  %1669 = vmatmul.mubr.f32.gmra.mrb[0].mxu0 %v1492
  %v1670 = vpop.f32.mrb[0].mxu0
  %v1671 = vadd.f32 0.0, %v1670
  %v1672 = vpop.f32.mrb[0].mxu0
  %1673 = vmatprep.mubr.f32.mxu0 0.0
  %1674 = vmatmul.mubr.f32.gmra.mrb[0].mxu0 %v1495
  %v1675 = vpop.f32.mrb[0].mxu0
  %v1676 = vadd.f32 0.0, %v1675
  %v1677 = vpop.f32.mrb[0].mxu0
  %1678 = vmatprep.mubr.f32.mxu0 0.0
  %1679 = vmatmul.mubr.f32.gmra.mrb[0].mxu0 %v1498
  %v1680 = vpop.f32.mrb[0].mxu0
  %v1681 = vadd.f32 0.0, %v1680
  %v1682 = vpop.f32.mrb[0].mxu0
  %1683 = vdwg.mxu0
  %v1684 = vld [vmem:[%s23] sm:$0xff]
  %v1685 = vld [vmem:[%s23 + $0x8] sm:$0xff]
  %v1686 = vld [vmem:[%s23 + $0x10] sm:$0xff]
  %v1687 = vld [vmem:[%s23 + $0x18] sm:$0xff]
  %v1688 = vld [vmem:[%s23 + $0x20] sm:$0xff]
  %v1689 = vld [vmem:[%s23 + $0x28] sm:$0xff]
  %v1690 = vld [vmem:[%s23 + $0x30] sm:$0xff]
  %v1691 = vld [vmem:[%s23 + $0x38] sm:$0xff]
  %v1692 = vld [vmem:[%s23 + $0x40] sm:$0xff]
  %v1693 = vld [vmem:[%s23 + $0x48] sm:$0xff]
  %v1694 = vld [vmem:[%s23 + $0x50] sm:$0xff]
  %v1695 = vld [vmem:[%s23 + $0x58] sm:$0xff]
  %v1696 = vmul.f32 %v1577, %v1684
  %v1697 = vmul.f32 %v1579, %v1685
  %v1698 = vmul.f32 %v1666, %v1686
  %v1699 = vmul.f32 %v1583, %v1687
  %v1700 = vmul.f32 %v1585, %v1688
  %v1701 = vmul.f32 %v1671, %v1689
  %v1702 = vmul.f32 %v1589, %v1690
  %v1703 = vmul.f32 %v1591, %v1691
  %v1704 = vmul.f32 %v1676, %v1692
  %v1705 = vmul.f32 %v1595, %v1693
  %v1706 = vmul.f32 %v1597, %v1694
  %v1707 = vmul.f32 %v1681, %v1695
  %vm1708 = vcmask 261120
  %v1710 = vsel %vm1708, %v1477, 0
  %1712 = vmatprep.subr.mxu0 %v1697
  %1713 = vmatpush1.msra.mxu0 %v1696
  %1714 = vmatprep.subr.mxu0 %v1700
  %1715 = vmatpush1.msra.mxu0 %v1699
  %1716 = vmatprep.subr.mxu0 %v1703
  %1717 = vmatpush1.msra.mxu0 %v1702
  %1718 = vmatprep.subr.mxu0 %v1706
  %1719 = vmatpush1.msra.mxu0 %v1705
  %1720 = vmatprep.subr.mxu0 0.0
  %1721 = vmatpush1.msra.mxu0 0.0
  %1722 = vmatprep.subr.mxu0 0.0
  %1723 = vmatpush1.msra.mxu0 0.0
  %1724 = vmatprep.subr.mxu0 0.0
  %1725 = vmatpush1.msra.mxu0 0.0
  %1726 = vmatprep.subr.mxu0 0.0
  %1727 = vmatpush1.msra.mxu0 0.0
  %1728 = vmatprep.subr.mxu0 0.0
  %1729 = vmatpush1.msra.mxu0 0.0
  %1730 = vmatprep.subr.mxu0 0.0
  %1731 = vmatpush1.msra.mxu0 0.0
  %1732 = vmatprep.subr.mxu0 0.0
  %1733 = vmatpush1.msra.mxu0 0.0
  %1734 = vmatprep.subr.mxu0 0.0
  %1735 = vmatpush1.msra.mxu0 0.0
  %1736 = vmatprep.subr.mxu0 0.0
  %1737 = vmatpush1.msra.mxu0 0.0
  %1738 = vmatprep.subr.mxu0 0.0
  %1739 = vmatpush1.msra.mxu0 0.0
  %1740 = vmatprep.subr.mxu0 0.0
  %1741 = vmatpush1.msra.mxu0 0.0
  %1742 = vmatprep.subr.mxu0 0.0
  %1743 = vmatpush1.msra.mxu0 0.0
  %1744 = vmatprep.subr.mxu0 0.0
  %1745 = vmatpush1.msra.mxu0 0.0
  %1746 = vmatprep.subr.mxu0 0.0
  %1747 = vmatpush1.msra.mxu0 0.0
  %1748 = vmatprep.subr.mxu0 0.0
  %1749 = vmatpush1.msra.mxu0 0.0
  %1750 = vmatprep.subr.mxu0 0.0
  %1751 = vmatpush1.msra.mxu0 0.0
  %1752 = vmatprep.subr.mxu0 0.0
  %1753 = vmatpush1.msra.mxu0 0.0
  %1754 = vmatprep.subr.mxu0 0.0
  %1755 = vmatpush1.msra.mxu0 0.0
  %1756 = vmatprep.subr.mxu0 0.0
  %1757 = vmatpush1.msra.mxu0 0.0
  %1758 = vmatprep.subr.mxu0 0.0
  %1759 = vmatpush1.msra.mxu0 0.0
  %1760 = vmatprep.subr.mxu0 0.0
  %1761 = vmatpush1.msra.mxu0 0.0
  %1762 = vmatprep.subr.mxu0 0.0
  %1763 = vmatpush1.msra.mxu0 0.0
  %1764 = vmatprep.subr.mxu0 0.0
  %1765 = vmatpush1.msra.mxu0 0.0
  %1766 = vmatprep.subr.mxu0 0.0
  %1767 = vmatpush1.msra.mxu0 0.0
  %1768 = vmatprep.subr.mxu0 0.0
  %1769 = vmatpush1.msra.mxu0 0.0
  %1770 = vmatprep.subr.mxu0 0.0
  %1771 = vmatpush1.msra.mxu0 0.0
  %1772 = vmatprep.subr.mxu0 0.0
  %1773 = vmatpush1.msra.mxu0 0.0
  %1774 = vmatprep.subr.mxu0 0.0
  %1775 = vmatpush1.msra.mxu0 0.0
  %1776 = vmatprep.mubr.f32.mxu0 0.0
  %1777 = vmatmul.mubr.f32.gmra.mrb[0].mxu0 %v1710
  %v1778 = vpop.f32.mrb[0].mxu0
  %v1779 = vadd.f32 0.0, %v1778
  %v1780 = vpop.f32.mrb[0].mxu0
  %v1781 = vadd.f32 0.0, %v1780
  %1782 = vdwg.mxu0
  %1783 = vmatprep.subr.mxu0 0.0
  %1784 = vmatpush1.msra.mxu0 %v1698
  %1785 = vmatprep.subr.mxu0 0.0
  %1786 = vmatpush1.msra.mxu0 %v1701
  %1787 = vmatprep.subr.mxu0 0.0
  %1788 = vmatpush1.msra.mxu0 %v1704
  %1789 = vmatprep.subr.mxu0 0.0
  %1790 = vmatpush1.msra.mxu0 %v1707
  %1791 = vmatprep.subr.mxu0 0.0
  %1792 = vmatpush1.msra.mxu0 0.0
  %1793 = vmatprep.subr.mxu0 0.0
  %1794 = vmatpush1.msra.mxu0 0.0
  %1795 = vmatprep.subr.mxu0 0.0
  %1796 = vmatpush1.msra.mxu0 0.0
  %1797 = vmatprep.subr.mxu0 0.0
  %1798 = vmatpush1.msra.mxu0 0.0
  %1799 = vmatprep.subr.mxu0 0.0
  %1800 = vmatpush1.msra.mxu0 0.0
  %1801 = vmatprep.subr.mxu0 0.0
  %1802 = vmatpush1.msra.mxu0 0.0
  %1803 = vmatprep.subr.mxu0 0.0
  %1804 = vmatpush1.msra.mxu0 0.0
  %1805 = vmatprep.subr.mxu0 0.0
  %1806 = vmatpush1.msra.mxu0 0.0
  %1807 = vmatprep.subr.mxu0 0.0
  %1808 = vmatpush1.msra.mxu0 0.0
  %1809 = vmatprep.subr.mxu0 0.0
  %1810 = vmatpush1.msra.mxu0 0.0
  %1811 = vmatprep.subr.mxu0 0.0
  %1812 = vmatpush1.msra.mxu0 0.0
  %1813 = vmatprep.subr.mxu0 0.0
  %1814 = vmatpush1.msra.mxu0 0.0
  %1815 = vmatprep.subr.mxu0 0.0
  %1816 = vmatpush1.msra.mxu0 0.0
  %1817 = vmatprep.subr.mxu0 0.0
  %1818 = vmatpush1.msra.mxu0 0.0
  %1819 = vmatprep.subr.mxu0 0.0
  %1820 = vmatpush1.msra.mxu0 0.0
  %1821 = vmatprep.subr.mxu0 0.0
  %1822 = vmatpush1.msra.mxu0 0.0
  %1823 = vmatprep.subr.mxu0 0.0
  %1824 = vmatpush1.msra.mxu0 0.0
  %1825 = vmatprep.subr.mxu0 0.0
  %1826 = vmatpush1.msra.mxu0 0.0
  %1827 = vmatprep.subr.mxu0 0.0
  %1828 = vmatpush1.msra.mxu0 0.0
  %1829 = vmatprep.subr.mxu0 0.0
  %1830 = vmatpush1.msra.mxu0 0.0
  %1831 = vmatprep.subr.mxu0 0.0
  %1832 = vmatpush1.msra.mxu0 0.0
  %1833 = vmatprep.subr.mxu0 0.0
  %1834 = vmatpush1.msra.mxu0 0.0
  %1835 = vmatprep.subr.mxu0 0.0
  %1836 = vmatpush1.msra.mxu0 0.0
  %1837 = vmatprep.subr.mxu0 0.0
  %1838 = vmatpush1.msra.mxu0 0.0
  %1839 = vmatprep.subr.mxu0 0.0
  %1840 = vmatpush1.msra.mxu0 0.0
  %1841 = vmatprep.subr.mxu0 0.0
  %1842 = vmatpush1.msra.mxu0 0.0
  %1843 = vmatprep.subr.mxu0 0.0
  %1844 = vmatpush1.msra.mxu0 0.0
  %1845 = vmatprep.subr.mxu0 0.0
  %1846 = vmatpush1.msra.mxu0 0.0
  %1847 = vmatprep.mubr.f32.mxu0 0.0
  %1848 = vmatmul.mubr.f32.gmra.mrb[0].mxu0 %v1710
  %v1849 = vpop.f32.mrb[0].mxu0
  %v1850 = vadd.f32 0.0, %v1849
  %v1851 = vpop.f32.mrb[0].mxu0
  %1852 = vdwg.mxu0
  %v1853 = vld [vmem:[%s29] sm:$0xf]
  %v1854 = vld [vmem:[%s29 + $0x4] sm:$0xf]
  %v1855 = vld [vmem:[%s29 + $0x8] sm:$0xf]
  %v1856 = vld [vmem:[%s29 + $0xc] sm:$0xf]
  %v1857 = vld [vmem:[%s29 + $0x10] sm:$0xf]
  %v1858 = vld [vmem:[%s29 + $0x14] sm:$0xf]
  %v1859 = vld [vmem:[%s29 + $0x18] sm:$0xf]
  %v1860 = vld [vmem:[%s29 + $0x1c] sm:$0xf]
  %v1861 = vld [vmem:[%s29 + $0x20] sm:$0xf]
  %v1862 = vld [vmem:[%s29 + $0x24] sm:$0xf]
  %v1863 = vld [vmem:[%s29 + $0x28] sm:$0xf]
  %v1864 = vld [vmem:[%s29 + $0x2c] sm:$0xf]
  %v1865 = vld [vmem:[%s29 + $0x30] sm:$0xf]
  %v1866 = vld [vmem:[%s29 + $0x34] sm:$0xf]
  %v1867 = vld [vmem:[%s29 + $0x38] sm:$0xf]
  %v1868 = vld [vmem:[%s29 + $0x3c] sm:$0xf]
  %v1869 = vld [vmem:[%s29 + $0x40] sm:$0xf]
  %v1870 = vld [vmem:[%s29 + $0x44] sm:$0xf]
  %v1871 = vld [vmem:[%s29 + $0x48] sm:$0xf]
  %v1872 = vld [vmem:[%s29 + $0x4c] sm:$0xf]
  %v1873 = vld [vmem:[%s29 + $0x50] sm:$0xf]
  %v1874 = vld [vmem:[%s29 + $0x54] sm:$0xf]
  %v1875 = vld [vmem:[%s29 + $0x58] sm:$0xf]
  %v1876 = vld [vmem:[%s29 + $0x5c] sm:$0xf]
  %v1877 = vld [vmem:[%s29 + $0x60] sm:$0xf]
  %v1878 = vld [vmem:[%s29 + $0x64] sm:$0xf]
  %v1879 = vld [vmem:[%s29 + $0x68] sm:$0xf]
  %v1880 = vld [vmem:[%s29 + $0x6c] sm:$0xf]
  %v1881 = vld [vmem:[%s29 + $0x70] sm:$0xf]
  %v1882 = vld [vmem:[%s29 + $0x74] sm:$0xf]
  %v1883 = vld [vmem:[%s29 + $0x78] sm:$0xf]
  %v1884 = vld [vmem:[%s29 + $0x7c] sm:$0xf]
  %v1885 = vld [vmem:[%s29 + $0x80] sm:$0xf]
  %v1886 = vld [vmem:[%s29 + $0x84] sm:$0xf]
  %v1887 = vld [vmem:[%s29 + $0x88] sm:$0xf]
  %v1888 = vld [vmem:[%s29 + $0x8c] sm:$0xf]
  %v1889 = vld [vmem:[%s29 + $0x90] sm:$0xf]
  %v1890 = vld [vmem:[%s29 + $0x94] sm:$0xf]
  %v1891 = vld [vmem:[%s29 + $0x98] sm:$0xf]
  %v1892 = vld [vmem:[%s29 + $0x9c] sm:$0xf]
  %v1893 = vpack.c.bf16 %v1779, %v1779
  %v1894 = vpack.c.bf16 %v1781, %v1781
  %v1895 = vpack.c.bf16 %v1850, %v1850
  %v1896 = vld [vmem:[%s31] sm:$0x1]
  %v1898 = vlaneseq
  %v1899 = vshrl.u32 %v1898, 7
  %v1900 = vsub.s32 0, %v1899
  %v1901 = vrot.slane %v1896, %v1900
  %v1943 = vunpack.c.l.b16 %v1853
  %v1944 = vunpack.c.l.b16 %v1854
  %v1945 = vunpack.c.l.b16 %v1855
  %v1946 = vunpack.c.l.b16 %v1856
  %v1947 = vunpack.c.l.b16 %v1857
  %v1948 = vunpack.c.l.b16 %v1858
  %v1949 = vunpack.c.l.b16 %v1859
  %v1950 = vunpack.c.l.b16 %v1860
  %v1951 = vunpack.c.l.b16 %v1861
  %v1952 = vunpack.c.l.b16 %v1862
  %v1953 = vunpack.c.l.b16 %v1863
  %v1954 = vunpack.c.l.b16 %v1864
  %v1955 = vunpack.c.l.b16 %v1865
  %v1956 = vunpack.c.l.b16 %v1866
  %v1957 = vunpack.c.l.b16 %v1867
  %v1958 = vunpack.c.l.b16 %v1868
  %v1959 = vunpack.c.l.b16 %v1869
  %v1960 = vunpack.c.l.b16 %v1870
  %v1961 = vunpack.c.l.b16 %v1871
  %v1962 = vunpack.c.l.b16 %v1872
  %v1963 = vunpack.c.l.b16 %v1873
  %v1964 = vunpack.c.l.b16 %v1874
  %v1965 = vunpack.c.l.b16 %v1875
  %v1966 = vunpack.c.l.b16 %v1876
  %v1967 = vunpack.c.l.b16 %v1877
  %v1968 = vunpack.c.l.b16 %v1878
  %v1969 = vunpack.c.l.b16 %v1879
  %v1970 = vunpack.c.l.b16 %v1880
  %v1971 = vunpack.c.l.b16 %v1881
  %v1972 = vunpack.c.l.b16 %v1882
  %v1973 = vunpack.c.l.b16 %v1883
  %v1974 = vunpack.c.l.b16 %v1884
  %v1975 = vunpack.c.l.b16 %v1885
  %v1976 = vunpack.c.l.b16 %v1886
  %v1977 = vunpack.c.l.b16 %v1887
  %v1978 = vunpack.c.l.b16 %v1888
  %v1979 = vunpack.c.l.b16 %v1889
  %v1980 = vunpack.c.l.b16 %v1890
  %v1981 = vunpack.c.l.b16 %v1891
  %v1982 = vunpack.c.l.b16 %v1892
  %v1983 = vpack.c.b16 %v1944, %v1943
  %v1984 = vpack.c.b16 %v1946, %v1945
  %v1985 = vpack.c.b16 %v1948, %v1947
  %v1986 = vpack.c.b16 %v1950, %v1949
  %v1987 = vpack.c.b16 %v1952, %v1951
  %v1988 = vpack.c.b16 %v1954, %v1953
  %v1989 = vpack.c.b16 %v1956, %v1955
  %v1990 = vpack.c.b16 %v1958, %v1957
  %v1991 = vpack.c.b16 %v1960, %v1959
  %v1992 = vpack.c.b16 %v1962, %v1961
  %v1993 = vpack.c.b16 %v1964, %v1963
  %v1994 = vpack.c.b16 %v1966, %v1965
  %v1995 = vpack.c.b16 %v1968, %v1967
  %v1996 = vpack.c.b16 %v1970, %v1969
  %v1997 = vpack.c.b16 %v1972, %v1971
  %v1998 = vpack.c.b16 %v1974, %v1973
  %v1999 = vpack.c.b16 %v1976, %v1975
  %v2000 = vpack.c.b16 %v1978, %v1977
  %v2001 = vpack.c.b16 %v1980, %v1979
  %v2002 = vpack.c.b16 %v1982, %v1981
  %vm2023 = vcmask 523264
  %v2025 = vsel %vm2023, %v1895, 0
  %2027 = vmatprep.subr.bf16.mxu0 0
  %2028 = vmatpush1.bf16.msra.mxu0 %v1983
  %2029 = vmatprep.subr.bf16.mxu0 0
  %2030 = vmatpush1.bf16.msra.mxu0 %v1984
  %2031 = vmatprep.subr.bf16.mxu0 0
  %2032 = vmatpush1.bf16.msra.mxu0 %v1985
  %2033 = vmatprep.subr.bf16.mxu0 0
  %2034 = vmatpush1.bf16.msra.mxu0 %v1986
  %2035 = vmatprep.subr.bf16.mxu0 0
  %2036 = vmatpush1.bf16.msra.mxu0 %v1987
  %2037 = vmatprep.subr.bf16.mxu0 0
  %2038 = vmatpush1.bf16.msra.mxu0 %v1988
  %2039 = vmatprep.subr.bf16.mxu0 0
  %2040 = vmatpush1.bf16.msra.mxu0 %v1989
  %2041 = vmatprep.subr.bf16.mxu0 0
  %2042 = vmatpush1.bf16.msra.mxu0 %v1990
  %2043 = vmatprep.subr.bf16.mxu0 0
  %2044 = vmatpush1.bf16.msra.mxu0 %v1991
  %2045 = vmatprep.subr.bf16.mxu0 0
  %2046 = vmatpush1.bf16.msra.mxu0 %v1992
  %2047 = vmatprep.subr.bf16.mxu0 0
  %2048 = vmatpush1.bf16.msra.mxu0 %v1993
  %2049 = vmatprep.subr.bf16.mxu0 0
  %2050 = vmatpush1.bf16.msra.mxu0 %v1994
  %2051 = vmatprep.subr.bf16.mxu0 0
  %2052 = vmatpush1.bf16.msra.mxu0 %v1995
  %2053 = vmatprep.subr.bf16.mxu0 0
  %2054 = vmatpush1.bf16.msra.mxu0 %v1996
  %2055 = vmatprep.subr.bf16.mxu0 0
  %2056 = vmatpush1.bf16.msra.mxu0 %v1997
  %2057 = vmatprep.subr.bf16.mxu0 0
  %2058 = vmatpush1.bf16.msra.mxu0 %v1998
  %2059 = vmatprep.mubr.bf16.mxu0 %v1894
  %2060 = vmatmul.mubr.bf16.gmra.mrb[0].mxu0 %v1893
  %v2061 = vpop.f32.mrb[0].mxu0
  %v2062 = vadd.f32 %v1901, %v2061
  %v2063 = vpop.f32.mrb[0].mxu0
  %v2064 = vpop.f32.mrb[0].mxu0
  %v2065 = vpop.f32.mrb[0].mxu0
  %2066 = vdwg.mxu0
  %2067 = vmatprep.subr.bf16.mxu0 0
  %2068 = vmatpush1.bf16.msra.mxu0 %v1999
  %2069 = vmatprep.subr.bf16.mxu0 0
  %2070 = vmatpush1.bf16.msra.mxu0 %v2000
  %2071 = vmatprep.subr.bf16.mxu0 0
  %2072 = vmatpush1.bf16.msra.mxu0 %v2001
  %2073 = vmatprep.subr.bf16.mxu0 0
  %2074 = vmatpush1.bf16.msra.mxu0 %v2002
  %2075 = vmatprep.subr.bf16.mxu0 0
  %2076 = vmatpush1.bf16.msra.mxu0 0
  %2077 = vmatprep.subr.bf16.mxu0 0
  %2078 = vmatpush1.bf16.msra.mxu0 0
  %2079 = vmatprep.subr.bf16.mxu0 0
  %2080 = vmatpush1.bf16.msra.mxu0 0
  %2081 = vmatprep.subr.bf16.mxu0 0
  %2082 = vmatpush1.bf16.msra.mxu0 0
  %2083 = vmatprep.subr.bf16.mxu0 0
  %2084 = vmatpush1.bf16.msra.mxu0 0
  %2085 = vmatprep.subr.bf16.mxu0 0
  %2086 = vmatpush1.bf16.msra.mxu0 0
  %2087 = vmatprep.subr.bf16.mxu0 0
  %2088 = vmatpush1.bf16.msra.mxu0 0
  %2089 = vmatprep.subr.bf16.mxu0 0
  %2090 = vmatpush1.bf16.msra.mxu0 0
  %2091 = vmatprep.subr.bf16.mxu0 0
  %2092 = vmatpush1.bf16.msra.mxu0 0
  %2093 = vmatprep.subr.bf16.mxu0 0
  %2094 = vmatpush1.bf16.msra.mxu0 0
  %2095 = vmatprep.subr.bf16.mxu0 0
  %2096 = vmatpush1.bf16.msra.mxu0 0
  %2097 = vmatprep.subr.bf16.mxu0 0
  %2098 = vmatpush1.bf16.msra.mxu0 0
  %2099 = vmatprep.mubr.bf16.mxu0 0
  %2100 = vmatmul.mubr.bf16.gmra.mrb[0].mxu0 %v2025
  %v2101 = vpop.f32.mrb[0].mxu0
  %v2102 = vadd.f32 %v2062, %v2101
  %v2103 = vpop.f32.mrb[0].mxu0
  %v2104 = vpop.f32.mrb[0].mxu0
  %v2105 = vpop.f32.mrb[0].mxu0
  %2106 = vdwg.mxu0
  %v2107 = vld [vmem:[%s33] sm:$0xff]
  %v2108 = vld [vmem:[%s33 + $0x8] sm:$0xff]
  %v2109 = vld [vmem:[%s35] sm:$0xff]
  %v2110 = vld [vmem:[%s35 + $0x8] sm:$0xff]
  %vm2111 = vcmask 15360
  %v2113 = vsel %vm2111, %v2107, 0
  %v2116 = vsel %vm2111, %v2108, 0
  %vm2118 = vcmask 1041408
  %v2120 = vsel %vm2118, %v2102, 0
  %2122 = vmatprep.subr.mxu0 0.0
  %2123 = vmatpush1.msra.mxu0 %v2120
  %2124 = vmatprep.subr.mxu0 0.0
  %2125 = vmatpush1.msra.mxu0 0.0
  %2126 = vmatprep.subr.mxu0 0.0
  %2127 = vmatpush1.msra.mxu0 0.0
  %2128 = vmatprep.subr.mxu0 0.0
  %2129 = vmatpush1.msra.mxu0 0.0
  %2130 = vmatprep.subr.mxu0 0.0
  %2131 = vmatpush1.msra.mxu0 0.0
  %2132 = vmatprep.subr.mxu0 0.0
  %2133 = vmatpush1.msra.mxu0 0.0
  %2134 = vmatprep.subr.mxu0 0.0
  %2135 = vmatpush1.msra.mxu0 0.0
  %2136 = vmatprep.subr.mxu0 0.0
  %2137 = vmatpush1.msra.mxu0 0.0
  %2138 = vmatprep.subr.mxu0 0.0
  %2139 = vmatpush1.msra.mxu0 0.0
  %2140 = vmatprep.subr.mxu0 0.0
  %2141 = vmatpush1.msra.mxu0 0.0
  %2142 = vmatprep.subr.mxu0 0.0
  %2143 = vmatpush1.msra.mxu0 0.0
  %2144 = vmatprep.subr.mxu0 0.0
  %2145 = vmatpush1.msra.mxu0 0.0
  %2146 = vmatprep.subr.mxu0 0.0
  %2147 = vmatpush1.msra.mxu0 0.0
  %2148 = vmatprep.subr.mxu0 0.0
  %2149 = vmatpush1.msra.mxu0 0.0
  %2150 = vmatprep.subr.mxu0 0.0
  %2151 = vmatpush1.msra.mxu0 0.0
  %2152 = vmatprep.subr.mxu0 0.0
  %2153 = vmatpush1.msra.mxu0 0.0
  %2154 = vmatprep.subr.mxu0 0.0
  %2155 = vmatpush1.msra.mxu0 0.0
  %2156 = vmatprep.subr.mxu0 0.0
  %2157 = vmatpush1.msra.mxu0 0.0
  %2158 = vmatprep.subr.mxu0 0.0
  %2159 = vmatpush1.msra.mxu0 0.0
  %2160 = vmatprep.subr.mxu0 0.0
  %2161 = vmatpush1.msra.mxu0 0.0
  %2162 = vmatprep.subr.mxu0 0.0
  %2163 = vmatpush1.msra.mxu0 0.0
  %2164 = vmatprep.subr.mxu0 0.0
  %2165 = vmatpush1.msra.mxu0 0.0
  %2166 = vmatprep.subr.mxu0 0.0
  %2167 = vmatpush1.msra.mxu0 0.0
  %2168 = vmatprep.subr.mxu0 0.0
  %2169 = vmatpush1.msra.mxu0 0.0
  %2170 = vmatprep.subr.mxu0 0.0
  %2171 = vmatpush1.msra.mxu0 0.0
  %2172 = vmatprep.subr.mxu0 0.0
  %2173 = vmatpush1.msra.mxu0 0.0
  %2174 = vmatprep.subr.mxu0 0.0
  %2175 = vmatpush1.msra.mxu0 0.0
  %2176 = vmatprep.subr.mxu0 0.0
  %2177 = vmatpush1.msra.mxu0 0.0
  %2178 = vmatprep.subr.mxu0 0.0
  %2179 = vmatpush1.msra.mxu0 0.0
  %2180 = vmatprep.subr.mxu0 0.0
  %2181 = vmatpush1.msra.mxu0 0.0
  %2182 = vmatprep.subr.mxu0 0.0
  %2183 = vmatpush1.msra.mxu0 0.0
  %2184 = vmatprep.subr.mxu0 0.0
  %2185 = vmatpush1.msra.mxu0 0.0
  %2186 = vmatprep.mubr.f32.mxu0 0.0
  %2187 = vmatmul.mubr.f32.gmra.mrb[0].mxu0 %v2113
  %v2188 = vpop.f32.mrb[0].mxu0
  %v2189 = vadd.f32 %v2109, %v2188
  %v2190 = vpop.f32.mrb[0].mxu0
  %2191 = vmatprep.mubr.f32.mxu0 0.0
  %2192 = vmatmul.mubr.f32.gmra.mrb[0].mxu0 %v2116
  %v2193 = vpop.f32.mrb[0].mxu0
  %v2194 = vadd.f32 %v2110, %v2193
  %v2195 = vpop.f32.mrb[0].mxu0
  %2196 = vdwg.mxu0
  %v2197 = vld [vmem:[%s37] sm:$0x1]
  %v2198 = vld [vmem:[%s39] sm:$0x1]
  %v2199 = vsel %vm2023, %v2189, 0.0
  %2200 = vadd.xlane.f32.xlu0 %v2199
  %v2201 = vpop.xlane.xlu0 %2200
  %v2202 = vsel %vm2023, %v2194, 0.0
  %2203 = vadd.xlane.f32.xlu0 %v2202
  %v2204 = vpop.xlane.xlu0 %2203
  %v2205 = vrcp.pop 64.0
  %v2206 = vmul.f32 %v2201, %v2205
  %v2207 = vmul.f32 %v2204, %v2205
  %v2208 = vsub.f32 %v2189, %v2206
  %v2209 = vsub.f32 %v2194, %v2207
  %v2210 = vmul.f32 %v2208, %v2208
  %v2211 = vmul.f32 %v2209, %v2209
  %v2212 = vsel %vm2023, %v2210, 0.0
  %2213 = vadd.xlane.f32.xlu0 %v2212
  %v2214 = vpop.xlane.xlu0 %2213
  %v2215 = vsel %vm2023, %v2211, 0.0
  %2216 = vadd.xlane.f32.xlu0 %v2215
  %v2217 = vpop.xlane.xlu0 %2216
  %v2218 = vmul.f32 %v2214, %v2205
  %v2219 = vmul.f32 %v2217, %v2205
  %v2220 = vadd.f32 %v2218, 1e-05
  %v2221 = vadd.f32 %v2219, 1e-05
  %v2222 = vrsqrt.pop %v2220
  %v2223 = vrsqrt.pop %v2221
  %v2224 = vmul.f32 %v2208, %v2222
  %v2225 = vmul.f32 %v2209, %v2223
  %v2227 = vlaneseq
  %v2228 = vshrl.u32 %v2227, 7
  %v2229 = vsub.s32 0, %v2228
  %v2230 = vrot.slane %v2197, %v2229
  %v2232 = vmul.f32 %v2224, %v2230
  %v2233 = vmul.f32 %v2225, %v2230
  %v2235 = vlaneseq
  %v2236 = vshrl.u32 %v2235, 7
  %v2237 = vsub.s32 0, %v2236
  %v2238 = vrot.slane %v2198, %v2237
  %v2240 = vadd.f32 %v2232, %v2238
  %v2241 = vadd.f32 %v2233, %v2238
  %v2242 = vpack.c.bf16 %v2241, %v2240
  %v2243 = vld [vmem:[%s59] sm:$0xff]
  %v2244 = vld [vmem:[%s59 + $0x8] sm:$0xff]
  %v2245 = vld [vmem:[%s57] sm:$0x1]
  %v2247 = vlaneseq
  %v2248 = vshrl.u32 %v2247, 7
  %v2249 = vsub.s32 0, %v2248
  %v2250 = vrot.slane %v2245, %v2249
  %v2252 = vadd.f32 %v2250, 0.0
  %v2253 = vld [vmem:[%s41] sm:$0xf]
  %v2254 = vld [vmem:[%s41 + $0x4] sm:$0xf]
  %v2255 = vld [vmem:[%s41 + $0x8] sm:$0xf]
  %v2256 = vld [vmem:[%s41 + $0xc] sm:$0xf]
  %v2257 = vld [vmem:[%s41 + $0x10] sm:$0xf]
  %v2258 = vld [vmem:[%s41 + $0x14] sm:$0xf]
  %v2259 = vld [vmem:[%s41 + $0x18] sm:$0xf]
  %v2260 = vld [vmem:[%s41 + $0x1c] sm:$0xf]
  %v2269 = vunpack.c.l.b16 %v2253
  %v2270 = vunpack.c.l.b16 %v2254
  %v2271 = vunpack.c.l.b16 %v2255
  %v2272 = vunpack.c.l.b16 %v2256
  %v2273 = vunpack.c.l.b16 %v2257
  %v2274 = vunpack.c.l.b16 %v2258
  %v2275 = vunpack.c.l.b16 %v2259
  %v2276 = vunpack.c.l.b16 %v2260
  %v2277 = vpack.c.b16 %v2270, %v2269
  %v2278 = vpack.c.b16 %v2272, %v2271
  %v2279 = vpack.c.b16 %v2274, %v2273
  %v2280 = vpack.c.b16 %v2276, %v2275
  %v2286 = vsel %vm2023, %v2242, 0
  %2288 = vmatprep.subr.bf16.mxu0 0
  %2289 = vmatpush1.bf16.msra.mxu0 %v2277
  %2290 = vmatprep.subr.bf16.mxu0 0
  %2291 = vmatpush1.bf16.msra.mxu0 %v2278
  %2292 = vmatprep.subr.bf16.mxu0 0
  %2293 = vmatpush1.bf16.msra.mxu0 %v2279
  %2294 = vmatprep.subr.bf16.mxu0 0
  %2295 = vmatpush1.bf16.msra.mxu0 %v2280
  %2296 = vmatprep.subr.bf16.mxu0 0
  %2297 = vmatpush1.bf16.msra.mxu0 0
  %2298 = vmatprep.subr.bf16.mxu0 0
  %2299 = vmatpush1.bf16.msra.mxu0 0
  %2300 = vmatprep.subr.bf16.mxu0 0
  %2301 = vmatpush1.bf16.msra.mxu0 0
  %2302 = vmatprep.subr.bf16.mxu0 0
  %2303 = vmatpush1.bf16.msra.mxu0 0
  %2304 = vmatprep.subr.bf16.mxu0 0
  %2305 = vmatpush1.bf16.msra.mxu0 0
  %2306 = vmatprep.subr.bf16.mxu0 0
  %2307 = vmatpush1.bf16.msra.mxu0 0
  %2308 = vmatprep.subr.bf16.mxu0 0
  %2309 = vmatpush1.bf16.msra.mxu0 0
  %2310 = vmatprep.subr.bf16.mxu0 0
  %2311 = vmatpush1.bf16.msra.mxu0 0
  %2312 = vmatprep.subr.bf16.mxu0 0
  %2313 = vmatpush1.bf16.msra.mxu0 0
  %2314 = vmatprep.subr.bf16.mxu0 0
  %2315 = vmatpush1.bf16.msra.mxu0 0
  %2316 = vmatprep.subr.bf16.mxu0 0
  %2317 = vmatpush1.bf16.msra.mxu0 0
  %2318 = vmatprep.subr.bf16.mxu0 0
  %2319 = vmatpush1.bf16.msra.mxu0 0
  %2320 = vmatprep.mubr.bf16.mxu0 0
  %2321 = vmatmul.mubr.bf16.gmra.mrb[0].mxu0 %v2286
  %v2322 = vpop.f32.mrb[0].mxu0
  %v2323 = vadd.f32 0.0, %v2322
  %v2324 = vpop.f32.mrb[0].mxu0
  %v2325 = vpop.f32.mrb[0].mxu0
  %v2326 = vadd.f32 0.0, %v2325
  %v2327 = vpop.f32.mrb[0].mxu0
  %2328 = vdwg.mxu0
  %v2329 = vld [vmem:[%s43] sm:$0xf]
  %v2330 = vld [vmem:[%s43 + $0x4] sm:$0xf]
  %v2331 = vld [vmem:[%s43 + $0x8] sm:$0xf]
  %v2332 = vld [vmem:[%s43 + $0xc] sm:$0xf]
  %v2333 = vld [vmem:[%s43 + $0x10] sm:$0xf]
  %v2334 = vld [vmem:[%s43 + $0x14] sm:$0xf]
  %v2335 = vld [vmem:[%s43 + $0x18] sm:$0xf]
  %v2336 = vld [vmem:[%s43 + $0x1c] sm:$0xf]
  %v2345 = vunpack.c.l.b16 %v2329
  %v2346 = vunpack.c.l.b16 %v2330
  %v2347 = vunpack.c.l.b16 %v2331
  %v2348 = vunpack.c.l.b16 %v2332
  %v2349 = vunpack.c.l.b16 %v2333
  %v2350 = vunpack.c.l.b16 %v2334
  %v2351 = vunpack.c.l.b16 %v2335
  %v2352 = vunpack.c.l.b16 %v2336
  %v2353 = vpack.c.b16 %v2346, %v2345
  %v2354 = vpack.c.b16 %v2348, %v2347
  %v2355 = vpack.c.b16 %v2350, %v2349
  %v2356 = vpack.c.b16 %v2352, %v2351
  %2361 = vmatprep.subr.bf16.mxu0 0
  %2362 = vmatpush1.bf16.msra.mxu0 %v2353
  %2363 = vmatprep.subr.bf16.mxu0 0
  %2364 = vmatpush1.bf16.msra.mxu0 %v2354
  %2365 = vmatprep.subr.bf16.mxu0 0
  %2366 = vmatpush1.bf16.msra.mxu0 %v2355
  %2367 = vmatprep.subr.bf16.mxu0 0
  %2368 = vmatpush1.bf16.msra.mxu0 %v2356
  %2369 = vmatprep.subr.bf16.mxu0 0
  %2370 = vmatpush1.bf16.msra.mxu0 0
  %2371 = vmatprep.subr.bf16.mxu0 0
  %2372 = vmatpush1.bf16.msra.mxu0 0
  %2373 = vmatprep.subr.bf16.mxu0 0
  %2374 = vmatpush1.bf16.msra.mxu0 0
  %2375 = vmatprep.subr.bf16.mxu0 0
  %2376 = vmatpush1.bf16.msra.mxu0 0
  %2377 = vmatprep.subr.bf16.mxu0 0
  %2378 = vmatpush1.bf16.msra.mxu0 0
  %2379 = vmatprep.subr.bf16.mxu0 0
  %2380 = vmatpush1.bf16.msra.mxu0 0
  %2381 = vmatprep.subr.bf16.mxu0 0
  %2382 = vmatpush1.bf16.msra.mxu0 0
  %2383 = vmatprep.subr.bf16.mxu0 0
  %2384 = vmatpush1.bf16.msra.mxu0 0
  %2385 = vmatprep.subr.bf16.mxu0 0
  %2386 = vmatpush1.bf16.msra.mxu0 0
  %2387 = vmatprep.subr.bf16.mxu0 0
  %2388 = vmatpush1.bf16.msra.mxu0 0
  %2389 = vmatprep.subr.bf16.mxu0 0
  %2390 = vmatpush1.bf16.msra.mxu0 0
  %2391 = vmatprep.subr.bf16.mxu0 0
  %2392 = vmatpush1.bf16.msra.mxu0 0
  %2393 = vmatprep.mubr.bf16.mxu0 0
  %2394 = vmatmul.mubr.bf16.gmra.mrb[0].mxu0 %v2286
  %v2395 = vpop.f32.mrb[0].mxu0
  %v2396 = vadd.f32 0.0, %v2395
  %v2397 = vpop.f32.mrb[0].mxu0
  %v2398 = vpop.f32.mrb[0].mxu0
  %v2399 = vadd.f32 0.0, %v2398
  %v2400 = vpop.f32.mrb[0].mxu0
  %2401 = vdwg.mxu0
  %v2402 = vld [vmem:[%s45] sm:$0xf]
  %v2403 = vld [vmem:[%s45 + $0x4] sm:$0xf]
  %v2404 = vld [vmem:[%s45 + $0x8] sm:$0xf]
  %v2405 = vld [vmem:[%s45 + $0xc] sm:$0xf]
  %v2406 = vld [vmem:[%s45 + $0x10] sm:$0xf]
  %v2407 = vld [vmem:[%s45 + $0x14] sm:$0xf]
  %v2408 = vld [vmem:[%s45 + $0x18] sm:$0xf]
  %v2409 = vld [vmem:[%s45 + $0x1c] sm:$0xf]
  %v2418 = vunpack.c.l.b16 %v2402
  %v2419 = vunpack.c.l.b16 %v2403
  %v2420 = vunpack.c.l.b16 %v2404
  %v2421 = vunpack.c.l.b16 %v2405
  %v2422 = vunpack.c.l.b16 %v2406
  %v2423 = vunpack.c.l.b16 %v2407
  %v2424 = vunpack.c.l.b16 %v2408
  %v2425 = vunpack.c.l.b16 %v2409
  %v2426 = vpack.c.b16 %v2419, %v2418
  %v2427 = vpack.c.b16 %v2421, %v2420
  %v2428 = vpack.c.b16 %v2423, %v2422
  %v2429 = vpack.c.b16 %v2425, %v2424
  %2434 = vmatprep.subr.bf16.mxu0 0
  %2435 = vmatpush1.bf16.msra.mxu0 %v2426
  %2436 = vmatprep.subr.bf16.mxu0 0
  %2437 = vmatpush1.bf16.msra.mxu0 %v2427
  %2438 = vmatprep.subr.bf16.mxu0 0
  %2439 = vmatpush1.bf16.msra.mxu0 %v2428
  %2440 = vmatprep.subr.bf16.mxu0 0
  %2441 = vmatpush1.bf16.msra.mxu0 %v2429
  %2442 = vmatprep.subr.bf16.mxu0 0
  %2443 = vmatpush1.bf16.msra.mxu0 0
  %2444 = vmatprep.subr.bf16.mxu0 0
  %2445 = vmatpush1.bf16.msra.mxu0 0
  %2446 = vmatprep.subr.bf16.mxu0 0
  %2447 = vmatpush1.bf16.msra.mxu0 0
  %2448 = vmatprep.subr.bf16.mxu0 0
  %2449 = vmatpush1.bf16.msra.mxu0 0
  %2450 = vmatprep.subr.bf16.mxu0 0
  %2451 = vmatpush1.bf16.msra.mxu0 0
  %2452 = vmatprep.subr.bf16.mxu0 0
  %2453 = vmatpush1.bf16.msra.mxu0 0
  %2454 = vmatprep.subr.bf16.mxu0 0
  %2455 = vmatpush1.bf16.msra.mxu0 0
  %2456 = vmatprep.subr.bf16.mxu0 0
  %2457 = vmatpush1.bf16.msra.mxu0 0
  %2458 = vmatprep.subr.bf16.mxu0 0
  %2459 = vmatpush1.bf16.msra.mxu0 0
  %2460 = vmatprep.subr.bf16.mxu0 0
  %2461 = vmatpush1.bf16.msra.mxu0 0
  %2462 = vmatprep.subr.bf16.mxu0 0
  %2463 = vmatpush1.bf16.msra.mxu0 0
  %2464 = vmatprep.subr.bf16.mxu0 0
  %2465 = vmatpush1.bf16.msra.mxu0 0
  %2466 = vmatprep.mubr.bf16.mxu0 0
  %2467 = vmatmul.mubr.bf16.gmra.mrb[0].mxu0 %v2286
  %v2468 = vpop.f32.mrb[0].mxu0
  %v2469 = vadd.f32 0.0, %v2468
  %v2470 = vpop.f32.mrb[0].mxu0
  %v2471 = vpop.f32.mrb[0].mxu0
  %v2472 = vadd.f32 0.0, %v2471
  %v2473 = vpop.f32.mrb[0].mxu0
  %2474 = vdwg.mxu0
  %v2475 = vpack.c.bf16 %v2326, %v2323
  %v2476 = vpack.c.bf16 %v2399, %v2396
  %v2478 = vsel %vm1708, %v2475, 0
  %v2481 = vsel %vm1708, %v2476, 0
  %2483 = vmatprep.subr.bf16.mxu0 0
  %2484 = vmatpush1.bf16.xpose.msra.mxu0 %v2481
  %2485 = vmatprep.subr.bf16.mxu0 0
  %2486 = vmatpush1.bf16.xpose.msra.mxu0 0
  %2487 = vmatprep.subr.bf16.mxu0 0
  %2488 = vmatpush1.bf16.xpose.msra.mxu0 0
  %2489 = vmatprep.subr.bf16.mxu0 0
  %2490 = vmatpush1.bf16.xpose.msra.mxu0 0
  %2491 = vmatprep.subr.bf16.mxu0 0
  %2492 = vmatpush1.bf16.xpose.msra.mxu0 0
  %2493 = vmatprep.subr.bf16.mxu0 0
  %2494 = vmatpush1.bf16.xpose.msra.mxu0 0
  %2495 = vmatprep.subr.bf16.mxu0 0
  %2496 = vmatpush1.bf16.xpose.msra.mxu0 0
  %2497 = vmatprep.subr.bf16.mxu0 0
  %2498 = vmatpush1.bf16.xpose.msra.mxu0 0
  %2499 = vmatprep.subr.bf16.mxu0 0
  %2500 = vmatpush1.bf16.xpose.msra.mxu0 0
  %2501 = vmatprep.subr.bf16.mxu0 0
  %2502 = vmatpush1.bf16.xpose.msra.mxu0 0
  %2503 = vmatprep.subr.bf16.mxu0 0
  %2504 = vmatpush1.bf16.xpose.msra.mxu0 0
  %2505 = vmatprep.subr.bf16.mxu0 0
  %2506 = vmatpush1.bf16.xpose.msra.mxu0 0
  %2507 = vmatprep.subr.bf16.mxu0 0
  %2508 = vmatpush1.bf16.xpose.msra.mxu0 0
  %2509 = vmatprep.subr.bf16.mxu0 0
  %2510 = vmatpush1.bf16.xpose.msra.mxu0 0
  %2511 = vmatprep.subr.bf16.mxu0 0
  %2512 = vmatpush1.bf16.xpose.msra.mxu0 0
  %2513 = vmatprep.subr.bf16.mxu0 0
  %2514 = vmatpush1.bf16.xpose.msra.mxu0 0
  %2515 = vmatprep.mubr.bf16.mxu0 0
  %2516 = vmatmul.mubr.bf16.gmra.mrb[0].mxu0 %v2478
  %v2517 = vpop.f32.mrb[0].mxu0
  %v2518 = vadd.f32 0.0, %v2517
  %v2519 = vpop.f32.mrb[0].mxu0
  %v2520 = vpop.f32.mrb[0].mxu0
  %v2521 = vadd.f32 0.0, %v2520
  %v2522 = vpop.f32.mrb[0].mxu0
  %2523 = vdwg.mxu0
  %v2524 = vmul.f32 %v2518, 0.17677669
  %v2525 = vmul.f32 %v2521, 0.17677669
  %v2526 = vadd.f32 %v2524, %v2243
  %v2527 = vadd.f32 %v2525, %v2244
  %vm2528 = vcmask 130048
  %v2529 = vsel %vm2528, %v2526, -inf
  %2530 = vmax.xlane.f32.xlu0 %v2529
  %v2531 = vpop.xlane.xlu0 %2530
  %v2532 = vsel %vm2528, %v2527, -inf
  %2533 = vmax.xlane.f32.xlu0 %v2532
  %v2534 = vpop.xlane.xlu0 %2533
  %v2535 = vsub.f32 %v2526, %v2531
  %v2536 = vsub.f32 %v2527, %v2534
  %v2537 = vmul.f32 %v2535, 1.442695
  %v2538 = vpow.pop %v2537
  %v2539 = vmul.f32 %v2536, 1.442695
  %v2540 = vpow.pop %v2539
  %v2541 = vsel %vm2528, %v2538, 0.0
  %2542 = vadd.xlane.f32.xlu0 %v2541
  %v2543 = vpop.xlane.xlu0 %2542
  %v2544 = vsel %vm2528, %v2540, 0.0
  %2545 = vadd.xlane.f32.xlu0 %v2544
  %v2546 = vpop.xlane.xlu0 %2545
  %v2547 = vrcp.pop %v2543
  %v2548 = vrcp.pop %v2546
  %v2549 = vmul.f32 %v2538, %v2547
  %v2550 = vmul.f32 %v2540, %v2548
  %v2551 = vpack.c.bf16 %v2550, %v2549
  %v2552 = vpack.c.bf16 %v2472, %v2469
  %v2554 = vsel %vm2528, %v2551, 0
  %2556 = vmatprep.subr.bf16.mxu0 0
  %2557 = vmatpush1.bf16.msra.mxu0 %v2552
  %2558 = vmatprep.subr.bf16.mxu0 0
  %2559 = vmatpush1.bf16.msra.mxu0 0
  %2560 = vmatprep.subr.bf16.mxu0 0
  %2561 = vmatpush1.bf16.msra.mxu0 0
  %2562 = vmatprep.subr.bf16.mxu0 0
  %2563 = vmatpush1.bf16.msra.mxu0 0
  %2564 = vmatprep.subr.bf16.mxu0 0
  %2565 = vmatpush1.bf16.msra.mxu0 0
  %2566 = vmatprep.subr.bf16.mxu0 0
  %2567 = vmatpush1.bf16.msra.mxu0 0
  %2568 = vmatprep.subr.bf16.mxu0 0
  %2569 = vmatpush1.bf16.msra.mxu0 0
  %2570 = vmatprep.subr.bf16.mxu0 0
  %2571 = vmatpush1.bf16.msra.mxu0 0
  %2572 = vmatprep.subr.bf16.mxu0 0
  %2573 = vmatpush1.bf16.msra.mxu0 0
  %2574 = vmatprep.subr.bf16.mxu0 0
  %2575 = vmatpush1.bf16.msra.mxu0 0
  %2576 = vmatprep.subr.bf16.mxu0 0
  %2577 = vmatpush1.bf16.msra.mxu0 0
  %2578 = vmatprep.subr.bf16.mxu0 0
  %2579 = vmatpush1.bf16.msra.mxu0 0
  %2580 = vmatprep.subr.bf16.mxu0 0
  %2581 = vmatpush1.bf16.msra.mxu0 0
  %2582 = vmatprep.subr.bf16.mxu0 0
  %2583 = vmatpush1.bf16.msra.mxu0 0
  %2584 = vmatprep.subr.bf16.mxu0 0
  %2585 = vmatpush1.bf16.msra.mxu0 0
  %2586 = vmatprep.subr.bf16.mxu0 0
  %2587 = vmatpush1.bf16.msra.mxu0 0
  %2588 = vmatprep.mubr.bf16.mxu0 0
  %2589 = vmatmul.mubr.bf16.gmra.mrb[0].mxu0 %v2554
  %v2590 = vpop.f32.mrb[0].mxu0
  %v2591 = vadd.f32 0.0, %v2590
  %v2592 = vpop.f32.mrb[0].mxu0
  %v2593 = vpop.f32.mrb[0].mxu0
  %v2594 = vadd.f32 0.0, %v2593
  %v2595 = vpop.f32.mrb[0].mxu0
  %2596 = vdwg.mxu0
  %v2597 = vpack.c.bf16 %v2594, %v2591
  %v2598 = vld [vmem:[%s47] sm:$0xf]
  %v2599 = vld [vmem:[%s47 + $0x4] sm:$0xf]
  %v2600 = vld [vmem:[%s47 + $0x8] sm:$0xf]
  %v2601 = vld [vmem:[%s47 + $0xc] sm:$0xf]
  %v2606 = vunpack.c.l.b16 %v2598
  %v2607 = vunpack.c.l.b16 %v2599
  %v2608 = vunpack.c.l.b16 %v2600
  %v2609 = vunpack.c.l.b16 %v2601
  %v2610 = vpack.c.b16 %v2607, %v2606
  %v2611 = vpack.c.b16 %v2609, %v2608
  %v2615 = vsel %vm1708, %v2597, 0
  %2617 = vmatprep.subr.bf16.mxu0 0
  %2618 = vmatpush1.bf16.msra.mxu0 %v2610
  %2619 = vmatprep.subr.bf16.mxu0 0
  %2620 = vmatpush1.bf16.msra.mxu0 %v2611
  %2621 = vmatprep.subr.bf16.mxu0 0
  %2622 = vmatpush1.bf16.msra.mxu0 0
  %2623 = vmatprep.subr.bf16.mxu0 0
  %2624 = vmatpush1.bf16.msra.mxu0 0
  %2625 = vmatprep.subr.bf16.mxu0 0
  %2626 = vmatpush1.bf16.msra.mxu0 0
  %2627 = vmatprep.subr.bf16.mxu0 0
  %2628 = vmatpush1.bf16.msra.mxu0 0
  %2629 = vmatprep.subr.bf16.mxu0 0
  %2630 = vmatpush1.bf16.msra.mxu0 0
  %2631 = vmatprep.subr.bf16.mxu0 0
  %2632 = vmatpush1.bf16.msra.mxu0 0
  %2633 = vmatprep.subr.bf16.mxu0 0
  %2634 = vmatpush1.bf16.msra.mxu0 0
  %2635 = vmatprep.subr.bf16.mxu0 0
  %2636 = vmatpush1.bf16.msra.mxu0 0
  %2637 = vmatprep.subr.bf16.mxu0 0
  %2638 = vmatpush1.bf16.msra.mxu0 0
  %2639 = vmatprep.subr.bf16.mxu0 0
  %2640 = vmatpush1.bf16.msra.mxu0 0
  %2641 = vmatprep.subr.bf16.mxu0 0
  %2642 = vmatpush1.bf16.msra.mxu0 0
  %2643 = vmatprep.subr.bf16.mxu0 0
  %2644 = vmatpush1.bf16.msra.mxu0 0
  %2645 = vmatprep.subr.bf16.mxu0 0
  %2646 = vmatpush1.bf16.msra.mxu0 0
  %2647 = vmatprep.subr.bf16.mxu0 0
  %2648 = vmatpush1.bf16.msra.mxu0 0
  %2649 = vmatprep.mubr.bf16.mxu0 0
  %2650 = vmatmul.mubr.bf16.gmra.mrb[0].mxu0 %v2615
  %v2651 = vpop.f32.mrb[0].mxu0
  %v2652 = vadd.f32 0.0, %v2651
  %v2653 = vpop.f32.mrb[0].mxu0
  %v2654 = vpop.f32.mrb[0].mxu0
  %v2655 = vadd.f32 0.0, %v2654
  %v2656 = vpop.f32.mrb[0].mxu0
  %2657 = vdwg.mxu0
  %v2658 = vadd.f32 %v2252, %v2652
  %v2659 = vadd.f32 %v2252, %v2655
  %v2660 = vld [vmem:[%s49] sm:$0xf]
  %v2661 = vld [vmem:[%s49 + $0x4] sm:$0xf]
  %v2662 = vld [vmem:[%s49 + $0x8] sm:$0xf]
  %v2663 = vld [vmem:[%s49 + $0xc] sm:$0xf]
  %v2664 = vld [vmem:[%s49 + $0x10] sm:$0xf]
  %v2665 = vld [vmem:[%s49 + $0x14] sm:$0xf]
  %v2666 = vld [vmem:[%s49 + $0x18] sm:$0xf]
  %v2667 = vld [vmem:[%s49 + $0x1c] sm:$0xf]
  %v2676 = vunpack.c.l.b16 %v2660
  %v2677 = vunpack.c.l.b16 %v2661
  %v2678 = vunpack.c.l.b16 %v2662
  %v2679 = vunpack.c.l.b16 %v2663
  %v2680 = vunpack.c.l.b16 %v2664
  %v2681 = vunpack.c.l.b16 %v2665
  %v2682 = vunpack.c.l.b16 %v2666
  %v2683 = vunpack.c.l.b16 %v2667
  %v2684 = vpack.c.b16 %v2677, %v2676
  %v2685 = vpack.c.b16 %v2679, %v2678
  %v2686 = vpack.c.b16 %v2681, %v2680
  %v2687 = vpack.c.b16 %v2683, %v2682
  %2692 = vmatprep.subr.bf16.mxu0 0
  %2693 = vmatpush1.bf16.msra.mxu0 %v2684
  %2694 = vmatprep.subr.bf16.mxu0 0
  %2695 = vmatpush1.bf16.msra.mxu0 %v2685
  %2696 = vmatprep.subr.bf16.mxu0 0
  %2697 = vmatpush1.bf16.msra.mxu0 %v2686
  %2698 = vmatprep.subr.bf16.mxu0 0
  %2699 = vmatpush1.bf16.msra.mxu0 %v2687
  %2700 = vmatprep.subr.bf16.mxu0 0
  %2701 = vmatpush1.bf16.msra.mxu0 0
  %2702 = vmatprep.subr.bf16.mxu0 0
  %2703 = vmatpush1.bf16.msra.mxu0 0
  %2704 = vmatprep.subr.bf16.mxu0 0
  %2705 = vmatpush1.bf16.msra.mxu0 0
  %2706 = vmatprep.subr.bf16.mxu0 0
  %2707 = vmatpush1.bf16.msra.mxu0 0
  %2708 = vmatprep.subr.bf16.mxu0 0
  %2709 = vmatpush1.bf16.msra.mxu0 0
  %2710 = vmatprep.subr.bf16.mxu0 0
  %2711 = vmatpush1.bf16.msra.mxu0 0
  %2712 = vmatprep.subr.bf16.mxu0 0
  %2713 = vmatpush1.bf16.msra.mxu0 0
  %2714 = vmatprep.subr.bf16.mxu0 0
  %2715 = vmatpush1.bf16.msra.mxu0 0
  %2716 = vmatprep.subr.bf16.mxu0 0
  %2717 = vmatpush1.bf16.msra.mxu0 0
  %2718 = vmatprep.subr.bf16.mxu0 0
  %2719 = vmatpush1.bf16.msra.mxu0 0
  %2720 = vmatprep.subr.bf16.mxu0 0
  %2721 = vmatpush1.bf16.msra.mxu0 0
  %2722 = vmatprep.subr.bf16.mxu0 0
  %2723 = vmatpush1.bf16.msra.mxu0 0
  %2724 = vmatprep.mubr.bf16.mxu0 0
  %2725 = vmatmul.mubr.bf16.gmra.mrb[0].mxu0 %v2286
  %v2726 = vpop.f32.mrb[0].mxu0
  %v2727 = vadd.f32 0.0, %v2726
  %v2728 = vpop.f32.mrb[0].mxu0
  %v2729 = vpop.f32.mrb[0].mxu0
  %v2730 = vadd.f32 0.0, %v2729
  %v2731 = vpop.f32.mrb[0].mxu0
  %2732 = vdwg.mxu0
  %v2733 = vld [vmem:[%s51] sm:$0xf]
  %v2734 = vld [vmem:[%s51 + $0x4] sm:$0xf]
  %v2735 = vld [vmem:[%s51 + $0x8] sm:$0xf]
  %v2736 = vld [vmem:[%s51 + $0xc] sm:$0xf]
  %v2737 = vld [vmem:[%s51 + $0x10] sm:$0xf]
  %v2738 = vld [vmem:[%s51 + $0x14] sm:$0xf]
  %v2739 = vld [vmem:[%s51 + $0x18] sm:$0xf]
  %v2740 = vld [vmem:[%s51 + $0x1c] sm:$0xf]
  %v2749 = vunpack.c.l.b16 %v2733
  %v2750 = vunpack.c.l.b16 %v2734
  %v2751 = vunpack.c.l.b16 %v2735
  %v2752 = vunpack.c.l.b16 %v2736
  %v2753 = vunpack.c.l.b16 %v2737
  %v2754 = vunpack.c.l.b16 %v2738
  %v2755 = vunpack.c.l.b16 %v2739
  %v2756 = vunpack.c.l.b16 %v2740
  %v2757 = vpack.c.b16 %v2750, %v2749
  %v2758 = vpack.c.b16 %v2752, %v2751
  %v2759 = vpack.c.b16 %v2754, %v2753
  %v2760 = vpack.c.b16 %v2756, %v2755
  %2765 = vmatprep.subr.bf16.mxu0 0
  %2766 = vmatpush1.bf16.msra.mxu0 %v2757
  %2767 = vmatprep.subr.bf16.mxu0 0
  %2768 = vmatpush1.bf16.msra.mxu0 %v2758
  %2769 = vmatprep.subr.bf16.mxu0 0
  %2770 = vmatpush1.bf16.msra.mxu0 %v2759
  %2771 = vmatprep.subr.bf16.mxu0 0
  %2772 = vmatpush1.bf16.msra.mxu0 %v2760
  %2773 = vmatprep.subr.bf16.mxu0 0
  %2774 = vmatpush1.bf16.msra.mxu0 0
  %2775 = vmatprep.subr.bf16.mxu0 0
  %2776 = vmatpush1.bf16.msra.mxu0 0
  %2777 = vmatprep.subr.bf16.mxu0 0
  %2778 = vmatpush1.bf16.msra.mxu0 0
  %2779 = vmatprep.subr.bf16.mxu0 0
  %2780 = vmatpush1.bf16.msra.mxu0 0
  %2781 = vmatprep.subr.bf16.mxu0 0
  %2782 = vmatpush1.bf16.msra.mxu0 0
  %2783 = vmatprep.subr.bf16.mxu0 0
  %2784 = vmatpush1.bf16.msra.mxu0 0
  %2785 = vmatprep.subr.bf16.mxu0 0
  %2786 = vmatpush1.bf16.msra.mxu0 0
  %2787 = vmatprep.subr.bf16.mxu0 0
  %2788 = vmatpush1.bf16.msra.mxu0 0
  %2789 = vmatprep.subr.bf16.mxu0 0
  %2790 = vmatpush1.bf16.msra.mxu0 0
  %2791 = vmatprep.subr.bf16.mxu0 0
  %2792 = vmatpush1.bf16.msra.mxu0 0
  %2793 = vmatprep.subr.bf16.mxu0 0
  %2794 = vmatpush1.bf16.msra.mxu0 0
  %2795 = vmatprep.subr.bf16.mxu0 0
  %2796 = vmatpush1.bf16.msra.mxu0 0
  %2797 = vmatprep.mubr.bf16.mxu0 0
  %2798 = vmatmul.mubr.bf16.gmra.mrb[0].mxu0 %v2286
  %v2799 = vpop.f32.mrb[0].mxu0
  %v2800 = vadd.f32 0.0, %v2799
  %v2801 = vpop.f32.mrb[0].mxu0
  %v2802 = vpop.f32.mrb[0].mxu0
  %v2803 = vadd.f32 0.0, %v2802
  %v2804 = vpop.f32.mrb[0].mxu0
  %2805 = vdwg.mxu0
  %v2806 = vld [vmem:[%s53] sm:$0xf]
  %v2807 = vld [vmem:[%s53 + $0x4] sm:$0xf]
  %v2808 = vld [vmem:[%s53 + $0x8] sm:$0xf]
  %v2809 = vld [vmem:[%s53 + $0xc] sm:$0xf]
  %v2810 = vld [vmem:[%s53 + $0x10] sm:$0xf]
  %v2811 = vld [vmem:[%s53 + $0x14] sm:$0xf]
  %v2812 = vld [vmem:[%s53 + $0x18] sm:$0xf]
  %v2813 = vld [vmem:[%s53 + $0x1c] sm:$0xf]
  %v2822 = vunpack.c.l.b16 %v2806
  %v2823 = vunpack.c.l.b16 %v2807
  %v2824 = vunpack.c.l.b16 %v2808
  %v2825 = vunpack.c.l.b16 %v2809
  %v2826 = vunpack.c.l.b16 %v2810
  %v2827 = vunpack.c.l.b16 %v2811
  %v2828 = vunpack.c.l.b16 %v2812
  %v2829 = vunpack.c.l.b16 %v2813
  %v2830 = vpack.c.b16 %v2823, %v2822
  %v2831 = vpack.c.b16 %v2825, %v2824
  %v2832 = vpack.c.b16 %v2827, %v2826
  %v2833 = vpack.c.b16 %v2829, %v2828
  %2838 = vmatprep.subr.bf16.mxu0 0
  %2839 = vmatpush1.bf16.msra.mxu0 %v2830
  %2840 = vmatprep.subr.bf16.mxu0 0
  %2841 = vmatpush1.bf16.msra.mxu0 %v2831
  %2842 = vmatprep.subr.bf16.mxu0 0
  %2843 = vmatpush1.bf16.msra.mxu0 %v2832
  %2844 = vmatprep.subr.bf16.mxu0 0
  %2845 = vmatpush1.bf16.msra.mxu0 %v2833
  %2846 = vmatprep.subr.bf16.mxu0 0
  %2847 = vmatpush1.bf16.msra.mxu0 0
  %2848 = vmatprep.subr.bf16.mxu0 0
  %2849 = vmatpush1.bf16.msra.mxu0 0
  %2850 = vmatprep.subr.bf16.mxu0 0
  %2851 = vmatpush1.bf16.msra.mxu0 0
  %2852 = vmatprep.subr.bf16.mxu0 0
  %2853 = vmatpush1.bf16.msra.mxu0 0
  %2854 = vmatprep.subr.bf16.mxu0 0
  %2855 = vmatpush1.bf16.msra.mxu0 0
  %2856 = vmatprep.subr.bf16.mxu0 0
  %2857 = vmatpush1.bf16.msra.mxu0 0
  %2858 = vmatprep.subr.bf16.mxu0 0
  %2859 = vmatpush1.bf16.msra.mxu0 0
  %2860 = vmatprep.subr.bf16.mxu0 0
  %2861 = vmatpush1.bf16.msra.mxu0 0
  %2862 = vmatprep.subr.bf16.mxu0 0
  %2863 = vmatpush1.bf16.msra.mxu0 0
  %2864 = vmatprep.subr.bf16.mxu0 0
  %2865 = vmatpush1.bf16.msra.mxu0 0
  %2866 = vmatprep.subr.bf16.mxu0 0
  %2867 = vmatpush1.bf16.msra.mxu0 0
  %2868 = vmatprep.subr.bf16.mxu0 0
  %2869 = vmatpush1.bf16.msra.mxu0 0
  %2870 = vmatprep.mubr.bf16.mxu0 0
  %2871 = vmatmul.mubr.bf16.gmra.mrb[0].mxu0 %v2286
  %v2872 = vpop.f32.mrb[0].mxu0
  %v2873 = vadd.f32 0.0, %v2872
  %v2874 = vpop.f32.mrb[0].mxu0
  %v2875 = vpop.f32.mrb[0].mxu0
  %v2876 = vadd.f32 0.0, %v2875
  %v2877 = vpop.f32.mrb[0].mxu0
  %2878 = vdwg.mxu0
  %v2879 = vpack.c.bf16 %v2730, %v2727
  %v2880 = vpack.c.bf16 %v2803, %v2800
  %v2882 = vsel %vm1708, %v2879, 0
  %v2885 = vsel %vm1708, %v2880, 0
  %2887 = vmatprep.subr.bf16.mxu0 0
  %2888 = vmatpush1.bf16.xpose.msra.mxu0 %v2885
  %2889 = vmatprep.subr.bf16.mxu0 0
  %2890 = vmatpush1.bf16.xpose.msra.mxu0 0
  %2891 = vmatprep.subr.bf16.mxu0 0
  %2892 = vmatpush1.bf16.xpose.msra.mxu0 0
  %2893 = vmatprep.subr.bf16.mxu0 0
  %2894 = vmatpush1.bf16.xpose.msra.mxu0 0
  %2895 = vmatprep.subr.bf16.mxu0 0
  %2896 = vmatpush1.bf16.xpose.msra.mxu0 0
  %2897 = vmatprep.subr.bf16.mxu0 0
  %2898 = vmatpush1.bf16.xpose.msra.mxu0 0
  %2899 = vmatprep.subr.bf16.mxu0 0
  %2900 = vmatpush1.bf16.xpose.msra.mxu0 0
  %2901 = vmatprep.subr.bf16.mxu0 0
  %2902 = vmatpush1.bf16.xpose.msra.mxu0 0
  %2903 = vmatprep.subr.bf16.mxu0 0
  %2904 = vmatpush1.bf16.xpose.msra.mxu0 0
  %2905 = vmatprep.subr.bf16.mxu0 0
  %2906 = vmatpush1.bf16.xpose.msra.mxu0 0
  %2907 = vmatprep.subr.bf16.mxu0 0
  %2908 = vmatpush1.bf16.xpose.msra.mxu0 0
  %2909 = vmatprep.subr.bf16.mxu0 0
  %2910 = vmatpush1.bf16.xpose.msra.mxu0 0
  %2911 = vmatprep.subr.bf16.mxu0 0
  %2912 = vmatpush1.bf16.xpose.msra.mxu0 0
  %2913 = vmatprep.subr.bf16.mxu0 0
  %2914 = vmatpush1.bf16.xpose.msra.mxu0 0
  %2915 = vmatprep.subr.bf16.mxu0 0
  %2916 = vmatpush1.bf16.xpose.msra.mxu0 0
  %2917 = vmatprep.subr.bf16.mxu0 0
  %2918 = vmatpush1.bf16.xpose.msra.mxu0 0
  %2919 = vmatprep.mubr.bf16.mxu0 0
  %2920 = vmatmul.mubr.bf16.gmra.mrb[0].mxu0 %v2882
  %v2921 = vpop.f32.mrb[0].mxu0
  %v2922 = vadd.f32 0.0, %v2921
  %v2923 = vpop.f32.mrb[0].mxu0
  %v2924 = vpop.f32.mrb[0].mxu0
  %v2925 = vadd.f32 0.0, %v2924
  %v2926 = vpop.f32.mrb[0].mxu0
  %2927 = vdwg.mxu0
  %v2928 = vmul.f32 %v2922, 0.17677669
  %v2929 = vmul.f32 %v2925, 0.17677669
  %v2930 = vadd.f32 %v2928, %v2243
  %v2931 = vadd.f32 %v2929, %v2244
  %v2932 = vsel %vm2528, %v2930, -inf
  %2933 = vmax.xlane.f32.xlu0 %v2932
  %v2934 = vpop.xlane.xlu0 %2933
  %v2935 = vsel %vm2528, %v2931, -inf
  %2936 = vmax.xlane.f32.xlu0 %v2935
  %v2937 = vpop.xlane.xlu0 %2936
  %v2938 = vsub.f32 %v2930, %v2934
  %v2939 = vsub.f32 %v2931, %v2937
  %v2940 = vmul.f32 %v2938, 1.442695
  %v2941 = vpow.pop %v2940
  %v2942 = vmul.f32 %v2939, 1.442695
  %v2943 = vpow.pop %v2942
  %v2944 = vsel %vm2528, %v2941, 0.0
  %2945 = vadd.xlane.f32.xlu0 %v2944
  %v2946 = vpop.xlane.xlu0 %2945
  %v2947 = vsel %vm2528, %v2943, 0.0
  %2948 = vadd.xlane.f32.xlu0 %v2947
  %v2949 = vpop.xlane.xlu0 %2948
  %v2950 = vrcp.pop %v2946
  %v2951 = vrcp.pop %v2949
  %v2952 = vmul.f32 %v2941, %v2950
  %v2953 = vmul.f32 %v2943, %v2951
  %v2954 = vpack.c.bf16 %v2953, %v2952
  %v2955 = vpack.c.bf16 %v2876, %v2873
  %v2957 = vsel %vm2528, %v2954, 0
  %2959 = vmatprep.subr.bf16.mxu0 0
  %2960 = vmatpush1.bf16.msra.mxu0 %v2955
  %2961 = vmatprep.subr.bf16.mxu0 0
  %2962 = vmatpush1.bf16.msra.mxu0 0
  %2963 = vmatprep.subr.bf16.mxu0 0
  %2964 = vmatpush1.bf16.msra.mxu0 0
  %2965 = vmatprep.subr.bf16.mxu0 0
  %2966 = vmatpush1.bf16.msra.mxu0 0
  %2967 = vmatprep.subr.bf16.mxu0 0
  %2968 = vmatpush1.bf16.msra.mxu0 0
  %2969 = vmatprep.subr.bf16.mxu0 0
  %2970 = vmatpush1.bf16.msra.mxu0 0
  %2971 = vmatprep.subr.bf16.mxu0 0
  %2972 = vmatpush1.bf16.msra.mxu0 0
  %2973 = vmatprep.subr.bf16.mxu0 0
  %2974 = vmatpush1.bf16.msra.mxu0 0
  %2975 = vmatprep.subr.bf16.mxu0 0
  %2976 = vmatpush1.bf16.msra.mxu0 0
  %2977 = vmatprep.subr.bf16.mxu0 0
  %2978 = vmatpush1.bf16.msra.mxu0 0
  %2979 = vmatprep.subr.bf16.mxu0 0
  %2980 = vmatpush1.bf16.msra.mxu0 0
  %2981 = vmatprep.subr.bf16.mxu0 0
  %2982 = vmatpush1.bf16.msra.mxu0 0
  %2983 = vmatprep.subr.bf16.mxu0 0
  %2984 = vmatpush1.bf16.msra.mxu0 0
  %2985 = vmatprep.subr.bf16.mxu0 0
  %2986 = vmatpush1.bf16.msra.mxu0 0
  %2987 = vmatprep.subr.bf16.mxu0 0
  %2988 = vmatpush1.bf16.msra.mxu0 0
  %2989 = vmatprep.subr.bf16.mxu0 0
  %2990 = vmatpush1.bf16.msra.mxu0 0
  %2991 = vmatprep.mubr.bf16.mxu0 0
  %2992 = vmatmul.mubr.bf16.gmra.mrb[0].mxu0 %v2957
  %v2993 = vpop.f32.mrb[0].mxu0
  %v2994 = vadd.f32 0.0, %v2993
  %v2995 = vpop.f32.mrb[0].mxu0
  %v2996 = vpop.f32.mrb[0].mxu0
  %v2997 = vadd.f32 0.0, %v2996
  %v2998 = vpop.f32.mrb[0].mxu0
  %2999 = vdwg.mxu0
  %v3000 = vpack.c.bf16 %v2997, %v2994
  %v3001 = vld [vmem:[%s55] sm:$0xf]
  %v3002 = vld [vmem:[%s55 + $0x4] sm:$0xf]
  %v3003 = vld [vmem:[%s55 + $0x8] sm:$0xf]
  %v3004 = vld [vmem:[%s55 + $0xc] sm:$0xf]
  %v3009 = vunpack.c.l.b16 %v3001
  %v3010 = vunpack.c.l.b16 %v3002
  %v3011 = vunpack.c.l.b16 %v3003
  %v3012 = vunpack.c.l.b16 %v3004
  %v3013 = vpack.c.b16 %v3010, %v3009
  %v3014 = vpack.c.b16 %v3012, %v3011
  %v3018 = vsel %vm1708, %v3000, 0
  %3020 = vmatprep.subr.bf16.mxu0 0
  %3021 = vmatpush1.bf16.msra.mxu0 %v3013
  %3022 = vmatprep.subr.bf16.mxu0 0
  %3023 = vmatpush1.bf16.msra.mxu0 %v3014
  %3024 = vmatprep.subr.bf16.mxu0 0
  %3025 = vmatpush1.bf16.msra.mxu0 0
  %3026 = vmatprep.subr.bf16.mxu0 0
  %3027 = vmatpush1.bf16.msra.mxu0 0
  %3028 = vmatprep.subr.bf16.mxu0 0
  %3029 = vmatpush1.bf16.msra.mxu0 0
  %3030 = vmatprep.subr.bf16.mxu0 0
  %3031 = vmatpush1.bf16.msra.mxu0 0
  %3032 = vmatprep.subr.bf16.mxu0 0
  %3033 = vmatpush1.bf16.msra.mxu0 0
  %3034 = vmatprep.subr.bf16.mxu0 0
  %3035 = vmatpush1.bf16.msra.mxu0 0
  %3036 = vmatprep.subr.bf16.mxu0 0
  %3037 = vmatpush1.bf16.msra.mxu0 0
  %3038 = vmatprep.subr.bf16.mxu0 0
  %3039 = vmatpush1.bf16.msra.mxu0 0
  %3040 = vmatprep.subr.bf16.mxu0 0
  %3041 = vmatpush1.bf16.msra.mxu0 0
  %3042 = vmatprep.subr.bf16.mxu0 0
  %3043 = vmatpush1.bf16.msra.mxu0 0
  %3044 = vmatprep.subr.bf16.mxu0 0
  %3045 = vmatpush1.bf16.msra.mxu0 0
  %3046 = vmatprep.subr.bf16.mxu0 0
  %3047 = vmatpush1.bf16.msra.mxu0 0
  %3048 = vmatprep.subr.bf16.mxu0 0
  %3049 = vmatpush1.bf16.msra.mxu0 0
  %3050 = vmatprep.subr.bf16.mxu0 0
  %3051 = vmatpush1.bf16.msra.mxu0 0
  %3052 = vmatprep.mubr.bf16.mxu0 0
  %3053 = vmatmul.mubr.bf16.gmra.mrb[0].mxu0 %v3018
  %v3054 = vpop.f32.mrb[0].mxu0
  %v3055 = vadd.f32 0.0, %v3054
  %v3056 = vpop.f32.mrb[0].mxu0
  %v3057 = vpop.f32.mrb[0].mxu0
  %v3058 = vadd.f32 0.0, %v3057
  %v3059 = vpop.f32.mrb[0].mxu0
  %3060 = vdwg.mxu0
  %v3061 = vadd.f32 %v2658, %v3055
  %v3062 = vadd.f32 %v2659, %v3058
  %v3063 = vadd.f32 %v2189, %v3061
  %v3064 = vadd.f32 %v2194, %v3062
  %v3065 = vld [vmem:[%s61] sm:$0x1]
  %v3066 = vld [vmem:[%s63] sm:$0x1]
  %v3067 = vsel %vm2023, %v3063, 0.0
  %3068 = vadd.xlane.f32.xlu0 %v3067
  %v3069 = vpop.xlane.xlu0 %3068
  %v3070 = vsel %vm2023, %v3064, 0.0
  %3071 = vadd.xlane.f32.xlu0 %v3070
  %v3072 = vpop.xlane.xlu0 %3071
  %v3073 = vmul.f32 %v3069, %v2205
  %v3074 = vmul.f32 %v3072, %v2205
  %v3075 = vsub.f32 %v3063, %v3073
  %v3076 = vsub.f32 %v3064, %v3074
  %v3077 = vmul.f32 %v3075, %v3075
  %v3078 = vmul.f32 %v3076, %v3076
  %v3079 = vsel %vm2023, %v3077, 0.0
  %3080 = vadd.xlane.f32.xlu0 %v3079
  %v3081 = vpop.xlane.xlu0 %3080
  %v3082 = vsel %vm2023, %v3078, 0.0
  %3083 = vadd.xlane.f32.xlu0 %v3082
  %v3084 = vpop.xlane.xlu0 %3083
  %v3085 = vmul.f32 %v3081, %v2205
  %v3086 = vmul.f32 %v3084, %v2205
  %v3087 = vadd.f32 %v3085, 1e-05
  %v3088 = vadd.f32 %v3086, 1e-05
  %v3089 = vrsqrt.pop %v3087
  %v3090 = vrsqrt.pop %v3088
  %v3091 = vmul.f32 %v3075, %v3089
  %v3092 = vmul.f32 %v3076, %v3090
  %v3094 = vlaneseq
  %v3095 = vshrl.u32 %v3094, 7
  %v3096 = vsub.s32 0, %v3095
  %v3097 = vrot.slane %v3065, %v3096
  %v3099 = vmul.f32 %v3091, %v3097
  %v3100 = vmul.f32 %v3092, %v3097
  %v3102 = vlaneseq
  %v3103 = vshrl.u32 %v3102, 7
  %v3104 = vsub.s32 0, %v3103
  %v3105 = vrot.slane %v3066, %v3104
  %v3107 = vadd.f32 %v3099, %v3105
  %v3108 = vadd.f32 %v3100, %v3105
  %v3109 = vld [vmem:[%s65] sm:$0xff]
  %v3110 = vld [vmem:[%s65 + $0x8] sm:$0xff]
  %v3111 = vld [vmem:[%s65 + $0x10] sm:$0xff]
  %v3112 = vld [vmem:[%s65 + $0x18] sm:$0xff]
  %v3113 = vld [vmem:[%s65 + $0x20] sm:$0xff]
  %v3114 = vld [vmem:[%s65 + $0x28] sm:$0xff]
  %v3115 = vld [vmem:[%s65 + $0x30] sm:$0xff]
  %v3116 = vld [vmem:[%s65 + $0x38] sm:$0xff]
  %v3117 = vld [vmem:[%s65 + $0x40] sm:$0xff]
  %v3118 = vld [vmem:[%s65 + $0x48] sm:$0xff]
  %v3119 = vld [vmem:[%s65 + $0x50] sm:$0xff]
  %v3120 = vld [vmem:[%s65 + $0x58] sm:$0xff]
  %v3121 = vld [vmem:[%s65 + $0x60] sm:$0xff]
  %v3122 = vld [vmem:[%s65 + $0x68] sm:$0xff]
  %v3123 = vld [vmem:[%s65 + $0x70] sm:$0xff]
  %v3124 = vld [vmem:[%s65 + $0x78] sm:$0xff]
  %v3125 = vpack.c.bf16 %v3108, %v3107
  %v3126 = vld [vmem:[%s67] sm:$0xf]
  %v3128 = vlaneseq
  %v3129 = vshrl.u32 %v3128, 7
  %v3130 = vsub.s32 0, %v3129
  %v3131 = vrot.slane %v3126, %v3130
  %v3132 = vlaneseq
  %v3133 = vshrl.u32 %v3132, 7
  %v3134 = vsub.s32 1, %v3133
  %v3135 = vrot.slane %v3126, %v3134
  %v3136 = vlaneseq
  %v3137 = vshrl.u32 %v3136, 7
  %v3138 = vsub.s32 2, %v3137
  %v3139 = vrot.slane %v3126, %v3138
  %v3140 = vlaneseq
  %v3141 = vshrl.u32 %v3140, 7
  %v3142 = vsub.s32 3, %v3141
  %v3143 = vrot.slane %v3126, %v3142
  %v3164 = vunpack.c.l.b16 %v3109
  %v3165 = vunpack.c.h.b16 %v3109
  %v3166 = vunpack.c.l.b16 %v3110
  %v3167 = vunpack.c.h.b16 %v3110
  %v3168 = vunpack.c.l.b16 %v3111
  %v3169 = vunpack.c.h.b16 %v3111
  %v3170 = vunpack.c.l.b16 %v3112
  %v3171 = vunpack.c.h.b16 %v3112
  %v3172 = vunpack.c.l.b16 %v3113
  %v3173 = vunpack.c.h.b16 %v3113
  %v3174 = vunpack.c.l.b16 %v3114
  %v3175 = vunpack.c.h.b16 %v3114
  %v3176 = vunpack.c.l.b16 %v3115
  %v3177 = vunpack.c.h.b16 %v3115
  %v3178 = vunpack.c.l.b16 %v3116
  %v3179 = vunpack.c.h.b16 %v3116
  %v3180 = vunpack.c.l.b16 %v3117
  %v3181 = vunpack.c.h.b16 %v3117
  %v3182 = vunpack.c.l.b16 %v3118
  %v3183 = vunpack.c.h.b16 %v3118
  %v3184 = vunpack.c.l.b16 %v3119
  %v3185 = vunpack.c.h.b16 %v3119
  %v3186 = vunpack.c.l.b16 %v3120
  %v3187 = vunpack.c.h.b16 %v3120
  %v3188 = vunpack.c.l.b16 %v3121
  %v3189 = vunpack.c.h.b16 %v3121
  %v3190 = vunpack.c.l.b16 %v3122
  %v3191 = vunpack.c.h.b16 %v3122
  %v3192 = vunpack.c.l.b16 %v3123
  %v3193 = vunpack.c.h.b16 %v3123
  %v3194 = vunpack.c.l.b16 %v3124
  %v3195 = vunpack.c.h.b16 %v3124
  %v3196 = vpack.c.b16 %v3168, %v3164
  %v3197 = vpack.c.b16 %v3169, %v3165
  %v3198 = vpack.c.b16 %v3170, %v3166
  %v3199 = vpack.c.b16 %v3171, %v3167
  %v3200 = vpack.c.b16 %v3176, %v3172
  %v3201 = vpack.c.b16 %v3177, %v3173
  %v3202 = vpack.c.b16 %v3178, %v3174
  %v3203 = vpack.c.b16 %v3179, %v3175
  %v3204 = vpack.c.b16 %v3184, %v3180
  %v3205 = vpack.c.b16 %v3185, %v3181
  %v3206 = vpack.c.b16 %v3186, %v3182
  %v3207 = vpack.c.b16 %v3187, %v3183
  %v3208 = vpack.c.b16 %v3192, %v3188
  %v3209 = vpack.c.b16 %v3193, %v3189
  %v3210 = vpack.c.b16 %v3194, %v3190
  %v3211 = vpack.c.b16 %v3195, %v3191
  %v3229 = vsel %vm2023, %v3125, 0
  %3231 = vmatprep.subr.bf16.mxu0 %v3197
  %3232 = vmatpush1.bf16.msra.mxu0 %v3196
  %3233 = vmatprep.subr.bf16.mxu0 %v3201
  %3234 = vmatpush1.bf16.msra.mxu0 %v3200
  %3235 = vmatprep.subr.bf16.mxu0 %v3205
  %3236 = vmatpush1.bf16.msra.mxu0 %v3204
  %3237 = vmatprep.subr.bf16.mxu0 %v3209
  %3238 = vmatpush1.bf16.msra.mxu0 %v3208
  %3239 = vmatprep.subr.bf16.mxu0 0
  %3240 = vmatpush1.bf16.msra.mxu0 0
  %3241 = vmatprep.subr.bf16.mxu0 0
  %3242 = vmatpush1.bf16.msra.mxu0 0
  %3243 = vmatprep.subr.bf16.mxu0 0
  %3244 = vmatpush1.bf16.msra.mxu0 0
  %3245 = vmatprep.subr.bf16.mxu0 0
  %3246 = vmatpush1.bf16.msra.mxu0 0
  %3247 = vmatprep.subr.bf16.mxu0 0
  %3248 = vmatpush1.bf16.msra.mxu0 0
  %3249 = vmatprep.subr.bf16.mxu0 0
  %3250 = vmatpush1.bf16.msra.mxu0 0
  %3251 = vmatprep.subr.bf16.mxu0 0
  %3252 = vmatpush1.bf16.msra.mxu0 0
  %3253 = vmatprep.subr.bf16.mxu0 0
  %3254 = vmatpush1.bf16.msra.mxu0 0
  %3255 = vmatprep.subr.bf16.mxu0 0
  %3256 = vmatpush1.bf16.msra.mxu0 0
  %3257 = vmatprep.subr.bf16.mxu0 0
  %3258 = vmatpush1.bf16.msra.mxu0 0
  %3259 = vmatprep.subr.bf16.mxu0 0
  %3260 = vmatpush1.bf16.msra.mxu0 0
  %3261 = vmatprep.subr.bf16.mxu0 0
  %3262 = vmatpush1.bf16.msra.mxu0 0
  %3263 = vmatprep.mubr.bf16.mxu0 0
  %3264 = vmatmul.mubr.bf16.gmra.mrb[0].mxu0 %v3229
  %v3265 = vpop.f32.mrb[0].mxu0
  %v3266 = vadd.f32 %v3131, %v3265
  %v3267 = vpop.f32.mrb[0].mxu0
  %v3268 = vadd.f32 %v3135, %v3267
  %v3269 = vpop.f32.mrb[0].mxu0
  %v3270 = vadd.f32 %v3131, %v3269
  %v3271 = vpop.f32.mrb[0].mxu0
  %v3272 = vadd.f32 %v3135, %v3271
  %3273 = vdwg.mxu0
  %3274 = vmatprep.subr.bf16.mxu0 %v3199
  %3275 = vmatpush1.bf16.msra.mxu0 %v3198
  %3276 = vmatprep.subr.bf16.mxu0 %v3203
  %3277 = vmatpush1.bf16.msra.mxu0 %v3202
  %3278 = vmatprep.subr.bf16.mxu0 %v3207
  %3279 = vmatpush1.bf16.msra.mxu0 %v3206
  %3280 = vmatprep.subr.bf16.mxu0 %v3211
  %3281 = vmatpush1.bf16.msra.mxu0 %v3210
  %3282 = vmatprep.subr.bf16.mxu0 0
  %3283 = vmatpush1.bf16.msra.mxu0 0
  %3284 = vmatprep.subr.bf16.mxu0 0
  %3285 = vmatpush1.bf16.msra.mxu0 0
  %3286 = vmatprep.subr.bf16.mxu0 0
  %3287 = vmatpush1.bf16.msra.mxu0 0
  %3288 = vmatprep.subr.bf16.mxu0 0
  %3289 = vmatpush1.bf16.msra.mxu0 0
  %3290 = vmatprep.subr.bf16.mxu0 0
  %3291 = vmatpush1.bf16.msra.mxu0 0
  %3292 = vmatprep.subr.bf16.mxu0 0
  %3293 = vmatpush1.bf16.msra.mxu0 0
  %3294 = vmatprep.subr.bf16.mxu0 0
  %3295 = vmatpush1.bf16.msra.mxu0 0
  %3296 = vmatprep.subr.bf16.mxu0 0
  %3297 = vmatpush1.bf16.msra.mxu0 0
  %3298 = vmatprep.subr.bf16.mxu0 0
  %3299 = vmatpush1.bf16.msra.mxu0 0
  %3300 = vmatprep.subr.bf16.mxu0 0
  %3301 = vmatpush1.bf16.msra.mxu0 0
  %3302 = vmatprep.subr.bf16.mxu0 0
  %3303 = vmatpush1.bf16.msra.mxu0 0
  %3304 = vmatprep.subr.bf16.mxu0 0
  %3305 = vmatpush1.bf16.msra.mxu0 0
  %3306 = vmatprep.mubr.bf16.mxu0 0
  %3307 = vmatmul.mubr.bf16.gmra.mrb[0].mxu0 %v3229
  %v3308 = vpop.f32.mrb[0].mxu0
  %v3309 = vadd.f32 %v3139, %v3308
  %v3310 = vpop.f32.mrb[0].mxu0
  %v3311 = vadd.f32 %v3143, %v3310
  %v3312 = vpop.f32.mrb[0].mxu0
  %v3313 = vadd.f32 %v3139, %v3312
  %v3314 = vpop.f32.mrb[0].mxu0
  %v3315 = vadd.f32 %v3143, %v3314
  %3316 = vdwg.mxu0
  %v3317 = vmul.f32 %v3266, 0.5
  %v3318 = vmul.f32 %v3268, 0.5
  %v3319 = vmul.f32 %v3309, 0.5
  %v3320 = vmul.f32 %v3311, 0.5
  %v3321 = vmul.f32 %v3270, 0.5
  %v3322 = vmul.f32 %v3272, 0.5
  %v3323 = vmul.f32 %v3313, 0.5
  %v3324 = vmul.f32 %v3315, 0.5
  %v3325 = vmul.f32 %v3266, 0.70710677
  %v3326 = vmul.f32 %v3268, 0.70710677
  %v3327 = vmul.f32 %v3309, 0.70710677
  %v3328 = vmul.f32 %v3311, 0.70710677
  %v3329 = vmul.f32 %v3270, 0.70710677
  %v3330 = vmul.f32 %v3272, 0.70710677
  %v3331 = vmul.f32 %v3313, 0.70710677
  %v3332 = vmul.f32 %v3315, 0.70710677
  %v3333 = verf.f32.pop %v3325
  %v3334 = verf.f32.pop %v3326
  %v3335 = verf.f32.pop %v3327
  %v3336 = verf.f32.pop %v3328
  %v3337 = verf.f32.pop %v3329
  %v3338 = verf.f32.pop %v3330
  %v3339 = verf.f32.pop %v3331
  %v3340 = verf.f32.pop %v3332
  %v3341 = vadd.f32 %v3333, 1.0
  %v3342 = vadd.f32 %v3334, 1.0
  %v3343 = vadd.f32 %v3335, 1.0
  %v3344 = vadd.f32 %v3336, 1.0
  %v3345 = vadd.f32 %v3337, 1.0
  %v3346 = vadd.f32 %v3338, 1.0
  %v3347 = vadd.f32 %v3339, 1.0
  %v3348 = vadd.f32 %v3340, 1.0
  %v3349 = vmul.f32 %v3317, %v3341
  %v3350 = vmul.f32 %v3318, %v3342
  %v3351 = vmul.f32 %v3319, %v3343
  %v3352 = vmul.f32 %v3320, %v3344
  %v3353 = vmul.f32 %v3321, %v3345
  %v3354 = vmul.f32 %v3322, %v3346
  %v3355 = vmul.f32 %v3323, %v3347
  %v3356 = vmul.f32 %v3324, %v3348
  %v3357 = vld [vmem:[%s69] sm:$0xf]
  %v3358 = vld [vmem:[%s69 + $0x4] sm:$0xf]
  %v3359 = vld [vmem:[%s69 + $0x8] sm:$0xf]
  %v3360 = vld [vmem:[%s69 + $0xc] sm:$0xf]
  %v3361 = vld [vmem:[%s69 + $0x10] sm:$0xf]
  %v3362 = vld [vmem:[%s69 + $0x14] sm:$0xf]
  %v3363 = vld [vmem:[%s69 + $0x18] sm:$0xf]
  %v3364 = vld [vmem:[%s69 + $0x1c] sm:$0xf]
  %v3365 = vld [vmem:[%s69 + $0x20] sm:$0xf]
  %v3366 = vld [vmem:[%s69 + $0x24] sm:$0xf]
  %v3367 = vld [vmem:[%s69 + $0x28] sm:$0xf]
  %v3368 = vld [vmem:[%s69 + $0x2c] sm:$0xf]
  %v3369 = vld [vmem:[%s69 + $0x30] sm:$0xf]
  %v3370 = vld [vmem:[%s69 + $0x34] sm:$0xf]
  %v3371 = vld [vmem:[%s69 + $0x38] sm:$0xf]
  %v3372 = vld [vmem:[%s69 + $0x3c] sm:$0xf]
  %v3373 = vld [vmem:[%s69 + $0x40] sm:$0xf]
  %v3374 = vld [vmem:[%s69 + $0x44] sm:$0xf]
  %v3375 = vld [vmem:[%s69 + $0x48] sm:$0xf]
  %v3376 = vld [vmem:[%s69 + $0x4c] sm:$0xf]
  %v3377 = vld [vmem:[%s69 + $0x50] sm:$0xf]
  %v3378 = vld [vmem:[%s69 + $0x54] sm:$0xf]
  %v3379 = vld [vmem:[%s69 + $0x58] sm:$0xf]
  %v3380 = vld [vmem:[%s69 + $0x5c] sm:$0xf]
  %v3381 = vld [vmem:[%s69 + $0x60] sm:$0xf]
  %v3382 = vld [vmem:[%s69 + $0x64] sm:$0xf]
  %v3383 = vld [vmem:[%s69 + $0x68] sm:$0xf]
  %v3384 = vld [vmem:[%s69 + $0x6c] sm:$0xf]
  %v3385 = vld [vmem:[%s69 + $0x70] sm:$0xf]
  %v3386 = vld [vmem:[%s69 + $0x74] sm:$0xf]
  %v3387 = vld [vmem:[%s69 + $0x78] sm:$0xf]
  %v3388 = vld [vmem:[%s69 + $0x7c] sm:$0xf]
  %v3389 = vld [vmem:[%s69 + $0x80] sm:$0xf]
  %v3390 = vld [vmem:[%s69 + $0x84] sm:$0xf]
  %v3391 = vld [vmem:[%s69 + $0x88] sm:$0xf]
  %v3392 = vld [vmem:[%s69 + $0x8c] sm:$0xf]
  %v3393 = vld [vmem:[%s69 + $0x90] sm:$0xf]
  %v3394 = vld [vmem:[%s69 + $0x94] sm:$0xf]
  %v3395 = vld [vmem:[%s69 + $0x98] sm:$0xf]
  %v3396 = vld [vmem:[%s69 + $0x9c] sm:$0xf]
  %v3397 = vld [vmem:[%s69 + $0xa0] sm:$0xf]
  %v3398 = vld [vmem:[%s69 + $0xa4] sm:$0xf]
  %v3399 = vld [vmem:[%s69 + $0xa8] sm:$0xf]
  %v3400 = vld [vmem:[%s69 + $0xac] sm:$0xf]
  %v3401 = vld [vmem:[%s69 + $0xb0] sm:$0xf]
  %v3402 = vld [vmem:[%s69 + $0xb4] sm:$0xf]
  %v3403 = vld [vmem:[%s69 + $0xb8] sm:$0xf]
  %v3404 = vld [vmem:[%s69 + $0xbc] sm:$0xf]
  %v3405 = vld [vmem:[%s69 + $0xc0] sm:$0xf]
  %v3406 = vld [vmem:[%s69 + $0xc4] sm:$0xf]
  %v3407 = vld [vmem:[%s69 + $0xc8] sm:$0xf]
  %v3408 = vld [vmem:[%s69 + $0xcc] sm:$0xf]
  %v3409 = vld [vmem:[%s69 + $0xd0] sm:$0xf]
  %v3410 = vld [vmem:[%s69 + $0xd4] sm:$0xf]
  %v3411 = vld [vmem:[%s69 + $0xd8] sm:$0xf]
  %v3412 = vld [vmem:[%s69 + $0xdc] sm:$0xf]
  %v3413 = vld [vmem:[%s69 + $0xe0] sm:$0xf]
  %v3414 = vld [vmem:[%s69 + $0xe4] sm:$0xf]
  %v3415 = vld [vmem:[%s69 + $0xe8] sm:$0xf]
  %v3416 = vld [vmem:[%s69 + $0xec] sm:$0xf]
  %v3417 = vld [vmem:[%s69 + $0xf0] sm:$0xf]
  %v3418 = vld [vmem:[%s69 + $0xf4] sm:$0xf]
  %v3419 = vld [vmem:[%s69 + $0xf8] sm:$0xf]
  %v3420 = vld [vmem:[%s69 + $0xfc] sm:$0xf]
  %v3421 = vpack.c.bf16 %v3353, %v3349
  %v3422 = vpack.c.bf16 %v3354, %v3350
  %v3423 = vpack.c.bf16 %v3355, %v3351
  %v3424 = vpack.c.bf16 %v3356, %v3352
  %v3489 = vunpack.c.l.b16 %v3357
  %v3490 = vunpack.c.l.b16 %v3358
  %v3491 = vunpack.c.l.b16 %v3359
  %v3492 = vunpack.c.l.b16 %v3360
  %v3493 = vunpack.c.l.b16 %v3361
  %v3494 = vunpack.c.l.b16 %v3362
  %v3495 = vunpack.c.l.b16 %v3363
  %v3496 = vunpack.c.l.b16 %v3364
  %v3497 = vunpack.c.l.b16 %v3365
  %v3498 = vunpack.c.l.b16 %v3366
  %v3499 = vunpack.c.l.b16 %v3367
  %v3500 = vunpack.c.l.b16 %v3368
  %v3501 = vunpack.c.l.b16 %v3369
  %v3502 = vunpack.c.l.b16 %v3370
  %v3503 = vunpack.c.l.b16 %v3371
  %v3504 = vunpack.c.l.b16 %v3372
  %v3505 = vunpack.c.l.b16 %v3373
  %v3506 = vunpack.c.l.b16 %v3374
  %v3507 = vunpack.c.l.b16 %v3375
  %v3508 = vunpack.c.l.b16 %v3376
  %v3509 = vunpack.c.l.b16 %v3377
  %v3510 = vunpack.c.l.b16 %v3378
  %v3511 = vunpack.c.l.b16 %v3379
  %v3512 = vunpack.c.l.b16 %v3380
  %v3513 = vunpack.c.l.b16 %v3381
  %v3514 = vunpack.c.l.b16 %v3382
  %v3515 = vunpack.c.l.b16 %v3383
  %v3516 = vunpack.c.l.b16 %v3384
  %v3517 = vunpack.c.l.b16 %v3385
  %v3518 = vunpack.c.l.b16 %v3386
  %v3519 = vunpack.c.l.b16 %v3387
  %v3520 = vunpack.c.l.b16 %v3388
  %v3521 = vunpack.c.l.b16 %v3389
  %v3522 = vunpack.c.l.b16 %v3390
  %v3523 = vunpack.c.l.b16 %v3391
  %v3524 = vunpack.c.l.b16 %v3392
  %v3525 = vunpack.c.l.b16 %v3393
  %v3526 = vunpack.c.l.b16 %v3394
  %v3527 = vunpack.c.l.b16 %v3395
  %v3528 = vunpack.c.l.b16 %v3396
  %v3529 = vunpack.c.l.b16 %v3397
  %v3530 = vunpack.c.l.b16 %v3398
  %v3531 = vunpack.c.l.b16 %v3399
  %v3532 = vunpack.c.l.b16 %v3400
  %v3533 = vunpack.c.l.b16 %v3401
  %v3534 = vunpack.c.l.b16 %v3402
  %v3535 = vunpack.c.l.b16 %v3403
  %v3536 = vunpack.c.l.b16 %v3404
  %v3537 = vunpack.c.l.b16 %v3405
  %v3538 = vunpack.c.l.b16 %v3406
  %v3539 = vunpack.c.l.b16 %v3407
  %v3540 = vunpack.c.l.b16 %v3408
  %v3541 = vunpack.c.l.b16 %v3409
  %v3542 = vunpack.c.l.b16 %v3410
  %v3543 = vunpack.c.l.b16 %v3411
  %v3544 = vunpack.c.l.b16 %v3412
  %v3545 = vunpack.c.l.b16 %v3413
  %v3546 = vunpack.c.l.b16 %v3414
  %v3547 = vunpack.c.l.b16 %v3415
  %v3548 = vunpack.c.l.b16 %v3416
  %v3549 = vunpack.c.l.b16 %v3417
  %v3550 = vunpack.c.l.b16 %v3418
  %v3551 = vunpack.c.l.b16 %v3419
  %v3552 = vunpack.c.l.b16 %v3420
  %v3553 = vpack.c.b16 %v3490, %v3489
  %v3554 = vpack.c.b16 %v3492, %v3491
  %v3555 = vpack.c.b16 %v3494, %v3493
  %v3556 = vpack.c.b16 %v3496, %v3495
  %v3557 = vpack.c.b16 %v3498, %v3497
  %v3558 = vpack.c.b16 %v3500, %v3499
  %v3559 = vpack.c.b16 %v3502, %v3501
  %v3560 = vpack.c.b16 %v3504, %v3503
  %v3561 = vpack.c.b16 %v3506, %v3505
  %v3562 = vpack.c.b16 %v3508, %v3507
  %v3563 = vpack.c.b16 %v3510, %v3509
  %v3564 = vpack.c.b16 %v3512, %v3511
  %v3565 = vpack.c.b16 %v3514, %v3513
  %v3566 = vpack.c.b16 %v3516, %v3515
  %v3567 = vpack.c.b16 %v3518, %v3517
  %v3568 = vpack.c.b16 %v3520, %v3519
  %v3569 = vpack.c.b16 %v3522, %v3521
  %v3570 = vpack.c.b16 %v3524, %v3523
  %v3571 = vpack.c.b16 %v3526, %v3525
  %v3572 = vpack.c.b16 %v3528, %v3527
  %v3573 = vpack.c.b16 %v3530, %v3529
  %v3574 = vpack.c.b16 %v3532, %v3531
  %v3575 = vpack.c.b16 %v3534, %v3533
  %v3576 = vpack.c.b16 %v3536, %v3535
  %v3577 = vpack.c.b16 %v3538, %v3537
  %v3578 = vpack.c.b16 %v3540, %v3539
  %v3579 = vpack.c.b16 %v3542, %v3541
  %v3580 = vpack.c.b16 %v3544, %v3543
  %v3581 = vpack.c.b16 %v3546, %v3545
  %v3582 = vpack.c.b16 %v3548, %v3547
  %v3583 = vpack.c.b16 %v3550, %v3549
  %v3584 = vpack.c.b16 %v3552, %v3551
  %3617 = vmatprep.subr.bf16.mxu0 0
  %3618 = vmatpush1.bf16.msra.mxu0 %v3553
  %3619 = vmatprep.subr.bf16.mxu0 0
  %3620 = vmatpush1.bf16.msra.mxu0 %v3554
  %3621 = vmatprep.subr.bf16.mxu0 0
  %3622 = vmatpush1.bf16.msra.mxu0 %v3555
  %3623 = vmatprep.subr.bf16.mxu0 0
  %3624 = vmatpush1.bf16.msra.mxu0 %v3556
  %3625 = vmatprep.subr.bf16.mxu0 0
  %3626 = vmatpush1.bf16.msra.mxu0 %v3557
  %3627 = vmatprep.subr.bf16.mxu0 0
  %3628 = vmatpush1.bf16.msra.mxu0 %v3558
  %3629 = vmatprep.subr.bf16.mxu0 0
  %3630 = vmatpush1.bf16.msra.mxu0 %v3559
  %3631 = vmatprep.subr.bf16.mxu0 0
  %3632 = vmatpush1.bf16.msra.mxu0 %v3560
  %3633 = vmatprep.subr.bf16.mxu0 0
  %3634 = vmatpush1.bf16.msra.mxu0 %v3561
  %3635 = vmatprep.subr.bf16.mxu0 0
  %3636 = vmatpush1.bf16.msra.mxu0 %v3562
  %3637 = vmatprep.subr.bf16.mxu0 0
  %3638 = vmatpush1.bf16.msra.mxu0 %v3563
  %3639 = vmatprep.subr.bf16.mxu0 0
  %3640 = vmatpush1.bf16.msra.mxu0 %v3564
  %3641 = vmatprep.subr.bf16.mxu0 0
  %3642 = vmatpush1.bf16.msra.mxu0 %v3565
  %3643 = vmatprep.subr.bf16.mxu0 0
  %3644 = vmatpush1.bf16.msra.mxu0 %v3566
  %3645 = vmatprep.subr.bf16.mxu0 0
  %3646 = vmatpush1.bf16.msra.mxu0 %v3567
  %3647 = vmatprep.subr.bf16.mxu0 0
  %3648 = vmatpush1.bf16.msra.mxu0 %v3568
  %3649 = vmatprep.mubr.bf16.mxu0 %v3422
  %3650 = vmatmul.mubr.bf16.gmra.mrb[0].mxu0 %v3421
  %v3651 = vpop.f32.mrb[0].mxu0
  %v3652 = vadd.f32 0.0, %v3651
  %v3653 = vpop.f32.mrb[0].mxu0
  %v3654 = vpop.f32.mrb[0].mxu0
  %v3655 = vadd.f32 0.0, %v3654
  %v3656 = vpop.f32.mrb[0].mxu0
  %3657 = vdwg.mxu0
  %3658 = vmatprep.subr.bf16.mxu0 0
  %3659 = vmatpush1.bf16.msra.mxu0 %v3569
  %3660 = vmatprep.subr.bf16.mxu0 0
  %3661 = vmatpush1.bf16.msra.mxu0 %v3570
  %3662 = vmatprep.subr.bf16.mxu0 0
  %3663 = vmatpush1.bf16.msra.mxu0 %v3571
  %3664 = vmatprep.subr.bf16.mxu0 0
  %3665 = vmatpush1.bf16.msra.mxu0 %v3572
  %3666 = vmatprep.subr.bf16.mxu0 0
  %3667 = vmatpush1.bf16.msra.mxu0 %v3573
  %3668 = vmatprep.subr.bf16.mxu0 0
  %3669 = vmatpush1.bf16.msra.mxu0 %v3574
  %3670 = vmatprep.subr.bf16.mxu0 0
  %3671 = vmatpush1.bf16.msra.mxu0 %v3575
  %3672 = vmatprep.subr.bf16.mxu0 0
  %3673 = vmatpush1.bf16.msra.mxu0 %v3576
  %3674 = vmatprep.subr.bf16.mxu0 0
  %3675 = vmatpush1.bf16.msra.mxu0 %v3577
  %3676 = vmatprep.subr.bf16.mxu0 0
  %3677 = vmatpush1.bf16.msra.mxu0 %v3578
  %3678 = vmatprep.subr.bf16.mxu0 0
  %3679 = vmatpush1.bf16.msra.mxu0 %v3579
  %3680 = vmatprep.subr.bf16.mxu0 0
  %3681 = vmatpush1.bf16.msra.mxu0 %v3580
  %3682 = vmatprep.subr.bf16.mxu0 0
  %3683 = vmatpush1.bf16.msra.mxu0 %v3581
  %3684 = vmatprep.subr.bf16.mxu0 0
  %3685 = vmatpush1.bf16.msra.mxu0 %v3582
  %3686 = vmatprep.subr.bf16.mxu0 0
  %3687 = vmatpush1.bf16.msra.mxu0 %v3583
  %3688 = vmatprep.subr.bf16.mxu0 0
  %3689 = vmatpush1.bf16.msra.mxu0 %v3584
  %3690 = vmatprep.mubr.bf16.mxu0 %v3424
  %3691 = vmatmul.mubr.bf16.gmra.mrb[0].mxu0 %v3423
  %v3692 = vpop.f32.mrb[0].mxu0
  %v3693 = vadd.f32 %v3652, %v3692
  %v3694 = vpop.f32.mrb[0].mxu0
  %v3695 = vpop.f32.mrb[0].mxu0
  %v3696 = vadd.f32 %v3655, %v3695
  %v3697 = vpop.f32.mrb[0].mxu0
  %3698 = vdwg.mxu0
  %v3699 = vadd.f32 %v3063, %v3693
  %v3700 = vadd.f32 %v3064, %v3696
  %v3701 = vld [vmem:[%s71] sm:$0x1]
  %v3703 = vlaneseq
  %v3704 = vshrl.u32 %v3703, 7
  %v3705 = vsub.s32 0, %v3704
  %v3706 = vrot.slane %v3701, %v3705
  %v3708 = vadd.f32 %v3699, %v3706
  %v3709 = vadd.f32 %v3700, %v3706
  %v3710 = vld [vmem:[%s81] sm:$0x3]
  %v3712 = vsel %vm2528, %v3710, 0
  %3714 = vmatprep.subr.mxu0 0.0
  %3715 = vmatpush1.msra.mxu0 %v3708
  %3716 = vmatprep.subr.mxu0 0.0
  %3717 = vmatpush1.msra.mxu0 %v3709
  %3718 = vmatprep.subr.mxu0 0.0
  %3719 = vmatpush1.msra.mxu0 0.0
  %3720 = vmatprep.subr.mxu0 0.0
  %3721 = vmatpush1.msra.mxu0 0.0
  %3722 = vmatprep.subr.mxu0 0.0
  %3723 = vmatpush1.msra.mxu0 0.0
  %3724 = vmatprep.subr.mxu0 0.0
  %3725 = vmatpush1.msra.mxu0 0.0
  %3726 = vmatprep.subr.mxu0 0.0
  %3727 = vmatpush1.msra.mxu0 0.0
  %3728 = vmatprep.subr.mxu0 0.0
  %3729 = vmatpush1.msra.mxu0 0.0
  %3730 = vmatprep.subr.mxu0 0.0
  %3731 = vmatpush1.msra.mxu0 0.0
  %3732 = vmatprep.subr.mxu0 0.0
  %3733 = vmatpush1.msra.mxu0 0.0
  %3734 = vmatprep.subr.mxu0 0.0
  %3735 = vmatpush1.msra.mxu0 0.0
  %3736 = vmatprep.subr.mxu0 0.0
  %3737 = vmatpush1.msra.mxu0 0.0
  %3738 = vmatprep.subr.mxu0 0.0
  %3739 = vmatpush1.msra.mxu0 0.0
  %3740 = vmatprep.subr.mxu0 0.0
  %3741 = vmatpush1.msra.mxu0 0.0
  %3742 = vmatprep.subr.mxu0 0.0
  %3743 = vmatpush1.msra.mxu0 0.0
  %3744 = vmatprep.subr.mxu0 0.0
  %3745 = vmatpush1.msra.mxu0 0.0
  %3746 = vmatprep.subr.mxu0 0.0
  %3747 = vmatpush1.msra.mxu0 0.0
  %3748 = vmatprep.subr.mxu0 0.0
  %3749 = vmatpush1.msra.mxu0 0.0
  %3750 = vmatprep.subr.mxu0 0.0
  %3751 = vmatpush1.msra.mxu0 0.0
  %3752 = vmatprep.subr.mxu0 0.0
  %3753 = vmatpush1.msra.mxu0 0.0
  %3754 = vmatprep.subr.mxu0 0.0
  %3755 = vmatpush1.msra.mxu0 0.0
  %3756 = vmatprep.subr.mxu0 0.0
  %3757 = vmatpush1.msra.mxu0 0.0
  %3758 = vmatprep.subr.mxu0 0.0
  %3759 = vmatpush1.msra.mxu0 0.0
  %3760 = vmatprep.subr.mxu0 0.0
  %3761 = vmatpush1.msra.mxu0 0.0
  %3762 = vmatprep.subr.mxu0 0.0
  %3763 = vmatpush1.msra.mxu0 0.0
  %3764 = vmatprep.subr.mxu0 0.0
  %3765 = vmatpush1.msra.mxu0 0.0
  %3766 = vmatprep.subr.mxu0 0.0
  %3767 = vmatpush1.msra.mxu0 0.0
  %3768 = vmatprep.subr.mxu0 0.0
  %3769 = vmatpush1.msra.mxu0 0.0
  %3770 = vmatprep.subr.mxu0 0.0
  %3771 = vmatpush1.msra.mxu0 0.0
  %3772 = vmatprep.subr.mxu0 0.0
  %3773 = vmatpush1.msra.mxu0 0.0
  %3774 = vmatprep.subr.mxu0 0.0
  %3775 = vmatpush1.msra.mxu0 0.0
  %3776 = vmatprep.subr.mxu0 0.0
  %3777 = vmatpush1.msra.mxu0 0.0
  %3778 = vmatprep.mubr.f32.mxu0 0.0
  %3779 = vmatmul.mubr.f32.gmra.mrb[0].mxu0 %v3712
  %v3780 = vpop.f32.mrb[0].mxu0
  %v3781 = vadd.f32 0.0, %v3780
  %v3782 = vpop.f32.mrb[0].mxu0
  %3783 = vdwg.mxu0
  %v3784 = vld [vmem:[%s73] sm:$0x1]
  %v3785 = vld [vmem:[%s75] sm:$0x1]
  %vm3786 = vcmask 517120
  %v3787 = vsel %vm3786, %v3781, 0.0
  %3788 = vadd.xlane.f32.xlu0 %v3787
  %v3789 = vpop.xlane.xlu0 %3788
  %v3790 = vmul.f32 %v3789, %v2205
  %v3791 = vsub.f32 %v3781, %v3790
  %v3792 = vmul.f32 %v3791, %v3791
  %v3793 = vsel %vm3786, %v3792, 0.0
  %3794 = vadd.xlane.f32.xlu0 %v3793
  %v3795 = vpop.xlane.xlu0 %3794
  %v3796 = vmul.f32 %v3795, %v2205
  %v3797 = vadd.f32 %v3796, 1e-05
  %v3798 = vrsqrt.pop %v3797
  %v3799 = vmul.f32 %v3791, %v3798
  %v3801 = vlaneseq
  %v3802 = vshrl.u32 %v3801, 7
  %v3803 = vsub.s32 0, %v3802
  %v3804 = vrot.slane %v3784, %v3803
  %v3806 = vmul.f32 %v3799, %v3804
  %v3808 = vlaneseq
  %v3809 = vshrl.u32 %v3808, 7
  %v3810 = vsub.s32 0, %v3809
  %v3811 = vrot.slane %v3785, %v3810
  %v3813 = vadd.f32 %v3806, %v3811
  %v3814 = vld [vmem:[%s77] sm:$0xff]
  %v3815 = vld [vmem:[%s77 + $0x8] sm:$0xf]
  %v3816 = vld [vmem:[%s77 + $0xc] sm:$0xff]
  %v3817 = vld [vmem:[%s77 + $0x14] sm:$0xf]
  %v3818 = vld [vmem:[%s77 + $0x18] sm:$0xff]
  %v3819 = vld [vmem:[%s77 + $0x20] sm:$0xf]
  %v3820 = vld [vmem:[%s77 + $0x24] sm:$0xff]
  %v3821 = vld [vmem:[%s77 + $0x2c] sm:$0xf]
  %v3822 = vld [vmem:[%s77 + $0x30] sm:$0xff]
  %v3823 = vld [vmem:[%s77 + $0x38] sm:$0xf]
  %v3824 = vld [vmem:[%s77 + $0x3c] sm:$0xff]
  %v3825 = vld [vmem:[%s77 + $0x44] sm:$0xf]
  %v3826 = vld [vmem:[%s77 + $0x48] sm:$0xff]
  %v3827 = vld [vmem:[%s77 + $0x50] sm:$0xf]
  %v3828 = vld [vmem:[%s77 + $0x54] sm:$0xff]
  %v3829 = vld [vmem:[%s77 + $0x5c] sm:$0xf]
  %v3830 = vpack.c.bf16 %v3813, %v3813
  %v3831 = vld [vmem:[%s79] sm:$0x7]
  %v3833 = vlaneseq
  %v3834 = vshrl.u32 %v3833, 7
  %v3835 = vsub.s32 0, %v3834
  %v3836 = vrot.slane %v3831, %v3835
  %v3837 = vlaneseq
  %v3838 = vshrl.u32 %v3837, 7
  %v3839 = vsub.s32 1, %v3838
  %v3840 = vrot.slane %v3831, %v3839
  %v3841 = vlaneseq
  %v3842 = vshrl.u32 %v3841, 7
  %v3843 = vsub.s32 2, %v3842
  %v3844 = vrot.slane %v3831, %v3843
  %v3864 = vunpack.c.l.b16 %v3814
  %v3865 = vunpack.c.h.b16 %v3814
  %v3866 = vunpack.c.l.b16 %v3815
  %v3867 = vunpack.c.l.b16 %v3816
  %v3868 = vunpack.c.h.b16 %v3816
  %v3869 = vunpack.c.l.b16 %v3817
  %v3870 = vunpack.c.l.b16 %v3818
  %v3871 = vunpack.c.h.b16 %v3818
  %v3872 = vunpack.c.l.b16 %v3819
  %v3873 = vunpack.c.l.b16 %v3820
  %v3874 = vunpack.c.h.b16 %v3820
  %v3875 = vunpack.c.l.b16 %v3821
  %v3876 = vunpack.c.l.b16 %v3822
  %v3877 = vunpack.c.h.b16 %v3822
  %v3878 = vunpack.c.l.b16 %v3823
  %v3879 = vunpack.c.l.b16 %v3824
  %v3880 = vunpack.c.h.b16 %v3824
  %v3881 = vunpack.c.l.b16 %v3825
  %v3882 = vunpack.c.l.b16 %v3826
  %v3883 = vunpack.c.h.b16 %v3826
  %v3884 = vunpack.c.l.b16 %v3827
  %v3885 = vunpack.c.l.b16 %v3828
  %v3886 = vunpack.c.h.b16 %v3828
  %v3887 = vunpack.c.l.b16 %v3829
  %v3888 = vpack.c.b16 %v3867, %v3864
  %v3889 = vpack.c.b16 %v3868, %v3865
  %v3890 = vpack.c.b16 %v3869, %v3866
  %v3891 = vpack.c.b16 %v3873, %v3870
  %v3892 = vpack.c.b16 %v3874, %v3871
  %v3893 = vpack.c.b16 %v3875, %v3872
  %v3894 = vpack.c.b16 %v3879, %v3876
  %v3895 = vpack.c.b16 %v3880, %v3877
  %v3896 = vpack.c.b16 %v3881, %v3878
  %v3897 = vpack.c.b16 %v3885, %v3882
  %v3898 = vpack.c.b16 %v3886, %v3883
  %v3899 = vpack.c.b16 %v3887, %v3884
  %v3913 = vsel %vm2023, %v3830, 0
  %3915 = vmatprep.subr.bf16.mxu0 %v3889
  %3916 = vmatpush1.bf16.msra.mxu0 %v3888
  %3917 = vmatprep.subr.bf16.mxu0 %v3892
  %3918 = vmatpush1.bf16.msra.mxu0 %v3891
  %3919 = vmatprep.subr.bf16.mxu0 %v3895
  %3920 = vmatpush1.bf16.msra.mxu0 %v3894
  %3921 = vmatprep.subr.bf16.mxu0 %v3898
  %3922 = vmatpush1.bf16.msra.mxu0 %v3897
  %3923 = vmatprep.subr.bf16.mxu0 0
  %3924 = vmatpush1.bf16.msra.mxu0 0
  %3925 = vmatprep.subr.bf16.mxu0 0
  %3926 = vmatpush1.bf16.msra.mxu0 0
  %3927 = vmatprep.subr.bf16.mxu0 0
  %3928 = vmatpush1.bf16.msra.mxu0 0
  %3929 = vmatprep.subr.bf16.mxu0 0
  %3930 = vmatpush1.bf16.msra.mxu0 0
  %3931 = vmatprep.subr.bf16.mxu0 0
  %3932 = vmatpush1.bf16.msra.mxu0 0
  %3933 = vmatprep.subr.bf16.mxu0 0
  %3934 = vmatpush1.bf16.msra.mxu0 0
  %3935 = vmatprep.subr.bf16.mxu0 0
  %3936 = vmatpush1.bf16.msra.mxu0 0
  %3937 = vmatprep.subr.bf16.mxu0 0
  %3938 = vmatpush1.bf16.msra.mxu0 0
  %3939 = vmatprep.subr.bf16.mxu0 0
  %3940 = vmatpush1.bf16.msra.mxu0 0
  %3941 = vmatprep.subr.bf16.mxu0 0
  %3942 = vmatpush1.bf16.msra.mxu0 0
  %3943 = vmatprep.subr.bf16.mxu0 0
  %3944 = vmatpush1.bf16.msra.mxu0 0
  %3945 = vmatprep.subr.bf16.mxu0 0
  %3946 = vmatpush1.bf16.msra.mxu0 0
  %3947 = vmatprep.mubr.bf16.mxu0 0
  %3948 = vmatmul.mubr.bf16.gmra.mrb[0].mxu0 %v3913
  %v3949 = vpop.f32.mrb[0].mxu0
  %v3950 = vadd.f32 %v3836, %v3949
  %v3951 = vpop.f32.mrb[0].mxu0
  %v3952 = vadd.f32 %v3840, %v3951
  %v3953 = vpop.f32.mrb[0].mxu0
  %v3954 = vpop.f32.mrb[0].mxu0
  %3955 = vdwg.mxu0
  %3956 = vmatprep.subr.bf16.mxu0 0
  %3957 = vmatpush1.bf16.msra.mxu0 %v3890
  %3958 = vmatprep.subr.bf16.mxu0 0
  %3959 = vmatpush1.bf16.msra.mxu0 %v3893
  %3960 = vmatprep.subr.bf16.mxu0 0
  %3961 = vmatpush1.bf16.msra.mxu0 %v3896
  %3962 = vmatprep.subr.bf16.mxu0 0
  %3963 = vmatpush1.bf16.msra.mxu0 %v3899
  %3964 = vmatprep.subr.bf16.mxu0 0
  %3965 = vmatpush1.bf16.msra.mxu0 0
  %3966 = vmatprep.subr.bf16.mxu0 0
  %3967 = vmatpush1.bf16.msra.mxu0 0
  %3968 = vmatprep.subr.bf16.mxu0 0
  %3969 = vmatpush1.bf16.msra.mxu0 0
  %3970 = vmatprep.subr.bf16.mxu0 0
  %3971 = vmatpush1.bf16.msra.mxu0 0
  %3972 = vmatprep.subr.bf16.mxu0 0
  %3973 = vmatpush1.bf16.msra.mxu0 0
  %3974 = vmatprep.subr.bf16.mxu0 0
  %3975 = vmatpush1.bf16.msra.mxu0 0
  %3976 = vmatprep.subr.bf16.mxu0 0
  %3977 = vmatpush1.bf16.msra.mxu0 0
  %3978 = vmatprep.subr.bf16.mxu0 0
  %3979 = vmatpush1.bf16.msra.mxu0 0
  %3980 = vmatprep.subr.bf16.mxu0 0
  %3981 = vmatpush1.bf16.msra.mxu0 0
  %3982 = vmatprep.subr.bf16.mxu0 0
  %3983 = vmatpush1.bf16.msra.mxu0 0
  %3984 = vmatprep.subr.bf16.mxu0 0
  %3985 = vmatpush1.bf16.msra.mxu0 0
  %3986 = vmatprep.subr.bf16.mxu0 0
  %3987 = vmatpush1.bf16.msra.mxu0 0
  %3988 = vmatprep.mubr.bf16.mxu0 0
  %3989 = vmatmul.mubr.bf16.gmra.mrb[0].mxu0 %v3913
  %v3990 = vpop.f32.mrb[0].mxu0
  %v3991 = vadd.f32 %v3844, %v3990
  %v3992 = vpop.f32.mrb[0].mxu0
  %v3993 = vpop.f32.mrb[0].mxu0
  %v3994 = vpop.f32.mrb[0].mxu0
  %3995 = vdwg.mxu0
  %v3996 = vld [vmem:[%s27] sm:$0xff]
  %v3997 = vld [vmem:[%s27 + $0x8] sm:$0xff]
  %v3998 = vld [vmem:[%s27 + $0x10] sm:$0xff]
  %v3999 = vld [vmem:[%s27 + $0x18] sm:$0xff]
  %v4001 = vsel %vm2111, %v3996, 0
  %v4004 = vsel %vm2111, %v3997, 0
  %v4007 = vsel %vm2111, %v3998, 0
  %v4010 = vsel %vm2111, %v3999, 0
  %v4013 = vsel %vm2118, %v3950, 0
  %v4016 = vsel %vm2118, %v3952, 0
  %v4019 = vsel %vm2118, %v3991, 0
  %4021 = vmatprep.subr.mxu0 %v4016
  %4022 = vmatpush1.msra.mxu0 %v4013
  %4023 = vmatprep.subr.mxu0 0.0
  %4024 = vmatpush1.msra.mxu0 0.0
  %4025 = vmatprep.subr.mxu0 0.0
  %4026 = vmatpush1.msra.mxu0 0.0
  %4027 = vmatprep.subr.mxu0 0.0
  %4028 = vmatpush1.msra.mxu0 0.0
  %4029 = vmatprep.subr.mxu0 0.0
  %4030 = vmatpush1.msra.mxu0 0.0
  %4031 = vmatprep.subr.mxu0 0.0
  %4032 = vmatpush1.msra.mxu0 0.0
  %4033 = vmatprep.subr.mxu0 0.0
  %4034 = vmatpush1.msra.mxu0 0.0
  %4035 = vmatprep.subr.mxu0 0.0
  %4036 = vmatpush1.msra.mxu0 0.0
  %4037 = vmatprep.subr.mxu0 0.0
  %4038 = vmatpush1.msra.mxu0 0.0
  %4039 = vmatprep.subr.mxu0 0.0
  %4040 = vmatpush1.msra.mxu0 0.0
  %4041 = vmatprep.subr.mxu0 0.0
  %4042 = vmatpush1.msra.mxu0 0.0
  %4043 = vmatprep.subr.mxu0 0.0
  %4044 = vmatpush1.msra.mxu0 0.0
  %4045 = vmatprep.subr.mxu0 0.0
  %4046 = vmatpush1.msra.mxu0 0.0
  %4047 = vmatprep.subr.mxu0 0.0
  %4048 = vmatpush1.msra.mxu0 0.0
  %4049 = vmatprep.subr.mxu0 0.0
  %4050 = vmatpush1.msra.mxu0 0.0
  %4051 = vmatprep.subr.mxu0 0.0
  %4052 = vmatpush1.msra.mxu0 0.0
  %4053 = vmatprep.subr.mxu0 0.0
  %4054 = vmatpush1.msra.mxu0 0.0
  %4055 = vmatprep.subr.mxu0 0.0
  %4056 = vmatpush1.msra.mxu0 0.0
  %4057 = vmatprep.subr.mxu0 0.0
  %4058 = vmatpush1.msra.mxu0 0.0
  %4059 = vmatprep.subr.mxu0 0.0
  %4060 = vmatpush1.msra.mxu0 0.0
  %4061 = vmatprep.subr.mxu0 0.0
  %4062 = vmatpush1.msra.mxu0 0.0
  %4063 = vmatprep.subr.mxu0 0.0
  %4064 = vmatpush1.msra.mxu0 0.0
  %4065 = vmatprep.subr.mxu0 0.0
  %4066 = vmatpush1.msra.mxu0 0.0
  %4067 = vmatprep.subr.mxu0 0.0
  %4068 = vmatpush1.msra.mxu0 0.0
  %4069 = vmatprep.subr.mxu0 0.0
  %4070 = vmatpush1.msra.mxu0 0.0
  %4071 = vmatprep.subr.mxu0 0.0
  %4072 = vmatpush1.msra.mxu0 0.0
  %4073 = vmatprep.subr.mxu0 0.0
  %4074 = vmatpush1.msra.mxu0 0.0
  %4075 = vmatprep.subr.mxu0 0.0
  %4076 = vmatpush1.msra.mxu0 0.0
  %4077 = vmatprep.subr.mxu0 0.0
  %4078 = vmatpush1.msra.mxu0 0.0
  %4079 = vmatprep.subr.mxu0 0.0
  %4080 = vmatpush1.msra.mxu0 0.0
  %4081 = vmatprep.subr.mxu0 0.0
  %4082 = vmatpush1.msra.mxu0 0.0
  %4083 = vmatprep.subr.mxu0 0.0
  %4084 = vmatpush1.msra.mxu0 0.0
  %4085 = vmatprep.mubr.f32.mxu0 0.0
  %4086 = vmatmul.mubr.f32.gmra.mrb[0].mxu0 %v4001
  %v4087 = vpop.f32.mrb[0].mxu0
  %v4088 = vadd.f32 0.0, %v4087
  %v4089 = vpop.f32.mrb[0].mxu0
  %v4090 = vadd.f32 0.0, %v4089
  %4091 = vmatprep.mubr.f32.mxu0 0.0
  %4092 = vmatmul.mubr.f32.gmra.mrb[0].mxu0 %v4004
  %v4093 = vpop.f32.mrb[0].mxu0
  %v4094 = vadd.f32 0.0, %v4093
  %v4095 = vpop.f32.mrb[0].mxu0
  %v4096 = vadd.f32 0.0, %v4095
  %4097 = vmatprep.mubr.f32.mxu0 0.0
  %4098 = vmatmul.mubr.f32.gmra.mrb[0].mxu0 %v4007
  %v4099 = vpop.f32.mrb[0].mxu0
  %v4100 = vadd.f32 0.0, %v4099
  %v4101 = vpop.f32.mrb[0].mxu0
  %v4102 = vadd.f32 0.0, %v4101
  %4103 = vmatprep.mubr.f32.mxu0 0.0
  %4104 = vmatmul.mubr.f32.gmra.mrb[0].mxu0 %v4010
  %v4105 = vpop.f32.mrb[0].mxu0
  %v4106 = vadd.f32 0.0, %v4105
  %v4107 = vpop.f32.mrb[0].mxu0
  %v4108 = vadd.f32 0.0, %v4107
  %4109 = vdwg.mxu0
  %4110 = vmatprep.subr.mxu0 0.0
  %4111 = vmatpush1.msra.mxu0 %v4019
  %4112 = vmatprep.subr.mxu0 0.0
  %4113 = vmatpush1.msra.mxu0 0.0
  %4114 = vmatprep.subr.mxu0 0.0
  %4115 = vmatpush1.msra.mxu0 0.0
  %4116 = vmatprep.subr.mxu0 0.0
  %4117 = vmatpush1.msra.mxu0 0.0
  %4118 = vmatprep.subr.mxu0 0.0
  %4119 = vmatpush1.msra.mxu0 0.0
  %4120 = vmatprep.subr.mxu0 0.0
  %4121 = vmatpush1.msra.mxu0 0.0
  %4122 = vmatprep.subr.mxu0 0.0
  %4123 = vmatpush1.msra.mxu0 0.0
  %4124 = vmatprep.subr.mxu0 0.0
  %4125 = vmatpush1.msra.mxu0 0.0
  %4126 = vmatprep.subr.mxu0 0.0
  %4127 = vmatpush1.msra.mxu0 0.0
  %4128 = vmatprep.subr.mxu0 0.0
  %4129 = vmatpush1.msra.mxu0 0.0
  %4130 = vmatprep.subr.mxu0 0.0
  %4131 = vmatpush1.msra.mxu0 0.0
  %4132 = vmatprep.subr.mxu0 0.0
  %4133 = vmatpush1.msra.mxu0 0.0
  %4134 = vmatprep.subr.mxu0 0.0
  %4135 = vmatpush1.msra.mxu0 0.0
  %4136 = vmatprep.subr.mxu0 0.0
  %4137 = vmatpush1.msra.mxu0 0.0
  %4138 = vmatprep.subr.mxu0 0.0
  %4139 = vmatpush1.msra.mxu0 0.0
  %4140 = vmatprep.subr.mxu0 0.0
  %4141 = vmatpush1.msra.mxu0 0.0
  %4142 = vmatprep.subr.mxu0 0.0
  %4143 = vmatpush1.msra.mxu0 0.0
  %4144 = vmatprep.subr.mxu0 0.0
  %4145 = vmatpush1.msra.mxu0 0.0
  %4146 = vmatprep.subr.mxu0 0.0
  %4147 = vmatpush1.msra.mxu0 0.0
  %4148 = vmatprep.subr.mxu0 0.0
  %4149 = vmatpush1.msra.mxu0 0.0
  %4150 = vmatprep.subr.mxu0 0.0
  %4151 = vmatpush1.msra.mxu0 0.0
  %4152 = vmatprep.subr.mxu0 0.0
  %4153 = vmatpush1.msra.mxu0 0.0
  %4154 = vmatprep.subr.mxu0 0.0
  %4155 = vmatpush1.msra.mxu0 0.0
  %4156 = vmatprep.subr.mxu0 0.0
  %4157 = vmatpush1.msra.mxu0 0.0
  %4158 = vmatprep.subr.mxu0 0.0
  %4159 = vmatpush1.msra.mxu0 0.0
  %4160 = vmatprep.subr.mxu0 0.0
  %4161 = vmatpush1.msra.mxu0 0.0
  %4162 = vmatprep.subr.mxu0 0.0
  %4163 = vmatpush1.msra.mxu0 0.0
  %4164 = vmatprep.subr.mxu0 0.0
  %4165 = vmatpush1.msra.mxu0 0.0
  %4166 = vmatprep.subr.mxu0 0.0
  %4167 = vmatpush1.msra.mxu0 0.0
  %4168 = vmatprep.subr.mxu0 0.0
  %4169 = vmatpush1.msra.mxu0 0.0
  %4170 = vmatprep.subr.mxu0 0.0
  %4171 = vmatpush1.msra.mxu0 0.0
  %4172 = vmatprep.subr.mxu0 0.0
  %4173 = vmatpush1.msra.mxu0 0.0
  %4174 = vmatprep.mubr.f32.mxu0 0.0
  %4175 = vmatmul.mubr.f32.gmra.mrb[0].mxu0 %v4001
  %v4176 = vpop.f32.mrb[0].mxu0
  %v4177 = vadd.f32 0.0, %v4176
  %v4178 = vpop.f32.mrb[0].mxu0
  %4179 = vmatprep.mubr.f32.mxu0 0.0
  %4180 = vmatmul.mubr.f32.gmra.mrb[0].mxu0 %v4004
  %v4181 = vpop.f32.mrb[0].mxu0
  %v4182 = vadd.f32 0.0, %v4181
  %v4183 = vpop.f32.mrb[0].mxu0
  %4184 = vmatprep.mubr.f32.mxu0 0.0
  %4185 = vmatmul.mubr.f32.gmra.mrb[0].mxu0 %v4007
  %v4186 = vpop.f32.mrb[0].mxu0
  %v4187 = vadd.f32 0.0, %v4186
  %v4188 = vpop.f32.mrb[0].mxu0
  %4189 = vmatprep.mubr.f32.mxu0 0.0
  %4190 = vmatmul.mubr.f32.gmra.mrb[0].mxu0 %v4010
  %v4191 = vpop.f32.mrb[0].mxu0
  %v4192 = vadd.f32 0.0, %v4191
  %v4193 = vpop.f32.mrb[0].mxu0
  %4194 = vdwg.mxu0
  %v4195 = vmul.f32 %v4088, %v1684
  %v4196 = vmul.f32 %v4090, %v1685
  %v4197 = vmul.f32 %v4177, %v1686
  %v4198 = vmul.f32 %v4094, %v1687
  %v4199 = vmul.f32 %v4096, %v1688
  %v4200 = vmul.f32 %v4182, %v1689
  %v4201 = vmul.f32 %v4100, %v1690
  %v4202 = vmul.f32 %v4102, %v1691
  %v4203 = vmul.f32 %v4187, %v1692
  %v4204 = vmul.f32 %v4106, %v1693
  %v4205 = vmul.f32 %v4108, %v1694
  %v4206 = vmul.f32 %v4192, %v1695
  %v4207 = vld [vmem:[%s21] sm:$0xff]
  %v4208 = vld [vmem:[%s21 + $0x8] sm:$0xff]
  %v4209 = vld [vmem:[%s21 + $0x10] sm:$0xff]
  %v4210 = vld [vmem:[%s21 + $0x18] sm:$0xff]
  %v4211 = vld [vmem:[%s21 + $0x20] sm:$0xff]
  %v4212 = vld [vmem:[%s21 + $0x28] sm:$0xff]
  %v4213 = vld [vmem:[%s21 + $0x30] sm:$0xff]
  %v4214 = vld [vmem:[%s21 + $0x38] sm:$0xff]
  %v4215 = vld [vmem:[%s21 + $0x40] sm:$0xff]
  %v4216 = vld [vmem:[%s21 + $0x48] sm:$0xff]
  %v4217 = vld [vmem:[%s21 + $0x50] sm:$0xff]
  %v4218 = vld [vmem:[%s21 + $0x58] sm:$0xff]
  %v4219 = vld [vmem:[%s21 + $0x60] sm:$0xff]
  %v4220 = vld [vmem:[%s21 + $0x68] sm:$0xff]
  %v4221 = vld [vmem:[%s21 + $0x70] sm:$0xff]
  %v4222 = vld [vmem:[%s21 + $0x78] sm:$0xff]
  %v4223 = vld [vmem:[%s21 + $0x80] sm:$0xff]
  %v4224 = vld [vmem:[%s21 + $0x88] sm:$0xff]
  %v4225 = vld [vmem:[%s21 + $0x90] sm:$0xff]
  %v4226 = vld [vmem:[%s21 + $0x98] sm:$0xff]
  %v4227 = vld [vmem:[%s21 + $0xa0] sm:$0xff]
  %v4228 = vld [vmem:[%s21 + $0xa8] sm:$0xff]
  %v4229 = vld [vmem:[%s21 + $0xb0] sm:$0xff]
  %v4230 = vld [vmem:[%s21 + $0xb8] sm:$0xff]
  %v4231 = vld [vmem:[%s21 + $0xc0] sm:$0xff]
  %v4232 = vld [vmem:[%s21 + $0xc8] sm:$0xff]
  %v4233 = vld [vmem:[%s21 + $0xd0] sm:$0xff]
  %v4234 = vld [vmem:[%s21 + $0xd8] sm:$0xff]
  %v4235 = vld [vmem:[%s21 + $0xe0] sm:$0xff]
  %v4236 = vld [vmem:[%s21 + $0xe8] sm:$0xff]
  %v4237 = vld [vmem:[%s21 + $0xf0] sm:$0xff]
  %v4238 = vld [vmem:[%s21 + $0xf8] sm:$0xff]
  %v4239 = vld [vmem:[%s21 + $0x100] sm:$0xff]
  %v4240 = vld [vmem:[%s21 + $0x108] sm:$0xff]
  %v4241 = vld [vmem:[%s21 + $0x110] sm:$0xff]
  %v4242 = vld [vmem:[%s21 + $0x118] sm:$0xff]
  %v4243 = vld [vmem:[%s21 + $0x120] sm:$0xff]
  %v4244 = vld [vmem:[%s21 + $0x128] sm:$0xff]
  %v4245 = vld [vmem:[%s21 + $0x130] sm:$0xff]
  %v4246 = vld [vmem:[%s21 + $0x138] sm:$0xff]
  %v4248 = vsel %vm2023, %v4197, 0
  %v4251 = vsel %vm2023, %v4200, 0
  %v4254 = vsel %vm2023, %v4203, 0
  %v4257 = vsel %vm2023, %v4206, 0
  %4259 = vmatprep.subr.mxu0 0.0
  %4260 = vmatpush1.msra.mxu0 %v4207
  %4261 = vmatprep.subr.mxu0 0.0
  %4262 = vmatpush1.msra.mxu0 %v4208
  %4263 = vmatprep.subr.mxu0 0.0
  %4264 = vmatpush1.msra.mxu0 %v4209
  %4265 = vmatprep.subr.mxu0 0.0
  %4266 = vmatpush1.msra.mxu0 %v4210
  %4267 = vmatprep.subr.mxu0 0.0
  %4268 = vmatpush1.msra.mxu0 %v4211
  %4269 = vmatprep.subr.mxu0 0.0
  %4270 = vmatpush1.msra.mxu0 %v4212
  %4271 = vmatprep.subr.mxu0 0.0
  %4272 = vmatpush1.msra.mxu0 %v4213
  %4273 = vmatprep.subr.mxu0 0.0
  %4274 = vmatpush1.msra.mxu0 %v4214
  %4275 = vmatprep.subr.mxu0 0.0
  %4276 = vmatpush1.msra.mxu0 %v4215
  %4277 = vmatprep.subr.mxu0 0.0
  %4278 = vmatpush1.msra.mxu0 %v4216
  %4279 = vmatprep.subr.mxu0 0.0
  %4280 = vmatpush1.msra.mxu0 %v4217
  %4281 = vmatprep.subr.mxu0 0.0
  %4282 = vmatpush1.msra.mxu0 %v4218
  %4283 = vmatprep.subr.mxu0 0.0
  %4284 = vmatpush1.msra.mxu0 %v4219
  %4285 = vmatprep.subr.mxu0 0.0
  %4286 = vmatpush1.msra.mxu0 %v4220
  %4287 = vmatprep.subr.mxu0 0.0
  %4288 = vmatpush1.msra.mxu0 %v4221
  %4289 = vmatprep.subr.mxu0 0.0
  %4290 = vmatpush1.msra.mxu0 %v4222
  %4291 = vmatprep.subr.mxu0 0.0
  %4292 = vmatpush1.msra.mxu0 %v4223
  %4293 = vmatprep.subr.mxu0 0.0
  %4294 = vmatpush1.msra.mxu0 %v4224
  %4295 = vmatprep.subr.mxu0 0.0
  %4296 = vmatpush1.msra.mxu0 %v4225
  %4297 = vmatprep.subr.mxu0 0.0
  %4298 = vmatpush1.msra.mxu0 %v4226
  %4299 = vmatprep.subr.mxu0 0.0
  %4300 = vmatpush1.msra.mxu0 %v4227
  %4301 = vmatprep.subr.mxu0 0.0
  %4302 = vmatpush1.msra.mxu0 %v4228
  %4303 = vmatprep.subr.mxu0 0.0
  %4304 = vmatpush1.msra.mxu0 %v4229
  %4305 = vmatprep.subr.mxu0 0.0
  %4306 = vmatpush1.msra.mxu0 %v4230
  %4307 = vmatprep.subr.mxu0 0.0
  %4308 = vmatpush1.msra.mxu0 %v4231
  %4309 = vmatprep.subr.mxu0 0.0
  %4310 = vmatpush1.msra.mxu0 %v4232
  %4311 = vmatprep.subr.mxu0 0.0
  %4312 = vmatpush1.msra.mxu0 %v4233
  %4313 = vmatprep.subr.mxu0 0.0
  %4314 = vmatpush1.msra.mxu0 %v4234
  %4315 = vmatprep.subr.mxu0 0.0
  %4316 = vmatpush1.msra.mxu0 %v4235
  %4317 = vmatprep.subr.mxu0 0.0
  %4318 = vmatpush1.msra.mxu0 %v4236
  %4319 = vmatprep.subr.mxu0 0.0
  %4320 = vmatpush1.msra.mxu0 %v4237
  %4321 = vmatprep.subr.mxu0 0.0
  %4322 = vmatpush1.msra.mxu0 %v4238
  %4323 = vmatprep.mubr.f32.mxu0 %v4196
  %4324 = vmatmul.mubr.f32.gmra.mrb[0].mxu0 %v4195
  %v4325 = vpop.f32.mrb[0].mxu0
  %v4326 = vadd.f32 0.0, %v4325
  %v4327 = vpop.f32.mrb[0].mxu0
  %4328 = vmatprep.mubr.f32.mxu0 %v4199
  %4329 = vmatmul.mubr.f32.gmra.mrb[0].mxu0 %v4198
  %v4330 = vpop.f32.mrb[0].mxu0
  %v4331 = vadd.f32 0.0, %v4330
  %v4332 = vpop.f32.mrb[0].mxu0
  %4333 = vmatprep.mubr.f32.mxu0 %v4202
  %4334 = vmatmul.mubr.f32.gmra.mrb[0].mxu0 %v4201
  %v4335 = vpop.f32.mrb[0].mxu0
  %v4336 = vadd.f32 0.0, %v4335
  %v4337 = vpop.f32.mrb[0].mxu0
  %4338 = vmatprep.mubr.f32.mxu0 %v4205
  %4339 = vmatmul.mubr.f32.gmra.mrb[0].mxu0 %v4204
  %v4340 = vpop.f32.mrb[0].mxu0
  %v4341 = vadd.f32 0.0, %v4340
  %v4342 = vpop.f32.mrb[0].mxu0
  %4343 = vdwg.mxu0
  %4344 = vmatprep.subr.mxu0 0.0
  %4345 = vmatpush1.msra.mxu0 %v4239
  %4346 = vmatprep.subr.mxu0 0.0
  %4347 = vmatpush1.msra.mxu0 %v4240
  %4348 = vmatprep.subr.mxu0 0.0
  %4349 = vmatpush1.msra.mxu0 %v4241
  %4350 = vmatprep.subr.mxu0 0.0
  %4351 = vmatpush1.msra.mxu0 %v4242
  %4352 = vmatprep.subr.mxu0 0.0
  %4353 = vmatpush1.msra.mxu0 %v4243
  %4354 = vmatprep.subr.mxu0 0.0
  %4355 = vmatpush1.msra.mxu0 %v4244
  %4356 = vmatprep.subr.mxu0 0.0
  %4357 = vmatpush1.msra.mxu0 %v4245
  %4358 = vmatprep.subr.mxu0 0.0
  %4359 = vmatpush1.msra.mxu0 %v4246
  %4360 = vmatprep.subr.mxu0 0.0
  %4361 = vmatpush1.msra.mxu0 0.0
  %4362 = vmatprep.subr.mxu0 0.0
  %4363 = vmatpush1.msra.mxu0 0.0
  %4364 = vmatprep.subr.mxu0 0.0
  %4365 = vmatpush1.msra.mxu0 0.0
  %4366 = vmatprep.subr.mxu0 0.0
  %4367 = vmatpush1.msra.mxu0 0.0
  %4368 = vmatprep.subr.mxu0 0.0
  %4369 = vmatpush1.msra.mxu0 0.0
  %4370 = vmatprep.subr.mxu0 0.0
  %4371 = vmatpush1.msra.mxu0 0.0
  %4372 = vmatprep.subr.mxu0 0.0
  %4373 = vmatpush1.msra.mxu0 0.0
  %4374 = vmatprep.subr.mxu0 0.0
  %4375 = vmatpush1.msra.mxu0 0.0
  %4376 = vmatprep.subr.mxu0 0.0
  %4377 = vmatpush1.msra.mxu0 0.0
  %4378 = vmatprep.subr.mxu0 0.0
  %4379 = vmatpush1.msra.mxu0 0.0
  %4380 = vmatprep.subr.mxu0 0.0
  %4381 = vmatpush1.msra.mxu0 0.0
  %4382 = vmatprep.subr.mxu0 0.0
  %4383 = vmatpush1.msra.mxu0 0.0
  %4384 = vmatprep.subr.mxu0 0.0
  %4385 = vmatpush1.msra.mxu0 0.0
  %4386 = vmatprep.subr.mxu0 0.0
  %4387 = vmatpush1.msra.mxu0 0.0
  %4388 = vmatprep.subr.mxu0 0.0
  %4389 = vmatpush1.msra.mxu0 0.0
  %4390 = vmatprep.subr.mxu0 0.0
  %4391 = vmatpush1.msra.mxu0 0.0
  %4392 = vmatprep.subr.mxu0 0.0
  %4393 = vmatpush1.msra.mxu0 0.0
  %4394 = vmatprep.subr.mxu0 0.0
  %4395 = vmatpush1.msra.mxu0 0.0
  %4396 = vmatprep.subr.mxu0 0.0
  %4397 = vmatpush1.msra.mxu0 0.0
  %4398 = vmatprep.subr.mxu0 0.0
  %4399 = vmatpush1.msra.mxu0 0.0
  %4400 = vmatprep.subr.mxu0 0.0
  %4401 = vmatpush1.msra.mxu0 0.0
  %4402 = vmatprep.subr.mxu0 0.0
  %4403 = vmatpush1.msra.mxu0 0.0
  %4404 = vmatprep.subr.mxu0 0.0
  %4405 = vmatpush1.msra.mxu0 0.0
  %4406 = vmatprep.subr.mxu0 0.0
  %4407 = vmatpush1.msra.mxu0 0.0
  %4408 = vmatprep.mubr.f32.mxu0 0.0
  %4409 = vmatmul.mubr.f32.gmra.mrb[0].mxu0 %v4248
  %v4410 = vpop.f32.mrb[0].mxu0
  %v4411 = vadd.f32 %v4326, %v4410
  %v4412 = vpop.f32.mrb[0].mxu0
  %4413 = vmatprep.mubr.f32.mxu0 0.0
  %4414 = vmatmul.mubr.f32.gmra.mrb[0].mxu0 %v4251
  %v4415 = vpop.f32.mrb[0].mxu0
  %v4416 = vadd.f32 %v4331, %v4415
  %v4417 = vpop.f32.mrb[0].mxu0
  %4418 = vmatprep.mubr.f32.mxu0 0.0
  %4419 = vmatmul.mubr.f32.gmra.mrb[0].mxu0 %v4254
  %v4420 = vpop.f32.mrb[0].mxu0
  %v4421 = vadd.f32 %v4336, %v4420
  %v4422 = vpop.f32.mrb[0].mxu0
  %4423 = vmatprep.mubr.f32.mxu0 0.0
  %4424 = vmatmul.mubr.f32.gmra.mrb[0].mxu0 %v4257
  %v4425 = vpop.f32.mrb[0].mxu0
  %v4426 = vadd.f32 %v4341, %v4425
  %v4427 = vpop.f32.mrb[0].mxu0
  %4428 = vdwg.mxu0
  %v4429 = vld [vmem:[%s17] sm:$0xff]
  %v4430 = vld [vmem:[%s17 + $0x8] sm:$0xff]
  %v4431 = vld [vmem:[%s17 + $0x10] sm:$0xf]
  %v4433 = vsel %vm1487, %v4411, 0
  %v4436 = vsel %vm1487, %v4416, 0
  %v4439 = vsel %vm1487, %v4421, 0
  %v4442 = vsel %vm1487, %v4426, 0
  %v4445 = vsel %vm1500, %v4431, 0
  %4447 = vmatprep.subr.mxu0 0.0
  %4448 = vmatpush1.msra.mxu0 %v4429
  %4449 = vmatprep.subr.mxu0 0.0
  %4450 = vmatpush1.msra.mxu0 %v4430
  %4451 = vmatprep.subr.mxu0 0.0
  %4452 = vmatpush1.msra.mxu0 %v4445
  %4453 = vmatprep.subr.mxu0 0.0
  %4454 = vmatpush1.msra.mxu0 0.0
  %4455 = vmatprep.subr.mxu0 0.0
  %4456 = vmatpush1.msra.mxu0 0.0
  %4457 = vmatprep.subr.mxu0 0.0
  %4458 = vmatpush1.msra.mxu0 0.0
  %4459 = vmatprep.subr.mxu0 0.0
  %4460 = vmatpush1.msra.mxu0 0.0
  %4461 = vmatprep.subr.mxu0 0.0
  %4462 = vmatpush1.msra.mxu0 0.0
  %4463 = vmatprep.subr.mxu0 0.0
  %4464 = vmatpush1.msra.mxu0 0.0
  %4465 = vmatprep.subr.mxu0 0.0
  %4466 = vmatpush1.msra.mxu0 0.0
  %4467 = vmatprep.subr.mxu0 0.0
  %4468 = vmatpush1.msra.mxu0 0.0
  %4469 = vmatprep.subr.mxu0 0.0
  %4470 = vmatpush1.msra.mxu0 0.0
  %4471 = vmatprep.subr.mxu0 0.0
  %4472 = vmatpush1.msra.mxu0 0.0
  %4473 = vmatprep.subr.mxu0 0.0
  %4474 = vmatpush1.msra.mxu0 0.0
  %4475 = vmatprep.subr.mxu0 0.0
  %4476 = vmatpush1.msra.mxu0 0.0
  %4477 = vmatprep.subr.mxu0 0.0
  %4478 = vmatpush1.msra.mxu0 0.0
  %4479 = vmatprep.subr.mxu0 0.0
  %4480 = vmatpush1.msra.mxu0 0.0
  %4481 = vmatprep.subr.mxu0 0.0
  %4482 = vmatpush1.msra.mxu0 0.0
  %4483 = vmatprep.subr.mxu0 0.0
  %4484 = vmatpush1.msra.mxu0 0.0
  %4485 = vmatprep.subr.mxu0 0.0
  %4486 = vmatpush1.msra.mxu0 0.0
  %4487 = vmatprep.subr.mxu0 0.0
  %4488 = vmatpush1.msra.mxu0 0.0
  %4489 = vmatprep.subr.mxu0 0.0
  %4490 = vmatpush1.msra.mxu0 0.0
  %4491 = vmatprep.subr.mxu0 0.0
  %4492 = vmatpush1.msra.mxu0 0.0
  %4493 = vmatprep.subr.mxu0 0.0
  %4494 = vmatpush1.msra.mxu0 0.0
  %4495 = vmatprep.subr.mxu0 0.0
  %4496 = vmatpush1.msra.mxu0 0.0
  %4497 = vmatprep.subr.mxu0 0.0
  %4498 = vmatpush1.msra.mxu0 0.0
  %4499 = vmatprep.subr.mxu0 0.0
  %4500 = vmatpush1.msra.mxu0 0.0
  %4501 = vmatprep.subr.mxu0 0.0
  %4502 = vmatpush1.msra.mxu0 0.0
  %4503 = vmatprep.subr.mxu0 0.0
  %4504 = vmatpush1.msra.mxu0 0.0
  %4505 = vmatprep.subr.mxu0 0.0
  %4506 = vmatpush1.msra.mxu0 0.0
  %4507 = vmatprep.subr.mxu0 0.0
  %4508 = vmatpush1.msra.mxu0 0.0
  %4509 = vmatprep.subr.mxu0 0.0
  %4510 = vmatpush1.msra.mxu0 0.0
  %4511 = vmatprep.mubr.f32.mxu0 0.0
  %4512 = vmatmul.mubr.f32.gmra.mrb[0].mxu0 %v4433
  %v4513 = vpop.f32.mrb[0].mxu0
  %v4514 = vadd.f32 0.0, %v4513
  %v4515 = vpop.f32.mrb[0].mxu0
  %4516 = vmatprep.mubr.f32.mxu0 0.0
  %4517 = vmatmul.mubr.f32.gmra.mrb[0].mxu0 %v4436
  %v4518 = vpop.f32.mrb[0].mxu0
  %v4519 = vadd.f32 0.0, %v4518
  %v4520 = vpop.f32.mrb[0].mxu0
  %4521 = vmatprep.mubr.f32.mxu0 0.0
  %4522 = vmatmul.mubr.f32.gmra.mrb[0].mxu0 %v4439
  %v4523 = vpop.f32.mrb[0].mxu0
  %v4524 = vadd.f32 0.0, %v4523
  %v4525 = vpop.f32.mrb[0].mxu0
  %4526 = vmatprep.mubr.f32.mxu0 0.0
  %4527 = vmatmul.mubr.f32.gmra.mrb[0].mxu0 %v4442
  %v4528 = vpop.f32.mrb[0].mxu0
  %v4529 = vadd.f32 0.0, %v4528
  %v4530 = vpop.f32.mrb[0].mxu0
  %4531 = vdwg.mxu0
  %v4532 = vsel %vm870, %v4514, %v174
  %v4533 = vsel %vm871, %v4519, %v175
  %v4534 = vsel %vm872, %v4524, %v176
  %v4535 = vsel %vm873, %v4529, %v177
  %s4536 = scalar_lea.vmem %s17, 24
  %v4537 = vld [vmem:[%s4536] sm:$0xff]
  %v4538 = vld [vmem:[%s4536 + $0x8] sm:$0xff]
  %v4539 = vld [vmem:[%s4536 + $0x10] sm:$0xf]
  %v4541 = vsel %vm1500, %v4539, 0
  %4543 = vmatprep.subr.mxu0 0.0
  %4544 = vmatpush1.msra.mxu0 %v4537
  %4545 = vmatprep.subr.mxu0 0.0
  %4546 = vmatpush1.msra.mxu0 %v4538
  %4547 = vmatprep.subr.mxu0 0.0
  %4548 = vmatpush1.msra.mxu0 %v4541
  %4549 = vmatprep.subr.mxu0 0.0
  %4550 = vmatpush1.msra.mxu0 0.0
  %4551 = vmatprep.subr.mxu0 0.0
  %4552 = vmatpush1.msra.mxu0 0.0
  %4553 = vmatprep.subr.mxu0 0.0
  %4554 = vmatpush1.msra.mxu0 0.0
  %4555 = vmatprep.subr.mxu0 0.0
  %4556 = vmatpush1.msra.mxu0 0.0
  %4557 = vmatprep.subr.mxu0 0.0
  %4558 = vmatpush1.msra.mxu0 0.0
  %4559 = vmatprep.subr.mxu0 0.0
  %4560 = vmatpush1.msra.mxu0 0.0
  %4561 = vmatprep.subr.mxu0 0.0
  %4562 = vmatpush1.msra.mxu0 0.0
  %4563 = vmatprep.subr.mxu0 0.0
  %4564 = vmatpush1.msra.mxu0 0.0
  %4565 = vmatprep.subr.mxu0 0.0
  %4566 = vmatpush1.msra.mxu0 0.0
  %4567 = vmatprep.subr.mxu0 0.0
  %4568 = vmatpush1.msra.mxu0 0.0
  %4569 = vmatprep.subr.mxu0 0.0
  %4570 = vmatpush1.msra.mxu0 0.0
  %4571 = vmatprep.subr.mxu0 0.0
  %4572 = vmatpush1.msra.mxu0 0.0
  %4573 = vmatprep.subr.mxu0 0.0
  %4574 = vmatpush1.msra.mxu0 0.0
  %4575 = vmatprep.subr.mxu0 0.0
  %4576 = vmatpush1.msra.mxu0 0.0
  %4577 = vmatprep.subr.mxu0 0.0
  %4578 = vmatpush1.msra.mxu0 0.0
  %4579 = vmatprep.subr.mxu0 0.0
  %4580 = vmatpush1.msra.mxu0 0.0
  %4581 = vmatprep.subr.mxu0 0.0
  %4582 = vmatpush1.msra.mxu0 0.0
  %4583 = vmatprep.subr.mxu0 0.0
  %4584 = vmatpush1.msra.mxu0 0.0
  %4585 = vmatprep.subr.mxu0 0.0
  %4586 = vmatpush1.msra.mxu0 0.0
  %4587 = vmatprep.subr.mxu0 0.0
  %4588 = vmatpush1.msra.mxu0 0.0
  %4589 = vmatprep.subr.mxu0 0.0
  %4590 = vmatpush1.msra.mxu0 0.0
  %4591 = vmatprep.subr.mxu0 0.0
  %4592 = vmatpush1.msra.mxu0 0.0
  %4593 = vmatprep.subr.mxu0 0.0
  %4594 = vmatpush1.msra.mxu0 0.0
  %4595 = vmatprep.subr.mxu0 0.0
  %4596 = vmatpush1.msra.mxu0 0.0
  %4597 = vmatprep.subr.mxu0 0.0
  %4598 = vmatpush1.msra.mxu0 0.0
  %4599 = vmatprep.subr.mxu0 0.0
  %4600 = vmatpush1.msra.mxu0 0.0
  %4601 = vmatprep.subr.mxu0 0.0
  %4602 = vmatpush1.msra.mxu0 0.0
  %4603 = vmatprep.subr.mxu0 0.0
  %4604 = vmatpush1.msra.mxu0 0.0
  %4605 = vmatprep.subr.mxu0 0.0
  %4606 = vmatpush1.msra.mxu0 0.0
  %4607 = vmatprep.mubr.f32.mxu0 0.0
  %4608 = vmatmul.mubr.f32.gmra.mrb[0].mxu0 %v4433
  %v4609 = vpop.f32.mrb[0].mxu0
  %v4610 = vadd.f32 0.0, %v4609
  %v4611 = vpop.f32.mrb[0].mxu0
  %4612 = vmatprep.mubr.f32.mxu0 0.0
  %4613 = vmatmul.mubr.f32.gmra.mrb[0].mxu0 %v4436
  %v4614 = vpop.f32.mrb[0].mxu0
  %v4615 = vadd.f32 0.0, %v4614
  %v4616 = vpop.f32.mrb[0].mxu0
  %4617 = vmatprep.mubr.f32.mxu0 0.0
  %4618 = vmatmul.mubr.f32.gmra.mrb[0].mxu0 %v4439
  %v4619 = vpop.f32.mrb[0].mxu0
  %v4620 = vadd.f32 0.0, %v4619
  %v4621 = vpop.f32.mrb[0].mxu0
  %4622 = vmatprep.mubr.f32.mxu0 0.0
  %4623 = vmatmul.mubr.f32.gmra.mrb[0].mxu0 %v4442
  %v4624 = vpop.f32.mrb[0].mxu0
  %v4625 = vadd.f32 0.0, %v4624
  %v4626 = vpop.f32.mrb[0].mxu0
  %4627 = vdwg.mxu0
  %v4628 = vsel %vm892, %v4610, %v4532
  %v4629 = vsel %vm893, %v4615, %v4533
  %v4630 = vsel %vm894, %v4620, %v4534
  %v4631 = vsel %vm895, %v4625, %v4535
  %s4632 = scalar_lea.vmem %s17, 48
  %v4633 = vld [vmem:[%s4632] sm:$0xff]
  %v4634 = vld [vmem:[%s4632 + $0x8] sm:$0xff]
  %v4635 = vld [vmem:[%s4632 + $0x10] sm:$0xf]
  %v4637 = vsel %vm1500, %v4635, 0
  %4639 = vmatprep.subr.mxu0 0.0
  %4640 = vmatpush1.msra.mxu0 %v4633
  %4641 = vmatprep.subr.mxu0 0.0
  %4642 = vmatpush1.msra.mxu0 %v4634
  %4643 = vmatprep.subr.mxu0 0.0
  %4644 = vmatpush1.msra.mxu0 %v4637
  %4645 = vmatprep.subr.mxu0 0.0
  %4646 = vmatpush1.msra.mxu0 0.0
  %4647 = vmatprep.subr.mxu0 0.0
  %4648 = vmatpush1.msra.mxu0 0.0
  %4649 = vmatprep.subr.mxu0 0.0
  %4650 = vmatpush1.msra.mxu0 0.0
  %4651 = vmatprep.subr.mxu0 0.0
  %4652 = vmatpush1.msra.mxu0 0.0
  %4653 = vmatprep.subr.mxu0 0.0
  %4654 = vmatpush1.msra.mxu0 0.0
  %4655 = vmatprep.subr.mxu0 0.0
  %4656 = vmatpush1.msra.mxu0 0.0
  %4657 = vmatprep.subr.mxu0 0.0
  %4658 = vmatpush1.msra.mxu0 0.0
  %4659 = vmatprep.subr.mxu0 0.0
  %4660 = vmatpush1.msra.mxu0 0.0
  %4661 = vmatprep.subr.mxu0 0.0
  %4662 = vmatpush1.msra.mxu0 0.0
  %4663 = vmatprep.subr.mxu0 0.0
  %4664 = vmatpush1.msra.mxu0 0.0
  %4665 = vmatprep.subr.mxu0 0.0
  %4666 = vmatpush1.msra.mxu0 0.0
  %4667 = vmatprep.subr.mxu0 0.0
  %4668 = vmatpush1.msra.mxu0 0.0
  %4669 = vmatprep.subr.mxu0 0.0
  %4670 = vmatpush1.msra.mxu0 0.0
  %4671 = vmatprep.subr.mxu0 0.0
  %4672 = vmatpush1.msra.mxu0 0.0
  %4673 = vmatprep.subr.mxu0 0.0
  %4674 = vmatpush1.msra.mxu0 0.0
  %4675 = vmatprep.subr.mxu0 0.0
  %4676 = vmatpush1.msra.mxu0 0.0
  %4677 = vmatprep.subr.mxu0 0.0
  %4678 = vmatpush1.msra.mxu0 0.0
  %4679 = vmatprep.subr.mxu0 0.0
  %4680 = vmatpush1.msra.mxu0 0.0
  %4681 = vmatprep.subr.mxu0 0.0
  %4682 = vmatpush1.msra.mxu0 0.0
  %4683 = vmatprep.subr.mxu0 0.0
  %4684 = vmatpush1.msra.mxu0 0.0
  %4685 = vmatprep.subr.mxu0 0.0
  %4686 = vmatpush1.msra.mxu0 0.0
  %4687 = vmatprep.subr.mxu0 0.0
  %4688 = vmatpush1.msra.mxu0 0.0
  %4689 = vmatprep.subr.mxu0 0.0
  %4690 = vmatpush1.msra.mxu0 0.0
  %4691 = vmatprep.subr.mxu0 0.0
  %4692 = vmatpush1.msra.mxu0 0.0
  %4693 = vmatprep.subr.mxu0 0.0
  %4694 = vmatpush1.msra.mxu0 0.0
  %4695 = vmatprep.subr.mxu0 0.0
  %4696 = vmatpush1.msra.mxu0 0.0
  %4697 = vmatprep.subr.mxu0 0.0
  %4698 = vmatpush1.msra.mxu0 0.0
  %4699 = vmatprep.subr.mxu0 0.0
  %4700 = vmatpush1.msra.mxu0 0.0
  %4701 = vmatprep.subr.mxu0 0.0
  %4702 = vmatpush1.msra.mxu0 0.0
  %4703 = vmatprep.mubr.f32.mxu0 0.0
  %4704 = vmatmul.mubr.f32.gmra.mrb[0].mxu0 %v4433
  %v4705 = vpop.f32.mrb[0].mxu0
  %v4706 = vadd.f32 0.0, %v4705
  %v4707 = vpop.f32.mrb[0].mxu0
  %4708 = vmatprep.mubr.f32.mxu0 0.0
  %4709 = vmatmul.mubr.f32.gmra.mrb[0].mxu0 %v4436
  %v4710 = vpop.f32.mrb[0].mxu0
  %v4711 = vadd.f32 0.0, %v4710
  %v4712 = vpop.f32.mrb[0].mxu0
  %4713 = vmatprep.mubr.f32.mxu0 0.0
  %4714 = vmatmul.mubr.f32.gmra.mrb[0].mxu0 %v4439
  %v4715 = vpop.f32.mrb[0].mxu0
  %v4716 = vadd.f32 0.0, %v4715
  %v4717 = vpop.f32.mrb[0].mxu0
  %4718 = vmatprep.mubr.f32.mxu0 0.0
  %4719 = vmatmul.mubr.f32.gmra.mrb[0].mxu0 %v4442
  %v4720 = vpop.f32.mrb[0].mxu0
  %v4721 = vadd.f32 0.0, %v4720
  %v4722 = vpop.f32.mrb[0].mxu0
  %4723 = vdwg.mxu0
  %v4724 = vsel %vm1109, %v4706, %v4628
  %v4725 = vsel %vm1110, %v4711, %v4629
  %v4726 = vsel %vm1111, %v4716, %v4630
  %v4727 = vsel %vm1112, %v4721, %v4631
  %s4728 = scalar_lea.vmem %s17, 72
  %v4729 = vld [vmem:[%s4728] sm:$0xff]
  %v4730 = vld [vmem:[%s4728 + $0x8] sm:$0xff]
  %v4731 = vld [vmem:[%s4728 + $0x10] sm:$0xf]
  %v4733 = vsel %vm1500, %v4731, 0
  %4735 = vmatprep.subr.mxu0 0.0
  %4736 = vmatpush1.msra.mxu0 %v4729
  %4737 = vmatprep.subr.mxu0 0.0
  %4738 = vmatpush1.msra.mxu0 %v4730
  %4739 = vmatprep.subr.mxu0 0.0
  %4740 = vmatpush1.msra.mxu0 %v4733
  %4741 = vmatprep.subr.mxu0 0.0
  %4742 = vmatpush1.msra.mxu0 0.0
  %4743 = vmatprep.subr.mxu0 0.0
  %4744 = vmatpush1.msra.mxu0 0.0
  %4745 = vmatprep.subr.mxu0 0.0
  %4746 = vmatpush1.msra.mxu0 0.0
  %4747 = vmatprep.subr.mxu0 0.0
  %4748 = vmatpush1.msra.mxu0 0.0
  %4749 = vmatprep.subr.mxu0 0.0
  %4750 = vmatpush1.msra.mxu0 0.0
  %4751 = vmatprep.subr.mxu0 0.0
  %4752 = vmatpush1.msra.mxu0 0.0
  %4753 = vmatprep.subr.mxu0 0.0
  %4754 = vmatpush1.msra.mxu0 0.0
  %4755 = vmatprep.subr.mxu0 0.0
  %4756 = vmatpush1.msra.mxu0 0.0
  %4757 = vmatprep.subr.mxu0 0.0
  %4758 = vmatpush1.msra.mxu0 0.0
  %4759 = vmatprep.subr.mxu0 0.0
  %4760 = vmatpush1.msra.mxu0 0.0
  %4761 = vmatprep.subr.mxu0 0.0
  %4762 = vmatpush1.msra.mxu0 0.0
  %4763 = vmatprep.subr.mxu0 0.0
  %4764 = vmatpush1.msra.mxu0 0.0
  %4765 = vmatprep.subr.mxu0 0.0
  %4766 = vmatpush1.msra.mxu0 0.0
  %4767 = vmatprep.subr.mxu0 0.0
  %4768 = vmatpush1.msra.mxu0 0.0
  %4769 = vmatprep.subr.mxu0 0.0
  %4770 = vmatpush1.msra.mxu0 0.0
  %4771 = vmatprep.subr.mxu0 0.0
  %4772 = vmatpush1.msra.mxu0 0.0
  %4773 = vmatprep.subr.mxu0 0.0
  %4774 = vmatpush1.msra.mxu0 0.0
  %4775 = vmatprep.subr.mxu0 0.0
  %4776 = vmatpush1.msra.mxu0 0.0
  %4777 = vmatprep.subr.mxu0 0.0
  %4778 = vmatpush1.msra.mxu0 0.0
  %4779 = vmatprep.subr.mxu0 0.0
  %4780 = vmatpush1.msra.mxu0 0.0
  %4781 = vmatprep.subr.mxu0 0.0
  %4782 = vmatpush1.msra.mxu0 0.0
  %4783 = vmatprep.subr.mxu0 0.0
  %4784 = vmatpush1.msra.mxu0 0.0
  %4785 = vmatprep.subr.mxu0 0.0
  %4786 = vmatpush1.msra.mxu0 0.0
  %4787 = vmatprep.subr.mxu0 0.0
  %4788 = vmatpush1.msra.mxu0 0.0
  %4789 = vmatprep.subr.mxu0 0.0
  %4790 = vmatpush1.msra.mxu0 0.0
  %4791 = vmatprep.subr.mxu0 0.0
  %4792 = vmatpush1.msra.mxu0 0.0
  %4793 = vmatprep.subr.mxu0 0.0
  %4794 = vmatpush1.msra.mxu0 0.0
  %4795 = vmatprep.subr.mxu0 0.0
  %4796 = vmatpush1.msra.mxu0 0.0
  %4797 = vmatprep.subr.mxu0 0.0
  %4798 = vmatpush1.msra.mxu0 0.0
  %4799 = vmatprep.mubr.f32.mxu0 0.0
  %4800 = vmatmul.mubr.f32.gmra.mrb[0].mxu0 %v4433
  %v4801 = vpop.f32.mrb[0].mxu0
  %v4802 = vadd.f32 0.0, %v4801
  %v4803 = vpop.f32.mrb[0].mxu0
  %4804 = vmatprep.mubr.f32.mxu0 0.0
  %4805 = vmatmul.mubr.f32.gmra.mrb[0].mxu0 %v4436
  %v4806 = vpop.f32.mrb[0].mxu0
  %v4807 = vadd.f32 0.0, %v4806
  %v4808 = vpop.f32.mrb[0].mxu0
  %4809 = vmatprep.mubr.f32.mxu0 0.0
  %4810 = vmatmul.mubr.f32.gmra.mrb[0].mxu0 %v4439
  %v4811 = vpop.f32.mrb[0].mxu0
  %v4812 = vadd.f32 0.0, %v4811
  %v4813 = vpop.f32.mrb[0].mxu0
  %4814 = vmatprep.mubr.f32.mxu0 0.0
  %4815 = vmatmul.mubr.f32.gmra.mrb[0].mxu0 %v4442
  %v4816 = vpop.f32.mrb[0].mxu0
  %v4817 = vadd.f32 0.0, %v4816
  %v4818 = vpop.f32.mrb[0].mxu0
  %4819 = vdwg.mxu0
  %v4820 = vsel %vm1233, %v4802, %v4724
  %v4821 = vsel %vm1234, %v4807, %v4725
  %v4822 = vsel %vm1235, %v4812, %v4726
  %v4823 = vsel %vm1236, %v4817, %v4727
  %s4824 = scalar_lea.vmem %s17, 96
  %v4825 = vld [vmem:[%s4824] sm:$0xff]
  %v4826 = vld [vmem:[%s4824 + $0x8] sm:$0xff]
  %v4827 = vld [vmem:[%s4824 + $0x10] sm:$0xf]
  %v4829 = vsel %vm1500, %v4827, 0
  %4831 = vmatprep.subr.mxu0 0.0
  %4832 = vmatpush1.msra.mxu0 %v4825
  %4833 = vmatprep.subr.mxu0 0.0
  %4834 = vmatpush1.msra.mxu0 %v4826
  %4835 = vmatprep.subr.mxu0 0.0
  %4836 = vmatpush1.msra.mxu0 %v4829
  %4837 = vmatprep.subr.mxu0 0.0
  %4838 = vmatpush1.msra.mxu0 0.0
  %4839 = vmatprep.subr.mxu0 0.0
  %4840 = vmatpush1.msra.mxu0 0.0
  %4841 = vmatprep.subr.mxu0 0.0
  %4842 = vmatpush1.msra.mxu0 0.0
  %4843 = vmatprep.subr.mxu0 0.0
  %4844 = vmatpush1.msra.mxu0 0.0
  %4845 = vmatprep.subr.mxu0 0.0
  %4846 = vmatpush1.msra.mxu0 0.0
  %4847 = vmatprep.subr.mxu0 0.0
  %4848 = vmatpush1.msra.mxu0 0.0
  %4849 = vmatprep.subr.mxu0 0.0
  %4850 = vmatpush1.msra.mxu0 0.0
  %4851 = vmatprep.subr.mxu0 0.0
  %4852 = vmatpush1.msra.mxu0 0.0
  %4853 = vmatprep.subr.mxu0 0.0
  %4854 = vmatpush1.msra.mxu0 0.0
  %4855 = vmatprep.subr.mxu0 0.0
  %4856 = vmatpush1.msra.mxu0 0.0
  %4857 = vmatprep.subr.mxu0 0.0
  %4858 = vmatpush1.msra.mxu0 0.0
  %4859 = vmatprep.subr.mxu0 0.0
  %4860 = vmatpush1.msra.mxu0 0.0
  %4861 = vmatprep.subr.mxu0 0.0
  %4862 = vmatpush1.msra.mxu0 0.0
  %4863 = vmatprep.subr.mxu0 0.0
  %4864 = vmatpush1.msra.mxu0 0.0
  %4865 = vmatprep.subr.mxu0 0.0
  %4866 = vmatpush1.msra.mxu0 0.0
  %4867 = vmatprep.subr.mxu0 0.0
  %4868 = vmatpush1.msra.mxu0 0.0
  %4869 = vmatprep.subr.mxu0 0.0
  %4870 = vmatpush1.msra.mxu0 0.0
  %4871 = vmatprep.subr.mxu0 0.0
  %4872 = vmatpush1.msra.mxu0 0.0
  %4873 = vmatprep.subr.mxu0 0.0
  %4874 = vmatpush1.msra.mxu0 0.0
  %4875 = vmatprep.subr.mxu0 0.0
  %4876 = vmatpush1.msra.mxu0 0.0
  %4877 = vmatprep.subr.mxu0 0.0
  %4878 = vmatpush1.msra.mxu0 0.0
  %4879 = vmatprep.subr.mxu0 0.0
  %4880 = vmatpush1.msra.mxu0 0.0
  %4881 = vmatprep.subr.mxu0 0.0
  %4882 = vmatpush1.msra.mxu0 0.0
  %4883 = vmatprep.subr.mxu0 0.0
  %4884 = vmatpush1.msra.mxu0 0.0
  %4885 = vmatprep.subr.mxu0 0.0
  %4886 = vmatpush1.msra.mxu0 0.0
  %4887 = vmatprep.subr.mxu0 0.0
  %4888 = vmatpush1.msra.mxu0 0.0
  %4889 = vmatprep.subr.mxu0 0.0
  %4890 = vmatpush1.msra.mxu0 0.0
  %4891 = vmatprep.subr.mxu0 0.0
  %4892 = vmatpush1.msra.mxu0 0.0
  %4893 = vmatprep.subr.mxu0 0.0
  %4894 = vmatpush1.msra.mxu0 0.0
  %4895 = vmatprep.mubr.f32.mxu0 0.0
  %4896 = vmatmul.mubr.f32.gmra.mrb[0].mxu0 %v4433
  %v4897 = vpop.f32.mrb[0].mxu0
  %v4898 = vadd.f32 0.0, %v4897
  %v4899 = vpop.f32.mrb[0].mxu0
  %4900 = vmatprep.mubr.f32.mxu0 0.0
  %4901 = vmatmul.mubr.f32.gmra.mrb[0].mxu0 %v4436
  %v4902 = vpop.f32.mrb[0].mxu0
  %v4903 = vadd.f32 0.0, %v4902
  %v4904 = vpop.f32.mrb[0].mxu0
  %4905 = vmatprep.mubr.f32.mxu0 0.0
  %4906 = vmatmul.mubr.f32.gmra.mrb[0].mxu0 %v4439
  %v4907 = vpop.f32.mrb[0].mxu0
  %v4908 = vadd.f32 0.0, %v4907
  %v4909 = vpop.f32.mrb[0].mxu0
  %4910 = vmatprep.mubr.f32.mxu0 0.0
  %4911 = vmatmul.mubr.f32.gmra.mrb[0].mxu0 %v4442
  %v4912 = vpop.f32.mrb[0].mxu0
  %v4913 = vadd.f32 0.0, %v4912
  %v4914 = vpop.f32.mrb[0].mxu0
  %4915 = vdwg.mxu0
  %v4916 = vsel %vm1357, %v4898, %v4820
  %v4917 = vsel %vm1358, %v4903, %v4821
  %v4918 = vsel %vm1359, %v4908, %v4822
  %v4919 = vsel %vm1360, %v4913, %v4823
  %v4920 = vsel %vm813, 1, 0
  %vm4921 = vcmp.eq.s32.totalorder %v4920, 1
  %v4922 = vsel %vm4921, %v4916, %v174
  %v4923 = vsel %vm4921, %v4917, %v175
  %v4924 = vsel %vm4921, %v4918, %v176
  %v4925 = vsel %vm4921, %v4919, %v177
  %v4926 = vld [vmem:[%s3] sm:$0xff]
  %v4927 = vld [vmem:[%s3 + $0x8] sm:$0xff]
  %v4928 = vld [vmem:[%s3 + $0x10] sm:$0xff]
  %v4929 = vld [vmem:[%s3 + $0x18] sm:$0xff]
  %v4930 = vld [vmem:[%s3 + $0x20] sm:$0xff]
  %v4931 = vld [vmem:[%s3 + $0x28] sm:$0xff]
  %v4932 = vld [vmem:[%s3 + $0x30] sm:$0xff]
  %v4933 = vld [vmem:[%s3 + $0x38] sm:$0xff]
  %v4934 = vld [vmem:[%s3 + $0x40] sm:$0xff]
  %v4935 = vld [vmem:[%s3 + $0x48] sm:$0xff]
  %v4936 = vld [vmem:[%s3 + $0x50] sm:$0xff]
  %v4937 = vld [vmem:[%s3 + $0x58] sm:$0xff]
  %v4938 = vld [vmem:[%s3 + $0x60] sm:$0xff]
  %v4939 = vld [vmem:[%s3 + $0x68] sm:$0xff]
  %v4940 = vld [vmem:[%s3 + $0x70] sm:$0xff]
  %v4941 = vld [vmem:[%s3 + $0x78] sm:$0xff]
  %v4942 = vld [vmem:[%s3 + $0x80] sm:$0xff]
  %v4943 = vld [vmem:[%s3 + $0x88] sm:$0xff]
  %v4944 = vld [vmem:[%s3 + $0x90] sm:$0xff]
  %v4945 = vld [vmem:[%s3 + $0x98] sm:$0xff]
  %v4946 = vld [vmem:[%s3 + $0xa0] sm:$0xff]
  %v4947 = vld [vmem:[%s3 + $0xa8] sm:$0xff]
  %v4948 = vld [vmem:[%s3 + $0xb0] sm:$0xff]
  %v4949 = vld [vmem:[%s3 + $0xb8] sm:$0xff]
  %v4950 = vld [vmem:[%s3 + $0xc0] sm:$0xff]
  %v4951 = vld [vmem:[%s3 + $0xc8] sm:$0xff]
  %v4952 = vld [vmem:[%s3 + $0xd0] sm:$0xff]
  %v4953 = vld [vmem:[%s3 + $0xd8] sm:$0xff]
  %v4954 = vld [vmem:[%s3 + $0xe0] sm:$0xff]
  %v4955 = vld [vmem:[%s3 + $0xe8] sm:$0xff]
  %v4956 = vld [vmem:[%s3 + $0xf0] sm:$0xff]
  %v4957 = vld [vmem:[%s3 + $0xf8] sm:$0xff]
  %v4958 = vld [vmem:[%s3 + $0x100] sm:$0xff]
  %v4959 = vld [vmem:[%s3 + $0x108] sm:$0xff]
  %v4960 = vld [vmem:[%s3 + $0x110] sm:$0xff]
  %v4961 = vld [vmem:[%s3 + $0x118] sm:$0xff]
  %v4962 = vld [vmem:[%s3 + $0x120] sm:$0xff]
  %v4963 = vld [vmem:[%s3 + $0x128] sm:$0xff]
  %v4964 = vld [vmem:[%s3 + $0x130] sm:$0xff]
  %v4965 = vld [vmem:[%s3 + $0x138] sm:$0xff]
  %v4966 = vld [vmem:[%s5] sm:$0xf]
  %v4968 = vlaneseq
  %v4969 = vshrl.u32 %v4968, 7
  %v4970 = vsub.s32 0, %v4969
  %v4971 = vrot.slane %v4966, %v4970
  %v4972 = vlaneseq
  %v4973 = vshrl.u32 %v4972, 7
  %v4974 = vsub.s32 1, %v4973
  %v4975 = vrot.slane %v4966, %v4974
  %v4976 = vlaneseq
  %v4977 = vshrl.u32 %v4976, 7
  %v4978 = vsub.s32 2, %v4977
  %v4979 = vrot.slane %v4966, %v4978
  %v4980 = vlaneseq
  %v4981 = vshrl.u32 %v4980, 7
  %v4982 = vsub.s32 3, %v4981
  %v4983 = vrot.slane %v4966, %v4982
  %v4989 = vsel %vm240, %v4922, 0
  %v4992 = vsel %vm240, %v4923, 0
  %v4995 = vsel %vm240, %v4924, 0
  %v4998 = vsel %vm240, %v4925, 0
  %5000 = vmatprep.subr.mxu0 %v4927
  %5001 = vmatpush1.msra.mxu0 %v4926
  %5002 = vmatprep.subr.mxu0 %v4931
  %5003 = vmatpush1.msra.mxu0 %v4930
  %5004 = vmatprep.subr.mxu0 %v4935
  %5005 = vmatpush1.msra.mxu0 %v4934
  %5006 = vmatprep.subr.mxu0 %v4939
  %5007 = vmatpush1.msra.mxu0 %v4938
  %5008 = vmatprep.subr.mxu0 %v4943
  %5009 = vmatpush1.msra.mxu0 %v4942
  %5010 = vmatprep.subr.mxu0 %v4947
  %5011 = vmatpush1.msra.mxu0 %v4946
  %5012 = vmatprep.subr.mxu0 %v4951
  %5013 = vmatpush1.msra.mxu0 %v4950
  %5014 = vmatprep.subr.mxu0 %v4955
  %5015 = vmatpush1.msra.mxu0 %v4954
  %5016 = vmatprep.subr.mxu0 %v4959
  %5017 = vmatpush1.msra.mxu0 %v4958
  %5018 = vmatprep.subr.mxu0 %v4963
  %5019 = vmatpush1.msra.mxu0 %v4962
  %5020 = vmatprep.subr.mxu0 0.0
  %5021 = vmatpush1.msra.mxu0 0.0
  %5022 = vmatprep.subr.mxu0 0.0
  %5023 = vmatpush1.msra.mxu0 0.0
  %5024 = vmatprep.subr.mxu0 0.0
  %5025 = vmatpush1.msra.mxu0 0.0
  %5026 = vmatprep.subr.mxu0 0.0
  %5027 = vmatpush1.msra.mxu0 0.0
  %5028 = vmatprep.subr.mxu0 0.0
  %5029 = vmatpush1.msra.mxu0 0.0
  %5030 = vmatprep.subr.mxu0 0.0
  %5031 = vmatpush1.msra.mxu0 0.0
  %5032 = vmatprep.subr.mxu0 0.0
  %5033 = vmatpush1.msra.mxu0 0.0
  %5034 = vmatprep.subr.mxu0 0.0
  %5035 = vmatpush1.msra.mxu0 0.0
  %5036 = vmatprep.subr.mxu0 0.0
  %5037 = vmatpush1.msra.mxu0 0.0
  %5038 = vmatprep.subr.mxu0 0.0
  %5039 = vmatpush1.msra.mxu0 0.0
  %5040 = vmatprep.subr.mxu0 0.0
  %5041 = vmatpush1.msra.mxu0 0.0
  %5042 = vmatprep.subr.mxu0 0.0
  %5043 = vmatpush1.msra.mxu0 0.0
  %5044 = vmatprep.subr.mxu0 0.0
  %5045 = vmatpush1.msra.mxu0 0.0
  %5046 = vmatprep.subr.mxu0 0.0
  %5047 = vmatpush1.msra.mxu0 0.0
  %5048 = vmatprep.subr.mxu0 0.0
  %5049 = vmatpush1.msra.mxu0 0.0
  %5050 = vmatprep.subr.mxu0 0.0
  %5051 = vmatpush1.msra.mxu0 0.0
  %5052 = vmatprep.subr.mxu0 0.0
  %5053 = vmatpush1.msra.mxu0 0.0
  %5054 = vmatprep.subr.mxu0 0.0
  %5055 = vmatpush1.msra.mxu0 0.0
  %5056 = vmatprep.subr.mxu0 0.0
  %5057 = vmatpush1.msra.mxu0 0.0
  %5058 = vmatprep.subr.mxu0 0.0
  %5059 = vmatpush1.msra.mxu0 0.0
  %5060 = vmatprep.subr.mxu0 0.0
  %5061 = vmatpush1.msra.mxu0 0.0
  %5062 = vmatprep.subr.mxu0 0.0
  %5063 = vmatpush1.msra.mxu0 0.0
  %5064 = vmatprep.mubr.f32.mxu0 0.0
  %5065 = vmatmul.mubr.f32.gmra.mrb[0].mxu0 %v4989
  %v5066 = vpop.f32.mrb[0].mxu0
  %v5067 = vadd.f32 %v4971, %v5066
  %v5068 = vpop.f32.mrb[0].mxu0
  %v5069 = vadd.f32 %v4975, %v5068
  %5070 = vmatprep.mubr.f32.mxu0 0.0
  %5071 = vmatmul.mubr.f32.gmra.mrb[0].mxu0 %v4992
  %v5072 = vpop.f32.mrb[0].mxu0
  %v5073 = vadd.f32 %v4971, %v5072
  %v5074 = vpop.f32.mrb[0].mxu0
  %v5075 = vadd.f32 %v4975, %v5074
  %5076 = vmatprep.mubr.f32.mxu0 0.0
  %5077 = vmatmul.mubr.f32.gmra.mrb[0].mxu0 %v4995
  %v5078 = vpop.f32.mrb[0].mxu0
  %v5079 = vadd.f32 %v4971, %v5078
  %v5080 = vpop.f32.mrb[0].mxu0
  %v5081 = vadd.f32 %v4975, %v5080
  %5082 = vmatprep.mubr.f32.mxu0 0.0
  %5083 = vmatmul.mubr.f32.gmra.mrb[0].mxu0 %v4998
  %v5084 = vpop.f32.mrb[0].mxu0
  %v5085 = vadd.f32 %v4971, %v5084
  %v5086 = vpop.f32.mrb[0].mxu0
  %v5087 = vadd.f32 %v4975, %v5086
  %5088 = vdwg.mxu0
  %5089 = vmatprep.subr.mxu0 %v4929
  %5090 = vmatpush1.msra.mxu0 %v4928
  %5091 = vmatprep.subr.mxu0 %v4933
  %5092 = vmatpush1.msra.mxu0 %v4932
  %5093 = vmatprep.subr.mxu0 %v4937
  %5094 = vmatpush1.msra.mxu0 %v4936
  %5095 = vmatprep.subr.mxu0 %v4941
  %5096 = vmatpush1.msra.mxu0 %v4940
  %5097 = vmatprep.subr.mxu0 %v4945
  %5098 = vmatpush1.msra.mxu0 %v4944
  %5099 = vmatprep.subr.mxu0 %v4949
  %5100 = vmatpush1.msra.mxu0 %v4948
  %5101 = vmatprep.subr.mxu0 %v4953
  %5102 = vmatpush1.msra.mxu0 %v4952
  %5103 = vmatprep.subr.mxu0 %v4957
  %5104 = vmatpush1.msra.mxu0 %v4956
  %5105 = vmatprep.subr.mxu0 %v4961
  %5106 = vmatpush1.msra.mxu0 %v4960
  %5107 = vmatprep.subr.mxu0 %v4965
  %5108 = vmatpush1.msra.mxu0 %v4964
  %5109 = vmatprep.subr.mxu0 0.0
  %5110 = vmatpush1.msra.mxu0 0.0
  %5111 = vmatprep.subr.mxu0 0.0
  %5112 = vmatpush1.msra.mxu0 0.0
  %5113 = vmatprep.subr.mxu0 0.0
  %5114 = vmatpush1.msra.mxu0 0.0
  %5115 = vmatprep.subr.mxu0 0.0
  %5116 = vmatpush1.msra.mxu0 0.0
  %5117 = vmatprep.subr.mxu0 0.0
  %5118 = vmatpush1.msra.mxu0 0.0
  %5119 = vmatprep.subr.mxu0 0.0
  %5120 = vmatpush1.msra.mxu0 0.0
  %5121 = vmatprep.subr.mxu0 0.0
  %5122 = vmatpush1.msra.mxu0 0.0
  %5123 = vmatprep.subr.mxu0 0.0
  %5124 = vmatpush1.msra.mxu0 0.0
  %5125 = vmatprep.subr.mxu0 0.0
  %5126 = vmatpush1.msra.mxu0 0.0
  %5127 = vmatprep.subr.mxu0 0.0
  %5128 = vmatpush1.msra.mxu0 0.0
  %5129 = vmatprep.subr.mxu0 0.0
  %5130 = vmatpush1.msra.mxu0 0.0
  %5131 = vmatprep.subr.mxu0 0.0
  %5132 = vmatpush1.msra.mxu0 0.0
  %5133 = vmatprep.subr.mxu0 0.0
  %5134 = vmatpush1.msra.mxu0 0.0
  %5135 = vmatprep.subr.mxu0 0.0
  %5136 = vmatpush1.msra.mxu0 0.0
  %5137 = vmatprep.subr.mxu0 0.0
  %5138 = vmatpush1.msra.mxu0 0.0
  %5139 = vmatprep.subr.mxu0 0.0
  %5140 = vmatpush1.msra.mxu0 0.0
  %5141 = vmatprep.subr.mxu0 0.0
  %5142 = vmatpush1.msra.mxu0 0.0
  %5143 = vmatprep.subr.mxu0 0.0
  %5144 = vmatpush1.msra.mxu0 0.0
  %5145 = vmatprep.subr.mxu0 0.0
  %5146 = vmatpush1.msra.mxu0 0.0
  %5147 = vmatprep.subr.mxu0 0.0
  %5148 = vmatpush1.msra.mxu0 0.0
  %5149 = vmatprep.subr.mxu0 0.0
  %5150 = vmatpush1.msra.mxu0 0.0
  %5151 = vmatprep.subr.mxu0 0.0
  %5152 = vmatpush1.msra.mxu0 0.0
  %5153 = vmatprep.mubr.f32.mxu0 0.0
  %5154 = vmatmul.mubr.f32.gmra.mrb[0].mxu0 %v4989
  %v5155 = vpop.f32.mrb[0].mxu0
  %v5156 = vadd.f32 %v4979, %v5155
  %v5157 = vpop.f32.mrb[0].mxu0
  %v5158 = vadd.f32 %v4983, %v5157
  %5159 = vmatprep.mubr.f32.mxu0 0.0
  %5160 = vmatmul.mubr.f32.gmra.mrb[0].mxu0 %v4992
  %v5161 = vpop.f32.mrb[0].mxu0
  %v5162 = vadd.f32 %v4979, %v5161
  %v5163 = vpop.f32.mrb[0].mxu0
  %v5164 = vadd.f32 %v4983, %v5163
  %5165 = vmatprep.mubr.f32.mxu0 0.0
  %5166 = vmatmul.mubr.f32.gmra.mrb[0].mxu0 %v4995
  %v5167 = vpop.f32.mrb[0].mxu0
  %v5168 = vadd.f32 %v4979, %v5167
  %v5169 = vpop.f32.mrb[0].mxu0
  %v5170 = vadd.f32 %v4983, %v5169
  %5171 = vmatprep.mubr.f32.mxu0 0.0
  %5172 = vmatmul.mubr.f32.gmra.mrb[0].mxu0 %v4998
  %v5173 = vpop.f32.mrb[0].mxu0
  %v5174 = vadd.f32 %v4979, %v5173
  %v5175 = vpop.f32.mrb[0].mxu0
  %v5176 = vadd.f32 %v4983, %v5175
  %5177 = vdwg.mxu0
  %v5178 = vld [vmem:[%s7] sm:$0xff]
  %v5179 = vld [vmem:[%s7 + $0x8] sm:$0xff]
  %v5180 = vld [vmem:[%s7 + $0x10] sm:$0xff]
  %v5181 = vld [vmem:[%s7 + $0x18] sm:$0xff]
  %v5182 = vld [vmem:[%s7 + $0x20] sm:$0xff]
  %v5183 = vld [vmem:[%s7 + $0x28] sm:$0xff]
  %v5184 = vld [vmem:[%s7 + $0x30] sm:$0xff]
  %v5185 = vld [vmem:[%s7 + $0x38] sm:$0xff]
  %v5186 = vld [vmem:[%s7 + $0x40] sm:$0xff]
  %v5187 = vld [vmem:[%s7 + $0x48] sm:$0xff]
  %v5188 = vld [vmem:[%s7 + $0x50] sm:$0xff]
  %v5189 = vld [vmem:[%s7 + $0x58] sm:$0xff]
  %v5190 = vld [vmem:[%s7 + $0x60] sm:$0xff]
  %v5191 = vld [vmem:[%s7 + $0x68] sm:$0xff]
  %v5192 = vld [vmem:[%s7 + $0x70] sm:$0xff]
  %v5193 = vld [vmem:[%s7 + $0x78] sm:$0xff]
  %v5194 = vld [vmem:[%s7 + $0x80] sm:$0xff]
  %v5195 = vld [vmem:[%s7 + $0x88] sm:$0xff]
  %v5196 = vld [vmem:[%s7 + $0x90] sm:$0xff]
  %v5197 = vld [vmem:[%s7 + $0x98] sm:$0xff]
  %v5198 = vld [vmem:[%s7 + $0xa0] sm:$0xff]
  %v5199 = vld [vmem:[%s7 + $0xa8] sm:$0xff]
  %v5200 = vld [vmem:[%s7 + $0xb0] sm:$0xff]
  %v5201 = vld [vmem:[%s7 + $0xb8] sm:$0xff]
  %v5202 = vld [vmem:[%s7 + $0xc0] sm:$0xff]
  %v5203 = vld [vmem:[%s7 + $0xc8] sm:$0xff]
  %v5204 = vld [vmem:[%s7 + $0xd0] sm:$0xff]
  %v5205 = vld [vmem:[%s7 + $0xd8] sm:$0xff]
  %v5206 = vld [vmem:[%s7 + $0xe0] sm:$0xff]
  %v5207 = vld [vmem:[%s7 + $0xe8] sm:$0xff]
  %v5208 = vld [vmem:[%s7 + $0xf0] sm:$0xff]
  %v5209 = vld [vmem:[%s7 + $0xf8] sm:$0xff]
  %v5210 = vld [vmem:[%s7 + $0x100] sm:$0xff]
  %v5211 = vld [vmem:[%s7 + $0x108] sm:$0xff]
  %v5212 = vld [vmem:[%s7 + $0x110] sm:$0xff]
  %v5213 = vld [vmem:[%s7 + $0x118] sm:$0xff]
  %v5214 = vld [vmem:[%s7 + $0x120] sm:$0xff]
  %v5215 = vld [vmem:[%s7 + $0x128] sm:$0xff]
  %v5216 = vld [vmem:[%s7 + $0x130] sm:$0xff]
  %v5217 = vld [vmem:[%s7 + $0x138] sm:$0xff]
  %v5218 = vld [vmem:[%s7 + $0x140] sm:$0xff]
  %v5219 = vld [vmem:[%s7 + $0x148] sm:$0xff]
  %v5220 = vld [vmem:[%s7 + $0x150] sm:$0xff]
  %v5221 = vld [vmem:[%s7 + $0x158] sm:$0xff]
  %v5222 = vld [vmem:[%s7 + $0x160] sm:$0xff]
  %v5223 = vld [vmem:[%s7 + $0x168] sm:$0xff]
  %v5224 = vld [vmem:[%s7 + $0x170] sm:$0xff]
  %v5225 = vld [vmem:[%s7 + $0x178] sm:$0xff]
  %v5226 = vld [vmem:[%s7 + $0x180] sm:$0xff]
  %v5227 = vld [vmem:[%s7 + $0x188] sm:$0xff]
  %v5228 = vld [vmem:[%s7 + $0x190] sm:$0xff]
  %v5229 = vld [vmem:[%s7 + $0x198] sm:$0xff]
  %v5230 = vld [vmem:[%s7 + $0x1a0] sm:$0xff]
  %v5231 = vld [vmem:[%s7 + $0x1a8] sm:$0xff]
  %v5232 = vld [vmem:[%s7 + $0x1b0] sm:$0xff]
  %v5233 = vld [vmem:[%s7 + $0x1b8] sm:$0xff]
  %v5234 = vld [vmem:[%s7 + $0x1c0] sm:$0xff]
  %v5235 = vld [vmem:[%s7 + $0x1c8] sm:$0xff]
  %v5236 = vld [vmem:[%s7 + $0x1d0] sm:$0xff]
  %v5237 = vld [vmem:[%s7 + $0x1d8] sm:$0xff]
  %v5238 = vld [vmem:[%s7 + $0x1e0] sm:$0xff]
  %v5239 = vld [vmem:[%s7 + $0x1e8] sm:$0xff]
  %v5240 = vld [vmem:[%s7 + $0x1f0] sm:$0xff]
  %v5241 = vld [vmem:[%s7 + $0x1f8] sm:$0xff]
  %v5242 = vld [vmem:[%s9] sm:$0x1]
  %v5244 = vlaneseq
  %v5245 = vshrl.u32 %v5244, 7
  %v5246 = vsub.s32 0, %v5245
  %v5247 = vrot.slane %v5242, %v5246
  %5249 = vmatprep.subr.mxu0 0.0
  %5250 = vmatpush1.msra.mxu0 %v5178
  %5251 = vmatprep.subr.mxu0 0.0
  %5252 = vmatpush1.msra.mxu0 %v5179
  %5253 = vmatprep.subr.mxu0 0.0
  %5254 = vmatpush1.msra.mxu0 %v5180
  %5255 = vmatprep.subr.mxu0 0.0
  %5256 = vmatpush1.msra.mxu0 %v5181
  %5257 = vmatprep.subr.mxu0 0.0
  %5258 = vmatpush1.msra.mxu0 %v5182
  %5259 = vmatprep.subr.mxu0 0.0
  %5260 = vmatpush1.msra.mxu0 %v5183
  %5261 = vmatprep.subr.mxu0 0.0
  %5262 = vmatpush1.msra.mxu0 %v5184
  %5263 = vmatprep.subr.mxu0 0.0
  %5264 = vmatpush1.msra.mxu0 %v5185
  %5265 = vmatprep.subr.mxu0 0.0
  %5266 = vmatpush1.msra.mxu0 %v5186
  %5267 = vmatprep.subr.mxu0 0.0
  %5268 = vmatpush1.msra.mxu0 %v5187
  %5269 = vmatprep.subr.mxu0 0.0
  %5270 = vmatpush1.msra.mxu0 %v5188
  %5271 = vmatprep.subr.mxu0 0.0
  %5272 = vmatpush1.msra.mxu0 %v5189
  %5273 = vmatprep.subr.mxu0 0.0
  %5274 = vmatpush1.msra.mxu0 %v5190
  %5275 = vmatprep.subr.mxu0 0.0
  %5276 = vmatpush1.msra.mxu0 %v5191
  %5277 = vmatprep.subr.mxu0 0.0
  %5278 = vmatpush1.msra.mxu0 %v5192
  %5279 = vmatprep.subr.mxu0 0.0
  %5280 = vmatpush1.msra.mxu0 %v5193
  %5281 = vmatprep.subr.mxu0 0.0
  %5282 = vmatpush1.msra.mxu0 %v5194
  %5283 = vmatprep.subr.mxu0 0.0
  %5284 = vmatpush1.msra.mxu0 %v5195
  %5285 = vmatprep.subr.mxu0 0.0
  %5286 = vmatpush1.msra.mxu0 %v5196
  %5287 = vmatprep.subr.mxu0 0.0
  %5288 = vmatpush1.msra.mxu0 %v5197
  %5289 = vmatprep.subr.mxu0 0.0
  %5290 = vmatpush1.msra.mxu0 %v5198
  %5291 = vmatprep.subr.mxu0 0.0
  %5292 = vmatpush1.msra.mxu0 %v5199
  %5293 = vmatprep.subr.mxu0 0.0
  %5294 = vmatpush1.msra.mxu0 %v5200
  %5295 = vmatprep.subr.mxu0 0.0
  %5296 = vmatpush1.msra.mxu0 %v5201
  %5297 = vmatprep.subr.mxu0 0.0
  %5298 = vmatpush1.msra.mxu0 %v5202
  %5299 = vmatprep.subr.mxu0 0.0
  %5300 = vmatpush1.msra.mxu0 %v5203
  %5301 = vmatprep.subr.mxu0 0.0
  %5302 = vmatpush1.msra.mxu0 %v5204
  %5303 = vmatprep.subr.mxu0 0.0
  %5304 = vmatpush1.msra.mxu0 %v5205
  %5305 = vmatprep.subr.mxu0 0.0
  %5306 = vmatpush1.msra.mxu0 %v5206
  %5307 = vmatprep.subr.mxu0 0.0
  %5308 = vmatpush1.msra.mxu0 %v5207
  %5309 = vmatprep.subr.mxu0 0.0
  %5310 = vmatpush1.msra.mxu0 %v5208
  %5311 = vmatprep.subr.mxu0 0.0
  %5312 = vmatpush1.msra.mxu0 %v5209
  %5313 = vmatprep.mubr.f32.mxu0 %v5069
  %5314 = vmatmul.mubr.f32.gmra.mrb[0].mxu0 %v5067
  %v5315 = vpop.f32.mrb[0].mxu0
  %v5316 = vadd.f32 %v5247, %v5315
  %v5317 = vpop.f32.mrb[0].mxu0
  %5318 = vmatprep.mubr.f32.mxu0 %v5075
  %5319 = vmatmul.mubr.f32.gmra.mrb[0].mxu0 %v5073
  %v5320 = vpop.f32.mrb[0].mxu0
  %v5321 = vadd.f32 %v5247, %v5320
  %v5322 = vpop.f32.mrb[0].mxu0
  %5323 = vmatprep.mubr.f32.mxu0 %v5081
  %5324 = vmatmul.mubr.f32.gmra.mrb[0].mxu0 %v5079
  %v5325 = vpop.f32.mrb[0].mxu0
  %v5326 = vadd.f32 %v5247, %v5325
  %v5327 = vpop.f32.mrb[0].mxu0
  %5328 = vmatprep.mubr.f32.mxu0 %v5087
  %5329 = vmatmul.mubr.f32.gmra.mrb[0].mxu0 %v5085
  %v5330 = vpop.f32.mrb[0].mxu0
  %v5331 = vadd.f32 %v5247, %v5330
  %v5332 = vpop.f32.mrb[0].mxu0
  %5333 = vdwg.mxu0
  %5334 = vmatprep.subr.mxu0 0.0
  %5335 = vmatpush1.msra.mxu0 %v5210
  %5336 = vmatprep.subr.mxu0 0.0
  %5337 = vmatpush1.msra.mxu0 %v5211
  %5338 = vmatprep.subr.mxu0 0.0
  %5339 = vmatpush1.msra.mxu0 %v5212
  %5340 = vmatprep.subr.mxu0 0.0
  %5341 = vmatpush1.msra.mxu0 %v5213
  %5342 = vmatprep.subr.mxu0 0.0
  %5343 = vmatpush1.msra.mxu0 %v5214
  %5344 = vmatprep.subr.mxu0 0.0
  %5345 = vmatpush1.msra.mxu0 %v5215
  %5346 = vmatprep.subr.mxu0 0.0
  %5347 = vmatpush1.msra.mxu0 %v5216
  %5348 = vmatprep.subr.mxu0 0.0
  %5349 = vmatpush1.msra.mxu0 %v5217
  %5350 = vmatprep.subr.mxu0 0.0
  %5351 = vmatpush1.msra.mxu0 %v5218
  %5352 = vmatprep.subr.mxu0 0.0
  %5353 = vmatpush1.msra.mxu0 %v5219
  %5354 = vmatprep.subr.mxu0 0.0
  %5355 = vmatpush1.msra.mxu0 %v5220
  %5356 = vmatprep.subr.mxu0 0.0
  %5357 = vmatpush1.msra.mxu0 %v5221
  %5358 = vmatprep.subr.mxu0 0.0
  %5359 = vmatpush1.msra.mxu0 %v5222
  %5360 = vmatprep.subr.mxu0 0.0
  %5361 = vmatpush1.msra.mxu0 %v5223
  %5362 = vmatprep.subr.mxu0 0.0
  %5363 = vmatpush1.msra.mxu0 %v5224
  %5364 = vmatprep.subr.mxu0 0.0
  %5365 = vmatpush1.msra.mxu0 %v5225
  %5366 = vmatprep.subr.mxu0 0.0
  %5367 = vmatpush1.msra.mxu0 %v5226
  %5368 = vmatprep.subr.mxu0 0.0
  %5369 = vmatpush1.msra.mxu0 %v5227
  %5370 = vmatprep.subr.mxu0 0.0
  %5371 = vmatpush1.msra.mxu0 %v5228
  %5372 = vmatprep.subr.mxu0 0.0
  %5373 = vmatpush1.msra.mxu0 %v5229
  %5374 = vmatprep.subr.mxu0 0.0
  %5375 = vmatpush1.msra.mxu0 %v5230
  %5376 = vmatprep.subr.mxu0 0.0
  %5377 = vmatpush1.msra.mxu0 %v5231
  %5378 = vmatprep.subr.mxu0 0.0
  %5379 = vmatpush1.msra.mxu0 %v5232
  %5380 = vmatprep.subr.mxu0 0.0
  %5381 = vmatpush1.msra.mxu0 %v5233
  %5382 = vmatprep.subr.mxu0 0.0
  %5383 = vmatpush1.msra.mxu0 %v5234
  %5384 = vmatprep.subr.mxu0 0.0
  %5385 = vmatpush1.msra.mxu0 %v5235
  %5386 = vmatprep.subr.mxu0 0.0
  %5387 = vmatpush1.msra.mxu0 %v5236
  %5388 = vmatprep.subr.mxu0 0.0
  %5389 = vmatpush1.msra.mxu0 %v5237
  %5390 = vmatprep.subr.mxu0 0.0
  %5391 = vmatpush1.msra.mxu0 %v5238
  %5392 = vmatprep.subr.mxu0 0.0
  %5393 = vmatpush1.msra.mxu0 %v5239
  %5394 = vmatprep.subr.mxu0 0.0
  %5395 = vmatpush1.msra.mxu0 %v5240
  %5396 = vmatprep.subr.mxu0 0.0
  %5397 = vmatpush1.msra.mxu0 %v5241
  %5398 = vmatprep.mubr.f32.mxu0 %v5158
  %5399 = vmatmul.mubr.f32.gmra.mrb[0].mxu0 %v5156
  %v5400 = vpop.f32.mrb[0].mxu0
  %v5401 = vadd.f32 %v5316, %v5400
  %v5402 = vpop.f32.mrb[0].mxu0
  %5403 = vmatprep.mubr.f32.mxu0 %v5164
  %5404 = vmatmul.mubr.f32.gmra.mrb[0].mxu0 %v5162
  %v5405 = vpop.f32.mrb[0].mxu0
  %v5406 = vadd.f32 %v5321, %v5405
  %v5407 = vpop.f32.mrb[0].mxu0
  %5408 = vmatprep.mubr.f32.mxu0 %v5170
  %5409 = vmatmul.mubr.f32.gmra.mrb[0].mxu0 %v5168
  %v5410 = vpop.f32.mrb[0].mxu0
  %v5411 = vadd.f32 %v5326, %v5410
  %v5412 = vpop.f32.mrb[0].mxu0
  %5413 = vmatprep.mubr.f32.mxu0 %v5176
  %5414 = vmatmul.mubr.f32.gmra.mrb[0].mxu0 %v5174
  %v5415 = vpop.f32.mrb[0].mxu0
  %v5416 = vadd.f32 %v5331, %v5415
  %v5417 = vpop.f32.mrb[0].mxu0
  %5418 = vdwg.mxu0
  %vm5419 = vcmp.lt.f32.partialorder %v780, 2.0
  %v5420 = vsel %vm5419, 1, 0
  %v5421 = vlaneseq
  %v5422 = vshrl.u32 %v5421, 7
  %v5423 = vsub.s32 0, %v5422
  %v5424 = vrot.slane %v5420, %v5423
  %vm5425 = vcmp.eq.s32.totalorder %v5424, 1
  %v5426 = vsel %vm5425, %v5401, -1e+30
  %v5427 = vsel %vm5425, %v5406, -1e+30
  %v5428 = vsel %vm5425, %v5411, -1e+30
  %v5429 = vsel %vm5425, %v5416, -1e+30
  %5430 = vmax.xlane.f32.xlu0 %v5426
  %v5431 = vpop.xlane.xlu0 %5430
  %5432 = vmax.xlane.f32.xlu0 %v5427
  %v5433 = vpop.xlane.xlu0 %5432
  %5434 = vmax.xlane.f32.xlu0 %v5428
  %v5435 = vpop.xlane.xlu0 %5434
  %5436 = vmax.xlane.f32.xlu0 %v5429
  %v5437 = vpop.xlane.xlu0 %5436
  %v5438 = vsel %vm819, %v5401, -1e+30
  %v5439 = vsel %vm819, %v5406, -1e+30
  %v5440 = vsel %vm819, %v5411, -1e+30
  %v5441 = vsel %vm819, %v5416, -1e+30
  %5442 = vmax.xlane.f32.xlu0 %v5438
  %v5443 = vpop.xlane.xlu0 %5442
  %5444 = vmax.xlane.f32.xlu0 %v5439
  %v5445 = vpop.xlane.xlu0 %5444
  %5446 = vmax.xlane.f32.xlu0 %v5440
  %v5447 = vpop.xlane.xlu0 %5446
  %5448 = vmax.xlane.f32.xlu0 %v5441
  %v5449 = vpop.xlane.xlu0 %5448
  %vm5450 = vmor %vm5419, %vm783
  %v5451 = vsel %vm5450, 1, 0
  %v5452 = vlaneseq
  %v5453 = vshrl.u32 %v5452, 7
  %v5454 = vsub.s32 0, %v5453
  %v5455 = vrot.slane %v5451, %v5454
  %vm5456 = vcmp.eq.s32.totalorder %v5455, 1
  %v5457 = vsel %vm5456, %v5401, -1e+30
  %v5458 = vsel %vm5456, %v5406, -1e+30
  %v5459 = vsel %vm5456, %v5411, -1e+30
  %v5460 = vsel %vm5456, %v5416, -1e+30
  %v5461 = vsel %vm5425, %v5431, %v5443
  %v5462 = vsel %vm5425, %v5433, %v5445
  %v5463 = vsel %vm5425, %v5435, %v5447
  %v5464 = vsel %vm5425, %v5437, %v5449
  %v5465 = vsub.f32 %v5457, %v5461
  %v5466 = vsub.f32 %v5458, %v5462
  %v5467 = vsub.f32 %v5459, %v5463
  %v5468 = vsub.f32 %v5460, %v5464
  %v5469 = vmul.f32 %v5465, 1.442695
  %v5470 = vpow.pop %v5469
  %v5471 = vmul.f32 %v5466, 1.442695
  %v5472 = vpow.pop %v5471
  %v5473 = vmul.f32 %v5467, 1.442695
  %v5474 = vpow.pop %v5473
  %v5475 = vmul.f32 %v5468, 1.442695
  %v5476 = vpow.pop %v5475
  %v5477 = vsel %vm5425, %v5470, 0.0
  %v5478 = vsel %vm5425, %v5472, 0.0
  %v5479 = vsel %vm5425, %v5474, 0.0
  %v5480 = vsel %vm5425, %v5476, 0.0
  %5481 = vadd.xlane.f32.xlu0 %v5477
  %v5482 = vpop.xlane.xlu0 %5481
  %5483 = vadd.xlane.f32.xlu0 %v5478
  %v5484 = vpop.xlane.xlu0 %5483
  %5485 = vadd.xlane.f32.xlu0 %v5479
  %v5486 = vpop.xlane.xlu0 %5485
  %5487 = vadd.xlane.f32.xlu0 %v5480
  %v5488 = vpop.xlane.xlu0 %5487
  %5489 = vadd.xlane.f32.xlu0 %v5470
  %v5490 = vpop.xlane.xlu0 %5489
  %5491 = vadd.xlane.f32.xlu0 %v5472
  %v5492 = vpop.xlane.xlu0 %5491
  %5493 = vadd.xlane.f32.xlu0 %v5474
  %v5494 = vpop.xlane.xlu0 %5493
  %5495 = vadd.xlane.f32.xlu0 %v5476
  %v5496 = vpop.xlane.xlu0 %5495
  %v5497 = vsub.f32 %v5490, %v5482
  %v5498 = vsub.f32 %v5492, %v5484
  %v5499 = vsub.f32 %v5494, %v5486
  %v5500 = vsub.f32 %v5496, %v5488
  %v5501 = vsel %vm5425, %v5482, %v5497
  %v5502 = vsel %vm5425, %v5484, %v5498
  %v5503 = vsel %vm5425, %v5486, %v5499
  %v5504 = vsel %vm5425, %v5488, %v5500
  %v5505 = vrcp.pop %v5501
  %v5506 = vmul.f32 %v5470, %v5505
  %v5507 = vrcp.pop %v5502
  %v5508 = vmul.f32 %v5472, %v5507
  %v5509 = vrcp.pop %v5503
  %v5510 = vmul.f32 %v5474, %v5509
  %v5511 = vrcp.pop %v5504
  %v5512 = vmul.f32 %v5476, %v5511
  %5513 = vst [vmem:[%s85] sm:$0xff] %v5506
  %5514 = vst [vmem:[%s85 + $0x8] sm:$0xff] %v5508
  %5515 = vst [vmem:[%s85 + $0x10] sm:$0xff] %v5510
  %5516 = vst [vmem:[%s85 + $0x18] sm:$0xff] %v5512
  // Predicated region
  $region166: #{forward.1} parent=0 // pred_check
    _
  $region167: #{forward.1} parent=0 // pred_check_branch
    %5518 = sbr.rel (0) target = $region169
  $region168: #{forward.1} parent=0 // pred_region
    _
  $region169: #{forward.1} parent=0 // pred_fallthru
    _
  // Predicated region
  $region170: #{forward.1} parent=0 // pred_check
    _
  $region171: #{forward.1} parent=0 // pred_check_branch
    %5520 = sbr.rel (0) target = $region173
  $region172: #{forward.1} parent=0 // pred_region
    _
  $region173: #{forward.1} parent=0 // pred_fallthru
    _
  // Predicated region
  $region174: #{forward.1} parent=0 // pred_check
    _
  $region175: #{forward.1} parent=0 // pred_check_branch
    %5522 = sbr.rel (0) target = $region177
  $region176: #{forward.1} parent=0 // pred_region
    _
  $region177: #{forward.1} parent=0 // pred_fallthru
    _
  // Predicated region
  $region178: #{forward.1} parent=0 // pred_check
    _
  $region179: #{forward.1} parent=0 // pred_check_branch
    %5524 = sbr.rel (0) target = $region181
  $region180: #{forward.1} parent=0 // pred_region
    _
  $region181: #{forward.1} parent=0 // pred_fallthru
    _

</llo_original>
